<compile_context>
chip_gen: v5e
topology: v5e:2x2
jax: 0.10.0
libtpu: 0.0.40
codegen_flags: <defaults>
</compile_context>

<pallas_src>
import functools

import jax
import jax.numpy as jnp
import numpy as np
from jax.experimental import pallas as pl
from jax.experimental.pallas import tpu as pltpu

LANE = 128
_LN_EPS = 1e-5


def _round_up(x, m):
    return (x + m - 1) // m * m


def _pick_tile(n, max_tile=512):
    """Sublane-aligned row tile, <= max_tile, and (when possible) >= 2 grid
    steps so megacore sharding engages on v7x."""
    if n <= 8:
        return n
    return min(max_tile, _round_up(max(n // 2, 8), 8))


# ----------------------------------------------------------------------------
# In-kernel math helpers (f32)
# ----------------------------------------------------------------------------
def _layernorm_f32(x, g, b):
    mean = jnp.mean(x, axis=-1, keepdims=True)
    xc = x - mean
    var = jnp.mean(xc * xc, axis=-1, keepdims=True)
    return xc * jax.lax.rsqrt(var + _LN_EPS) * g + b


def _erf(x):
    # Abramowitz & Stegun 7.1.26 (|err| <= 1.5e-7); only exp/mul/add/where,
    # all of which lower on Mosaic -> exact-GELU fusion without lax.erf.
    a1, a2, a3, a4, a5 = 0.254829592, -0.284496736, 1.421413741, -1.453152027, 1.061405429
    pp = 0.3275911
    ax = jnp.abs(x)
    t = 1.0 / (1.0 + pp * ax)
    poly = ((((a5 * t + a4) * t + a3) * t + a2) * t + a1) * t
    y = 1.0 - poly * jnp.exp(-ax * ax)
    return jnp.where(x >= 0, y, -y)


def _gelu(x):
    return 0.5 * x * (1.0 + _erf(x * np.float32(1.0 / np.sqrt(2.0))))


# ----------------------------------------------------------------------------
# Pallas kernels
# ----------------------------------------------------------------------------
def _linear_kernel(x_ref, w_ref, b_ref, o_ref):
    acc = jnp.dot(x_ref[...], w_ref[...], preferred_element_type=jnp.float32)
    o_ref[...] = (acc + b_ref[...]).astype(o_ref.dtype)


def _linear_ln_kernel(x_ref, w_ref, b_ref, g_ref, bb_ref, o_ref):
    acc = jnp.dot(x_ref[...], w_ref[...], preferred_element_type=jnp.float32) + b_ref[...]
    o_ref[...] = _layernorm_f32(acc, g_ref[...], bb_ref[...]).astype(o_ref.dtype)


def _linear_residual_kernel(x_ref, w_ref, b_ref, r_ref, o_ref):
    acc = jnp.dot(x_ref[...], w_ref[...], preferred_element_type=jnp.float32)
    o_ref[...] = (acc + b_ref[...] + r_ref[...].astype(jnp.float32)).astype(o_ref.dtype)


def _ln_qkv_kernel(x_ref, g_ref, b_ref, w_ref, wb_ref, xn_ref, qkv_ref):
    xn = _layernorm_f32(x_ref[...].astype(jnp.float32), g_ref[...], b_ref[...])
    xn_ref[...] = xn.astype(xn_ref.dtype)
    qkv = jnp.dot(xn.astype(w_ref.dtype), w_ref[...],
                  preferred_element_type=jnp.float32) + wb_ref[...]
    qkv_ref[...] = qkv.astype(qkv_ref.dtype)


def _attention_kernel(qkv_ref, o_ref, *, num_heads, scale):
    qkv = qkv_ref[0]                              # (S, 3E), heads on the lane axis
    e = qkv.shape[-1] // 3
    hd = e // num_heads
    outs = []
    for h in range(num_heads):
        q = qkv[:, h * hd:(h + 1) * hd]
        k = qkv[:, e + h * hd:e + (h + 1) * hd]
        v = qkv[:, 2 * e + h * hd:2 * e + (h + 1) * hd]
        s = jax.lax.dot_general(q, k, (((1,), (1,)), ((), ())),
                                preferred_element_type=jnp.float32) * scale
        s = s - jnp.max(s, axis=-1, keepdims=True)
        p = jnp.exp(s)
        r = pl.reciprocal(jnp.sum(p, axis=-1, keepdims=True), approx=True)
        o = jnp.dot(p.astype(v.dtype), v, preferred_element_type=jnp.float32) * r
        outs.append(o)
    o_ref[0] = jnp.concatenate(outs, axis=-1).astype(o_ref.dtype)


def _ln_mlp_residual_kernel(x_ref, r2_ref, g_ref, b_ref,
                            w1_ref, b1_ref, w2_ref, b2_ref, o_ref):
    x = x_ref[...].astype(jnp.float32)
    xn = _layernorm_f32(x, g_ref[...], b_ref[...])
    h = jnp.dot(xn.astype(w1_ref.dtype), w1_ref[...],
                preferred_element_type=jnp.float32) + b1_ref[...]
    h = _gelu(h)
    y = jnp.dot(h.astype(w2_ref.dtype), w2_ref[...],
                preferred_element_type=jnp.float32) + b2_ref[...]
    o_ref[...] = (x + r2_ref[...].astype(jnp.float32) + y).astype(o_ref.dtype)


def _upsample_proj_kernel(u_ref, t_ref, w_ref, b_ref, hi_ref, o_ref):
    up = jnp.dot(u_ref[...], t_ref[0], preferred_element_type=jnp.float32)
    y = jnp.dot(up.astype(w_ref.dtype), w_ref[...],
                preferred_element_type=jnp.float32) + b_ref[...]
    o_ref[0] = (y + hi_ref[0].astype(jnp.float32)).astype(o_ref.dtype)


# ----------------------------------------------------------------------------
# Thin wrappers (row-tiled 1-D grids; weights stay VMEM-resident)
# ----------------------------------------------------------------------------
def _tiled_map(ndim):
    return lambda i: (i,) + (0,) * (ndim - 1)


def _const_map(ndim):
    return lambda i: (0,) * ndim


def _row_tiled_call(kernel, inputs, input_tiled, out_shapes, n_rows,
                    *, max_tile=512, cost=None):
    tile = _pick_tile(n_rows, max_tile)
    grid = (pl.cdiv(n_rows, tile),)

    def spec(shape, is_tiled):
        if is_tiled:
            return pl.BlockSpec((tile,) + tuple(shape[1:]), _tiled_map(len(shape)))
        return pl.BlockSpec(tuple(shape), _const_map(len(shape)))

    in_specs = [spec(a.shape, t) for a, t in zip(inputs, input_tiled)]
    single = not isinstance(out_shapes, (tuple, list))
    outs = (out_shapes,) if single else tuple(out_shapes)
    out_specs = tuple(spec(o.shape, True) for o in outs)
    return pl.pallas_call(
        kernel,
        out_shape=outs[0] if single else outs,
        grid=grid,
        in_specs=in_specs,
        out_specs=out_specs[0] if single else out_specs,
        compiler_params=pltpu.CompilerParams(dimension_semantics=("parallel",)),
        cost_estimate=cost,
    )(*inputs)


def linear_pallas(x, w, b, *, out_dtype=None, max_tile=512):
    n, k = x.shape
    e = w.shape[1]
    out_dtype = out_dtype or x.dtype
    cost = pl.CostEstimate(
        flops=2 * n * k * e, transcendentals=0,
        bytes_accessed=int(x.size * x.dtype.itemsize + w.size * w.dtype.itemsize
                           + b.size * 4 + n * e * jnp.dtype(out_dtype).itemsize))
    return _row_tiled_call(_linear_kernel, [x, w, b], [True, False, False],
                           jax.ShapeDtypeStruct((n, e), out_dtype), n,
                           max_tile=max_tile, cost=cost)


def linear_ln_pallas(x, w, b, g, bb, *, max_tile=512):
    n = x.shape[0]
    e = w.shape[1]
    return _row_tiled_call(_linear_ln_kernel, [x, w, b, g, bb],
                           [True, False, False, False, False],
                           jax.ShapeDtypeStruct((n, e), x.dtype), n, max_tile=max_tile)


def linear_residual_pallas(x, w, b, res, *, max_tile=512):
    n = x.shape[0]
    e = w.shape[1]
    return _row_tiled_call(_linear_residual_kernel, [x, w, b, res],
                           [True, False, False, True],
                           jax.ShapeDtypeStruct((n, e), x.dtype), n, max_tile=max_tile)


def ln_qkv_pallas(x, g, b, w, wb, *, max_tile=512):
    n, e = x.shape
    te = w.shape[1]
    return _row_tiled_call(_ln_qkv_kernel, [x, g, b, w, wb],
                           [True, False, False, False, False],
                           (jax.ShapeDtypeStruct((n, e), x.dtype),
                            jax.ShapeDtypeStruct((n, te), x.dtype)),
                           n, max_tile=max_tile)


def ln_mlp_residual_pallas(x, res2, g, b, w1, b1, w2, b2, *, max_tile=512):
    n, e = x.shape
    return _row_tiled_call(_ln_mlp_residual_kernel,
                           [x, res2, g, b, w1, b1, w2, b2],
                           [True, True, False, False, False, False, False, False],
                           jax.ShapeDtypeStruct((n, e), x.dtype), n, max_tile=max_tile)


def attention_pallas(qkv, *, num_heads):
    bsz, s, te = qkv.shape
    e = te // 3
    scale = 1.0 / float(np.sqrt(e // num_heads))
    return pl.pallas_call(
        functools.partial(_attention_kernel, num_heads=num_heads, scale=scale),
        out_shape=jax.ShapeDtypeStruct((bsz, s, e), qkv.dtype),
        grid=(bsz,),
        in_specs=[pl.BlockSpec((1, s, te), lambda i: (i, 0, 0))],
        out_specs=pl.BlockSpec((1, s, e), lambda i: (i, 0, 0)),
        compiler_params=pltpu.CompilerParams(dimension_semantics=("parallel",)),
    )(qkv)


def upsample_project_pallas(t_tok, u2, wc, bc, hi, *, out_dtype=jnp.float32, max_tile=512):
    bsz, s, e = t_tok.shape
    r = u2.shape[0]
    cout = wc.shape[1]
    tile_r = _pick_tile(r, max_tile)
    return pl.pallas_call(
        _upsample_proj_kernel,
        out_shape=jax.ShapeDtypeStruct((bsz, r, cout), out_dtype),
        grid=(bsz, pl.cdiv(r, tile_r)),
        in_specs=[pl.BlockSpec((tile_r, s), lambda b, i: (i, 0)),
                  pl.BlockSpec((1, s, e), lambda b, i: (b, 0, 0)),
                  pl.BlockSpec((e, cout), lambda b, i: (0, 0)),
                  pl.BlockSpec((1, cout), lambda b, i: (0, 0)),
                  pl.BlockSpec((1, tile_r, cout), lambda b, i: (b, i, 0))],
        out_specs=pl.BlockSpec((1, tile_r, cout), lambda b, i: (b, i, 0)),
        compiler_params=pltpu.CompilerParams(dimension_semantics=("parallel", "parallel")),
    )(u2, t_tok, wc, bc, hi)


# ----------------------------------------------------------------------------
# XLA glue (layout only)
# ----------------------------------------------------------------------------
def _im2col(x, k, pad, k_padded):
    """x: (B,H,W,C) NHWC, stride-1 conv patches -> (B*H*W, k_padded) (zero-padded K).
    # TODO(synk): for large configs, fuse this gather into the matmul kernel's
    # BlockSpec/DMA (halo-tiled (b,h) grid) instead of materializing in HBM."""
    b, h, w, c = x.shape
    xp = jnp.pad(x, ((0, 0), (pad, pad), (pad, pad), (0, 0)))
    cols = [xp[:, i:i + h, j:j + w, :] for i in range(k) for j in range(k)]
    kk = k * k * c
    if k_padded > kk:
        cols.append(jnp.zeros((b, h, w, k_padded - kk), x.dtype))
    return jnp.concatenate(cols, axis=-1).reshape(b * h * w, k_padded)


def _bilinear_matrix_np(n_in, scale):
    """(n_in*scale, n_in) 1-D bilinear upsample matrix, align_corners=False."""
    n_out = n_in * scale
    o = np.arange(n_out, dtype=np.float64)
    src = np.maximum((o + 0.5) / scale - 0.5, 0.0)
    i0 = np.minimum(np.floor(src).astype(np.int64), n_in - 1)
    t = src - i0
    i1 = np.minimum(i0 + 1, n_in - 1)
    u = np.zeros((n_out, n_in), dtype=np.float64)
    rows = np.arange(n_out)
    u[rows, i0] += 1.0 - t
    u[rows, i1] += t
    return u


# ----------------------------------------------------------------------------
# Parameter prep: PyTorch layouts -> kernel-ready (transposed / fused / bf16)
# ----------------------------------------------------------------------------
def prepare_params(p, *, compute_dtype=jnp.bfloat16):
    cd = compute_dtype

    def row(v):
        return jnp.asarray(v, jnp.float32).reshape(1, -1)

    q = {}
    # Multi-scale: pad 3x3/5x5 to centered 7x7, concat over Cout, fold the 1x1
    # fusion conv algebraically, pad K to a lane multiple.
    cin = p['ms1_w'].shape[1]

    def to7(w):
        k = w.shape[-1]
        o = (7 - k) // 2
        return jnp.pad(w, ((0, 0), (0, 0), (o, o), (o, o)))

    wcat = jnp.concatenate([to7(p['ms1_w']), to7(p['ms3_w']), to7(p['ms5_w'])], axis=0)
    wcat2d = jnp.transpose(wcat, (2, 3, 1, 0)).reshape(49 * cin, -1)
    bcat = jnp.concatenate([p['ms1_b'], p['ms3_b'], p['ms5_b']])
    wmsf = p['msf_w'][:, :, 0, 0].T
    w_ms = wcat2d @ wmsf
    b_ms = bcat @ wmsf + p['msf_b']
    kms = _round_up(w_ms.shape[0], LANE)
    q['ms_w'] = jnp.pad(w_ms, ((0, kms - w_ms.shape[0]), (0, 0))).astype(cd)
    q['ms_b'] = row(b_ms)

    # Patch embedding.
    e = p['pe_w'].shape[0]
    patch = p['pe_w'].shape[-1]
    q['pe_w'] = jnp.transpose(p['pe_w'], (2, 3, 1, 0)).reshape(patch * patch * cin, e).astype(cd)
    q['pe_b'] = row(p['pe_b'])

    # MHSA blocks.
    q['mhsa'] = []
    for blk in p['mhsa']:
        q['mhsa'].append(dict(
            ln1_g=row(blk['ln1_g']), ln1_b=row(blk['ln1_b']),
            qkv_w=blk['in_w'].T.astype(cd), qkv_b=row(blk['in_b']),
            out_w=blk['out_w'].T.astype(cd), out_b=row(blk['out_b']),
            ln2_g=row(blk['ln2_g']), ln2_b=row(blk['ln2_b']),
            fc1_w=blk['fc1_w'].T.astype(cd), fc1_b=row(blk['fc1_b']),
            fc2_w=blk['fc2_w'].T.astype(cd), fc2_b=row(blk['fc2_b']),
        ))

    # Second embed 3x3 conv + final LayerNorm.
    kse = _round_up(9 * e, LANE)
    w_se = jnp.transpose(p['se_w'], (2, 3, 1, 0)).reshape(9 * e, e)
    q['se_w'] = jnp.pad(w_se, ((0, kse - 9 * e), (0, 0))).astype(cd)
    q['se_b'] = row(p['se_b'])
    q['norm_g'] = row(p['norm_g'])
    q['norm_b'] = row(p['norm_b'])

    # Final 1x1 projection.
    q['conv_w'] = p['conv_w'][:, :, 0, 0].T.astype(cd)
    q['conv_b'] = row(p['conv_b'])
    return q


# ----------------------------------------------------------------------------
# Forward pass
# ----------------------------------------------------------------------------
def glse_pallas(x_nchw, qp, *, patch=4, num_heads=4, compute_dtype=jnp.bfloat16):
    b, cin, h, w = x_nchw.shape
    x = jnp.transpose(x_nchw, (0, 2, 3, 1)).astype(compute_dtype)    # NHWC, bf16

    # Multi-scale branch: 3 convs + 1x1 fusion folded into one matmul over a
    # shared 7x7 im2col patch matrix.
    hi = linear_pallas(_im2col(x, 7, 3, qp['ms_w'].shape[0]), qp['ms_w'], qp['ms_b'],
                       out_dtype=jnp.float32)                        # (B*H*W, Cout)
    cout = hi.shape[1]

    # Patch embedding (non-overlapping conv as a matmul).
    hp, wp = h // patch, w // patch
    s = hp * wp
    xpt = (x.reshape(b, hp, patch, wp, patch, cin)
            .transpose(0, 1, 3, 2, 4, 5)
            .reshape(b * s, patch * patch * cin))
    tok = linear_pallas(xpt, qp['pe_w'], qp['pe_b'])                 # (B*S, E) bf16
    e = tok.shape[1]

    # MHSA stack: LN1+QKV fused, per-batch attention (heads on lanes),
    # out-proj+residual fused, LN2+MLP(GELU)+both residuals fused.
    for blk in qp['mhsa']:
        xn, qkv = ln_qkv_pallas(tok, blk['ln1_g'], blk['ln1_b'],
                                blk['qkv_w'], blk['qkv_b'])
        attn = attention_pallas(qkv.reshape(b, s, 3 * e),
                                num_heads=num_heads).reshape(b * s, e)
        xr = linear_residual_pallas(attn, blk['out_w'], blk['out_b'], xn)
        tok = ln_mlp_residual_pallas(xr, tok, blk['ln2_g'], blk['ln2_b'],
                                     blk['fc1_w'], blk['fc1_b'],
                                     blk['fc2_w'], blk['fc2_b'])

    # Second embedding (3x3 conv) fused with the final LayerNorm.
    tp = _im2col(tok.reshape(b, hp, wp, e), 3, 1, qp['se_w'].shape[0])
    t = linear_ln_pallas(tp, qp['se_w'], qp['se_b'], qp['norm_g'], qp['norm_b'])

    # Bilinear x4 upsample as one interpolation matmul (E on lanes, no
    # transposes), fused with the 1x1 projection and the hi residual.
    # TODO(synk): for large images use the separable two-pass form with a
    # K-tiled grid axis; kron(Uh, Uw) grows as (16*S, S).
    u2 = jnp.asarray(np.kron(_bilinear_matrix_np(hp, 4), _bilinear_matrix_np(wp, 4)),
                     dtype=compute_dtype)
    out = upsample_project_pallas(t.reshape(b, s, e), u2,
                                  qp['conv_w'], qp['conv_b'],
                                  hi.reshape(b, h * w, cout))
    return jnp.transpose(out.reshape(b, h, w, cout), (0, 3, 1, 2))   # back to NCHW


# ----------------------------------------------------------------------------
# Parameters (deterministic synthetic init, PyTorch weight layouts)
# ----------------------------------------------------------------------------
def init_params(key, *, in_ch=4, out_ch=32, embed=64, patch=4, num_mhsa=4):
    keys = iter(jax.random.split(key, 64))

    def conv_init(cout, cin, k):
        sc = 1.0 / np.sqrt(cin * k * k)
        w = jax.random.uniform(next(keys), (cout, cin, k, k), jnp.float32, -sc, sc)
        bb = jax.random.uniform(next(keys), (cout,), jnp.float32, -sc, sc)
        return w, bb

    def lin_init(cout, cin):
        sc = 1.0 / np.sqrt(cin)
        w = jax.random.uniform(next(keys), (cout, cin), jnp.float32, -sc, sc)
        bb = jax.random.uniform(next(keys), (cout,), jnp.float32, -sc, sc)
        return w, bb

    p = {}
    p['ms1_w'], p['ms1_b'] = conv_init(out_ch // 2, in_ch, 3)
    p['ms3_w'], p['ms3_b'] = conv_init(out_ch // 4, in_ch, 5)
    p['ms5_w'], p['ms5_b'] = conv_init(out_ch // 4, in_ch, 7)
    p['msf_w'], p['msf_b'] = conv_init(out_ch, out_ch // 2 + out_ch // 4 + out_ch // 4, 1)
    p['pe_w'], p['pe_b'] = conv_init(embed, in_ch, patch)
    blocks = []
    for _ in range(num_mhsa):
        blk = {}
        blk['ln1_g'] = jnp.ones((embed,), jnp.float32)
        blk['ln1_b'] = jnp.zeros((embed,), jnp.float32)
        blk['in_w'], blk['in_b'] = lin_init(3 * embed, embed)
        blk['out_w'], blk['out_b'] = lin_init(embed, embed)
        blk['ln2_g'] = jnp.ones((embed,), jnp.float32)
        blk['ln2_b'] = jnp.zeros((embed,), jnp.float32)
        blk['fc1_w'], blk['fc1_b'] = lin_init(4 * embed, embed)
        blk['fc2_w'], blk['fc2_b'] = lin_init(embed, 4 * embed)
        blocks.append(blk)
    p['mhsa'] = blocks
    p['se_w'], p['se_b'] = conv_init(embed, embed, 3)
    p['conv_w'], p['conv_b'] = conv_init(out_ch, embed, 1)
    p['norm_g'] = jnp.ones((embed,), jnp.float32)
    p['norm_b'] = jnp.zeros((embed,), jnp.float32)
    return p


# ----------------------------------------------------------------------------
# Pure-JAX f32 reference (mirrors the PyTorch module; verification only)
# ----------------------------------------------------------------------------
HI = jax.lax.Precision.HIGHEST


def _conv_ref(x, w, b, pad, stride=1):
    out = jax.lax.conv_general_dilated(
        x, w, (stride, stride), ((pad, pad), (pad, pad)),
        dimension_numbers=("NCHW", "OIHW", "NCHW"), precision=HI)
    return out + b.reshape(1, -1, 1, 1)


def _ln_ref(x, g, b, eps=1e-5):
    m = jnp.mean(x, -1, keepdims=True)
    v = jnp.mean(jnp.square(x - m), -1, keepdims=True)
    return (x - m) * jax.lax.rsqrt(v + eps) * g + b


def _mhsa_ref(tok, blk, num_heads):
    B, S, E = tok.shape
    hd = E // num_heads
    xn = _ln_ref(tok, blk['ln1_g'], blk['ln1_b'])
    qkv = jnp.einsum('bse,oe->bso', xn, blk['in_w'], precision=HI) + blk['in_b']
    q, k, v = qkv[..., :E], qkv[..., E:2 * E], qkv[..., 2 * E:]

    def sh(z):
        return z.reshape(B, S, num_heads, hd).transpose(0, 2, 1, 3)

    s = jnp.einsum('bhqd,bhkd->bhqk', sh(q), sh(k), precision=HI) / np.sqrt(hd)
    a = jax.nn.softmax(s, axis=-1)
    o = jnp.einsum('bhqk,bhkd->bhqd', a, sh(v), precision=HI)
    o = o.transpose(0, 2, 1, 3).reshape(B, S, E)
    attn = jnp.einsum('bse,oe->bso', o, blk['out_w'], precision=HI) + blk['out_b']
    xr = xn + attn
    xn2 = _ln_ref(xr, blk['ln2_g'], blk['ln2_b'])
    h = jnp.einsum('bse,oe->bso', xn2, blk['fc1_w'], precision=HI) + blk['fc1_b']
    h = jax.nn.gelu(h, approximate=False)
    h = jnp.einsum('bse,oe->bso', h, blk['fc2_w'], precision=HI) + blk['fc2_b']
    return xr + h


def _bilinear_up4_ref(x):
    B, C, H, W = x.shape

    def coords(n):
        o = jnp.arange(n * 4)
        src = jnp.maximum((o + 0.5) / 4.0 - 0.5, 0.0)
        i0 = jnp.minimum(jnp.floor(src).astype(jnp.int32), n - 1)
        t = src - i0.astype(src.dtype)
        i1 = jnp.minimum(i0 + 1, n - 1)
        return i0, i1, t

    hi0, hi1, ht = coords(H)
    wi0, wi1, wt = coords(W)
    xh = (x[:, :, hi0, :] * (1 - ht)[None, None, :, None]
          + x[:, :, hi1, :] * ht[None, None, :, None])
    return xh[:, :, :, wi0] * (1 - wt) + xh[:, :, :, wi1] * wt


def glse_ref(x, p, *, patch=4, num_heads=4):
    x1 = _conv_ref(x, p['ms1_w'], p['ms1_b'], 1)
    x2 = _conv_ref(x, p['ms3_w'], p['ms3_b'], 2)
    x3 = _conv_ref(x, p['ms5_w'], p['ms5_b'], 3)
    hi = _conv_ref(jnp.concatenate([x1, x2, x3], axis=1), p['msf_w'], p['msf_b'], 0)
    t = jax.lax.conv_general_dilated(
        x, p['pe_w'], (patch, patch), 'VALID',
        dimension_numbers=("NCHW", "OIHW", "NCHW"), precision=HI)
    t = t + p['pe_b'].reshape(1, -1, 1, 1)
    B, E, Hp, Wp = t.shape
    S = Hp * Wp
    tok = t.reshape(B, E, S).transpose(0, 2, 1)
    for blk in p['mhsa']:
        tok = _mhsa_ref(tok, blk, num_heads) + tok
    t = tok.transpose(0, 2, 1).reshape(B, E, Hp, Wp)
    t = _conv_ref(t, p['se_w'], p['se_b'], 1)
    tok = _ln_ref(t.reshape(B, E, S).transpose(0, 2, 1), p['norm_g'], p['norm_b'])
    t = tok.transpose(0, 2, 1).reshape(B, E, Hp, Wp)
    t = _bilinear_up4_ref(t)
    return _conv_ref(t, p['conv_w'], p['conv_b'], 0) + hi


# ----------------------------------------------------------------------------
if __name__ == "__main__":
    B, Cin, H, W = 2, 4, 32, 32
    out_ch, embed, patch, heads, num_mhsa = 32, 64, 4, 4, 4

    key = jax.random.PRNGKey(0)
    kx, kp = jax.random.split(key)
    x = jax.random.normal(kx, (B, Cin, H, W), dtype=jnp.float32)
    params = init_params(kp, in_ch=Cin, out_ch=out_ch, embed=embed,
                         patch=patch, num_mhsa=num_mhsa)
    qparams = prepare_params(params)            # transposed / fused / bf16, done once

    fwd = jax.jit(functools.partial(glse_pallas, patch=patch, num_heads=heads))
    out = jax.block_until_ready(fwd(x, qparams))
    assert out.shape == (B, out_ch, H, W), out.shape

    ref_fn = jax.jit(functools.partial(glse_ref, patch=patch, num_heads=heads))
    ref = jax.block_until_ready(ref_fn(x, params))
    err = float(jnp.max(jnp.abs(out - ref)))
    scale_ref = float(jnp.max(jnp.abs(ref)))
    tol = 0.08 * scale_ref + 0.02               # bf16 operands vs f32 HIGHEST reference
    assert err <= tol, f"max abs err {err} (ref max {scale_ref}, tol {tol})"

    print("KERNEL_OK")
</pallas_src>

<mosaic_0001>
module attributes {stable_mosaic.version = 11 : i64} {
  func.func @_linear_kernel(%arg0: i32, %arg1: memref<64x64xbf16, #tpu.memory_space<vmem>>, %arg2: memref<64x64xbf16, #tpu.memory_space<vmem>>, %arg3: memref<1x64xf32, #tpu.memory_space<vmem>>, %arg4: memref<64x64xbf16, #tpu.memory_space<vmem>>) attributes {dimension_semantics = [#tpu.dimension_semantics<parallel>], iteration_bounds = array<i64: 2>, scalar_prefetch = 0 : i64, scratch_operands = 0 : i64, tpu.core_type = #tpu.core_type<tc>, window_params = [{transform_indices = @transform_0, window_bounds = array<i64: 64, 64>}, {pipeline_mode = #tpu.pipeline_mode<synchronous>, transform_indices = @transform_1, window_bounds = array<i64: 64, 64>}, {pipeline_mode = #tpu.pipeline_mode<synchronous>, transform_indices = @transform_2, window_bounds = array<i64: 1, 64>}, {transform_indices = @transform_3, window_bounds = array<i64: 64, 64>}]} {
    %c0 = arith.constant 0 : index
    %c0_0 = arith.constant 0 : index
    %0 = vector.load %arg1[%c0, %c0_0] : memref<64x64xbf16, #tpu.memory_space<vmem>>, vector<64x64xbf16>
    %c0_1 = arith.constant 0 : index
    %c0_2 = arith.constant 0 : index
    %1 = vector.load %arg2[%c0_1, %c0_2] : memref<64x64xbf16, #tpu.memory_space<vmem>>, vector<64x64xbf16>
    %cst = arith.constant dense<0.000000e+00> : vector<64x64xf32>
    %2 = tpu.matmul %0, %1, %cst {dimension_numbers = #tpu.dot_dimension_numbers<[1], [0], [0], [1], [0, 0, 1, 1], [], []>} : vector<64x64xbf16>, vector<64x64xbf16>, vector<64x64xf32> -> vector<64x64xf32>
    %c0_3 = arith.constant 0 : index
    %c0_4 = arith.constant 0 : index
    %3 = vector.load %arg3[%c0_3, %c0_4] : memref<1x64xf32, #tpu.memory_space<vmem>>, vector<1x64xf32>
    %4 = vector.broadcast %3 : vector<1x64xf32> to vector<64x64xf32>
    %5 = arith.addf %2, %4 : vector<64x64xf32>
    %6 = arith.truncf %5 : vector<64x64xf32> to vector<64x64xbf16>
    %c0_5 = arith.constant 0 : index
    %c0_6 = arith.constant 0 : index
    %7 = vector.load %arg4[%c0_5, %c0_6] : memref<64x64xbf16, #tpu.memory_space<vmem>>, vector<64x64xbf16>
    tpu.vector_store %arg4[%c0_5, %c0_6], %6 {strides = array<i32>} : memref<64x64xbf16, #tpu.memory_space<vmem>>, vector<64x64xbf16>,
    return
  }
  func.func @transform_0(%arg0: i32) -> (i32, i32) {
    %c0_i32 = arith.constant 0 : i32
    %c0_i32_0 = arith.constant 0 : i32
    return %arg0, %c0_i32 : i32, i32
  }
  func.func @transform_1(%arg0: i32) -> (i32, i32) {
    %c0_i32 = arith.constant 0 : i32
    %c0_i32_0 = arith.constant 0 : i32
    %c0_i32_1 = arith.constant 0 : i32
    return %c0_i32, %c0_i32_0 : i32, i32
  }
  func.func @transform_2(%arg0: i32) -> (i32, i32) {
    %c0_i32 = arith.constant 0 : i32
    %c0_i32_0 = arith.constant 0 : i32
    %c0_i32_1 = arith.constant 0 : i32
    return %c0_i32, %c0_i32_0 : i32, i32
  }
  func.func @transform_3(%arg0: i32) -> (i32, i32) {
    %c0_i32 = arith.constant 0 : i32
    %c0_i32_0 = arith.constant 0 : i32
    return %arg0, %c0_i32 : i32, i32
  }
}

module attributes {stable_mosaic.version = 11 : i64} {
  func.func @_attention_kernel(%arg0: i32, %arg1: memref<1x64x192xbf16, #tpu.memory_space<vmem>>, %arg2: memref<1x64x64xbf16, #tpu.memory_space<vmem>>) attributes {dimension_semantics = [#tpu.dimension_semantics<parallel>], iteration_bounds = array<i64: 2>, scalar_prefetch = 0 : i64, scratch_operands = 0 : i64, tpu.core_type = #tpu.core_type<tc>, window_params = [{transform_indices = @transform_0, window_bounds = array<i64: 1, 64, 192>}, {transform_indices = @transform_1, window_bounds = array<i64: 1, 64, 64>}]} {
    %c0 = arith.constant 0 : index
    %c0_0 = arith.constant 0 : index
    %c0_1 = arith.constant 0 : index
    %0 = vector.load %arg1[%c0, %c0_0, %c0_1] : memref<1x64x192xbf16, #tpu.memory_space<vmem>>, vector<1x64x192xbf16>
    %1 = vector.shape_cast %0 : vector<1x64x192xbf16> to vector<64x192xbf16>
    %2 = vector.extract_strided_slice %1 {offsets = [0, 0], sizes = [64, 16], strides = [1, 1]} : vector<64x192xbf16> to vector<64x16xbf16>
    %3 = vector.extract_strided_slice %1 {offsets = [0, 64], sizes = [64, 16], strides = [1, 1]} : vector<64x192xbf16> to vector<64x16xbf16>
    %4 = vector.extract_strided_slice %1 {offsets = [0, 128], sizes = [64, 16], strides = [1, 1]} : vector<64x192xbf16> to vector<64x16xbf16>
    %cst = arith.constant dense<0.000000e+00> : vector<64x64xf32>
    %5 = tpu.matmul %2, %3, %cst {dimension_numbers = #tpu.dot_dimension_numbers<[1], [1], [0], [0], [0, 0, 1, 0], [], []>} : vector<64x16xbf16>, vector<64x16xbf16>, vector<64x64xf32> -> vector<64x64xf32>
    %cst_2 = arith.constant 2.500000e-01 : f32
    %6 = vector.broadcast %cst_2 : f32 to vector<64x64xf32>
    %7 = arith.mulf %5, %6 : vector<64x64xf32>
    %cst_3 = arith.constant dense<0xFF800000> : vector<64xf32>
    %8 = vector.multi_reduction <maximumf>, %7, %cst_3 [1] : vector<64x64xf32> to vector<64xf32>
    %9 = vector.shape_cast %8 : vector<64xf32> to vector<64x1xf32>
    %10 = vector.broadcast %9 : vector<64x1xf32> to vector<64x64xf32>
    %11 = arith.subf %7, %10 : vector<64x64xf32>
    %12 = math.exp %11 : vector<64x64xf32>
    %cst_4 = arith.constant dense<0.000000e+00> : vector<64xf32>
    %13 = vector.multi_reduction <add>, %12, %cst_4 [1] : vector<64x64xf32> to vector<64xf32>
    %14 = vector.shape_cast %13 : vector<64xf32> to vector<64x1xf32>
    %15 = tpu.reciprocal %14 {approx = true} : vector<64x1xf32> -> vector<64x1xf32>
    %16 = arith.truncf %12 : vector<64x64xf32> to vector<64x64xbf16>
    %cst_5 = arith.constant dense<0.000000e+00> : vector<64x16xf32>
    %17 = tpu.matmul %16, %4, %cst_5 {dimension_numbers = #tpu.dot_dimension_numbers<[1], [0], [0], [1], [0, 0, 1, 1], [], []>} : vector<64x64xbf16>, vector<64x16xbf16>, vector<64x16xf32> -> vector<64x16xf32>
    %18 = vector.broadcast %15 : vector<64x1xf32> to vector<64x16xf32>
    %19 = arith.mulf %17, %18 : vector<64x16xf32>
    %20 = vector.extract_strided_slice %1 {offsets = [0, 16], sizes = [64, 16], strides = [1, 1]} : vector<64x192xbf16> to vector<64x16xbf16>
    %21 = vector.extract_strided_slice %1 {offsets = [0, 80], sizes = [64, 16], strides = [1, 1]} : vector<64x192xbf16> to vector<64x16xbf16>
    %22 = vector.extract_strided_slice %1 {offsets = [0, 144], sizes = [64, 16], strides = [1, 1]} : vector<64x192xbf16> to vector<64x16xbf16>
    %cst_6 = arith.constant dense<0.000000e+00> : vector<64x64xf32>
    %23 = tpu.matmul %20, %21, %cst_6 {dimension_numbers = #tpu.dot_dimension_numbers<[1], [1], [0], [0], [0, 0, 1, 0], [], []>} : vector<64x16xbf16>, vector<64x16xbf16>, vector<64x64xf32> -> vector<64x64xf32>
    %cst_7 = arith.constant 2.500000e-01 : f32
    %24 = vector.broadcast %cst_7 : f32 to vector<64x64xf32>
    %25 = arith.mulf %23, %24 : vector<64x64xf32>
    %cst_8 = arith.constant dense<0xFF800000> : vector<64xf32>
    %26 = vector.multi_reduction <maximumf>, %25, %cst_8 [1] : vector<64x64xf32> to vector<64xf32>
    %27 = vector.shape_cast %26 : vector<64xf32> to vector<64x1xf32>
    %28 = vector.broadcast %27 : vector<64x1xf32> to vector<64x64xf32>
    %29 = arith.subf %25, %28 : vector<64x64xf32>
    %30 = math.exp %29 : vector<64x64xf32>
    %cst_9 = arith.constant dense<0.000000e+00> : vector<64xf32>
    %31 = vector.multi_reduction <add>, %30, %cst_9 [1] : vector<64x64xf32> to vector<64xf32>
    %32 = vector.shape_cast %31 : vector<64xf32> to vector<64x1xf32>
    %33 = tpu.reciprocal %32 {approx = true} : vector<64x1xf32> -> vector<64x1xf32>
    %34 = arith.truncf %30 : vector<64x64xf32> to vector<64x64xbf16>
    %cst_10 = arith.constant dense<0.000000e+00> : vector<64x16xf32>
    %35 = tpu.matmul %34, %22, %cst_10 {dimension_numbers = #tpu.dot_dimension_numbers<[1], [0], [0], [1], [0, 0, 1, 1], [], []>} : vector<64x64xbf16>, vector<64x16xbf16>, vector<64x16xf32> -> vector<64x16xf32>
    %36 = vector.broadcast %33 : vector<64x1xf32> to vector<64x16xf32>
    %37 = arith.mulf %35, %36 : vector<64x16xf32>
    %38 = vector.extract_strided_slice %1 {offsets = [0, 32], sizes = [64, 16], strides = [1, 1]} : vector<64x192xbf16> to vector<64x16xbf16>
    %39 = vector.extract_strided_slice %1 {offsets = [0, 96], sizes = [64, 16], strides = [1, 1]} : vector<64x192xbf16> to vector<64x16xbf16>
    %40 = vector.extract_strided_slice %1 {offsets = [0, 160], sizes = [64, 16], strides = [1, 1]} : vector<64x192xbf16> to vector<64x16xbf16>
    %cst_11 = arith.constant dense<0.000000e+00> : vector<64x64xf32>
    %41 = tpu.matmul %38, %39, %cst_11 {dimension_numbers = #tpu.dot_dimension_numbers<[1], [1], [0], [0], [0, 0, 1, 0], [], []>} : vector<64x16xbf16>, vector<64x16xbf16>, vector<64x64xf32> -> vector<64x64xf32>
    %cst_12 = arith.constant 2.500000e-01 : f32
    %42 = vector.broadcast %cst_12 : f32 to vector<64x64xf32>
    %43 = arith.mulf %41, %42 : vector<64x64xf32>
    %cst_13 = arith.constant dense<0xFF800000> : vector<64xf32>
    %44 = vector.multi_reduction <maximumf>, %43, %cst_13 [1] : vector<64x64xf32> to vector<64xf32>
    %45 = vector.shape_cast %44 : vector<64xf32> to vector<64x1xf32>
    %46 = vector.broadcast %45 : vector<64x1xf32> to vector<64x64xf32>
    %47 = arith.subf %43, %46 : vector<64x64xf32>
    %48 = math.exp %47 : vector<64x64xf32>
    %cst_14 = arith.constant dense<0.000000e+00> : vector<64xf32>
    %49 = vector.multi_reduction <add>, %48, %cst_14 [1] : vector<64x64xf32> to vector<64xf32>
    %50 = vector.shape_cast %49 : vector<64xf32> to vector<64x1xf32>
    %51 = tpu.reciprocal %50 {approx = true} : vector<64x1xf32> -> vector<64x1xf32>
    %52 = arith.truncf %48 : vector<64x64xf32> to vector<64x64xbf16>
    %cst_15 = arith.constant dense<0.000000e+00> : vector<64x16xf32>
    %53 = tpu.matmul %52, %40, %cst_15 {dimension_numbers = #tpu.dot_dimension_numbers<[1], [0], [0], [1], [0, 0, 1, 1], [], []>} : vector<64x64xbf16>, vector<64x16xbf16>, vector<64x16xf32> -> vector<64x16xf32>
    %54 = vector.broadcast %51 : vector<64x1xf32> to vector<64x16xf32>
    %55 = arith.mulf %53, %54 : vector<64x16xf32>
    %56 = vector.extract_strided_slice %1 {offsets = [0, 48], sizes = [64, 16], strides = [1, 1]} : vector<64x192xbf16> to vector<64x16xbf16>
    %57 = vector.extract_strided_slice %1 {offsets = [0, 112], sizes = [64, 16], strides = [1, 1]} : vector<64x192xbf16> to vector<64x16xbf16>
    %58 = vector.extract_strided_slice %1 {offsets = [0, 176], sizes = [64, 16], strides = [1, 1]} : vector<64x192xbf16> to vector<64x16xbf16>
    %cst_16 = arith.constant dense<0.000000e+00> : vector<64x64xf32>
    %59 = tpu.matmul %56, %57, %cst_16 {dimension_numbers = #tpu.dot_dimension_numbers<[1], [1], [0], [0], [0, 0, 1, 0], [], []>} : vector<64x16xbf16>, vector<64x16xbf16>, vector<64x64xf32> -> vector<64x64xf32>
    %cst_17 = arith.constant 2.500000e-01 : f32
    %60 = vector.broadcast %cst_17 : f32 to vector<64x64xf32>
    %61 = arith.mulf %59, %60 : vector<64x64xf32>
    %cst_18 = arith.constant dense<0xFF800000> : vector<64xf32>
    %62 = vector.multi_reduction <maximumf>, %61, %cst_18 [1] : vector<64x64xf32> to vector<64xf32>
    %63 = vector.shape_cast %62 : vector<64xf32> to vector<64x1xf32>
    %64 = vector.broadcast %63 : vector<64x1xf32> to vector<64x64xf32>
    %65 = arith.subf %61, %64 : vector<64x64xf32>
    %66 = math.exp %65 : vector<64x64xf32>
    %cst_19 = arith.constant dense<0.000000e+00> : vector<64xf32>
    %67 = vector.multi_reduction <add>, %66, %cst_19 [1] : vector<64x64xf32> to vector<64xf32>
    %68 = vector.shape_cast %67 : vector<64xf32> to vector<64x1xf32>
    %69 = tpu.reciprocal %68 {approx = true} : vector<64x1xf32> -> vector<64x1xf32>
    %70 = arith.truncf %66 : vector<64x64xf32> to vector<64x64xbf16>
    %cst_20 = arith.constant dense<0.000000e+00> : vector<64x16xf32>
    %71 = tpu.matmul %70, %58, %cst_20 {dimension_numbers = #tpu.dot_dimension_numbers<[1], [0], [0], [1], [0, 0, 1, 1], [], []>} : vector<64x64xbf16>, vector<64x16xbf16>, vector<64x16xf32> -> vector<64x16xf32>
    %72 = vector.broadcast %69 : vector<64x1xf32> to vector<64x16xf32>
    %73 = arith.mulf %71, %72 : vector<64x16xf32>
    %74 = tpu.concatenate %19, %37, %55, %73 in 1 : vector<64x16xf32>, vector<64x16xf32>, vector<64x16xf32>, vector<64x16xf32> -> vector<64x64xf32>
    %75 = arith.truncf %74 : vector<64x64xf32> to vector<64x64xbf16>
    %c0_21 = arith.constant 0 : index
    %c0_22 = arith.constant 0 : index
    %c0_23 = arith.constant 0 : index
    %76 = vector.load %arg2[%c0_21, %c0_22, %c0_23] : memref<1x64x64xbf16, #tpu.memory_space<vmem>>, vector<1x64x64xbf16>
    %77 = vector.shape_cast %76 : vector<1x64x64xbf16> to vector<64x64xbf16>
    %78 = vector.shape_cast %75 : vector<64x64xbf16> to vector<1x64x64xbf16>
    tpu.vector_store %arg2[%c0_21, %c0_22, %c0_23], %78 {strides = array<i32>} : memref<1x64x64xbf16, #tpu.memory_space<vmem>>, vector<1x64x64xbf16>,
    return
  }
  func.func @transform_0(%arg0: i32) -> (i32, i32, i32) {
    %c0_i32 = arith.constant 0 : i32
    %c0_i32_0 = arith.constant 0 : i32
    %c0_i32_1 = arith.constant 0 : i32
    return %arg0, %c0_i32, %c0_i32_0 : i32, i32, i32
  }
  func.func @transform_1(%arg0: i32) -> (i32, i32, i32) {
    %c0_i32 = arith.constant 0 : i32
    %c0_i32_0 = arith.constant 0 : i32
    %c0_i32_1 = arith.constant 0 : i32
    return %arg0, %c0_i32, %c0_i32_0 : i32, i32, i32
  }
}

module attributes {stable_mosaic.version = 11 : i64} {
  func.func @_ln_qkv_kernel(%arg0: i32, %arg1: memref<64x64xbf16, #tpu.memory_space<vmem>>, %arg2: memref<1x64xf32, #tpu.memory_space<vmem>>, %arg3: memref<1x64xf32, #tpu.memory_space<vmem>>, %arg4: memref<64x192xbf16, #tpu.memory_space<vmem>>, %arg5: memref<1x192xf32, #tpu.memory_space<vmem>>, %arg6: memref<64x64xbf16, #tpu.memory_space<vmem>>, %arg7: memref<64x192xbf16, #tpu.memory_space<vmem>>) attributes {dimension_semantics = [#tpu.dimension_semantics<parallel>], iteration_bounds = array<i64: 2>, scalar_prefetch = 0 : i64, scratch_operands = 0 : i64, tpu.core_type = #tpu.core_type<tc>, window_params = [{transform_indices = @transform_0, window_bounds = array<i64: 64, 64>}, {pipeline_mode = #tpu.pipeline_mode<synchronous>, transform_indices = @transform_1, window_bounds = array<i64: 1, 64>}, {pipeline_mode = #tpu.pipeline_mode<synchronous>, transform_indices = @transform_2, window_bounds = array<i64: 1, 64>}, {pipeline_mode = #tpu.pipeline_mode<synchronous>, transform_indices = @transform_3, window_bounds = array<i64: 64, 192>}, {pipeline_mode = #tpu.pipeline_mode<synchronous>, transform_indices = @transform_4, window_bounds = array<i64: 1, 192>}, {transform_indices = @transform_5, window_bounds = array<i64: 64, 64>}, {transform_indices = @transform_6, window_bounds = array<i64: 64, 192>}]} {
    %c0 = arith.constant 0 : index
    %c0_0 = arith.constant 0 : index
    %0 = vector.load %arg1[%c0, %c0_0] : memref<64x64xbf16, #tpu.memory_space<vmem>>, vector<64x64xbf16>
    %1 = arith.extf %0 : vector<64x64xbf16> to vector<64x64xf32>
    %c0_1 = arith.constant 0 : index
    %c0_2 = arith.constant 0 : index
    %2 = vector.load %arg2[%c0_1, %c0_2] : memref<1x64xf32, #tpu.memory_space<vmem>>, vector<1x64xf32>
    %c0_3 = arith.constant 0 : index
    %c0_4 = arith.constant 0 : index
    %3 = vector.load %arg3[%c0_3, %c0_4] : memref<1x64xf32, #tpu.memory_space<vmem>>, vector<1x64xf32>
    %cst = arith.constant dense<0.000000e+00> : vector<64xf32>
    %4 = vector.multi_reduction <add>, %1, %cst [1] : vector<64x64xf32> to vector<64xf32>
    %5 = vector.shape_cast %4 : vector<64xf32> to vector<64x1xf32>
    %cst_5 = arith.constant 6.400000e+01 : f32
    %6 = vector.broadcast %cst_5 : f32 to vector<64x1xf32>
    %7 = arith.divf %5, %6 : vector<64x1xf32>
    %8 = vector.broadcast %7 : vector<64x1xf32> to vector<64x64xf32>
    %9 = arith.subf %1, %8 : vector<64x64xf32>
    %10 = arith.mulf %9, %9 : vector<64x64xf32>
    %cst_6 = arith.constant dense<0.000000e+00> : vector<64xf32>
    %11 = vector.multi_reduction <add>, %10, %cst_6 [1] : vector<64x64xf32> to vector<64xf32>
    %12 = vector.shape_cast %11 : vector<64xf32> to vector<64x1xf32>
    %cst_7 = arith.constant 6.400000e+01 : f32
    %13 = vector.broadcast %cst_7 : f32 to vector<64x1xf32>
    %14 = arith.divf %12, %13 : vector<64x1xf32>
    %cst_8 = arith.constant 9.99999974E-6 : f32
    %15 = vector.broadcast %cst_8 : f32 to vector<64x1xf32>
    %16 = arith.addf %14, %15 : vector<64x1xf32>
    %17 = math.rsqrt %16 : vector<64x1xf32>
    %18 = vector.broadcast %17 : vector<64x1xf32> to vector<64x64xf32>
    %19 = arith.mulf %9, %18 : vector<64x64xf32>
    %20 = vector.broadcast %2 : vector<1x64xf32> to vector<64x64xf32>
    %21 = arith.mulf %19, %20 : vector<64x64xf32>
    %22 = vector.broadcast %3 : vector<1x64xf32> to vector<64x64xf32>
    %23 = arith.addf %21, %22 : vector<64x64xf32>
    %24 = arith.truncf %23 : vector<64x64xf32> to vector<64x64xbf16>
    %c0_9 = arith.constant 0 : index
    %c0_10 = arith.constant 0 : index
    %25 = vector.load %arg6[%c0_9, %c0_10] : memref<64x64xbf16, #tpu.memory_space<vmem>>, vector<64x64xbf16>
    tpu.vector_store %arg6[%c0_9, %c0_10], %24 {strides = array<i32>} : memref<64x64xbf16, #tpu.memory_space<vmem>>, vector<64x64xbf16>,
    %26 = arith.truncf %23 : vector<64x64xf32> to vector<64x64xbf16>
    %c0_11 = arith.constant 0 : index
    %c0_12 = arith.constant 0 : index
    %27 = vector.load %arg4[%c0_11, %c0_12] : memref<64x192xbf16, #tpu.memory_space<vmem>>, vector<64x192xbf16>
    %cst_13 = arith.constant dense<0.000000e+00> : vector<64x192xf32>
    %28 = tpu.matmul %26, %27, %cst_13 {dimension_numbers = #tpu.dot_dimension_numbers<[1], [0], [0], [1], [0, 0, 1, 1], [], []>} : vector<64x64xbf16>, vector<64x192xbf16>, vector<64x192xf32> -> vector<64x192xf32>
    %c0_14 = arith.constant 0 : index
    %c0_15 = arith.constant 0 : index
    %29 = vector.load %arg5[%c0_14, %c0_15] : memref<1x192xf32, #tpu.memory_space<vmem>>, vector<1x192xf32>
    %30 = vector.broadcast %29 : vector<1x192xf32> to vector<64x192xf32>
    %31 = arith.addf %28, %30 : vector<64x192xf32>
    %32 = arith.truncf %31 : vector<64x192xf32> to vector<64x192xbf16>
    %c0_16 = arith.constant 0 : index
    %c0_17 = arith.constant 0 : index
    %33 = vector.load %arg7[%c0_16, %c0_17] : memref<64x192xbf16, #tpu.memory_space<vmem>>, vector<64x192xbf16>
    tpu.vector_store %arg7[%c0_16, %c0_17], %32 {strides = array<i32>} : memref<64x192xbf16, #tpu.memory_space<vmem>>, vector<64x192xbf16>,
    return
  }
  func.func @transform_0(%arg0: i32) -> (i32, i32) {
    %c0_i32 = arith.constant 0 : i32
    %c0_i32_0 = arith.constant 0 : i32
    return %arg0, %c0_i32 : i32, i32
  }
  func.func @transform_1(%arg0: i32) -> (i32, i32) {
    %c0_i32 = arith.constant 0 : i32
    %c0_i32_0 = arith.constant 0 : i32
    %c0_i32_1 = arith.constant 0 : i32
    return %c0_i32, %c0_i32_0 : i32, i32
  }
  func.func @transform_2(%arg0: i32) -> (i32, i32) {
    %c0_i32 = arith.constant 0 : i32
    %c0_i32_0 = arith.constant 0 : i32
    %c0_i32_1 = arith.constant 0 : i32
    return %c0_i32, %c0_i32_0 : i32, i32
  }
  func.func @transform_3(%arg0: i32) -> (i32, i32) {
    %c0_i32 = arith.constant 0 : i32
    %c0_i32_0 = arith.constant 0 : i32
    %c0_i32_1 = arith.constant 0 : i32
    return %c0_i32, %c0_i32_0 : i32, i32
  }
  func.func @transform_4(%arg0: i32) -> (i32, i32) {
    %c0_i32 = arith.constant 0 : i32
    %c0_i32_0 = arith.constant 0 : i32
    %c0_i32_1 = arith.constant 0 : i32
    return %c0_i32, %c0_i32_0 : i32, i32
  }
  func.func @transform_5(%arg0: i32) -> (i32, i32) {
    %c0_i32 = arith.constant 0 : i32
    %c0_i32_0 = arith.constant 0 : i32
    return %arg0, %c0_i32 : i32, i32
  }
  func.func @transform_6(%arg0: i32) -> (i32, i32) {
    %c0_i32 = arith.constant 0 : i32
    %c0_i32_0 = arith.constant 0 : i32
    return %arg0, %c0_i32 : i32, i32
  }
}

module attributes {stable_mosaic.version = 11 : i64} {
  func.func @_ln_mlp_residual_kernel(%arg0: i32, %arg1: memref<64x64xbf16, #tpu.memory_space<vmem>>, %arg2: memref<64x64xbf16, #tpu.memory_space<vmem>>, %arg3: memref<1x64xf32, #tpu.memory_space<vmem>>, %arg4: memref<1x64xf32, #tpu.memory_space<vmem>>, %arg5: memref<64x256xbf16, #tpu.memory_space<vmem>>, %arg6: memref<1x256xf32, #tpu.memory_space<vmem>>, %arg7: memref<256x64xbf16, #tpu.memory_space<vmem>>, %arg8: memref<1x64xf32, #tpu.memory_space<vmem>>, %arg9: memref<64x64xbf16, #tpu.memory_space<vmem>>) attributes {dimension_semantics = [#tpu.dimension_semantics<parallel>], iteration_bounds = array<i64: 2>, scalar_prefetch = 0 : i64, scratch_operands = 0 : i64, tpu.core_type = #tpu.core_type<tc>, window_params = [{transform_indices = @transform_0, window_bounds = array<i64: 64, 64>}, {transform_indices = @transform_1, window_bounds = array<i64: 64, 64>}, {pipeline_mode = #tpu.pipeline_mode<synchronous>, transform_indices = @transform_2, window_bounds = array<i64: 1, 64>}, {pipeline_mode = #tpu.pipeline_mode<synchronous>, transform_indices = @transform_3, window_bounds = array<i64: 1, 64>}, {pipeline_mode = #tpu.pipeline_mode<synchronous>, transform_indices = @transform_4, window_bounds = array<i64: 64, 256>}, {pipeline_mode = #tpu.pipeline_mode<synchronous>, transform_indices = @transform_5, window_bounds = array<i64: 1, 256>}, {pipeline_mode = #tpu.pipeline_mode<synchronous>, transform_indices = @transform_6, window_bounds = array<i64: 256, 64>}, {pipeline_mode = #tpu.pipeline_mode<synchronous>, transform_indices = @transform_7, window_bounds = array<i64: 1, 64>}, {transform_indices = @transform_8, window_bounds = array<i64: 64, 64>}]} {
    %c0 = arith.constant 0 : index
    %c0_0 = arith.constant 0 : index
    %0 = vector.load %arg1[%c0, %c0_0] : memref<64x64xbf16, #tpu.memory_space<vmem>>, vector<64x64xbf16>
    %1 = arith.extf %0 : vector<64x64xbf16> to vector<64x64xf32>
    %c0_1 = arith.constant 0 : index
    %c0_2 = arith.constant 0 : index
    %2 = vector.load %arg3[%c0_1, %c0_2] : memref<1x64xf32, #tpu.memory_space<vmem>>, vector<1x64xf32>
    %c0_3 = arith.constant 0 : index
    %c0_4 = arith.constant 0 : index
    %3 = vector.load %arg4[%c0_3, %c0_4] : memref<1x64xf32, #tpu.memory_space<vmem>>, vector<1x64xf32>
    %cst = arith.constant dense<0.000000e+00> : vector<64xf32>
    %4 = vector.multi_reduction <add>, %1, %cst [1] : vector<64x64xf32> to vector<64xf32>
    %5 = vector.shape_cast %4 : vector<64xf32> to vector<64x1xf32>
    %cst_5 = arith.constant 6.400000e+01 : f32
    %6 = vector.broadcast %cst_5 : f32 to vector<64x1xf32>
    %7 = arith.divf %5, %6 : vector<64x1xf32>
    %8 = vector.broadcast %7 : vector<64x1xf32> to vector<64x64xf32>
    %9 = arith.subf %1, %8 : vector<64x64xf32>
    %10 = arith.mulf %9, %9 : vector<64x64xf32>
    %cst_6 = arith.constant dense<0.000000e+00> : vector<64xf32>
    %11 = vector.multi_reduction <add>, %10, %cst_6 [1] : vector<64x64xf32> to vector<64xf32>
    %12 = vector.shape_cast %11 : vector<64xf32> to vector<64x1xf32>
    %cst_7 = arith.constant 6.400000e+01 : f32
    %13 = vector.broadcast %cst_7 : f32 to vector<64x1xf32>
    %14 = arith.divf %12, %13 : vector<64x1xf32>
    %cst_8 = arith.constant 9.99999974E-6 : f32
    %15 = vector.broadcast %cst_8 : f32 to vector<64x1xf32>
    %16 = arith.addf %14, %15 : vector<64x1xf32>
    %17 = math.rsqrt %16 : vector<64x1xf32>
    %18 = vector.broadcast %17 : vector<64x1xf32> to vector<64x64xf32>
    %19 = arith.mulf %9, %18 : vector<64x64xf32>
    %20 = vector.broadcast %2 : vector<1x64xf32> to vector<64x64xf32>
    %21 = arith.mulf %19, %20 : vector<64x64xf32>
    %22 = vector.broadcast %3 : vector<1x64xf32> to vector<64x64xf32>
    %23 = arith.addf %21, %22 : vector<64x64xf32>
    %24 = arith.truncf %23 : vector<64x64xf32> to vector<64x64xbf16>
    %c0_9 = arith.constant 0 : index
    %c0_10 = arith.constant 0 : index
    %25 = vector.load %arg5[%c0_9, %c0_10] : memref<64x256xbf16, #tpu.memory_space<vmem>>, vector<64x256xbf16>
    %cst_11 = arith.constant dense<0.000000e+00> : vector<64x256xf32>
    %26 = tpu.matmul %24, %25, %cst_11 {dimension_numbers = #tpu.dot_dimension_numbers<[1], [0], [0], [1], [0, 0, 1, 1], [], []>} : vector<64x64xbf16>, vector<64x256xbf16>, vector<64x256xf32> -> vector<64x256xf32>
    %c0_12 = arith.constant 0 : index
    %c0_13 = arith.constant 0 : index
    %27 = vector.load %arg6[%c0_12, %c0_13] : memref<1x256xf32, #tpu.memory_space<vmem>>, vector<1x256xf32>
    %28 = vector.broadcast %27 : vector<1x256xf32> to vector<64x256xf32>
    %29 = arith.addf %26, %28 : vector<64x256xf32>
    %cst_14 = arith.constant 5.000000e-01 : f32
    %30 = vector.broadcast %cst_14 : f32 to vector<64x256xf32>
    %31 = arith.mulf %30, %29 : vector<64x256xf32>
    %cst_15 = arith.constant 0.707106769 : f32
    %32 = vector.broadcast %cst_15 : f32 to vector<64x256xf32>
    %33 = arith.mulf %29, %32 : vector<64x256xf32>
    %34 = math.absf %33 : vector<64x256xf32>
    %cst_16 = arith.constant 0.327591091 : f32
    %35 = vector.broadcast %cst_16 : f32 to vector<64x256xf32>
    %36 = arith.mulf %35, %34 : vector<64x256xf32>
    %cst_17 = arith.constant 1.000000e+00 : f32
    %37 = vector.broadcast %cst_17 : f32 to vector<64x256xf32>
    %38 = arith.addf %37, %36 : vector<64x256xf32>
    %cst_18 = arith.constant 1.000000e+00 : f32
    %39 = vector.broadcast %cst_18 : f32 to vector<64x256xf32>
    %40 = arith.divf %39, %38 : vector<64x256xf32>
    %cst_19 = arith.constant 1.06140542 : f32
    %41 = vector.broadcast %cst_19 : f32 to vector<64x256xf32>
    %42 = arith.mulf %41, %40 : vector<64x256xf32>
    %cst_20 = arith.constant -1.45315206 : f32
    %43 = vector.broadcast %cst_20 : f32 to vector<64x256xf32>
    %44 = arith.addf %42, %43 : vector<64x256xf32>
    %45 = arith.mulf %44, %40 : vector<64x256xf32>
    %cst_21 = arith.constant 1.42141378 : f32
    %46 = vector.broadcast %cst_21 : f32 to vector<64x256xf32>
    %47 = arith.addf %45, %46 : vector<64x256xf32>
    %48 = arith.mulf %47, %40 : vector<64x256xf32>
    %cst_22 = arith.constant -0.284496725 : f32
    %49 = vector.broadcast %cst_22 : f32 to vector<64x256xf32>
    %50 = arith.addf %48, %49 : vector<64x256xf32>
    %51 = arith.mulf %50, %40 : vector<64x256xf32>
    %cst_23 = arith.constant 0.254829586 : f32
    %52 = vector.broadcast %cst_23 : f32 to vector<64x256xf32>
    %53 = arith.addf %51, %52 : vector<64x256xf32>
    %54 = arith.mulf %53, %40 : vector<64x256xf32>
    %cst_24 = arith.constant 0.000000e+00 : f32
    %55 = vector.broadcast %cst_24 : f32 to vector<64x256xf32>
    %56 = arith.subf %55, %34 : vector<64x256xf32>
    %57 = arith.mulf %56, %34 : vector<64x256xf32>
    %58 = math.exp %57 : vector<64x256xf32>
    %59 = arith.mulf %54, %58 : vector<64x256xf32>
    %cst_25 = arith.constant 1.000000e+00 : f32
    %60 = vector.broadcast %cst_25 : f32 to vector<64x256xf32>
    %61 = arith.subf %60, %59 : vector<64x256xf32>
    %cst_26 = arith.constant 0.000000e+00 : f32
    %62 = vector.broadcast %cst_26 : f32 to vector<64x256xf32>
    %63 = arith.cmpf oge, %33, %62 : vector<64x256xf32>
    %cst_27 = arith.constant 0.000000e+00 : f32
    %64 = vector.broadcast %cst_27 : f32 to vector<64x256xf32>
    %65 = arith.subf %64, %61 : vector<64x256xf32>
    %66 = arith.select %63, %61, %65 : vector<64x256xi1>, vector<64x256xf32>
    %cst_28 = arith.constant 1.000000e+00 : f32
    %67 = vector.broadcast %cst_28 : f32 to vector<64x256xf32>
    %68 = arith.addf %67, %66 : vector<64x256xf32>
    %69 = arith.mulf %31, %68 : vector<64x256xf32>
    %70 = arith.truncf %69 : vector<64x256xf32> to vector<64x256xbf16>
    %c0_29 = arith.constant 0 : index
    %c0_30 = arith.constant 0 : index
    %71 = vector.load %arg7[%c0_29, %c0_30] : memref<256x64xbf16, #tpu.memory_space<vmem>>, vector<256x64xbf16>
    %cst_31 = arith.constant dense<0.000000e+00> : vector<64x64xf32>
    %72 = tpu.matmul %70, %71, %cst_31 {dimension_numbers = #tpu.dot_dimension_numbers<[1], [0], [0], [1], [0, 0, 1, 1], [], []>} : vector<64x256xbf16>, vector<256x64xbf16>, vector<64x64xf32> -> vector<64x64xf32>
    %c0_32 = arith.constant 0 : index
    %c0_33 = arith.constant 0 : index
    %73 = vector.load %arg8[%c0_32, %c0_33] : memref<1x64xf32, #tpu.memory_space<vmem>>, vector<1x64xf32>
    %74 = vector.broadcast %73 : vector<1x64xf32> to vector<64x64xf32>
    %75 = arith.addf %72, %74 : vector<64x64xf32>
    %c0_34 = arith.constant 0 : index
    %c0_35 = arith.constant 0 : index
    %76 = vector.load %arg2[%c0_34, %c0_35] : memref<64x64xbf16, #tpu.memory_space<vmem>>, vector<64x64xbf16>
    %77 = arith.extf %76 : vector<64x64xbf16> to vector<64x64xf32>
    %78 = arith.addf %1, %77 : vector<64x64xf32>
    %79 = arith.addf %78, %75 : vector<64x64xf32>
    %80 = arith.truncf %79 : vector<64x64xf32> to vector<64x64xbf16>
    %c0_36 = arith.constant 0 : index
    %c0_37 = arith.constant 0 : index
    %81 = vector.load %arg9[%c0_36, %c0_37] : memref<64x64xbf16, #tpu.memory_space<vmem>>, vector<64x64xbf16>
    tpu.vector_store %arg9[%c0_36, %c0_37], %80 {strides = array<i32>} : memref<64x64xbf16, #tpu.memory_space<vmem>>, vector<64x64xbf16>,
    return
  }
  func.func @transform_0(%arg0: i32) -> (i32, i32) {
    %c0_i32 = arith.constant 0 : i32
    %c0_i32_0 = arith.constant 0 : i32
    return %arg0, %c0_i32 : i32, i32
  }
  func.func @transform_1(%arg0: i32) -> (i32, i32) {
    %c0_i32 = arith.constant 0 : i32
    %c0_i32_0 = arith.constant 0 : i32
    return %arg0, %c0_i32 : i32, i32
  }
  func.func @transform_2(%arg0: i32) -> (i32, i32) {
    %c0_i32 = arith.constant 0 : i32
    %c0_i32_0 = arith.constant 0 : i32
    %c0_i32_1 = arith.constant 0 : i32
    return %c0_i32, %c0_i32_0 : i32, i32
  }
  func.func @transform_3(%arg0: i32) -> (i32, i32) {
    %c0_i32 = arith.constant 0 : i32
    %c0_i32_0 = arith.constant 0 : i32
    %c0_i32_1 = arith.constant 0 : i32
    return %c0_i32, %c0_i32_0 : i32, i32
  }
  func.func @transform_4(%arg0: i32) -> (i32, i32) {
    %c0_i32 = arith.constant 0 : i32
    %c0_i32_0 = arith.constant 0 : i32
    %c0_i32_1 = arith.constant 0 : i32
    return %c0_i32, %c0_i32_0 : i32, i32
  }
  func.func @transform_5(%arg0: i32) -> (i32, i32) {
    %c0_i32 = arith.constant 0 : i32
    %c0_i32_0 = arith.constant 0 : i32
    %c0_i32_1 = arith.constant 0 : i32
    return %c0_i32, %c0_i32_0 : i32, i32
  }
  func.func @transform_6(%arg0: i32) -> (i32, i32) {
    %c0_i32 = arith.constant 0 : i32
    %c0_i32_0 = arith.constant 0 : i32
    %c0_i32_1 = arith.constant 0 : i32
    return %c0_i32, %c0_i32_0 : i32, i32
  }
  func.func @transform_7(%arg0: i32) -> (i32, i32) {
    %c0_i32 = arith.constant 0 : i32
    %c0_i32_0 = arith.constant 0 : i32
    %c0_i32_1 = arith.constant 0 : i32
    return %c0_i32, %c0_i32_0 : i32, i32
  }
  func.func @transform_8(%arg0: i32) -> (i32, i32) {
    %c0_i32 = arith.constant 0 : i32
    %c0_i32_0 = arith.constant 0 : i32
    return %arg0, %c0_i32 : i32, i32
  }
}

module attributes {stable_mosaic.version = 11 : i64} {
  func.func @_linear_residual_kernel(%arg0: i32, %arg1: memref<64x64xbf16, #tpu.memory_space<vmem>>, %arg2: memref<64x64xbf16, #tpu.memory_space<vmem>>, %arg3: memref<1x64xf32, #tpu.memory_space<vmem>>, %arg4: memref<64x64xbf16, #tpu.memory_space<vmem>>, %arg5: memref<64x64xbf16, #tpu.memory_space<vmem>>) attributes {dimension_semantics = [#tpu.dimension_semantics<parallel>], iteration_bounds = array<i64: 2>, scalar_prefetch = 0 : i64, scratch_operands = 0 : i64, tpu.core_type = #tpu.core_type<tc>, window_params = [{transform_indices = @transform_0, window_bounds = array<i64: 64, 64>}, {pipeline_mode = #tpu.pipeline_mode<synchronous>, transform_indices = @transform_1, window_bounds = array<i64: 64, 64>}, {pipeline_mode = #tpu.pipeline_mode<synchronous>, transform_indices = @transform_2, window_bounds = array<i64: 1, 64>}, {transform_indices = @transform_3, window_bounds = array<i64: 64, 64>}, {transform_indices = @transform_4, window_bounds = array<i64: 64, 64>}]} {
    %c0 = arith.constant 0 : index
    %c0_0 = arith.constant 0 : index
    %0 = vector.load %arg1[%c0, %c0_0] : memref<64x64xbf16, #tpu.memory_space<vmem>>, vector<64x64xbf16>
    %c0_1 = arith.constant 0 : index
    %c0_2 = arith.constant 0 : index
    %1 = vector.load %arg2[%c0_1, %c0_2] : memref<64x64xbf16, #tpu.memory_space<vmem>>, vector<64x64xbf16>
    %cst = arith.constant dense<0.000000e+00> : vector<64x64xf32>
    %2 = tpu.matmul %0, %1, %cst {dimension_numbers = #tpu.dot_dimension_numbers<[1], [0], [0], [1], [0, 0, 1, 1], [], []>} : vector<64x64xbf16>, vector<64x64xbf16>, vector<64x64xf32> -> vector<64x64xf32>
    %c0_3 = arith.constant 0 : index
    %c0_4 = arith.constant 0 : index
    %3 = vector.load %arg3[%c0_3, %c0_4] : memref<1x64xf32, #tpu.memory_space<vmem>>, vector<1x64xf32>
    %4 = vector.broadcast %3 : vector<1x64xf32> to vector<64x64xf32>
    %5 = arith.addf %2, %4 : vector<64x64xf32>
    %c0_5 = arith.constant 0 : index
    %c0_6 = arith.constant 0 : index
    %6 = vector.load %arg4[%c0_5, %c0_6] : memref<64x64xbf16, #tpu.memory_space<vmem>>, vector<64x64xbf16>
    %7 = arith.extf %6 : vector<64x64xbf16> to vector<64x64xf32>
    %8 = arith.addf %5, %7 : vector<64x64xf32>
    %9 = arith.truncf %8 : vector<64x64xf32> to vector<64x64xbf16>
    %c0_7 = arith.constant 0 : index
    %c0_8 = arith.constant 0 : index
    %10 = vector.load %arg5[%c0_7, %c0_8] : memref<64x64xbf16, #tpu.memory_space<vmem>>, vector<64x64xbf16>
    tpu.vector_store %arg5[%c0_7, %c0_8], %9 {strides = array<i32>} : memref<64x64xbf16, #tpu.memory_space<vmem>>, vector<64x64xbf16>,
    return
  }
  func.func @transform_0(%arg0: i32) -> (i32, i32) {
    %c0_i32 = arith.constant 0 : i32
    %c0_i32_0 = arith.constant 0 : i32
    return %arg0, %c0_i32 : i32, i32
  }
  func.func @transform_1(%arg0: i32) -> (i32, i32) {
    %c0_i32 = arith.constant 0 : i32
    %c0_i32_0 = arith.constant 0 : i32
    %c0_i32_1 = arith.constant 0 : i32
    return %c0_i32, %c0_i32_0 : i32, i32
  }
  func.func @transform_2(%arg0: i32) -> (i32, i32) {
    %c0_i32 = arith.constant 0 : i32
    %c0_i32_0 = arith.constant 0 : i32
    %c0_i32_1 = arith.constant 0 : i32
    return %c0_i32, %c0_i32_0 : i32, i32
  }
  func.func @transform_3(%arg0: i32) -> (i32, i32) {
    %c0_i32 = arith.constant 0 : i32
    %c0_i32_0 = arith.constant 0 : i32
    return %arg0, %c0_i32 : i32, i32
  }
  func.func @transform_4(%arg0: i32) -> (i32, i32) {
    %c0_i32 = arith.constant 0 : i32
    %c0_i32_0 = arith.constant 0 : i32
    return %arg0, %c0_i32 : i32, i32
  }
}

module attributes {stable_mosaic.version = 11 : i64} {
  func.func @_ln_mlp_residual_kernel(%arg0: i32, %arg1: memref<64x64xbf16, #tpu.memory_space<vmem>>, %arg2: memref<64x64xbf16, #tpu.memory_space<vmem>>, %arg3: memref<1x64xf32, #tpu.memory_space<vmem>>, %arg4: memref<1x64xf32, #tpu.memory_space<vmem>>, %arg5: memref<64x256xbf16, #tpu.memory_space<vmem>>, %arg6: memref<1x256xf32, #tpu.memory_space<vmem>>, %arg7: memref<256x64xbf16, #tpu.memory_space<vmem>>, %arg8: memref<1x64xf32, #tpu.memory_space<vmem>>, %arg9: memref<64x64xbf16, #tpu.memory_space<vmem>>) attributes {dimension_semantics = [#tpu.dimension_semantics<parallel>], iteration_bounds = array<i64: 2>, scalar_prefetch = 0 : i64, scratch_operands = 0 : i64, tpu.core_type = #tpu.core_type<tc>, window_params = [{transform_indices = @transform_0, window_bounds = array<i64: 64, 64>}, {transform_indices = @transform_1, window_bounds = array<i64: 64, 64>}, {pipeline_mode = #tpu.pipeline_mode<synchronous>, transform_indices = @transform_2, window_bounds = array<i64: 1, 64>}, {pipeline_mode = #tpu.pipeline_mode<synchronous>, transform_indices = @transform_3, window_bounds = array<i64: 1, 64>}, {pipeline_mode = #tpu.pipeline_mode<synchronous>, transform_indices = @transform_4, window_bounds = array<i64: 64, 256>}, {pipeline_mode = #tpu.pipeline_mode<synchronous>, transform_indices = @transform_5, window_bounds = array<i64: 1, 256>}, {pipeline_mode = #tpu.pipeline_mode<synchronous>, transform_indices = @transform_6, window_bounds = array<i64: 256, 64>}, {pipeline_mode = #tpu.pipeline_mode<synchronous>, transform_indices = @transform_7, window_bounds = array<i64: 1, 64>}, {transform_indices = @transform_8, window_bounds = array<i64: 64, 64>}]} {
    %c0 = arith.constant 0 : index
    %c0_0 = arith.constant 0 : index
    %0 = vector.load %arg1[%c0, %c0_0] : memref<64x64xbf16, #tpu.memory_space<vmem>>, vector<64x64xbf16>
    %1 = arith.extf %0 : vector<64x64xbf16> to vector<64x64xf32>
    %c0_1 = arith.constant 0 : index
    %c0_2 = arith.constant 0 : index
    %2 = vector.load %arg3[%c0_1, %c0_2] : memref<1x64xf32, #tpu.memory_space<vmem>>, vector<1x64xf32>
    %c0_3 = arith.constant 0 : index
    %c0_4 = arith.constant 0 : index
    %3 = vector.load %arg4[%c0_3, %c0_4] : memref<1x64xf32, #tpu.memory_space<vmem>>, vector<1x64xf32>
    %cst = arith.constant dense<0.000000e+00> : vector<64xf32>
    %4 = vector.multi_reduction <add>, %1, %cst [1] : vector<64x64xf32> to vector<64xf32>
    %5 = vector.shape_cast %4 : vector<64xf32> to vector<64x1xf32>
    %cst_5 = arith.constant 6.400000e+01 : f32
    %6 = vector.broadcast %cst_5 : f32 to vector<64x1xf32>
    %7 = arith.divf %5, %6 : vector<64x1xf32>
    %8 = vector.broadcast %7 : vector<64x1xf32> to vector<64x64xf32>
    %9 = arith.subf %1, %8 : vector<64x64xf32>
    %10 = arith.mulf %9, %9 : vector<64x64xf32>
    %cst_6 = arith.constant dense<0.000000e+00> : vector<64xf32>
    %11 = vector.multi_reduction <add>, %10, %cst_6 [1] : vector<64x64xf32> to vector<64xf32>
    %12 = vector.shape_cast %11 : vector<64xf32> to vector<64x1xf32>
    %cst_7 = arith.constant 6.400000e+01 : f32
    %13 = vector.broadcast %cst_7 : f32 to vector<64x1xf32>
    %14 = arith.divf %12, %13 : vector<64x1xf32>
    %cst_8 = arith.constant 9.99999974E-6 : f32
    %15 = vector.broadcast %cst_8 : f32 to vector<64x1xf32>
    %16 = arith.addf %14, %15 : vector<64x1xf32>
    %17 = math.rsqrt %16 : vector<64x1xf32>
    %18 = vector.broadcast %17 : vector<64x1xf32> to vector<64x64xf32>
    %19 = arith.mulf %9, %18 : vector<64x64xf32>
    %20 = vector.broadcast %2 : vector<1x64xf32> to vector<64x64xf32>
    %21 = arith.mulf %19, %20 : vector<64x64xf32>
    %22 = vector.broadcast %3 : vector<1x64xf32> to vector<64x64xf32>
    %23 = arith.addf %21, %22 : vector<64x64xf32>
    %24 = arith.truncf %23 : vector<64x64xf32> to vector<64x64xbf16>
    %c0_9 = arith.constant 0 : index
    %c0_10 = arith.constant 0 : index
    %25 = vector.load %arg5[%c0_9, %c0_10] : memref<64x256xbf16, #tpu.memory_space<vmem>>, vector<64x256xbf16>
    %cst_11 = arith.constant dense<0.000000e+00> : vector<64x256xf32>
    %26 = tpu.matmul %24, %25, %cst_11 {dimension_numbers = #tpu.dot_dimension_numbers<[1], [0], [0], [1], [0, 0, 1, 1], [], []>} : vector<64x64xbf16>, vector<64x256xbf16>, vector<64x256xf32> -> vector<64x256xf32>
    %c0_12 = arith.constant 0 : index
    %c0_13 = arith.constant 0 : index
    %27 = vector.load %arg6[%c0_12, %c0_13] : memref<1x256xf32, #tpu.memory_space<vmem>>, vector<1x256xf32>
    %28 = vector.broadcast %27 : vector<1x256xf32> to vector<64x256xf32>
    %29 = arith.addf %26, %28 : vector<64x256xf32>
    %cst_14 = arith.constant 5.000000e-01 : f32
    %30 = vector.broadcast %cst_14 : f32 to vector<64x256xf32>
    %31 = arith.mulf %30, %29 : vector<64x256xf32>
    %cst_15 = arith.constant 0.707106769 : f32
    %32 = vector.broadcast %cst_15 : f32 to vector<64x256xf32>
    %33 = arith.mulf %29, %32 : vector<64x256xf32>
    %34 = math.absf %33 : vector<64x256xf32>
    %cst_16 = arith.constant 0.327591091 : f32
    %35 = vector.broadcast %cst_16 : f32 to vector<64x256xf32>
    %36 = arith.mulf %35, %34 : vector<64x256xf32>
    %cst_17 = arith.constant 1.000000e+00 : f32
    %37 = vector.broadcast %cst_17 : f32 to vector<64x256xf32>
    %38 = arith.addf %37, %36 : vector<64x256xf32>
    %cst_18 = arith.constant 1.000000e+00 : f32
    %39 = vector.broadcast %cst_18 : f32 to vector<64x256xf32>
    %40 = arith.divf %39, %38 : vector<64x256xf32>
    %cst_19 = arith.constant 1.06140542 : f32
    %41 = vector.broadcast %cst_19 : f32 to vector<64x256xf32>
    %42 = arith.mulf %41, %40 : vector<64x256xf32>
    %cst_20 = arith.constant -1.45315206 : f32
    %43 = vector.broadcast %cst_20 : f32 to vector<64x256xf32>
    %44 = arith.addf %42, %43 : vector<64x256xf32>
    %45 = arith.mulf %44, %40 : vector<64x256xf32>
    %cst_21 = arith.constant 1.42141378 : f32
    %46 = vector.broadcast %cst_21 : f32 to vector<64x256xf32>
    %47 = arith.addf %45, %46 : vector<64x256xf32>
    %48 = arith.mulf %47, %40 : vector<64x256xf32>
    %cst_22 = arith.constant -0.284496725 : f32
    %49 = vector.broadcast %cst_22 : f32 to vector<64x256xf32>
    %50 = arith.addf %48, %49 : vector<64x256xf32>
    %51 = arith.mulf %50, %40 : vector<64x256xf32>
    %cst_23 = arith.constant 0.254829586 : f32
    %52 = vector.broadcast %cst_23 : f32 to vector<64x256xf32>
    %53 = arith.addf %51, %52 : vector<64x256xf32>
    %54 = arith.mulf %53, %40 : vector<64x256xf32>
    %cst_24 = arith.constant 0.000000e+00 : f32
    %55 = vector.broadcast %cst_24 : f32 to vector<64x256xf32>
    %56 = arith.subf %55, %34 : vector<64x256xf32>
    %57 = arith.mulf %56, %34 : vector<64x256xf32>
    %58 = math.exp %57 : vector<64x256xf32>
    %59 = arith.mulf %54, %58 : vector<64x256xf32>
    %cst_25 = arith.constant 1.000000e+00 : f32
    %60 = vector.broadcast %cst_25 : f32 to vector<64x256xf32>
    %61 = arith.subf %60, %59 : vector<64x256xf32>
    %cst_26 = arith.constant 0.000000e+00 : f32
    %62 = vector.broadcast %cst_26 : f32 to vector<64x256xf32>
    %63 = arith.cmpf oge, %33, %62 : vector<64x256xf32>
    %cst_27 = arith.constant 0.000000e+00 : f32
    %64 = vector.broadcast %cst_27 : f32 to vector<64x256xf32>
    %65 = arith.subf %64, %61 : vector<64x256xf32>
    %66 = arith.select %63, %61, %65 : vector<64x256xi1>, vector<64x256xf32>
    %cst_28 = arith.constant 1.000000e+00 : f32
    %67 = vector.broadcast %cst_28 : f32 to vector<64x256xf32>
    %68 = arith.addf %67, %66 : vector<64x256xf32>
    %69 = arith.mulf %31, %68 : vector<64x256xf32>
    %70 = arith.truncf %69 : vector<64x256xf32> to vector<64x256xbf16>
    %c0_29 = arith.constant 0 : index
    %c0_30 = arith.constant 0 : index
    %71 = vector.load %arg7[%c0_29, %c0_30] : memref<256x64xbf16, #tpu.memory_space<vmem>>, vector<256x64xbf16>
    %cst_31 = arith.constant dense<0.000000e+00> : vector<64x64xf32>
    %72 = tpu.matmul %70, %71, %cst_31 {dimension_numbers = #tpu.dot_dimension_numbers<[1], [0], [0], [1], [0, 0, 1, 1], [], []>} : vector<64x256xbf16>, vector<256x64xbf16>, vector<64x64xf32> -> vector<64x64xf32>
    %c0_32 = arith.constant 0 : index
    %c0_33 = arith.constant 0 : index
    %73 = vector.load %arg8[%c0_32, %c0_33] : memref<1x64xf32, #tpu.memory_space<vmem>>, vector<1x64xf32>
    %74 = vector.broadcast %73 : vector<1x64xf32> to vector<64x64xf32>
    %75 = arith.addf %72, %74 : vector<64x64xf32>
    %c0_34 = arith.constant 0 : index
    %c0_35 = arith.constant 0 : index
    %76 = vector.load %arg2[%c0_34, %c0_35] : memref<64x64xbf16, #tpu.memory_space<vmem>>, vector<64x64xbf16>
    %77 = arith.extf %76 : vector<64x64xbf16> to vector<64x64xf32>
    %78 = arith.addf %1, %77 : vector<64x64xf32>
    %79 = arith.addf %78, %75 : vector<64x64xf32>
    %80 = arith.truncf %79 : vector<64x64xf32> to vector<64x64xbf16>
    %c0_36 = arith.constant 0 : index
    %c0_37 = arith.constant 0 : index
    %81 = vector.load %arg9[%c0_36, %c0_37] : memref<64x64xbf16, #tpu.memory_space<vmem>>, vector<64x64xbf16>
    tpu.vector_store %arg9[%c0_36, %c0_37], %80 {strides = array<i32>} : memref<64x64xbf16, #tpu.memory_space<vmem>>, vector<64x64xbf16>,
    return
  }
  func.func @transform_0(%arg0: i32) -> (i32, i32) {
    %c0_i32 = arith.constant 0 : i32
    %c0_i32_0 = arith.constant 0 : i32
    return %arg0, %c0_i32 : i32, i32
  }
  func.func @transform_1(%arg0: i32) -> (i32, i32) {
    %c0_i32 = arith.constant 0 : i32
    %c0_i32_0 = arith.constant 0 : i32
    return %arg0, %c0_i32 : i32, i32
  }
  func.func @transform_2(%arg0: i32) -> (i32, i32) {
    %c0_i32 = arith.constant 0 : i32
    %c0_i32_0 = arith.constant 0 : i32
    %c0_i32_1 = arith.constant 0 : i32
    return %c0_i32, %c0_i32_0 : i32, i32
  }
  func.func @transform_3(%arg0: i32) -> (i32, i32) {
    %c0_i32 = arith.constant 0 : i32
    %c0_i32_0 = arith.constant 0 : i32
    %c0_i32_1 = arith.constant 0 : i32
    return %c0_i32, %c0_i32_0 : i32, i32
  }
  func.func @transform_4(%arg0: i32) -> (i32, i32) {
    %c0_i32 = arith.constant 0 : i32
    %c0_i32_0 = arith.constant 0 : i32
    %c0_i32_1 = arith.constant 0 : i32
    return %c0_i32, %c0_i32_0 : i32, i32
  }
  func.func @transform_5(%arg0: i32) -> (i32, i32) {
    %c0_i32 = arith.constant 0 : i32
    %c0_i32_0 = arith.constant 0 : i32
    %c0_i32_1 = arith.constant 0 : i32
    return %c0_i32, %c0_i32_0 : i32, i32
  }
  func.func @transform_6(%arg0: i32) -> (i32, i32) {
    %c0_i32 = arith.constant 0 : i32
    %c0_i32_0 = arith.constant 0 : i32
    %c0_i32_1 = arith.constant 0 : i32
    return %c0_i32, %c0_i32_0 : i32, i32
  }
  func.func @transform_7(%arg0: i32) -> (i32, i32) {
    %c0_i32 = arith.constant 0 : i32
    %c0_i32_0 = arith.constant 0 : i32
    %c0_i32_1 = arith.constant 0 : i32
    return %c0_i32, %c0_i32_0 : i32, i32
  }
  func.func @transform_8(%arg0: i32) -> (i32, i32) {
    %c0_i32 = arith.constant 0 : i32
    %c0_i32_0 = arith.constant 0 : i32
    return %arg0, %c0_i32 : i32, i32
  }
}

module attributes {stable_mosaic.version = 11 : i64} {
  func.func @_ln_qkv_kernel(%arg0: i32, %arg1: memref<64x64xbf16, #tpu.memory_space<vmem>>, %arg2: memref<1x64xf32, #tpu.memory_space<vmem>>, %arg3: memref<1x64xf32, #tpu.memory_space<vmem>>, %arg4: memref<64x192xbf16, #tpu.memory_space<vmem>>, %arg5: memref<1x192xf32, #tpu.memory_space<vmem>>, %arg6: memref<64x64xbf16, #tpu.memory_space<vmem>>, %arg7: memref<64x192xbf16, #tpu.memory_space<vmem>>) attributes {dimension_semantics = [#tpu.dimension_semantics<parallel>], iteration_bounds = array<i64: 2>, scalar_prefetch = 0 : i64, scratch_operands = 0 : i64, tpu.core_type = #tpu.core_type<tc>, window_params = [{transform_indices = @transform_0, window_bounds = array<i64: 64, 64>}, {pipeline_mode = #tpu.pipeline_mode<synchronous>, transform_indices = @transform_1, window_bounds = array<i64: 1, 64>}, {pipeline_mode = #tpu.pipeline_mode<synchronous>, transform_indices = @transform_2, window_bounds = array<i64: 1, 64>}, {pipeline_mode = #tpu.pipeline_mode<synchronous>, transform_indices = @transform_3, window_bounds = array<i64: 64, 192>}, {pipeline_mode = #tpu.pipeline_mode<synchronous>, transform_indices = @transform_4, window_bounds = array<i64: 1, 192>}, {transform_indices = @transform_5, window_bounds = array<i64: 64, 64>}, {transform_indices = @transform_6, window_bounds = array<i64: 64, 192>}]} {
    %c0 = arith.constant 0 : index
    %c0_0 = arith.constant 0 : index
    %0 = vector.load %arg1[%c0, %c0_0] : memref<64x64xbf16, #tpu.memory_space<vmem>>, vector<64x64xbf16>
    %1 = arith.extf %0 : vector<64x64xbf16> to vector<64x64xf32>
    %c0_1 = arith.constant 0 : index
    %c0_2 = arith.constant 0 : index
    %2 = vector.load %arg2[%c0_1, %c0_2] : memref<1x64xf32, #tpu.memory_space<vmem>>, vector<1x64xf32>
    %c0_3 = arith.constant 0 : index
    %c0_4 = arith.constant 0 : index
    %3 = vector.load %arg3[%c0_3, %c0_4] : memref<1x64xf32, #tpu.memory_space<vmem>>, vector<1x64xf32>
    %cst = arith.constant dense<0.000000e+00> : vector<64xf32>
    %4 = vector.multi_reduction <add>, %1, %cst [1] : vector<64x64xf32> to vector<64xf32>
    %5 = vector.shape_cast %4 : vector<64xf32> to vector<64x1xf32>
    %cst_5 = arith.constant 6.400000e+01 : f32
    %6 = vector.broadcast %cst_5 : f32 to vector<64x1xf32>
    %7 = arith.divf %5, %6 : vector<64x1xf32>
    %8 = vector.broadcast %7 : vector<64x1xf32> to vector<64x64xf32>
    %9 = arith.subf %1, %8 : vector<64x64xf32>
    %10 = arith.mulf %9, %9 : vector<64x64xf32>
    %cst_6 = arith.constant dense<0.000000e+00> : vector<64xf32>
    %11 = vector.multi_reduction <add>, %10, %cst_6 [1] : vector<64x64xf32> to vector<64xf32>
    %12 = vector.shape_cast %11 : vector<64xf32> to vector<64x1xf32>
    %cst_7 = arith.constant 6.400000e+01 : f32
    %13 = vector.broadcast %cst_7 : f32 to vector<64x1xf32>
    %14 = arith.divf %12, %13 : vector<64x1xf32>
    %cst_8 = arith.constant 9.99999974E-6 : f32
    %15 = vector.broadcast %cst_8 : f32 to vector<64x1xf32>
    %16 = arith.addf %14, %15 : vector<64x1xf32>
    %17 = math.rsqrt %16 : vector<64x1xf32>
    %18 = vector.broadcast %17 : vector<64x1xf32> to vector<64x64xf32>
    %19 = arith.mulf %9, %18 : vector<64x64xf32>
    %20 = vector.broadcast %2 : vector<1x64xf32> to vector<64x64xf32>
    %21 = arith.mulf %19, %20 : vector<64x64xf32>
    %22 = vector.broadcast %3 : vector<1x64xf32> to vector<64x64xf32>
    %23 = arith.addf %21, %22 : vector<64x64xf32>
    %24 = arith.truncf %23 : vector<64x64xf32> to vector<64x64xbf16>
    %c0_9 = arith.constant 0 : index
    %c0_10 = arith.constant 0 : index
    %25 = vector.load %arg6[%c0_9, %c0_10] : memref<64x64xbf16, #tpu.memory_space<vmem>>, vector<64x64xbf16>
    tpu.vector_store %arg6[%c0_9, %c0_10], %24 {strides = array<i32>} : memref<64x64xbf16, #tpu.memory_space<vmem>>, vector<64x64xbf16>,
    %26 = arith.truncf %23 : vector<64x64xf32> to vector<64x64xbf16>
    %c0_11 = arith.constant 0 : index
    %c0_12 = arith.constant 0 : index
    %27 = vector.load %arg4[%c0_11, %c0_12] : memref<64x192xbf16, #tpu.memory_space<vmem>>, vector<64x192xbf16>
    %cst_13 = arith.constant dense<0.000000e+00> : vector<64x192xf32>
    %28 = tpu.matmul %26, %27, %cst_13 {dimension_numbers = #tpu.dot_dimension_numbers<[1], [0], [0], [1], [0, 0, 1, 1], [], []>} : vector<64x64xbf16>, vector<64x192xbf16>, vector<64x192xf32> -> vector<64x192xf32>
    %c0_14 = arith.constant 0 : index
    %c0_15 = arith.constant 0 : index
    %29 = vector.load %arg5[%c0_14, %c0_15] : memref<1x192xf32, #tpu.memory_space<vmem>>, vector<1x192xf32>
    %30 = vector.broadcast %29 : vector<1x192xf32> to vector<64x192xf32>
    %31 = arith.addf %28, %30 : vector<64x192xf32>
    %32 = arith.truncf %31 : vector<64x192xf32> to vector<64x192xbf16>
    %c0_16 = arith.constant 0 : index
    %c0_17 = arith.constant 0 : index
    %33 = vector.load %arg7[%c0_16, %c0_17] : memref<64x192xbf16, #tpu.memory_space<vmem>>, vector<64x192xbf16>
    tpu.vector_store %arg7[%c0_16, %c0_17], %32 {strides = array<i32>} : memref<64x192xbf16, #tpu.memory_space<vmem>>, vector<64x192xbf16>,
    return
  }
  func.func @transform_0(%arg0: i32) -> (i32, i32) {
    %c0_i32 = arith.constant 0 : i32
    %c0_i32_0 = arith.constant 0 : i32
    return %arg0, %c0_i32 : i32, i32
  }
  func.func @transform_1(%arg0: i32) -> (i32, i32) {
    %c0_i32 = arith.constant 0 : i32
    %c0_i32_0 = arith.constant 0 : i32
    %c0_i32_1 = arith.constant 0 : i32
    return %c0_i32, %c0_i32_0 : i32, i32
  }
  func.func @transform_2(%arg0: i32) -> (i32, i32) {
    %c0_i32 = arith.constant 0 : i32
    %c0_i32_0 = arith.constant 0 : i32
    %c0_i32_1 = arith.constant 0 : i32
    return %c0_i32, %c0_i32_0 : i32, i32
  }
  func.func @transform_3(%arg0: i32) -> (i32, i32) {
    %c0_i32 = arith.constant 0 : i32
    %c0_i32_0 = arith.constant 0 : i32
    %c0_i32_1 = arith.constant 0 : i32
    return %c0_i32, %c0_i32_0 : i32, i32
  }
  func.func @transform_4(%arg0: i32) -> (i32, i32) {
    %c0_i32 = arith.constant 0 : i32
    %c0_i32_0 = arith.constant 0 : i32
    %c0_i32_1 = arith.constant 0 : i32
    return %c0_i32, %c0_i32_0 : i32, i32
  }
  func.func @transform_5(%arg0: i32) -> (i32, i32) {
    %c0_i32 = arith.constant 0 : i32
    %c0_i32_0 = arith.constant 0 : i32
    return %arg0, %c0_i32 : i32, i32
  }
  func.func @transform_6(%arg0: i32) -> (i32, i32) {
    %c0_i32 = arith.constant 0 : i32
    %c0_i32_0 = arith.constant 0 : i32
    return %arg0, %c0_i32 : i32, i32
  }
}

module attributes {stable_mosaic.version = 11 : i64} {
  func.func @_linear_ln_kernel(%arg0: i32, %arg1: memref<64x640xbf16, #tpu.memory_space<vmem>>, %arg2: memref<640x64xbf16, #tpu.memory_space<vmem>>, %arg3: memref<1x64xf32, #tpu.memory_space<vmem>>, %arg4: memref<1x64xf32, #tpu.memory_space<vmem>>, %arg5: memref<1x64xf32, #tpu.memory_space<vmem>>, %arg6: memref<64x64xbf16, #tpu.memory_space<vmem>>) attributes {dimension_semantics = [#tpu.dimension_semantics<parallel>], iteration_bounds = array<i64: 2>, scalar_prefetch = 0 : i64, scratch_operands = 0 : i64, tpu.core_type = #tpu.core_type<tc>, window_params = [{transform_indices = @transform_0, window_bounds = array<i64: 64, 640>}, {pipeline_mode = #tpu.pipeline_mode<synchronous>, transform_indices = @transform_1, window_bounds = array<i64: 640, 64>}, {pipeline_mode = #tpu.pipeline_mode<synchronous>, transform_indices = @transform_2, window_bounds = array<i64: 1, 64>}, {pipeline_mode = #tpu.pipeline_mode<synchronous>, transform_indices = @transform_3, window_bounds = array<i64: 1, 64>}, {pipeline_mode = #tpu.pipeline_mode<synchronous>, transform_indices = @transform_4, window_bounds = array<i64: 1, 64>}, {transform_indices = @transform_5, window_bounds = array<i64: 64, 64>}]} {
    %c0 = arith.constant 0 : index
    %c0_0 = arith.constant 0 : index
    %0 = vector.load %arg1[%c0, %c0_0] : memref<64x640xbf16, #tpu.memory_space<vmem>>, vector<64x640xbf16>
    %c0_1 = arith.constant 0 : index
    %c0_2 = arith.constant 0 : index
    %1 = vector.load %arg2[%c0_1, %c0_2] : memref<640x64xbf16, #tpu.memory_space<vmem>>, vector<640x64xbf16>
    %cst = arith.constant dense<0.000000e+00> : vector<64x64xf32>
    %2 = tpu.matmul %0, %1, %cst {dimension_numbers = #tpu.dot_dimension_numbers<[1], [0], [0], [1], [0, 0, 1, 1], [], []>} : vector<64x640xbf16>, vector<640x64xbf16>, vector<64x64xf32> -> vector<64x64xf32>
    %c0_3 = arith.constant 0 : index
    %c0_4 = arith.constant 0 : index
    %3 = vector.load %arg3[%c0_3, %c0_4] : memref<1x64xf32, #tpu.memory_space<vmem>>, vector<1x64xf32>
    %4 = vector.broadcast %3 : vector<1x64xf32> to vector<64x64xf32>
    %5 = arith.addf %2, %4 : vector<64x64xf32>
    %c0_5 = arith.constant 0 : index
    %c0_6 = arith.constant 0 : index
    %6 = vector.load %arg4[%c0_5, %c0_6] : memref<1x64xf32, #tpu.memory_space<vmem>>, vector<1x64xf32>
    %c0_7 = arith.constant 0 : index
    %c0_8 = arith.constant 0 : index
    %7 = vector.load %arg5[%c0_7, %c0_8] : memref<1x64xf32, #tpu.memory_space<vmem>>, vector<1x64xf32>
    %cst_9 = arith.constant dense<0.000000e+00> : vector<64xf32>
    %8 = vector.multi_reduction <add>, %5, %cst_9 [1] : vector<64x64xf32> to vector<64xf32>
    %9 = vector.shape_cast %8 : vector<64xf32> to vector<64x1xf32>
    %cst_10 = arith.constant 6.400000e+01 : f32
    %10 = vector.broadcast %cst_10 : f32 to vector<64x1xf32>
    %11 = arith.divf %9, %10 : vector<64x1xf32>
    %12 = vector.broadcast %11 : vector<64x1xf32> to vector<64x64xf32>
    %13 = arith.subf %5, %12 : vector<64x64xf32>
    %14 = arith.mulf %13, %13 : vector<64x64xf32>
    %cst_11 = arith.constant dense<0.000000e+00> : vector<64xf32>
    %15 = vector.multi_reduction <add>, %14, %cst_11 [1] : vector<64x64xf32> to vector<64xf32>
    %16 = vector.shape_cast %15 : vector<64xf32> to vector<64x1xf32>
    %cst_12 = arith.constant 6.400000e+01 : f32
    %17 = vector.broadcast %cst_12 : f32 to vector<64x1xf32>
    %18 = arith.divf %16, %17 : vector<64x1xf32>
    %cst_13 = arith.constant 9.99999974E-6 : f32
    %19 = vector.broadcast %cst_13 : f32 to vector<64x1xf32>
    %20 = arith.addf %18, %19 : vector<64x1xf32>
    %21 = math.rsqrt %20 : vector<64x1xf32>
    %22 = vector.broadcast %21 : vector<64x1xf32> to vector<64x64xf32>
    %23 = arith.mulf %13, %22 : vector<64x64xf32>
    %24 = vector.broadcast %6 : vector<1x64xf32> to vector<64x64xf32>
    %25 = arith.mulf %23, %24 : vector<64x64xf32>
    %26 = vector.broadcast %7 : vector<1x64xf32> to vector<64x64xf32>
    %27 = arith.addf %25, %26 : vector<64x64xf32>
    %28 = arith.truncf %27 : vector<64x64xf32> to vector<64x64xbf16>
    %c0_14 = arith.constant 0 : index
    %c0_15 = arith.constant 0 : index
    %29 = vector.load %arg6[%c0_14, %c0_15] : memref<64x64xbf16, #tpu.memory_space<vmem>>, vector<64x64xbf16>
    tpu.vector_store %arg6[%c0_14, %c0_15], %28 {strides = array<i32>} : memref<64x64xbf16, #tpu.memory_space<vmem>>, vector<64x64xbf16>,
    return
  }
  func.func @transform_0(%arg0: i32) -> (i32, i32) {
    %c0_i32 = arith.constant 0 : i32
    %c0_i32_0 = arith.constant 0 : i32
    return %arg0, %c0_i32 : i32, i32
  }
  func.func @transform_1(%arg0: i32) -> (i32, i32) {
    %c0_i32 = arith.constant 0 : i32
    %c0_i32_0 = arith.constant 0 : i32
    %c0_i32_1 = arith.constant 0 : i32
    return %c0_i32, %c0_i32_0 : i32, i32
  }
  func.func @transform_2(%arg0: i32) -> (i32, i32) {
    %c0_i32 = arith.constant 0 : i32
    %c0_i32_0 = arith.constant 0 : i32
    %c0_i32_1 = arith.constant 0 : i32
    return %c0_i32, %c0_i32_0 : i32, i32
  }
  func.func @transform_3(%arg0: i32) -> (i32, i32) {
    %c0_i32 = arith.constant 0 : i32
    %c0_i32_0 = arith.constant 0 : i32
    %c0_i32_1 = arith.constant 0 : i32
    return %c0_i32, %c0_i32_0 : i32, i32
  }
  func.func @transform_4(%arg0: i32) -> (i32, i32) {
    %c0_i32 = arith.constant 0 : i32
    %c0_i32_0 = arith.constant 0 : i32
    %c0_i32_1 = arith.constant 0 : i32
    return %c0_i32, %c0_i32_0 : i32, i32
  }
  func.func @transform_5(%arg0: i32) -> (i32, i32) {
    %c0_i32 = arith.constant 0 : i32
    %c0_i32_0 = arith.constant 0 : i32
    return %arg0, %c0_i32 : i32, i32
  }
}

module attributes {stable_mosaic.version = 11 : i64} {
  func.func @_linear_kernel(%arg0: i32, %arg1: memref<512x256xbf16, #tpu.memory_space<vmem>>, %arg2: memref<256x32xbf16, #tpu.memory_space<vmem>>, %arg3: memref<1x32xf32, #tpu.memory_space<vmem>>, %arg4: memref<512x32xf32, #tpu.memory_space<vmem>>) attributes {dimension_semantics = [#tpu.dimension_semantics<parallel>], iteration_bounds = array<i64: 4>, scalar_prefetch = 0 : i64, scratch_operands = 0 : i64, tpu.core_type = #tpu.core_type<tc>, window_params = [{transform_indices = @transform_0, window_bounds = array<i64: 512, 256>}, {pipeline_mode = #tpu.pipeline_mode<synchronous>, transform_indices = @transform_1, window_bounds = array<i64: 256, 32>}, {pipeline_mode = #tpu.pipeline_mode<synchronous>, transform_indices = @transform_2, window_bounds = array<i64: 1, 32>}, {transform_indices = @transform_3, window_bounds = array<i64: 512, 32>}]} {
    %c0 = arith.constant 0 : index
    %c0_0 = arith.constant 0 : index
    %0 = vector.load %arg1[%c0, %c0_0] : memref<512x256xbf16, #tpu.memory_space<vmem>>, vector<512x256xbf16>
    %c0_1 = arith.constant 0 : index
    %c0_2 = arith.constant 0 : index
    %1 = vector.load %arg2[%c0_1, %c0_2] : memref<256x32xbf16, #tpu.memory_space<vmem>>, vector<256x32xbf16>
    %cst = arith.constant dense<0.000000e+00> : vector<512x32xf32>
    %2 = tpu.matmul %0, %1, %cst {dimension_numbers = #tpu.dot_dimension_numbers<[1], [0], [0], [1], [0, 0, 1, 1], [], []>} : vector<512x256xbf16>, vector<256x32xbf16>, vector<512x32xf32> -> vector<512x32xf32>
    %c0_3 = arith.constant 0 : index
    %c0_4 = arith.constant 0 : index
    %3 = vector.load %arg3[%c0_3, %c0_4] : memref<1x32xf32, #tpu.memory_space<vmem>>, vector<1x32xf32>
    %4 = vector.broadcast %3 : vector<1x32xf32> to vector<512x32xf32>
    %5 = arith.addf %2, %4 : vector<512x32xf32>
    %c0_5 = arith.constant 0 : index
    %c0_6 = arith.constant 0 : index
    %6 = vector.load %arg4[%c0_5, %c0_6] : memref<512x32xf32, #tpu.memory_space<vmem>>, vector<512x32xf32>
    tpu.vector_store %arg4[%c0_5, %c0_6], %5 {strides = array<i32>} : memref<512x32xf32, #tpu.memory_space<vmem>>, vector<512x32xf32>,
    return
  }
  func.func @transform_0(%arg0: i32) -> (i32, i32) {
    %c0_i32 = arith.constant 0 : i32
    %c0_i32_0 = arith.constant 0 : i32
    return %arg0, %c0_i32 : i32, i32
  }
  func.func @transform_1(%arg0: i32) -> (i32, i32) {
    %c0_i32 = arith.constant 0 : i32
    %c0_i32_0 = arith.constant 0 : i32
    %c0_i32_1 = arith.constant 0 : i32
    return %c0_i32, %c0_i32_0 : i32, i32
  }
  func.func @transform_2(%arg0: i32) -> (i32, i32) {
    %c0_i32 = arith.constant 0 : i32
    %c0_i32_0 = arith.constant 0 : i32
    %c0_i32_1 = arith.constant 0 : i32
    return %c0_i32, %c0_i32_0 : i32, i32
  }
  func.func @transform_3(%arg0: i32) -> (i32, i32) {
    %c0_i32 = arith.constant 0 : i32
    %c0_i32_0 = arith.constant 0 : i32
    return %arg0, %c0_i32 : i32, i32
  }
}

module attributes {stable_mosaic.version = 11 : i64} {
  func.func @_upsample_proj_kernel(%arg0: i32, %arg1: i32, %arg2: memref<512x64xbf16, #tpu.memory_space<vmem>>, %arg3: memref<1x64x64xbf16, #tpu.memory_space<vmem>>, %arg4: memref<64x32xbf16, #tpu.memory_space<vmem>>, %arg5: memref<1x32xf32, #tpu.memory_space<vmem>>, %arg6: memref<1x512x32xf32, #tpu.memory_space<vmem>>, %arg7: memref<1x512x32xf32, #tpu.memory_space<vmem>>) attributes {dimension_semantics = [#tpu.dimension_semantics<parallel>, #tpu.dimension_semantics<parallel>], iteration_bounds = array<i64: 2, 2>, scalar_prefetch = 0 : i64, scratch_operands = 0 : i64, tpu.core_type = #tpu.core_type<tc>, window_params = [{transform_indices = @transform_0, window_bounds = array<i64: 512, 64>}, {transform_indices = @transform_1, window_bounds = array<i64: 1, 64, 64>}, {pipeline_mode = #tpu.pipeline_mode<synchronous>, transform_indices = @transform_2, window_bounds = array<i64: 64, 32>}, {pipeline_mode = #tpu.pipeline_mode<synchronous>, transform_indices = @transform_3, window_bounds = array<i64: 1, 32>}, {transform_indices = @transform_4, window_bounds = array<i64: 1, 512, 32>}, {transform_indices = @transform_5, window_bounds = array<i64: 1, 512, 32>}]} {
    %c0 = arith.constant 0 : index
    %c0_0 = arith.constant 0 : index
    %0 = vector.load %arg2[%c0, %c0_0] : memref<512x64xbf16, #tpu.memory_space<vmem>>, vector<512x64xbf16>
    %c0_1 = arith.constant 0 : index
    %c0_2 = arith.constant 0 : index
    %c0_3 = arith.constant 0 : index
    %1 = vector.load %arg3[%c0_1, %c0_2, %c0_3] : memref<1x64x64xbf16, #tpu.memory_space<vmem>>, vector<1x64x64xbf16>
    %2 = vector.shape_cast %1 : vector<1x64x64xbf16> to vector<64x64xbf16>
    %cst = arith.constant dense<0.000000e+00> : vector<512x64xf32>
    %3 = tpu.matmul %0, %2, %cst {dimension_numbers = #tpu.dot_dimension_numbers<[1], [0], [0], [1], [0, 0, 1, 1], [], []>} : vector<512x64xbf16>, vector<64x64xbf16>, vector<512x64xf32> -> vector<512x64xf32>
    %4 = arith.truncf %3 : vector<512x64xf32> to vector<512x64xbf16>
    %c0_4 = arith.constant 0 : index
    %c0_5 = arith.constant 0 : index
    %5 = vector.load %arg4[%c0_4, %c0_5] : memref<64x32xbf16, #tpu.memory_space<vmem>>, vector<64x32xbf16>
    %cst_6 = arith.constant dense<0.000000e+00> : vector<512x32xf32>
    %6 = tpu.matmul %4, %5, %cst_6 {dimension_numbers = #tpu.dot_dimension_numbers<[1], [0], [0], [1], [0, 0, 1, 1], [], []>} : vector<512x64xbf16>, vector<64x32xbf16>, vector<512x32xf32> -> vector<512x32xf32>
    %c0_7 = arith.constant 0 : index
    %c0_8 = arith.constant 0 : index
    %7 = vector.load %arg5[%c0_7, %c0_8] : memref<1x32xf32, #tpu.memory_space<vmem>>, vector<1x32xf32>
    %8 = vector.broadcast %7 : vector<1x32xf32> to vector<512x32xf32>
    %9 = arith.addf %6, %8 : vector<512x32xf32>
    %c0_9 = arith.constant 0 : index
    %c0_10 = arith.constant 0 : index
    %c0_11 = arith.constant 0 : index
    %10 = vector.load %arg6[%c0_9, %c0_10, %c0_11] : memref<1x512x32xf32, #tpu.memory_space<vmem>>, vector<1x512x32xf32>
    %11 = vector.shape_cast %10 : vector<1x512x32xf32> to vector<512x32xf32>
    %12 = arith.addf %9, %11 : vector<512x32xf32>
    %c0_12 = arith.constant 0 : index
    %c0_13 = arith.constant 0 : index
    %c0_14 = arith.constant 0 : index
    %13 = vector.load %arg7[%c0_12, %c0_13, %c0_14] : memref<1x512x32xf32, #tpu.memory_space<vmem>>, vector<1x512x32xf32>
    %14 = vector.shape_cast %13 : vector<1x512x32xf32> to vector<512x32xf32>
    %15 = vector.shape_cast %12 : vector<512x32xf32> to vector<1x512x32xf32>
    tpu.vector_store %arg7[%c0_12, %c0_13, %c0_14], %15 {strides = array<i32>} : memref<1x512x32xf32, #tpu.memory_space<vmem>>, vector<1x512x32xf32>,
    return
  }
  func.func @transform_0(%arg0: i32, %arg1: i32) -> (i32, i32) {
    %c0_i32 = arith.constant 0 : i32
    %c0_i32_0 = arith.constant 0 : i32
    return %arg1, %c0_i32 : i32, i32
  }
  func.func @transform_1(%arg0: i32, %arg1: i32) -> (i32, i32, i32) {
    %c0_i32 = arith.constant 0 : i32
    %c0_i32_0 = arith.constant 0 : i32
    %c0_i32_1 = arith.constant 0 : i32
    return %arg0, %c0_i32, %c0_i32_0 : i32, i32, i32
  }
  func.func @transform_2(%arg0: i32, %arg1: i32) -> (i32, i32) {
    %c0_i32 = arith.constant 0 : i32
    %c0_i32_0 = arith.constant 0 : i32
    %c0_i32_1 = arith.constant 0 : i32
    return %c0_i32, %c0_i32_0 : i32, i32
  }
  func.func @transform_3(%arg0: i32, %arg1: i32) -> (i32, i32) {
    %c0_i32 = arith.constant 0 : i32
    %c0_i32_0 = arith.constant 0 : i32
    %c0_i32_1 = arith.constant 0 : i32
    return %c0_i32, %c0_i32_0 : i32, i32
  }
  func.func @transform_4(%arg0: i32, %arg1: i32) -> (i32, i32, i32) {
    %c0_i32 = arith.constant 0 : i32
    %c0_i32_0 = arith.constant 0 : i32
    return %arg0, %arg1, %c0_i32 : i32, i32, i32
  }
  func.func @transform_5(%arg0: i32, %arg1: i32) -> (i32, i32, i32) {
    %c0_i32 = arith.constant 0 : i32
    %c0_i32_0 = arith.constant 0 : i32
    return %arg0, %arg1, %c0_i32 : i32, i32, i32
  }
}

</mosaic_0001>

<llo_original>
// kernel: glse_pallas.21
$region0: #{glse_pallas.21}
  #allocation0 [shape = 'u32[]', space=smem, size = 0x4, offset = 0x4, fixed_abs, tag = 'smem constant byte address 0x4 - core index']
  #allocation1 [shape = 'u32[72,128]{1,0:T(1,128)}', space=vmem, size = 0x9000, scoped, tag = 'internal scratch']
  %s0 = inlined_call_operand.vmem [shape: bf16[128,64], index: 0, kind: input, shape index: {}]
  %s1 = inlined_call_operand.vmem [shape: bf16[64,64], index: 1, kind: input, shape index: {}]
  %s2 = inlined_call_operand.vmem [shape: f32[1,64], index: 2, kind: input, shape index: {}]
  %s3 = inlined_call_operand.vmem [shape: bf16[128,64], index: 3, kind: output, shape index: {}]
  %s4 = sld [smem:[#allocation0]]
  $region45: #{glse_pallas.21} parent=0
    _
  %s6 = ssub.s32 1, %s4
  %s7 = scalar_select 0, %s6, %s4
  loop: start=0, step=1, limit=4
  $region2: #{glse_pallas.21} parent=0 // loop_pre_header
    _
  $region3: #{glse_pallas.21} parent=0 // loop_header
    %s9 = sphi 0, %s13
    %p10 = scmp.ge.s32.totalorder %s9, 4
    %s19 = sphi 0, %s21
    %s22 = sphi 0, %s19
    %s23 = sphi 0, %s22
    %s39 = sphi 0, %s23
    %s43 = sphi 0, %s43
    %s45 = sphi 0, %s43
    %s46 = sphi 0, %s45
    %s60 = sphi 0, %s46
    %s64 = sphi 0, %s64
    %s66 = sphi 0, %s64
    %s67 = sphi 0, %s66
    %s81 = sphi 0, %s67
    %s87 = sphi 0, %s89
    %s90 = sphi 0, %s87
    %s91 = sphi 0, %s90
    %s107 = sphi 0, %s91
  $region4: #{glse_pallas.21} parent=0 // loop_header_branch
    %12 = sbr.rel (%p10) target = $region8
  $region5: #{glse_pallas.21} parent=0 // loop_body
    %s14 = ssub.s32 %s9, 1
    %s15 = ssub.s32 %s9, 2
    %s16 = sadd.s32 %s9, 1
    %s17 = ssub.s32 %s9, %s16
    %p18 = scmp.eq.s32.totalorder %s17, 0
    %s20 = sadd.s32 %s19, 1
    %s21 = scalar_select %p18, %s19, %s20
    %p24 = pneg %p18
    %p25 = scmp.eq.s32.totalorder %s9, 1
    %p26 = por %p24, %p25
    %p27 = scmp.ne.s32.totalorder %s19, %s22
    %p28 = scmp.eq.s32.totalorder %s9, 0
    %p29 = por %p27, %p28
    %p30 = scmp.ne.s32.totalorder %s19, %s22
    %p31 = scmp.eq.s32.totalorder %s14, 1
    %p32 = por %p30, %p31
    %p33 = scmp.ne.s32.totalorder %s22, %s23
    %p34 = scmp.eq.s32.totalorder %s14, 0
    %p35 = por %p33, %p34
    %p36 = scmp.ne.s32.totalorder %s22, %s23
    %p37 = scmp.eq.s32.totalorder %s15, 1
    %p38 = por %p36, %p37
    %p40 = scmp.ne.s32.totalorder %s23, %s39
    %p41 = scmp.eq.s32.totalorder %s15, 0
    %p42 = por %p40, %p41
    %s44 = sadd.s32 %s43, 1
    %p47 = scmp.eq.s32.totalorder %s9, 1
    %p48 = scmp.ne.s32.totalorder %s43, %s45
    %p49 = scmp.eq.s32.totalorder %s9, 0
    %p50 = por %p48, %p49
    %p51 = scmp.ne.s32.totalorder %s43, %s45
    %p52 = scmp.eq.s32.totalorder %s14, 1
    %p53 = por %p51, %p52
    %p54 = scmp.ne.s32.totalorder %s45, %s46
    %p55 = scmp.eq.s32.totalorder %s14, 0
    %p56 = por %p54, %p55
    %p57 = scmp.ne.s32.totalorder %s45, %s46
    %p58 = scmp.eq.s32.totalorder %s15, 1
    %p59 = por %p57, %p58
    %p61 = scmp.ne.s32.totalorder %s46, %s60
    %p62 = scmp.eq.s32.totalorder %s15, 0
    %p63 = por %p61, %p62
    %s65 = sadd.s32 %s64, 1
    %p68 = scmp.eq.s32.totalorder %s9, 1
    %p69 = scmp.ne.s32.totalorder %s64, %s66
    %p70 = scmp.eq.s32.totalorder %s9, 0
    %p71 = por %p69, %p70
    %p72 = scmp.ne.s32.totalorder %s64, %s66
    %p73 = scmp.eq.s32.totalorder %s14, 1
    %p74 = por %p72, %p73
    %p75 = scmp.ne.s32.totalorder %s66, %s67
    %p76 = scmp.eq.s32.totalorder %s14, 0
    %p77 = por %p75, %p76
    %p78 = scmp.ne.s32.totalorder %s66, %s67
    %p79 = scmp.eq.s32.totalorder %s15, 1
    %p80 = por %p78, %p79
    %p82 = scmp.ne.s32.totalorder %s67, %s81
    %p83 = scmp.eq.s32.totalorder %s15, 0
    %p84 = por %p82, %p83
    %s85 = ssub.s32 %s9, %s16
    %p86 = scmp.eq.s32.totalorder %s85, 0
    %s88 = sadd.s32 %s87, 1
    %s89 = scalar_select %p86, %s87, %s88
    %p92 = pneg %p86
    %p93 = scmp.eq.s32.totalorder %s9, 1
    %p94 = por %p92, %p93
    %p95 = scmp.ne.s32.totalorder %s87, %s90
    %p96 = scmp.eq.s32.totalorder %s9, 0
    %p97 = por %p95, %p96
    %p98 = scmp.ne.s32.totalorder %s87, %s90
    %p99 = scmp.eq.s32.totalorder %s14, 1
    %p100 = por %p98, %p99
    %p101 = scmp.ne.s32.totalorder %s90, %s91
    %p102 = scmp.eq.s32.totalorder %s14, 0
    %p103 = por %p101, %p102
    %p104 = scmp.ne.s32.totalorder %s90, %s91
    %p105 = scmp.eq.s32.totalorder %s15, 1
    %p106 = por %p104, %p105
    %p108 = scmp.ne.s32.totalorder %s91, %s107
    %p109 = scmp.eq.s32.totalorder %s15, 0
    %p110 = por %p108, %p109
    %p111 = scmp.le.s32.totalorder 1, %s9
    %p112 = scmp.lt.s32.totalorder %s9, 3
    %p113 = pnand %p111, %p112
    %p114 = pneg %p113
    // Predicated region
    $region9: #{glse_pallas.21} parent=5 // pred_check
      _
    $region10: #{glse_pallas.21} parent=5 // pred_check_branch
      %116 = sbr.rel (%p113) target = $region12
    $region11: #{glse_pallas.21} parent=5 // pred_region
      %s117 = ssub.s32 %s9, 1
      // Predicated region
      $region13: #{glse_pallas.21} parent=11 // pred_check
        %p118 = pneg %p56
      $region14: #{glse_pallas.21} parent=11 // pred_check_branch
        %120 = sbr.rel (%p118) target = $region16
      $region15: #{glse_pallas.21} parent=11 // pred_region
        _
      $region16: #{glse_pallas.21} parent=11 // pred_fallthru
        _
      // Predicated region
      $region17: #{glse_pallas.21} parent=11 // pred_check
        %p121 = pneg %p77
      $region18: #{glse_pallas.21} parent=11 // pred_check_branch
        %123 = sbr.rel (%p121) target = $region20
      $region19: #{glse_pallas.21} parent=11 // pred_region
        _
      $region20: #{glse_pallas.21} parent=11 // pred_fallthru
        _
    $region12: #{glse_pallas.21} parent=5 // pred_fallthru
      _
    %p124 = scmp.lt.s32.totalorder %s9, 2
    // Predicated region
    $region21: #{glse_pallas.21} parent=5 // pred_check
      %p125 = pneg %p124
    $region22: #{glse_pallas.21} parent=5 // pred_check_branch
      %127 = sbr.rel (%p125) target = $region24
    $region23: #{glse_pallas.21} parent=5 // pred_region
      // Predicated region
      $region25: #{glse_pallas.21} parent=23 // pred_check
        %p128 = pneg %p29
      $region26: #{glse_pallas.21} parent=23 // pred_check_branch
        %130 = sbr.rel (%p128) target = $region28
      $region27: #{glse_pallas.21} parent=23 // pred_region
        %s131 = smul.u32 8, %s9
        %p132 = scmp.lt.s32.totalorder %s131, 15
        %s133 = scalar_select %p132, %s131, 15
        %s134 = smul.addr %s133, 4
        %s135 = scalar_lea.vmem %s0, %s134
        %s136 = smul.u32 8, %s9
      $region28: #{glse_pallas.21} parent=23 // pred_fallthru
        _
    $region24: #{glse_pallas.21} parent=5 // pred_fallthru
      _
    %p137 = scmp.le.s32.totalorder 1, %s9
    %p138 = scmp.lt.s32.totalorder %s9, 3
    %p139 = pnand %p137, %p138
    %p140 = pneg %p139
    // Predicated region
    $region29: #{glse_pallas.21} parent=5 // pred_check
      _
    $region30: #{glse_pallas.21} parent=5 // pred_check_branch
      %142 = sbr.rel (%p139) target = $region32
    $region31: #{glse_pallas.21} parent=5 // pred_region
      %s143 = ssub.s32 %s9, 1
      %s144 = smul.u32 8, %s14
      %p145 = scmp.lt.s32.totalorder %s144, 15
      %s146 = scalar_select %p145, %s144, 15
      %s147 = smul.addr %s146, 4
      %s148 = scalar_lea.vmem %s0, %s147
      %p149 = pneg %p35
      %p150 = pneg %p32
      %p151 = pneg %p56
      %p152 = pneg %p53
      %p153 = pneg %p77
      %p154 = pneg %p74
      %p155 = pneg %p103
      %p156 = pneg %p100
      %s157 = smul.u32 8, %s14
      %p158 = scmp.lt.s32.totalorder %s157, 15
      %s159 = scalar_select %p158, %s157, 15
      %s160 = smul.addr %s159, 4
      %s161 = scalar_lea.vmem %s3, %s160
      %s162 = smul.u32 8, %s14
      %p163 = scmp.lt.s32.totalorder %s162, 15
      %s164 = scalar_select %p163, %s162, 15
      %s165 = smul.addr %s164, 4
      %s166 = scalar_lea.vmem %s0, %s165
      %s167 = smul.u32 8, %s14
      %s168 = smul.u32 8, %s14
      %p169 = scmp.lt.s32.totalorder %s168, 15
      %s170 = scalar_select %p169, %s168, 15
      %s171 = smul.addr %s170, 4
      %s172 = scalar_lea.vmem %s3, %s171
      %s173 = smul.u32 8, %s14
      %v175 = vld [vmem:[%s166] sm:$0xf]
      %v176 = vld [vmem:[%s166 + $0x4] sm:$0xf]
      %v177 = vld [vmem:[%s166 + $0x8] sm:$0xf]
      %v178 = vld [vmem:[%s166 + $0xc] sm:$0xf]
      %v179 = vld [vmem:[%s166 + $0x10] sm:$0xf]
      %v180 = vld [vmem:[%s166 + $0x14] sm:$0xf]
      %v181 = vld [vmem:[%s166 + $0x18] sm:$0xf]
      %v182 = vld [vmem:[%s166 + $0x1c] sm:$0xf]
      %v183 = vld [vmem:[%s1] sm:$0xf]
      %v184 = vld [vmem:[%s1 + $0x4] sm:$0xf]
      %v185 = vld [vmem:[%s1 + $0x8] sm:$0xf]
      %v186 = vld [vmem:[%s1 + $0xc] sm:$0xf]
      %v187 = vld [vmem:[%s1 + $0x10] sm:$0xf]
      %v188 = vld [vmem:[%s1 + $0x14] sm:$0xf]
      %v189 = vld [vmem:[%s1 + $0x18] sm:$0xf]
      %v190 = vld [vmem:[%s1 + $0x1c] sm:$0xf]
      %v191 = vld [vmem:[%s2] sm:$0x1]
      %v193 = vperm.slane %v191, 0
      %v203 = vunpack.c.l.b16 %v175
      %v204 = vunpack.c.l.b16 %v176
      %v205 = vunpack.c.l.b16 %v177
      %v206 = vunpack.c.l.b16 %v178
      %v207 = vunpack.c.l.b16 %v179
      %v208 = vunpack.c.l.b16 %v180
      %v209 = vunpack.c.l.b16 %v181
      %v210 = vunpack.c.l.b16 %v182
      %v211 = vpack.c.b16 %v204, %v203
      %v212 = vpack.c.b16 %v206, %v205
      %v213 = vpack.c.b16 %v208, %v207
      %v214 = vpack.c.b16 %v210, %v209
      %v223 = vunpack.c.l.b16 %v183
      %v224 = vunpack.c.l.b16 %v184
      %v225 = vunpack.c.l.b16 %v185
      %v226 = vunpack.c.l.b16 %v186
      %v227 = vunpack.c.l.b16 %v187
      %v228 = vunpack.c.l.b16 %v188
      %v229 = vunpack.c.l.b16 %v189
      %v230 = vunpack.c.l.b16 %v190
      %v231 = vpack.c.b16 %v224, %v223
      %v232 = vpack.c.b16 %v226, %v225
      %v233 = vpack.c.b16 %v228, %v227
      %v234 = vpack.c.b16 %v230, %v229
      %vm239 = vcmask 523264
      %v241 = vsel %vm239, %v211, 0
      %v244 = vsel %vm239, %v212, 0
      %v247 = vsel %vm239, %v213, 0
      %v250 = vsel %vm239, %v214, 0
      %252 = vmatpush.bf16.msra.mxu0 0
      %253 = vmatpush.bf16.msra.mxu0 0
      %254 = vmatpush.bf16.msra.mxu0 0
      %255 = vmatpush.bf16.msra.mxu0 0
      %256 = vmatpush.bf16.msra.mxu0 %v234
      %257 = vmatpush.bf16.msra.mxu0 %v233
      %258 = vmatpush.bf16.msra.mxu0 %v232
      %259 = vmatpush.bf16.msra.mxu0 %v231
      %260 = vmatmul.bf16.gmra.mxu0 %v241
      %v261 = vpop.f32.mrf.mxu0
      %v262 = vadd.f32 %v193, %v261
      %v263 = vpop.f32.mrf.mxu0
      %v264 = vadd.f32 %v193, %v263
      %265 = vmatmul.bf16.gmra.mxu0 %v244
      %v266 = vpop.f32.mrf.mxu0
      %v267 = vadd.f32 %v193, %v266
      %v268 = vpop.f32.mrf.mxu0
      %v269 = vadd.f32 %v193, %v268
      %270 = vmatmul.bf16.gmra.mxu0 %v247
      %v271 = vpop.f32.mrf.mxu0
      %v272 = vadd.f32 %v193, %v271
      %v273 = vpop.f32.mrf.mxu0
      %v274 = vadd.f32 %v193, %v273
      %275 = vmatmul.bf16.gmra.mxu0 %v250
      %v276 = vpop.f32.mrf.mxu0
      %v277 = vadd.f32 %v193, %v276
      %v278 = vpop.f32.mrf.mxu0
      %v279 = vadd.f32 %v193, %v278
      %280 = vdwg.mxu0
      %v281 = vpack.c.bf16 %v262, %v262
      %v282 = vpack.c.bf16 %v264, %v264
      %v283 = vpack.c.bf16 %v267, %v267
      %v284 = vpack.c.bf16 %v269, %v269
      %v285 = vpack.c.bf16 %v272, %v272
      %v286 = vpack.c.bf16 %v274, %v274
      %v287 = vpack.c.bf16 %v277, %v277
      %v288 = vpack.c.bf16 %v279, %v279
      %vm289 = vcmask 519168
      %290 = vst.msk [vmem:[%s172] sm:$0xf] %vm289, %v281
      %291 = vst.msk [vmem:[%s172 + $0x4] sm:$0xf] %vm289, %v282
      %292 = vst.msk [vmem:[%s172 + $0x8] sm:$0xf] %vm289, %v283
      %293 = vst.msk [vmem:[%s172 + $0xc] sm:$0xf] %vm289, %v284
      %294 = vst.msk [vmem:[%s172 + $0x10] sm:$0xf] %vm289, %v285
      %295 = vst.msk [vmem:[%s172 + $0x14] sm:$0xf] %vm289, %v286
      %296 = vst.msk [vmem:[%s172 + $0x18] sm:$0xf] %vm289, %v287
      %297 = vst.msk [vmem:[%s172 + $0x1c] sm:$0xf] %vm289, %v288
      %s298 = smul.u32 8, %s14
      %p299 = scmp.lt.s32.totalorder %s298, 15
      %s300 = scalar_select %p299, %s298, 15
      %s301 = smul.addr %s300, 4
      %s302 = scalar_lea.vmem %s3, %s301
      // Predicated region
      $region33: #{glse_pallas.21} parent=31 // pred_check
        %p303 = pneg %p100
      $region34: #{glse_pallas.21} parent=31 // pred_check_branch
        %305 = sbr.rel (%p303) target = $region36
      $region35: #{glse_pallas.21} parent=31 // pred_region
        %s306 = smul.u32 8, %s14
      $region36: #{glse_pallas.21} parent=31 // pred_fallthru
        _
    $region32: #{glse_pallas.21} parent=5 // pred_fallthru
      _
    %p307 = scmp.le.s32.totalorder 2, %s9
    // Predicated region
    $region37: #{glse_pallas.21} parent=5 // pred_check
      %p308 = pneg %p307
    $region38: #{glse_pallas.21} parent=5 // pred_check_branch
      %310 = sbr.rel (%p308) target = $region40
    $region39: #{glse_pallas.21} parent=5 // pred_region
      %s311 = ssub.s32 %s9, 2
      // Predicated region
      $region41: #{glse_pallas.21} parent=39 // pred_check
        %p312 = pneg %p106
      $region42: #{glse_pallas.21} parent=39 // pred_check_branch
        %314 = sbr.rel (%p312) target = $region44
      $region43: #{glse_pallas.21} parent=39 // pred_region
        %s315 = smul.u32 8, %s15
        %p316 = scmp.lt.s32.totalorder %s315, 15
        %s317 = scalar_select %p316, %s315, 15
        %s318 = smul.addr %s317, 4
        %s319 = scalar_lea.vmem %s3, %s318
      $region44: #{glse_pallas.21} parent=39 // pred_fallthru
        _
    $region40: #{glse_pallas.21} parent=5 // pred_fallthru
      _
  $region6: #{glse_pallas.21} parent=0 // loop_footer
    %s13 = sadd.s32 1, %s9
  $region7: #{glse_pallas.21} parent=0 // loop_footer_branch
    %8 = sbr.rel target = $region3
  $region8: #{glse_pallas.21} parent=0 // loop_exit
    _

// kernel: glse_pallas.22
$region0: #{glse_pallas.22}
  #allocation0 [shape = 'u32[]', space=smem, size = 0x4, offset = 0x4, fixed_abs, tag = 'smem constant byte address 0x4 - core index']
  #allocation1 [shape = 'u32[72,128]{1,0:T(1,128)}', space=vmem, size = 0x9000, scoped, tag = 'internal scratch']
  %s0 = inlined_call_operand.vmem [shape: bf16[128,64], index: 0, kind: input, shape index: {}]
  %s1 = inlined_call_operand.vmem [shape: f32[1,64], index: 1, kind: input, shape index: {}]
  %s2 = inlined_call_operand.vmem [shape: f32[1,64], index: 2, kind: input, shape index: {}]
  %s3 = inlined_call_operand.vmem [shape: bf16[64,192], index: 3, kind: input, shape index: {}]
  %s4 = inlined_call_operand.vmem [shape: f32[1,192], index: 4, kind: input, shape index: {}]
  %s5 = inlined_call_operand.vmem [shape: bf16[128,64], index: 5, kind: output, shape index: {0}]
  %s6 = inlined_call_operand.vmem [shape: bf16[128,192], index: 6, kind: output, shape index: {1}]
  %7 = xla_tuple %s5, %s6
  %s8 = sld [smem:[#allocation0]]
  $region61: #{glse_pallas.22} parent=0
    _
  %s10 = ssub.s32 1, %s8
  %s11 = scalar_select 0, %s10, %s8
  loop: start=0, step=1, limit=4
  $region2: #{glse_pallas.22} parent=0 // loop_pre_header
    _
  $region3: #{glse_pallas.22} parent=0 // loop_header
    %s13 = sphi 0, %s17
    %p14 = scmp.ge.s32.totalorder %s13, 4
    %s23 = sphi 0, %s25
    %s26 = sphi 0, %s23
    %s27 = sphi 0, %s26
    %s43 = sphi 0, %s27
    %s47 = sphi 0, %s47
    %s49 = sphi 0, %s47
    %s50 = sphi 0, %s49
    %s64 = sphi 0, %s50
    %s68 = sphi 0, %s68
    %s70 = sphi 0, %s68
    %s71 = sphi 0, %s70
    %s85 = sphi 0, %s71
    %s89 = sphi 0, %s89
    %s91 = sphi 0, %s89
    %s92 = sphi 0, %s91
    %s106 = sphi 0, %s92
    %s110 = sphi 0, %s110
    %s112 = sphi 0, %s110
    %s113 = sphi 0, %s112
    %s127 = sphi 0, %s113
    %s133 = sphi 0, %s135
    %s136 = sphi 0, %s133
    %s137 = sphi 0, %s136
    %s153 = sphi 0, %s137
    %s159 = sphi 0, %s161
    %s162 = sphi 0, %s159
    %s163 = sphi 0, %s162
    %s179 = sphi 0, %s163
  $region4: #{glse_pallas.22} parent=0 // loop_header_branch
    %16 = sbr.rel (%p14) target = $region8
  $region5: #{glse_pallas.22} parent=0 // loop_body
    %s18 = ssub.s32 %s13, 1
    %s19 = ssub.s32 %s13, 2
    %s20 = sadd.s32 %s13, 1
    %s21 = ssub.s32 %s13, %s20
    %p22 = scmp.eq.s32.totalorder %s21, 0
    %s24 = sadd.s32 %s23, 1
    %s25 = scalar_select %p22, %s23, %s24
    %p28 = pneg %p22
    %p29 = scmp.eq.s32.totalorder %s13, 1
    %p30 = por %p28, %p29
    %p31 = scmp.ne.s32.totalorder %s23, %s26
    %p32 = scmp.eq.s32.totalorder %s13, 0
    %p33 = por %p31, %p32
    %p34 = scmp.ne.s32.totalorder %s23, %s26
    %p35 = scmp.eq.s32.totalorder %s18, 1
    %p36 = por %p34, %p35
    %p37 = scmp.ne.s32.totalorder %s26, %s27
    %p38 = scmp.eq.s32.totalorder %s18, 0
    %p39 = por %p37, %p38
    %p40 = scmp.ne.s32.totalorder %s26, %s27
    %p41 = scmp.eq.s32.totalorder %s19, 1
    %p42 = por %p40, %p41
    %p44 = scmp.ne.s32.totalorder %s27, %s43
    %p45 = scmp.eq.s32.totalorder %s19, 0
    %p46 = por %p44, %p45
    %s48 = sadd.s32 %s47, 1
    %p51 = scmp.eq.s32.totalorder %s13, 1
    %p52 = scmp.ne.s32.totalorder %s47, %s49
    %p53 = scmp.eq.s32.totalorder %s13, 0
    %p54 = por %p52, %p53
    %p55 = scmp.ne.s32.totalorder %s47, %s49
    %p56 = scmp.eq.s32.totalorder %s18, 1
    %p57 = por %p55, %p56
    %p58 = scmp.ne.s32.totalorder %s49, %s50
    %p59 = scmp.eq.s32.totalorder %s18, 0
    %p60 = por %p58, %p59
    %p61 = scmp.ne.s32.totalorder %s49, %s50
    %p62 = scmp.eq.s32.totalorder %s19, 1
    %p63 = por %p61, %p62
    %p65 = scmp.ne.s32.totalorder %s50, %s64
    %p66 = scmp.eq.s32.totalorder %s19, 0
    %p67 = por %p65, %p66
    %s69 = sadd.s32 %s68, 1
    %p72 = scmp.eq.s32.totalorder %s13, 1
    %p73 = scmp.ne.s32.totalorder %s68, %s70
    %p74 = scmp.eq.s32.totalorder %s13, 0
    %p75 = por %p73, %p74
    %p76 = scmp.ne.s32.totalorder %s68, %s70
    %p77 = scmp.eq.s32.totalorder %s18, 1
    %p78 = por %p76, %p77
    %p79 = scmp.ne.s32.totalorder %s70, %s71
    %p80 = scmp.eq.s32.totalorder %s18, 0
    %p81 = por %p79, %p80
    %p82 = scmp.ne.s32.totalorder %s70, %s71
    %p83 = scmp.eq.s32.totalorder %s19, 1
    %p84 = por %p82, %p83
    %p86 = scmp.ne.s32.totalorder %s71, %s85
    %p87 = scmp.eq.s32.totalorder %s19, 0
    %p88 = por %p86, %p87
    %s90 = sadd.s32 %s89, 1
    %p93 = scmp.eq.s32.totalorder %s13, 1
    %p94 = scmp.ne.s32.totalorder %s89, %s91
    %p95 = scmp.eq.s32.totalorder %s13, 0
    %p96 = por %p94, %p95
    %p97 = scmp.ne.s32.totalorder %s89, %s91
    %p98 = scmp.eq.s32.totalorder %s18, 1
    %p99 = por %p97, %p98
    %p100 = scmp.ne.s32.totalorder %s91, %s92
    %p101 = scmp.eq.s32.totalorder %s18, 0
    %p102 = por %p100, %p101
    %p103 = scmp.ne.s32.totalorder %s91, %s92
    %p104 = scmp.eq.s32.totalorder %s19, 1
    %p105 = por %p103, %p104
    %p107 = scmp.ne.s32.totalorder %s92, %s106
    %p108 = scmp.eq.s32.totalorder %s19, 0
    %p109 = por %p107, %p108
    %s111 = sadd.s32 %s110, 1
    %p114 = scmp.eq.s32.totalorder %s13, 1
    %p115 = scmp.ne.s32.totalorder %s110, %s112
    %p116 = scmp.eq.s32.totalorder %s13, 0
    %p117 = por %p115, %p116
    %p118 = scmp.ne.s32.totalorder %s110, %s112
    %p119 = scmp.eq.s32.totalorder %s18, 1
    %p120 = por %p118, %p119
    %p121 = scmp.ne.s32.totalorder %s112, %s113
    %p122 = scmp.eq.s32.totalorder %s18, 0
    %p123 = por %p121, %p122
    %p124 = scmp.ne.s32.totalorder %s112, %s113
    %p125 = scmp.eq.s32.totalorder %s19, 1
    %p126 = por %p124, %p125
    %p128 = scmp.ne.s32.totalorder %s113, %s127
    %p129 = scmp.eq.s32.totalorder %s19, 0
    %p130 = por %p128, %p129
    %s131 = ssub.s32 %s13, %s20
    %p132 = scmp.eq.s32.totalorder %s131, 0
    %s134 = sadd.s32 %s133, 1
    %s135 = scalar_select %p132, %s133, %s134
    %p138 = pneg %p132
    %p139 = scmp.eq.s32.totalorder %s13, 1
    %p140 = por %p138, %p139
    %p141 = scmp.ne.s32.totalorder %s133, %s136
    %p142 = scmp.eq.s32.totalorder %s13, 0
    %p143 = por %p141, %p142
    %p144 = scmp.ne.s32.totalorder %s133, %s136
    %p145 = scmp.eq.s32.totalorder %s18, 1
    %p146 = por %p144, %p145
    %p147 = scmp.ne.s32.totalorder %s136, %s137
    %p148 = scmp.eq.s32.totalorder %s18, 0
    %p149 = por %p147, %p148
    %p150 = scmp.ne.s32.totalorder %s136, %s137
    %p151 = scmp.eq.s32.totalorder %s19, 1
    %p152 = por %p150, %p151
    %p154 = scmp.ne.s32.totalorder %s137, %s153
    %p155 = scmp.eq.s32.totalorder %s19, 0
    %p156 = por %p154, %p155
    %s157 = ssub.s32 %s13, %s20
    %p158 = scmp.eq.s32.totalorder %s157, 0
    %s160 = sadd.s32 %s159, 1
    %s161 = scalar_select %p158, %s159, %s160
    %p164 = pneg %p158
    %p165 = scmp.eq.s32.totalorder %s13, 1
    %p166 = por %p164, %p165
    %p167 = scmp.ne.s32.totalorder %s159, %s162
    %p168 = scmp.eq.s32.totalorder %s13, 0
    %p169 = por %p167, %p168
    %p170 = scmp.ne.s32.totalorder %s159, %s162
    %p171 = scmp.eq.s32.totalorder %s18, 1
    %p172 = por %p170, %p171
    %p173 = scmp.ne.s32.totalorder %s162, %s163
    %p174 = scmp.eq.s32.totalorder %s18, 0
    %p175 = por %p173, %p174
    %p176 = scmp.ne.s32.totalorder %s162, %s163
    %p177 = scmp.eq.s32.totalorder %s19, 1
    %p178 = por %p176, %p177
    %p180 = scmp.ne.s32.totalorder %s163, %s179
    %p181 = scmp.eq.s32.totalorder %s19, 0
    %p182 = por %p180, %p181
    %p183 = scmp.le.s32.totalorder 1, %s13
    %p184 = scmp.lt.s32.totalorder %s13, 3
    %p185 = pnand %p183, %p184
    %p186 = pneg %p185
    // Predicated region
    $region9: #{glse_pallas.22} parent=5 // pred_check
      _
    $region10: #{glse_pallas.22} parent=5 // pred_check_branch
      %188 = sbr.rel (%p185) target = $region12
    $region11: #{glse_pallas.22} parent=5 // pred_region
      %s189 = ssub.s32 %s13, 1
      // Predicated region
      $region13: #{glse_pallas.22} parent=11 // pred_check
        %p190 = pneg %p60
      $region14: #{glse_pallas.22} parent=11 // pred_check_branch
        %192 = sbr.rel (%p190) target = $region16
      $region15: #{glse_pallas.22} parent=11 // pred_region
        _
      $region16: #{glse_pallas.22} parent=11 // pred_fallthru
        _
      // Predicated region
      $region17: #{glse_pallas.22} parent=11 // pred_check
        %p193 = pneg %p81
      $region18: #{glse_pallas.22} parent=11 // pred_check_branch
        %195 = sbr.rel (%p193) target = $region20
      $region19: #{glse_pallas.22} parent=11 // pred_region
        _
      $region20: #{glse_pallas.22} parent=11 // pred_fallthru
        _
      // Predicated region
      $region21: #{glse_pallas.22} parent=11 // pred_check
        %p196 = pneg %p102
      $region22: #{glse_pallas.22} parent=11 // pred_check_branch
        %198 = sbr.rel (%p196) target = $region24
      $region23: #{glse_pallas.22} parent=11 // pred_region
        _
      $region24: #{glse_pallas.22} parent=11 // pred_fallthru
        _
      // Predicated region
      $region25: #{glse_pallas.22} parent=11 // pred_check
        %p199 = pneg %p123
      $region26: #{glse_pallas.22} parent=11 // pred_check_branch
        %201 = sbr.rel (%p199) target = $region28
      $region27: #{glse_pallas.22} parent=11 // pred_region
        _
      $region28: #{glse_pallas.22} parent=11 // pred_fallthru
        _
    $region12: #{glse_pallas.22} parent=5 // pred_fallthru
      _
    %p202 = scmp.lt.s32.totalorder %s13, 2
    // Predicated region
    $region29: #{glse_pallas.22} parent=5 // pred_check
      %p203 = pneg %p202
    $region30: #{glse_pallas.22} parent=5 // pred_check_branch
      %205 = sbr.rel (%p203) target = $region32
    $region31: #{glse_pallas.22} parent=5 // pred_region
      // Predicated region
      $region33: #{glse_pallas.22} parent=31 // pred_check
        %p206 = pneg %p33
      $region34: #{glse_pallas.22} parent=31 // pred_check_branch
        %208 = sbr.rel (%p206) target = $region36
      $region35: #{glse_pallas.22} parent=31 // pred_region
        %s209 = smul.u32 8, %s13
        %p210 = scmp.lt.s32.totalorder %s209, 15
        %s211 = scalar_select %p210, %s209, 15
        %s212 = smul.addr %s211, 4
        %s213 = scalar_lea.vmem %s0, %s212
        %s214 = smul.u32 8, %s13
      $region36: #{glse_pallas.22} parent=31 // pred_fallthru
        _
    $region32: #{glse_pallas.22} parent=5 // pred_fallthru
      _
    %p215 = scmp.le.s32.totalorder 1, %s13
    %p216 = scmp.lt.s32.totalorder %s13, 3
    %p217 = pnand %p215, %p216
    %p218 = pneg %p217
    // Predicated region
    $region37: #{glse_pallas.22} parent=5 // pred_check
      _
    $region38: #{glse_pallas.22} parent=5 // pred_check_branch
      %220 = sbr.rel (%p217) target = $region40
    $region39: #{glse_pallas.22} parent=5 // pred_region
      %s221 = ssub.s32 %s13, 1
      %s222 = smul.u32 8, %s18
      %p223 = scmp.lt.s32.totalorder %s222, 15
      %s224 = scalar_select %p223, %s222, 15
      %s225 = smul.addr %s224, 4
      %s226 = scalar_lea.vmem %s0, %s225
      %p227 = pneg %p39
      %p228 = pneg %p36
      %p229 = pneg %p60
      %p230 = pneg %p57
      %p231 = pneg %p81
      %p232 = pneg %p78
      %p233 = pneg %p102
      %p234 = pneg %p99
      %p235 = pneg %p123
      %p236 = pneg %p120
      %p237 = pneg %p149
      %p238 = pneg %p146
      %s239 = smul.u32 8, %s18
      %p240 = scmp.lt.s32.totalorder %s239, 15
      %s241 = scalar_select %p240, %s239, 15
      %s242 = smul.addr %s241, 4
      %s243 = scalar_lea.vmem %s5, %s242
      %p244 = pneg %p175
      %p245 = pneg %p172
      %s246 = smul.u32 8, %s18
      %p247 = scmp.lt.s32.totalorder %s246, 15
      %s248 = scalar_select %p247, %s246, 15
      %s249 = smul.addr %s248, 2
      %s250 = smul.addr %s249, 4
      %s251 = scalar_lea.vmem %s6, %s250
      %s252 = smul.u32 8, %s18
      %p253 = scmp.lt.s32.totalorder %s252, 15
      %s254 = scalar_select %p253, %s252, 15
      %s255 = smul.addr %s254, 4
      %s256 = scalar_lea.vmem %s0, %s255
      %s257 = smul.u32 8, %s18
      %s258 = smul.u32 8, %s18
      %p259 = scmp.lt.s32.totalorder %s258, 15
      %s260 = scalar_select %p259, %s258, 15
      %s261 = smul.addr %s260, 4
      %s262 = scalar_lea.vmem %s5, %s261
      %s263 = smul.u32 8, %s18
      %s264 = smul.u32 8, %s18
      %p265 = scmp.lt.s32.totalorder %s264, 15
      %s266 = scalar_select %p265, %s264, 15
      %s267 = smul.addr %s266, 2
      %s268 = smul.addr %s267, 4
      %s269 = scalar_lea.vmem %s6, %s268
      %s270 = smul.u32 8, %s18
      %v272 = vld [vmem:[%s256] sm:$0xf]
      %v273 = vld [vmem:[%s256 + $0x4] sm:$0xf]
      %v274 = vld [vmem:[%s256 + $0x8] sm:$0xf]
      %v275 = vld [vmem:[%s256 + $0xc] sm:$0xf]
      %v276 = vld [vmem:[%s256 + $0x10] sm:$0xf]
      %v277 = vld [vmem:[%s256 + $0x14] sm:$0xf]
      %v278 = vld [vmem:[%s256 + $0x18] sm:$0xf]
      %v279 = vld [vmem:[%s256 + $0x1c] sm:$0xf]
      %v280 = vunpack.c.l.bf16 %v272
      %v281 = vunpack.c.l.bf16 %v273
      %v282 = vunpack.c.l.bf16 %v274
      %v283 = vunpack.c.l.bf16 %v275
      %v284 = vunpack.c.l.bf16 %v276
      %v285 = vunpack.c.l.bf16 %v277
      %v286 = vunpack.c.l.bf16 %v278
      %v287 = vunpack.c.l.bf16 %v279
      %v288 = vld [vmem:[%s1] sm:$0x1]
      %v289 = vld [vmem:[%s2] sm:$0x1]
      %vm290 = vcmask 523264
      %v291 = vsel %vm290, %v280, 0.0
      %292 = vadd.xlane.f32.xlu0 %v291
      %v293 = vpop.xlane.xlu0 %292
      %v294 = vsel %vm290, %v281, 0.0
      %295 = vadd.xlane.f32.xlu0 %v294
      %v296 = vpop.xlane.xlu0 %295
      %v297 = vsel %vm290, %v282, 0.0
      %298 = vadd.xlane.f32.xlu0 %v297
      %v299 = vpop.xlane.xlu0 %298
      %v300 = vsel %vm290, %v283, 0.0
      %301 = vadd.xlane.f32.xlu0 %v300
      %v302 = vpop.xlane.xlu0 %301
      %v303 = vsel %vm290, %v284, 0.0
      %304 = vadd.xlane.f32.xlu0 %v303
      %v305 = vpop.xlane.xlu0 %304
      %v306 = vsel %vm290, %v285, 0.0
      %307 = vadd.xlane.f32.xlu0 %v306
      %v308 = vpop.xlane.xlu0 %307
      %v309 = vsel %vm290, %v286, 0.0
      %310 = vadd.xlane.f32.xlu0 %v309
      %v311 = vpop.xlane.xlu0 %310
      %v312 = vsel %vm290, %v287, 0.0
      %313 = vadd.xlane.f32.xlu0 %v312
      %v314 = vpop.xlane.xlu0 %313
      %v315 = vrcp.pop 64.0
      %v316 = vmul.f32 64.0, %v315
      %v317 = vsub.f32 1.0, %v316
      %v318 = vmul.f32 %v315, %v317
      %v319 = vadd.f32 %v315, %v318
      %vm320 = vweird.f32 %v315
      %v321 = vsel %vm320, %v315, %v319
      %v322 = vmul.f32 %v293, %v321
      %v323 = vmul.f32 %v296, %v321
      %v324 = vmul.f32 %v299, %v321
      %v325 = vmul.f32 %v302, %v321
      %v326 = vmul.f32 %v305, %v321
      %v327 = vmul.f32 %v308, %v321
      %v328 = vmul.f32 %v311, %v321
      %v329 = vmul.f32 %v314, %v321
      %v330 = vsub.f32 %v280, %v322
      %v331 = vsub.f32 %v281, %v323
      %v332 = vsub.f32 %v282, %v324
      %v333 = vsub.f32 %v283, %v325
      %v334 = vsub.f32 %v284, %v326
      %v335 = vsub.f32 %v285, %v327
      %v336 = vsub.f32 %v286, %v328
      %v337 = vsub.f32 %v287, %v329
      %v338 = vmul.f32 %v330, %v330
      %v339 = vmul.f32 %v331, %v331
      %v340 = vmul.f32 %v332, %v332
      %v341 = vmul.f32 %v333, %v333
      %v342 = vmul.f32 %v334, %v334
      %v343 = vmul.f32 %v335, %v335
      %v344 = vmul.f32 %v336, %v336
      %v345 = vmul.f32 %v337, %v337
      %v346 = vsel %vm290, %v338, 0.0
      %347 = vadd.xlane.f32.xlu0 %v346
      %v348 = vpop.xlane.xlu0 %347
      %v349 = vsel %vm290, %v339, 0.0
      %350 = vadd.xlane.f32.xlu0 %v349
      %v351 = vpop.xlane.xlu0 %350
      %v352 = vsel %vm290, %v340, 0.0
      %353 = vadd.xlane.f32.xlu0 %v352
      %v354 = vpop.xlane.xlu0 %353
      %v355 = vsel %vm290, %v341, 0.0
      %356 = vadd.xlane.f32.xlu0 %v355
      %v357 = vpop.xlane.xlu0 %356
      %v358 = vsel %vm290, %v342, 0.0
      %359 = vadd.xlane.f32.xlu0 %v358
      %v360 = vpop.xlane.xlu0 %359
      %v361 = vsel %vm290, %v343, 0.0
      %362 = vadd.xlane.f32.xlu0 %v361
      %v363 = vpop.xlane.xlu0 %362
      %v364 = vsel %vm290, %v344, 0.0
      %365 = vadd.xlane.f32.xlu0 %v364
      %v366 = vpop.xlane.xlu0 %365
      %v367 = vsel %vm290, %v345, 0.0
      %368 = vadd.xlane.f32.xlu0 %v367
      %v369 = vpop.xlane.xlu0 %368
      %v370 = vmul.f32 %v348, %v321
      %v371 = vmul.f32 %v351, %v321
      %v372 = vmul.f32 %v354, %v321
      %v373 = vmul.f32 %v357, %v321
      %v374 = vmul.f32 %v360, %v321
      %v375 = vmul.f32 %v363, %v321
      %v376 = vmul.f32 %v366, %v321
      %v377 = vmul.f32 %v369, %v321
      %v378 = vadd.f32 %v370, 1e-05
      %v379 = vadd.f32 %v371, 1e-05
      %v380 = vadd.f32 %v372, 1e-05
      %v381 = vadd.f32 %v373, 1e-05
      %v382 = vadd.f32 %v374, 1e-05
      %v383 = vadd.f32 %v375, 1e-05
      %v384 = vadd.f32 %v376, 1e-05
      %v385 = vadd.f32 %v377, 1e-05
      %v386 = vrsqrt.pop %v378
      %v387 = vmul.f32 %v386, %v378
      %v388 = vmul.f32 %v387, %v386
      %v389 = vmul.f32 0.5, %v388
      %v390 = vsub.f32 1.5, %v389
      %v391 = vmul.f32 %v386, %v390
      %vm392 = vweird.f32 %v378
      %vm393 = vweird.f32 %v386
      %vm394 = vmor %vm392, %vm393
      %v395 = vsel %vm394, %v386, %v391
      %v396 = vrsqrt.pop %v379
      %v397 = vmul.f32 %v396, %v379
      %v398 = vmul.f32 %v397, %v396
      %v399 = vmul.f32 0.5, %v398
      %v400 = vsub.f32 1.5, %v399
      %v401 = vmul.f32 %v396, %v400
      %vm402 = vweird.f32 %v379
      %vm403 = vweird.f32 %v396
      %vm404 = vmor %vm402, %vm403
      %v405 = vsel %vm404, %v396, %v401
      %v406 = vrsqrt.pop %v380
      %v407 = vmul.f32 %v406, %v380
      %v408 = vmul.f32 %v407, %v406
      %v409 = vmul.f32 0.5, %v408
      %v410 = vsub.f32 1.5, %v409
      %v411 = vmul.f32 %v406, %v410
      %vm412 = vweird.f32 %v380
      %vm413 = vweird.f32 %v406
      %vm414 = vmor %vm412, %vm413
      %v415 = vsel %vm414, %v406, %v411
      %v416 = vrsqrt.pop %v381
      %v417 = vmul.f32 %v416, %v381
      %v418 = vmul.f32 %v417, %v416
      %v419 = vmul.f32 0.5, %v418
      %v420 = vsub.f32 1.5, %v419
      %v421 = vmul.f32 %v416, %v420
      %vm422 = vweird.f32 %v381
      %vm423 = vweird.f32 %v416
      %vm424 = vmor %vm422, %vm423
      %v425 = vsel %vm424, %v416, %v421
      %v426 = vrsqrt.pop %v382
      %v427 = vmul.f32 %v426, %v382
      %v428 = vmul.f32 %v427, %v426
      %v429 = vmul.f32 0.5, %v428
      %v430 = vsub.f32 1.5, %v429
      %v431 = vmul.f32 %v426, %v430
      %vm432 = vweird.f32 %v382
      %vm433 = vweird.f32 %v426
      %vm434 = vmor %vm432, %vm433
      %v435 = vsel %vm434, %v426, %v431
      %v436 = vrsqrt.pop %v383
      %v437 = vmul.f32 %v436, %v383
      %v438 = vmul.f32 %v437, %v436
      %v439 = vmul.f32 0.5, %v438
      %v440 = vsub.f32 1.5, %v439
      %v441 = vmul.f32 %v436, %v440
      %vm442 = vweird.f32 %v383
      %vm443 = vweird.f32 %v436
      %vm444 = vmor %vm442, %vm443
      %v445 = vsel %vm444, %v436, %v441
      %v446 = vrsqrt.pop %v384
      %v447 = vmul.f32 %v446, %v384
      %v448 = vmul.f32 %v447, %v446
      %v449 = vmul.f32 0.5, %v448
      %v450 = vsub.f32 1.5, %v449
      %v451 = vmul.f32 %v446, %v450
      %vm452 = vweird.f32 %v384
      %vm453 = vweird.f32 %v446
      %vm454 = vmor %vm452, %vm453
      %v455 = vsel %vm454, %v446, %v451
      %v456 = vrsqrt.pop %v385
      %v457 = vmul.f32 %v456, %v385
      %v458 = vmul.f32 %v457, %v456
      %v459 = vmul.f32 0.5, %v458
      %v460 = vsub.f32 1.5, %v459
      %v461 = vmul.f32 %v456, %v460
      %vm462 = vweird.f32 %v385
      %vm463 = vweird.f32 %v456
      %vm464 = vmor %vm462, %vm463
      %v465 = vsel %vm464, %v456, %v461
      %v466 = vmul.f32 %v330, %v395
      %v467 = vmul.f32 %v331, %v405
      %v468 = vmul.f32 %v332, %v415
      %v469 = vmul.f32 %v333, %v425
      %v470 = vmul.f32 %v334, %v435
      %v471 = vmul.f32 %v335, %v445
      %v472 = vmul.f32 %v336, %v455
      %v473 = vmul.f32 %v337, %v465
      %v475 = vperm.slane %v288, 0
      %v477 = vmul.f32 %v466, %v475
      %v478 = vmul.f32 %v467, %v475
      %v479 = vmul.f32 %v468, %v475
      %v480 = vmul.f32 %v469, %v475
      %v481 = vmul.f32 %v470, %v475
      %v482 = vmul.f32 %v471, %v475
      %v483 = vmul.f32 %v472, %v475
      %v484 = vmul.f32 %v473, %v475
      %v486 = vperm.slane %v289, 0
      %v488 = vadd.f32 %v477, %v486
      %v489 = vadd.f32 %v478, %v486
      %v490 = vadd.f32 %v479, %v486
      %v491 = vadd.f32 %v480, %v486
      %v492 = vadd.f32 %v481, %v486
      %v493 = vadd.f32 %v482, %v486
      %v494 = vadd.f32 %v483, %v486
      %v495 = vadd.f32 %v484, %v486
      %v496 = vpack.c.bf16 %v488, %v488
      %v497 = vpack.c.bf16 %v489, %v489
      %v498 = vpack.c.bf16 %v490, %v490
      %v499 = vpack.c.bf16 %v491, %v491
      %v500 = vpack.c.bf16 %v492, %v492
      %v501 = vpack.c.bf16 %v493, %v493
      %v502 = vpack.c.bf16 %v494, %v494
      %v503 = vpack.c.bf16 %v495, %v495
      %vm504 = vcmask 519168
      %505 = vst.msk [vmem:[%s262] sm:$0xf] %vm504, %v496
      %506 = vst.msk [vmem:[%s262 + $0x4] sm:$0xf] %vm504, %v497
      %507 = vst.msk [vmem:[%s262 + $0x8] sm:$0xf] %vm504, %v498
      %508 = vst.msk [vmem:[%s262 + $0xc] sm:$0xf] %vm504, %v499
      %509 = vst.msk [vmem:[%s262 + $0x10] sm:$0xf] %vm504, %v500
      %510 = vst.msk [vmem:[%s262 + $0x14] sm:$0xf] %vm504, %v501
      %511 = vst.msk [vmem:[%s262 + $0x18] sm:$0xf] %vm504, %v502
      %512 = vst.msk [vmem:[%s262 + $0x1c] sm:$0xf] %vm504, %v503
      %v513 = vld [vmem:[%s3] sm:$0xff]
      %v514 = vld [vmem:[%s3 + $0x8] sm:$0xff]
      %v515 = vld [vmem:[%s3 + $0x10] sm:$0xff]
      %v516 = vld [vmem:[%s3 + $0x18] sm:$0xff]
      %v517 = vld [vmem:[%s3 + $0x20] sm:$0xff]
      %v518 = vld [vmem:[%s3 + $0x28] sm:$0xff]
      %v519 = vld [vmem:[%s3 + $0x30] sm:$0xff]
      %v520 = vld [vmem:[%s3 + $0x38] sm:$0xff]
      %v521 = vld [vmem:[%s4] sm:$0x3]
      %v523 = vperm.slane %v521, 0
      %v524 = vperm.slane %v521, 1
      %v535 = vunpack.c.l.b16 %v496
      %v536 = vunpack.c.l.b16 %v497
      %v537 = vunpack.c.l.b16 %v498
      %v538 = vunpack.c.l.b16 %v499
      %v539 = vunpack.c.l.b16 %v500
      %v540 = vunpack.c.l.b16 %v501
      %v541 = vunpack.c.l.b16 %v502
      %v542 = vunpack.c.l.b16 %v503
      %v543 = vpack.c.b16 %v536, %v535
      %v544 = vpack.c.b16 %v538, %v537
      %v545 = vpack.c.b16 %v540, %v539
      %v546 = vpack.c.b16 %v542, %v541
      %v555 = vunpack.c.l.b16 %v513
      %v556 = vunpack.c.h.b16 %v513
      %v557 = vunpack.c.l.b16 %v514
      %v558 = vunpack.c.h.b16 %v514
      %v559 = vunpack.c.l.b16 %v515
      %v560 = vunpack.c.h.b16 %v515
      %v561 = vunpack.c.l.b16 %v516
      %v562 = vunpack.c.h.b16 %v516
      %v563 = vunpack.c.l.b16 %v517
      %v564 = vunpack.c.h.b16 %v517
      %v565 = vunpack.c.l.b16 %v518
      %v566 = vunpack.c.h.b16 %v518
      %v567 = vunpack.c.l.b16 %v519
      %v568 = vunpack.c.h.b16 %v519
      %v569 = vunpack.c.l.b16 %v520
      %v570 = vunpack.c.h.b16 %v520
      %v571 = vpack.c.b16 %v557, %v555
      %v572 = vpack.c.b16 %v558, %v556
      %v573 = vpack.c.b16 %v561, %v559
      %v574 = vpack.c.b16 %v562, %v560
      %v575 = vpack.c.b16 %v565, %v563
      %v576 = vpack.c.b16 %v566, %v564
      %v577 = vpack.c.b16 %v569, %v567
      %v578 = vpack.c.b16 %v570, %v568
      %v588 = vsel %vm290, %v543, 0
      %v591 = vsel %vm290, %v544, 0
      %v594 = vsel %vm290, %v545, 0
      %v597 = vsel %vm290, %v546, 0
      %599 = vmatpush.bf16.msra.mxu0 0
      %600 = vmatpush.bf16.msra.mxu0 0
      %601 = vmatpush.bf16.msra.mxu0 0
      %602 = vmatpush.bf16.msra.mxu0 0
      %603 = vmatpush.bf16.msra.mxu0 %v577
      %604 = vmatpush.bf16.msra.mxu0 %v575
      %605 = vmatpush.bf16.msra.mxu0 %v573
      %606 = vmatpush.bf16.msra.mxu0 %v571
      %607 = vmatmul.bf16.gmra.mxu0 %v588
      %v608 = vpop.f32.mrf.mxu0
      %v609 = vadd.f32 %v523, %v608
      %v610 = vpop.f32.mrf.mxu0
      %v611 = vadd.f32 %v523, %v610
      %612 = vmatmul.bf16.gmra.mxu0 %v591
      %v613 = vpop.f32.mrf.mxu0
      %v614 = vadd.f32 %v523, %v613
      %v615 = vpop.f32.mrf.mxu0
      %v616 = vadd.f32 %v523, %v615
      %617 = vmatmul.bf16.gmra.mxu0 %v594
      %v618 = vpop.f32.mrf.mxu0
      %v619 = vadd.f32 %v523, %v618
      %v620 = vpop.f32.mrf.mxu0
      %v621 = vadd.f32 %v523, %v620
      %622 = vmatmul.bf16.gmra.mxu0 %v597
      %v623 = vpop.f32.mrf.mxu0
      %v624 = vadd.f32 %v523, %v623
      %v625 = vpop.f32.mrf.mxu0
      %v626 = vadd.f32 %v523, %v625
      %627 = vdwg.mxu0
      %628 = vmatpush.bf16.msra.mxu0 0
      %629 = vmatpush.bf16.msra.mxu0 0
      %630 = vmatpush.bf16.msra.mxu0 0
      %631 = vmatpush.bf16.msra.mxu0 0
      %632 = vmatpush.bf16.msra.mxu0 %v578
      %633 = vmatpush.bf16.msra.mxu0 %v576
      %634 = vmatpush.bf16.msra.mxu0 %v574
      %635 = vmatpush.bf16.msra.mxu0 %v572
      %636 = vmatmul.bf16.gmra.mxu0 %v588
      %v637 = vpop.f32.mrf.mxu0
      %v638 = vadd.f32 %v524, %v637
      %v639 = vpop.f32.mrf.mxu0
      %v640 = vadd.f32 %v524, %v639
      %641 = vmatmul.bf16.gmra.mxu0 %v591
      %v642 = vpop.f32.mrf.mxu0
      %v643 = vadd.f32 %v524, %v642
      %v644 = vpop.f32.mrf.mxu0
      %v645 = vadd.f32 %v524, %v644
      %646 = vmatmul.bf16.gmra.mxu0 %v594
      %v647 = vpop.f32.mrf.mxu0
      %v648 = vadd.f32 %v524, %v647
      %v649 = vpop.f32.mrf.mxu0
      %v650 = vadd.f32 %v524, %v649
      %651 = vmatmul.bf16.gmra.mxu0 %v597
      %v652 = vpop.f32.mrf.mxu0
      %v653 = vadd.f32 %v524, %v652
      %v654 = vpop.f32.mrf.mxu0
      %v655 = vadd.f32 %v524, %v654
      %656 = vdwg.mxu0
      %v657 = vpack.c.bf16 %v638, %v609
      %v658 = vpack.c.bf16 %v640, %v611
      %v659 = vpack.c.bf16 %v643, %v614
      %v660 = vpack.c.bf16 %v645, %v616
      %v661 = vpack.c.bf16 %v648, %v619
      %v662 = vpack.c.bf16 %v650, %v621
      %v663 = vpack.c.bf16 %v653, %v624
      %v664 = vpack.c.bf16 %v655, %v626
      %vm665 = vcmask 1043456
      %vm666 = vcmask 523268
      %vm667 = vmor %vm666, %vm665
      %668 = vst.msk [vmem:[%s269] sm:$0xff] %vm667, %v657
      %669 = vst.msk [vmem:[%s269 + $0x8] sm:$0xff] %vm667, %v658
      %670 = vst.msk [vmem:[%s269 + $0x10] sm:$0xff] %vm667, %v659
      %671 = vst.msk [vmem:[%s269 + $0x18] sm:$0xff] %vm667, %v660
      %672 = vst.msk [vmem:[%s269 + $0x20] sm:$0xff] %vm667, %v661
      %673 = vst.msk [vmem:[%s269 + $0x28] sm:$0xff] %vm667, %v662
      %674 = vst.msk [vmem:[%s269 + $0x30] sm:$0xff] %vm667, %v663
      %675 = vst.msk [vmem:[%s269 + $0x38] sm:$0xff] %vm667, %v664
      %s676 = smul.u32 8, %s18
      %p677 = scmp.lt.s32.totalorder %s676, 15
      %s678 = scalar_select %p677, %s676, 15
      %s679 = smul.addr %s678, 4
      %s680 = scalar_lea.vmem %s5, %s679
      %s681 = smul.u32 8, %s18
      %p682 = scmp.lt.s32.totalorder %s681, 15
      %s683 = scalar_select %p682, %s681, 15
      %s684 = smul.addr %s683, 2
      %s685 = smul.addr %s684, 4
      %s686 = scalar_lea.vmem %s6, %s685
      // Predicated region
      $region41: #{glse_pallas.22} parent=39 // pred_check
        %p687 = pneg %p146
      $region42: #{glse_pallas.22} parent=39 // pred_check_branch
        %689 = sbr.rel (%p687) target = $region44
      $region43: #{glse_pallas.22} parent=39 // pred_region
        %s690 = smul.u32 8, %s18
      $region44: #{glse_pallas.22} parent=39 // pred_fallthru
        _
      // Predicated region
      $region45: #{glse_pallas.22} parent=39 // pred_check
        %p691 = pneg %p172
      $region46: #{glse_pallas.22} parent=39 // pred_check_branch
        %693 = sbr.rel (%p691) target = $region48
      $region47: #{glse_pallas.22} parent=39 // pred_region
        %s694 = smul.u32 8, %s18
      $region48: #{glse_pallas.22} parent=39 // pred_fallthru
        _
    $region40: #{glse_pallas.22} parent=5 // pred_fallthru
      _
    %p695 = scmp.le.s32.totalorder 2, %s13
    // Predicated region
    $region49: #{glse_pallas.22} parent=5 // pred_check
      %p696 = pneg %p695
    $region50: #{glse_pallas.22} parent=5 // pred_check_branch
      %698 = sbr.rel (%p696) target = $region52
    $region51: #{glse_pallas.22} parent=5 // pred_region
      %s699 = ssub.s32 %s13, 2
      // Predicated region
      $region53: #{glse_pallas.22} parent=51 // pred_check
        %p700 = pneg %p152
      $region54: #{glse_pallas.22} parent=51 // pred_check_branch
        %702 = sbr.rel (%p700) target = $region56
      $region55: #{glse_pallas.22} parent=51 // pred_region
        %s703 = smul.u32 8, %s19
        %p704 = scmp.lt.s32.totalorder %s703, 15
        %s705 = scalar_select %p704, %s703, 15
        %s706 = smul.addr %s705, 4
        %s707 = scalar_lea.vmem %s5, %s706
      $region56: #{glse_pallas.22} parent=51 // pred_fallthru
        _
      // Predicated region
      $region57: #{glse_pallas.22} parent=51 // pred_check
        %p708 = pneg %p178
      $region58: #{glse_pallas.22} parent=51 // pred_check_branch
        %710 = sbr.rel (%p708) target = $region60
      $region59: #{glse_pallas.22} parent=51 // pred_region
        %s711 = smul.u32 8, %s19
        %p712 = scmp.lt.s32.totalorder %s711, 15
        %s713 = scalar_select %p712, %s711, 15
        %s714 = smul.addr %s713, 2
        %s715 = smul.addr %s714, 4
        %s716 = scalar_lea.vmem %s6, %s715
      $region60: #{glse_pallas.22} parent=51 // pred_fallthru
        _
    $region52: #{glse_pallas.22} parent=5 // pred_fallthru
      _
  $region6: #{glse_pallas.22} parent=0 // loop_footer
    %s17 = sadd.s32 1, %s13
  $region7: #{glse_pallas.22} parent=0 // loop_footer_branch
    %12 = sbr.rel target = $region3
  $region8: #{glse_pallas.22} parent=0 // loop_exit
    _

// kernel: glse_pallas.23
$region0: #{glse_pallas.23}
  #allocation0 [shape = 'u32[]', space=smem, size = 0x4, offset = 0x4, fixed_abs, tag = 'smem constant byte address 0x4 - core index']
  #allocation1 [shape = 'u32[72,128]{1,0:T(1,128)}', space=vmem, size = 0x9000, scoped, tag = 'internal scratch']
  %s0 = inlined_call_operand.vmem [shape: bf16[2,64,192], index: 0, kind: input, shape index: {}]
  %s1 = inlined_call_operand.vmem [shape: bf16[2,64,64], index: 1, kind: output, shape index: {}]
  %s2 = sld [smem:[#allocation0]]
  $region37: #{glse_pallas.23} parent=0
    _
  %s4 = ssub.s32 1, %s2
  %s5 = scalar_select 0, %s4, %s2
  loop: start=0, step=1, limit=4
  $region2: #{glse_pallas.23} parent=0 // loop_pre_header
    _
  $region3: #{glse_pallas.23} parent=0 // loop_header
    %s7 = sphi 0, %s11
    %p8 = scmp.ge.s32.totalorder %s7, 4
    %s17 = sphi 0, %s19
    %s20 = sphi 0, %s17
    %s21 = sphi 0, %s20
    %s37 = sphi 0, %s21
    %s43 = sphi 0, %s45
    %s46 = sphi 0, %s43
    %s47 = sphi 0, %s46
    %s63 = sphi 0, %s47
  $region4: #{glse_pallas.23} parent=0 // loop_header_branch
    %10 = sbr.rel (%p8) target = $region8
  $region5: #{glse_pallas.23} parent=0 // loop_body
    %s12 = ssub.s32 %s7, 1
    %s13 = ssub.s32 %s7, 2
    %s14 = sadd.s32 %s7, 1
    %s15 = ssub.s32 %s7, %s14
    %p16 = scmp.eq.s32.totalorder %s15, 0
    %s18 = sadd.s32 %s17, 1
    %s19 = scalar_select %p16, %s17, %s18
    %p22 = pneg %p16
    %p23 = scmp.eq.s32.totalorder %s7, 1
    %p24 = por %p22, %p23
    %p25 = scmp.ne.s32.totalorder %s17, %s20
    %p26 = scmp.eq.s32.totalorder %s7, 0
    %p27 = por %p25, %p26
    %p28 = scmp.ne.s32.totalorder %s17, %s20
    %p29 = scmp.eq.s32.totalorder %s12, 1
    %p30 = por %p28, %p29
    %p31 = scmp.ne.s32.totalorder %s20, %s21
    %p32 = scmp.eq.s32.totalorder %s12, 0
    %p33 = por %p31, %p32
    %p34 = scmp.ne.s32.totalorder %s20, %s21
    %p35 = scmp.eq.s32.totalorder %s13, 1
    %p36 = por %p34, %p35
    %p38 = scmp.ne.s32.totalorder %s21, %s37
    %p39 = scmp.eq.s32.totalorder %s13, 0
    %p40 = por %p38, %p39
    %s41 = ssub.s32 %s7, %s14
    %p42 = scmp.eq.s32.totalorder %s41, 0
    %s44 = sadd.s32 %s43, 1
    %s45 = scalar_select %p42, %s43, %s44
    %p48 = pneg %p42
    %p49 = scmp.eq.s32.totalorder %s7, 1
    %p50 = por %p48, %p49
    %p51 = scmp.ne.s32.totalorder %s43, %s46
    %p52 = scmp.eq.s32.totalorder %s7, 0
    %p53 = por %p51, %p52
    %p54 = scmp.ne.s32.totalorder %s43, %s46
    %p55 = scmp.eq.s32.totalorder %s12, 1
    %p56 = por %p54, %p55
    %p57 = scmp.ne.s32.totalorder %s46, %s47
    %p58 = scmp.eq.s32.totalorder %s12, 0
    %p59 = por %p57, %p58
    %p60 = scmp.ne.s32.totalorder %s46, %s47
    %p61 = scmp.eq.s32.totalorder %s13, 1
    %p62 = por %p60, %p61
    %p64 = scmp.ne.s32.totalorder %s47, %s63
    %p65 = scmp.eq.s32.totalorder %s13, 0
    %p66 = por %p64, %p65
    %p67 = scmp.le.s32.totalorder 1, %s7
    %p68 = scmp.lt.s32.totalorder %s7, 3
    %p69 = pnand %p67, %p68
    %p70 = pneg %p69
    // Predicated region
    $region9: #{glse_pallas.23} parent=5 // pred_check
      _
    $region10: #{glse_pallas.23} parent=5 // pred_check_branch
      %72 = sbr.rel (%p69) target = $region12
    $region11: #{glse_pallas.23} parent=5 // pred_region
      %s73 = ssub.s32 %s7, 1
    $region12: #{glse_pallas.23} parent=5 // pred_fallthru
      _
    %p74 = scmp.lt.s32.totalorder %s7, 2
    // Predicated region
    $region13: #{glse_pallas.23} parent=5 // pred_check
      %p75 = pneg %p74
    $region14: #{glse_pallas.23} parent=5 // pred_check_branch
      %77 = sbr.rel (%p75) target = $region16
    $region15: #{glse_pallas.23} parent=5 // pred_region
      // Predicated region
      $region17: #{glse_pallas.23} parent=15 // pred_check
        %p78 = pneg %p27
      $region18: #{glse_pallas.23} parent=15 // pred_check_branch
        %80 = sbr.rel (%p78) target = $region20
      $region19: #{glse_pallas.23} parent=15 // pred_region
        %p81 = scmp.lt.s32.totalorder %s7, 1
        %s82 = scalar_select %p81, %s7, 1
        %s83 = smul.addr %s82, 16
        %s84 = smul.addr %s83, 4
        %s85 = scalar_lea.vmem %s0, %s84
      $region20: #{glse_pallas.23} parent=15 // pred_fallthru
        _
    $region16: #{glse_pallas.23} parent=5 // pred_fallthru
      _
    %p86 = scmp.le.s32.totalorder 1, %s7
    %p87 = scmp.lt.s32.totalorder %s7, 3
    %p88 = pnand %p86, %p87
    %p89 = pneg %p88
    // Predicated region
    $region21: #{glse_pallas.23} parent=5 // pred_check
      _
    $region22: #{glse_pallas.23} parent=5 // pred_check_branch
      %91 = sbr.rel (%p88) target = $region24
    $region23: #{glse_pallas.23} parent=5 // pred_region
      %s92 = ssub.s32 %s7, 1
      %p93 = scmp.lt.s32.totalorder %s12, 1
      %s94 = scalar_select %p93, %s12, 1
      %s95 = smul.addr %s94, 16
      %s96 = smul.addr %s95, 4
      %s97 = scalar_lea.vmem %s0, %s96
      %p98 = pneg %p33
      %p99 = pneg %p30
      %p100 = pneg %p59
      %p101 = pneg %p56
      %p102 = scmp.lt.s32.totalorder %s12, 1
      %s103 = scalar_select %p102, %s12, 1
      %s104 = smul.addr %s103, 8
      %s105 = smul.addr %s104, 4
      %s106 = scalar_lea.vmem %s1, %s105
      %p107 = scmp.lt.s32.totalorder %s12, 1
      %s108 = scalar_select %p107, %s12, 1
      %s109 = smul.addr %s108, 16
      %s110 = smul.addr %s109, 4
      %s111 = scalar_lea.vmem %s0, %s110
      %p112 = scmp.lt.s32.totalorder %s12, 1
      %s113 = scalar_select %p112, %s12, 1
      %s114 = smul.addr %s113, 8
      %s115 = smul.addr %s114, 4
      %s116 = scalar_lea.vmem %s1, %s115
      %v118 = vld [vmem:[%s111] sm:$0xff]
      %v119 = vld [vmem:[%s111 + $0x8] sm:$0xff]
      %v120 = vld [vmem:[%s111 + $0x10] sm:$0xff]
      %v121 = vld [vmem:[%s111 + $0x18] sm:$0xff]
      %v122 = vld [vmem:[%s111 + $0x20] sm:$0xff]
      %v123 = vld [vmem:[%s111 + $0x28] sm:$0xff]
      %v124 = vld [vmem:[%s111 + $0x30] sm:$0xff]
      %v125 = vld [vmem:[%s111 + $0x38] sm:$0xff]
      %v134 = vunpack.c.l.b16 %v118
      %v135 = vunpack.c.l.b16 %v119
      %v136 = vunpack.c.l.b16 %v120
      %v137 = vunpack.c.l.b16 %v121
      %v138 = vunpack.c.l.b16 %v122
      %v139 = vunpack.c.l.b16 %v123
      %v140 = vunpack.c.l.b16 %v124
      %v141 = vunpack.c.l.b16 %v125
      %v142 = vpack.c.b16 %v135, %v134
      %v143 = vpack.c.b16 %v137, %v136
      %v144 = vpack.c.b16 %v139, %v138
      %v145 = vpack.c.b16 %v141, %v140
      %146 = vrot.lane.b32.xlu0 %v142, 64
      %v147 = vpop.permute.xlu0 %146
      %148 = vrot.lane.b32.xlu0 %v143, 64
      %v149 = vpop.permute.xlu0 %148
      %150 = vrot.lane.b32.xlu0 %v144, 64
      %v151 = vpop.permute.xlu0 %150
      %152 = vrot.lane.b32.xlu0 %v145, 64
      %v153 = vpop.permute.xlu0 %152
      %vm154 = vcmask 130048
      %v156 = vsel %vm154, %v142, 0
      %v159 = vsel %vm154, %v143, 0
      %v162 = vsel %vm154, %v144, 0
      %v165 = vsel %vm154, %v145, 0
      %v168 = vsel %vm154, %v147, 0
      %v171 = vsel %vm154, %v149, 0
      %v174 = vsel %vm154, %v151, 0
      %v177 = vsel %vm154, %v153, 0
      %179 = vmatpush.bf16.xpose.msra.mxu0 0
      %180 = vmatpush.bf16.xpose.msra.mxu0 0
      %181 = vmatpush.bf16.xpose.msra.mxu0 0
      %182 = vmatpush.bf16.xpose.msra.mxu0 0
      %183 = vmatpush.bf16.xpose.msra.mxu0 %v177
      %184 = vmatpush.bf16.xpose.msra.mxu0 %v174
      %185 = vmatpush.bf16.xpose.msra.mxu0 %v171
      %186 = vmatpush.bf16.xpose.msra.mxu0 %v168
      %187 = vmatmul.bf16.gmra.mxu0 %v156
      %v188 = vpop.f32.mrf.mxu0
      %v189 = vadd.f32 0.0, %v188
      %v190 = vpop.f32.mrf.mxu0
      %v191 = vadd.f32 0.0, %v190
      %192 = vmatmul.bf16.gmra.mxu0 %v159
      %v193 = vpop.f32.mrf.mxu0
      %v194 = vadd.f32 0.0, %v193
      %v195 = vpop.f32.mrf.mxu0
      %v196 = vadd.f32 0.0, %v195
      %197 = vmatmul.bf16.gmra.mxu0 %v162
      %v198 = vpop.f32.mrf.mxu0
      %v199 = vadd.f32 0.0, %v198
      %v200 = vpop.f32.mrf.mxu0
      %v201 = vadd.f32 0.0, %v200
      %202 = vmatmul.bf16.gmra.mxu0 %v165
      %v203 = vpop.f32.mrf.mxu0
      %v204 = vadd.f32 0.0, %v203
      %v205 = vpop.f32.mrf.mxu0
      %v206 = vadd.f32 0.0, %v205
      %207 = vdwg.mxu0
      %v208 = vmul.f32 %v189, 0.25
      %v209 = vmul.f32 %v191, 0.25
      %v210 = vmul.f32 %v194, 0.25
      %v211 = vmul.f32 %v196, 0.25
      %v212 = vmul.f32 %v199, 0.25
      %v213 = vmul.f32 %v201, 0.25
      %v214 = vmul.f32 %v204, 0.25
      %v215 = vmul.f32 %v206, 0.25
      %vm216 = vcmask 523264
      %v217 = vsel %vm216, %v208, -inf
      %218 = vmax.xlane.f32.xlu0 %v217
      %v219 = vpop.xlane.xlu0 %218
      %v220 = vsel %vm216, %v209, -inf
      %221 = vmax.xlane.f32.xlu0 %v220
      %v222 = vpop.xlane.xlu0 %221
      %v223 = vsel %vm216, %v210, -inf
      %224 = vmax.xlane.f32.xlu0 %v223
      %v225 = vpop.xlane.xlu0 %224
      %v226 = vsel %vm216, %v211, -inf
      %227 = vmax.xlane.f32.xlu0 %v226
      %v228 = vpop.xlane.xlu0 %227
      %v229 = vsel %vm216, %v212, -inf
      %230 = vmax.xlane.f32.xlu0 %v229
      %v231 = vpop.xlane.xlu0 %230
      %v232 = vsel %vm216, %v213, -inf
      %233 = vmax.xlane.f32.xlu0 %v232
      %v234 = vpop.xlane.xlu0 %233
      %v235 = vsel %vm216, %v214, -inf
      %236 = vmax.xlane.f32.xlu0 %v235
      %v237 = vpop.xlane.xlu0 %236
      %v238 = vsel %vm216, %v215, -inf
      %239 = vmax.xlane.f32.xlu0 %v238
      %v240 = vpop.xlane.xlu0 %239
      %v241 = vsub.f32 %v208, %v219
      %v242 = vsub.f32 %v209, %v222
      %v243 = vsub.f32 %v210, %v225
      %v244 = vsub.f32 %v211, %v228
      %v245 = vsub.f32 %v212, %v231
      %v246 = vsub.f32 %v213, %v234
      %v247 = vsub.f32 %v214, %v237
      %v248 = vsub.f32 %v215, %v240
      %v249 = vmul.f32 %v241, 1.442695
      %v250 = vpow.pop %v249
      %v251 = vmul.f32 %v242, 1.442695
      %v252 = vpow.pop %v251
      %v253 = vmul.f32 %v243, 1.442695
      %v254 = vpow.pop %v253
      %v255 = vmul.f32 %v244, 1.442695
      %v256 = vpow.pop %v255
      %v257 = vmul.f32 %v245, 1.442695
      %v258 = vpow.pop %v257
      %v259 = vmul.f32 %v246, 1.442695
      %v260 = vpow.pop %v259
      %v261 = vmul.f32 %v247, 1.442695
      %v262 = vpow.pop %v261
      %v263 = vmul.f32 %v248, 1.442695
      %v264 = vpow.pop %v263
      %v265 = vsel %vm216, %v250, 0.0
      %266 = vadd.xlane.f32.xlu0 %v265
      %v267 = vpop.xlane.xlu0 %266
      %v268 = vsel %vm216, %v252, 0.0
      %269 = vadd.xlane.f32.xlu0 %v268
      %v270 = vpop.xlane.xlu0 %269
      %v271 = vsel %vm216, %v254, 0.0
      %272 = vadd.xlane.f32.xlu0 %v271
      %v273 = vpop.xlane.xlu0 %272
      %v274 = vsel %vm216, %v256, 0.0
      %275 = vadd.xlane.f32.xlu0 %v274
      %v276 = vpop.xlane.xlu0 %275
      %v277 = vsel %vm216, %v258, 0.0
      %278 = vadd.xlane.f32.xlu0 %v277
      %v279 = vpop.xlane.xlu0 %278
      %v280 = vsel %vm216, %v260, 0.0
      %281 = vadd.xlane.f32.xlu0 %v280
      %v282 = vpop.xlane.xlu0 %281
      %v283 = vsel %vm216, %v262, 0.0
      %284 = vadd.xlane.f32.xlu0 %v283
      %v285 = vpop.xlane.xlu0 %284
      %v286 = vsel %vm216, %v264, 0.0
      %287 = vadd.xlane.f32.xlu0 %v286
      %v288 = vpop.xlane.xlu0 %287
      %v289 = vrcp.pop %v267
      %v290 = vrcp.pop %v270
      %v291 = vrcp.pop %v273
      %v292 = vrcp.pop %v276
      %v293 = vrcp.pop %v279
      %v294 = vrcp.pop %v282
      %v295 = vrcp.pop %v285
      %v296 = vrcp.pop %v288
      %v297 = vpack.c.bf16 %v252, %v250
      %v298 = vpack.c.bf16 %v256, %v254
      %v299 = vpack.c.bf16 %v260, %v258
      %v300 = vpack.c.bf16 %v264, %v262
      %v301 = vunpack.c.h.b16 %v118
      %v302 = vunpack.c.h.b16 %v119
      %v303 = vunpack.c.h.b16 %v120
      %v304 = vunpack.c.h.b16 %v121
      %v305 = vunpack.c.h.b16 %v122
      %v306 = vunpack.c.h.b16 %v123
      %v307 = vunpack.c.h.b16 %v124
      %v308 = vunpack.c.h.b16 %v125
      %v309 = vpack.c.b16 %v302, %v301
      %v310 = vpack.c.b16 %v304, %v303
      %v311 = vpack.c.b16 %v306, %v305
      %v312 = vpack.c.b16 %v308, %v307
      %v318 = vsel %vm216, %v297, 0
      %v321 = vsel %vm216, %v298, 0
      %v324 = vsel %vm216, %v299, 0
      %v327 = vsel %vm216, %v300, 0
      %329 = vmatpush.bf16.msra.mxu0 0
      %330 = vmatpush.bf16.msra.mxu0 0
      %331 = vmatpush.bf16.msra.mxu0 0
      %332 = vmatpush.bf16.msra.mxu0 0
      %333 = vmatpush.bf16.msra.mxu0 %v312
      %334 = vmatpush.bf16.msra.mxu0 %v311
      %335 = vmatpush.bf16.msra.mxu0 %v310
      %336 = vmatpush.bf16.msra.mxu0 %v309
      %337 = vmatmul.bf16.gmra.mxu0 %v318
      %v338 = vpop.f32.mrf.mxu0
      %v339 = vadd.f32 0.0, %v338
      %v340 = vpop.f32.mrf.mxu0
      %v341 = vadd.f32 0.0, %v340
      %342 = vmatmul.bf16.gmra.mxu0 %v321
      %v343 = vpop.f32.mrf.mxu0
      %v344 = vadd.f32 0.0, %v343
      %v345 = vpop.f32.mrf.mxu0
      %v346 = vadd.f32 0.0, %v345
      %347 = vmatmul.bf16.gmra.mxu0 %v324
      %v348 = vpop.f32.mrf.mxu0
      %v349 = vadd.f32 0.0, %v348
      %v350 = vpop.f32.mrf.mxu0
      %v351 = vadd.f32 0.0, %v350
      %352 = vmatmul.bf16.gmra.mxu0 %v327
      %v353 = vpop.f32.mrf.mxu0
      %v354 = vadd.f32 0.0, %v353
      %v355 = vpop.f32.mrf.mxu0
      %v356 = vadd.f32 0.0, %v355
      %357 = vdwg.mxu0
      %v358 = vmul.f32 %v339, %v289
      %v359 = vmul.f32 %v341, %v290
      %v360 = vmul.f32 %v344, %v291
      %v361 = vmul.f32 %v346, %v292
      %v362 = vmul.f32 %v349, %v293
      %v363 = vmul.f32 %v351, %v294
      %v364 = vmul.f32 %v354, %v295
      %v365 = vmul.f32 %v356, %v296
      %366 = vrot.lane.b32.xlu0 %v142, 112
      %v367 = vpop.permute.xlu0 %366
      %368 = vrot.lane.b32.xlu0 %v143, 112
      %v369 = vpop.permute.xlu0 %368
      %370 = vrot.lane.b32.xlu0 %v144, 112
      %v371 = vpop.permute.xlu0 %370
      %372 = vrot.lane.b32.xlu0 %v145, 112
      %v373 = vpop.permute.xlu0 %372
      %374 = vrot.lane.b32.xlu0 %v142, 48
      %v375 = vpop.permute.xlu0 %374
      %376 = vrot.lane.b32.xlu0 %v143, 48
      %v377 = vpop.permute.xlu0 %376
      %378 = vrot.lane.b32.xlu0 %v144, 48
      %v379 = vpop.permute.xlu0 %378
      %380 = vrot.lane.b32.xlu0 %v145, 48
      %v381 = vpop.permute.xlu0 %380
      %v383 = vsel %vm154, %v367, 0
      %v386 = vsel %vm154, %v369, 0
      %v389 = vsel %vm154, %v371, 0
      %v392 = vsel %vm154, %v373, 0
      %v395 = vsel %vm154, %v375, 0
      %v398 = vsel %vm154, %v377, 0
      %v401 = vsel %vm154, %v379, 0
      %v404 = vsel %vm154, %v381, 0
      %406 = vmatpush.bf16.xpose.msra.mxu0 0
      %407 = vmatpush.bf16.xpose.msra.mxu0 0
      %408 = vmatpush.bf16.xpose.msra.mxu0 0
      %409 = vmatpush.bf16.xpose.msra.mxu0 0
      %410 = vmatpush.bf16.xpose.msra.mxu0 %v404
      %411 = vmatpush.bf16.xpose.msra.mxu0 %v401
      %412 = vmatpush.bf16.xpose.msra.mxu0 %v398
      %413 = vmatpush.bf16.xpose.msra.mxu0 %v395
      %414 = vmatmul.bf16.gmra.mxu0 %v383
      %v415 = vpop.f32.mrf.mxu0
      %v416 = vadd.f32 0.0, %v415
      %v417 = vpop.f32.mrf.mxu0
      %v418 = vadd.f32 0.0, %v417
      %419 = vmatmul.bf16.gmra.mxu0 %v386
      %v420 = vpop.f32.mrf.mxu0
      %v421 = vadd.f32 0.0, %v420
      %v422 = vpop.f32.mrf.mxu0
      %v423 = vadd.f32 0.0, %v422
      %424 = vmatmul.bf16.gmra.mxu0 %v389
      %v425 = vpop.f32.mrf.mxu0
      %v426 = vadd.f32 0.0, %v425
      %v427 = vpop.f32.mrf.mxu0
      %v428 = vadd.f32 0.0, %v427
      %429 = vmatmul.bf16.gmra.mxu0 %v392
      %v430 = vpop.f32.mrf.mxu0
      %v431 = vadd.f32 0.0, %v430
      %v432 = vpop.f32.mrf.mxu0
      %v433 = vadd.f32 0.0, %v432
      %434 = vdwg.mxu0
      %v435 = vmul.f32 %v416, 0.25
      %v436 = vmul.f32 %v418, 0.25
      %v437 = vmul.f32 %v421, 0.25
      %v438 = vmul.f32 %v423, 0.25
      %v439 = vmul.f32 %v426, 0.25
      %v440 = vmul.f32 %v428, 0.25
      %v441 = vmul.f32 %v431, 0.25
      %v442 = vmul.f32 %v433, 0.25
      %v443 = vsel %vm216, %v435, -inf
      %444 = vmax.xlane.f32.xlu0 %v443
      %v445 = vpop.xlane.xlu0 %444
      %v446 = vsel %vm216, %v436, -inf
      %447 = vmax.xlane.f32.xlu0 %v446
      %v448 = vpop.xlane.xlu0 %447
      %v449 = vsel %vm216, %v437, -inf
      %450 = vmax.xlane.f32.xlu0 %v449
      %v451 = vpop.xlane.xlu0 %450
      %v452 = vsel %vm216, %v438, -inf
      %453 = vmax.xlane.f32.xlu0 %v452
      %v454 = vpop.xlane.xlu0 %453
      %v455 = vsel %vm216, %v439, -inf
      %456 = vmax.xlane.f32.xlu0 %v455
      %v457 = vpop.xlane.xlu0 %456
      %v458 = vsel %vm216, %v440, -inf
      %459 = vmax.xlane.f32.xlu0 %v458
      %v460 = vpop.xlane.xlu0 %459
      %v461 = vsel %vm216, %v441, -inf
      %462 = vmax.xlane.f32.xlu0 %v461
      %v463 = vpop.xlane.xlu0 %462
      %v464 = vsel %vm216, %v442, -inf
      %465 = vmax.xlane.f32.xlu0 %v464
      %v466 = vpop.xlane.xlu0 %465
      %v467 = vsub.f32 %v435, %v445
      %v468 = vsub.f32 %v436, %v448
      %v469 = vsub.f32 %v437, %v451
      %v470 = vsub.f32 %v438, %v454
      %v471 = vsub.f32 %v439, %v457
      %v472 = vsub.f32 %v440, %v460
      %v473 = vsub.f32 %v441, %v463
      %v474 = vsub.f32 %v442, %v466
      %v475 = vmul.f32 %v467, 1.442695
      %v476 = vpow.pop %v475
      %v477 = vmul.f32 %v468, 1.442695
      %v478 = vpow.pop %v477
      %v479 = vmul.f32 %v469, 1.442695
      %v480 = vpow.pop %v479
      %v481 = vmul.f32 %v470, 1.442695
      %v482 = vpow.pop %v481
      %v483 = vmul.f32 %v471, 1.442695
      %v484 = vpow.pop %v483
      %v485 = vmul.f32 %v472, 1.442695
      %v486 = vpow.pop %v485
      %v487 = vmul.f32 %v473, 1.442695
      %v488 = vpow.pop %v487
      %v489 = vmul.f32 %v474, 1.442695
      %v490 = vpow.pop %v489
      %v491 = vsel %vm216, %v476, 0.0
      %492 = vadd.xlane.f32.xlu0 %v491
      %v493 = vpop.xlane.xlu0 %492
      %v494 = vsel %vm216, %v478, 0.0
      %495 = vadd.xlane.f32.xlu0 %v494
      %v496 = vpop.xlane.xlu0 %495
      %v497 = vsel %vm216, %v480, 0.0
      %498 = vadd.xlane.f32.xlu0 %v497
      %v499 = vpop.xlane.xlu0 %498
      %v500 = vsel %vm216, %v482, 0.0
      %501 = vadd.xlane.f32.xlu0 %v500
      %v502 = vpop.xlane.xlu0 %501
      %v503 = vsel %vm216, %v484, 0.0
      %504 = vadd.xlane.f32.xlu0 %v503
      %v505 = vpop.xlane.xlu0 %504
      %v506 = vsel %vm216, %v486, 0.0
      %507 = vadd.xlane.f32.xlu0 %v506
      %v508 = vpop.xlane.xlu0 %507
      %v509 = vsel %vm216, %v488, 0.0
      %510 = vadd.xlane.f32.xlu0 %v509
      %v511 = vpop.xlane.xlu0 %510
      %v512 = vsel %vm216, %v490, 0.0
      %513 = vadd.xlane.f32.xlu0 %v512
      %v514 = vpop.xlane.xlu0 %513
      %v515 = vrcp.pop %v493
      %v516 = vrcp.pop %v496
      %v517 = vrcp.pop %v499
      %v518 = vrcp.pop %v502
      %v519 = vrcp.pop %v505
      %v520 = vrcp.pop %v508
      %v521 = vrcp.pop %v511
      %v522 = vrcp.pop %v514
      %v523 = vpack.c.bf16 %v478, %v476
      %v524 = vpack.c.bf16 %v482, %v480
      %v525 = vpack.c.bf16 %v486, %v484
      %v526 = vpack.c.bf16 %v490, %v488
      %527 = vrot.lane.b32.xlu0 %v309, 112
      %v528 = vpop.permute.xlu0 %527
      %529 = vrot.lane.b32.xlu0 %v310, 112
      %v530 = vpop.permute.xlu0 %529
      %531 = vrot.lane.b32.xlu0 %v311, 112
      %v532 = vpop.permute.xlu0 %531
      %533 = vrot.lane.b32.xlu0 %v312, 112
      %v534 = vpop.permute.xlu0 %533
      %v540 = vsel %vm216, %v523, 0
      %v543 = vsel %vm216, %v524, 0
      %v546 = vsel %vm216, %v525, 0
      %v549 = vsel %vm216, %v526, 0
      %551 = vmatpush.bf16.msra.mxu0 0
      %552 = vmatpush.bf16.msra.mxu0 0
      %553 = vmatpush.bf16.msra.mxu0 0
      %554 = vmatpush.bf16.msra.mxu0 0
      %555 = vmatpush.bf16.msra.mxu0 %v534
      %556 = vmatpush.bf16.msra.mxu0 %v532
      %557 = vmatpush.bf16.msra.mxu0 %v530
      %558 = vmatpush.bf16.msra.mxu0 %v528
      %559 = vmatmul.bf16.gmra.mxu0 %v540
      %v560 = vpop.f32.mrf.mxu0
      %v561 = vadd.f32 0.0, %v560
      %v562 = vpop.f32.mrf.mxu0
      %v563 = vadd.f32 0.0, %v562
      %564 = vmatmul.bf16.gmra.mxu0 %v543
      %v565 = vpop.f32.mrf.mxu0
      %v566 = vadd.f32 0.0, %v565
      %v567 = vpop.f32.mrf.mxu0
      %v568 = vadd.f32 0.0, %v567
      %569 = vmatmul.bf16.gmra.mxu0 %v546
      %v570 = vpop.f32.mrf.mxu0
      %v571 = vadd.f32 0.0, %v570
      %v572 = vpop.f32.mrf.mxu0
      %v573 = vadd.f32 0.0, %v572
      %574 = vmatmul.bf16.gmra.mxu0 %v549
      %v575 = vpop.f32.mrf.mxu0
      %v576 = vadd.f32 0.0, %v575
      %v577 = vpop.f32.mrf.mxu0
      %v578 = vadd.f32 0.0, %v577
      %579 = vdwg.mxu0
      %v580 = vmul.f32 %v561, %v515
      %v581 = vmul.f32 %v563, %v516
      %v582 = vmul.f32 %v566, %v517
      %v583 = vmul.f32 %v568, %v518
      %v584 = vmul.f32 %v571, %v519
      %v585 = vmul.f32 %v573, %v520
      %v586 = vmul.f32 %v576, %v521
      %v587 = vmul.f32 %v578, %v522
      %588 = vrot.lane.b32.xlu0 %v142, 96
      %v589 = vpop.permute.xlu0 %588
      %590 = vrot.lane.b32.xlu0 %v143, 96
      %v591 = vpop.permute.xlu0 %590
      %592 = vrot.lane.b32.xlu0 %v144, 96
      %v593 = vpop.permute.xlu0 %592
      %594 = vrot.lane.b32.xlu0 %v145, 96
      %v595 = vpop.permute.xlu0 %594
      %596 = vrot.lane.b32.xlu0 %v142, 32
      %v597 = vpop.permute.xlu0 %596
      %598 = vrot.lane.b32.xlu0 %v143, 32
      %v599 = vpop.permute.xlu0 %598
      %600 = vrot.lane.b32.xlu0 %v144, 32
      %v601 = vpop.permute.xlu0 %600
      %602 = vrot.lane.b32.xlu0 %v145, 32
      %v603 = vpop.permute.xlu0 %602
      %v605 = vsel %vm154, %v589, 0
      %v608 = vsel %vm154, %v591, 0
      %v611 = vsel %vm154, %v593, 0
      %v614 = vsel %vm154, %v595, 0
      %v617 = vsel %vm154, %v597, 0
      %v620 = vsel %vm154, %v599, 0
      %v623 = vsel %vm154, %v601, 0
      %v626 = vsel %vm154, %v603, 0
      %628 = vmatpush.bf16.xpose.msra.mxu0 0
      %629 = vmatpush.bf16.xpose.msra.mxu0 0
      %630 = vmatpush.bf16.xpose.msra.mxu0 0
      %631 = vmatpush.bf16.xpose.msra.mxu0 0
      %632 = vmatpush.bf16.xpose.msra.mxu0 %v626
      %633 = vmatpush.bf16.xpose.msra.mxu0 %v623
      %634 = vmatpush.bf16.xpose.msra.mxu0 %v620
      %635 = vmatpush.bf16.xpose.msra.mxu0 %v617
      %636 = vmatmul.bf16.gmra.mxu0 %v605
      %v637 = vpop.f32.mrf.mxu0
      %v638 = vadd.f32 0.0, %v637
      %v639 = vpop.f32.mrf.mxu0
      %v640 = vadd.f32 0.0, %v639
      %641 = vmatmul.bf16.gmra.mxu0 %v608
      %v642 = vpop.f32.mrf.mxu0
      %v643 = vadd.f32 0.0, %v642
      %v644 = vpop.f32.mrf.mxu0
      %v645 = vadd.f32 0.0, %v644
      %646 = vmatmul.bf16.gmra.mxu0 %v611
      %v647 = vpop.f32.mrf.mxu0
      %v648 = vadd.f32 0.0, %v647
      %v649 = vpop.f32.mrf.mxu0
      %v650 = vadd.f32 0.0, %v649
      %651 = vmatmul.bf16.gmra.mxu0 %v614
      %v652 = vpop.f32.mrf.mxu0
      %v653 = vadd.f32 0.0, %v652
      %v654 = vpop.f32.mrf.mxu0
      %v655 = vadd.f32 0.0, %v654
      %656 = vdwg.mxu0
      %v657 = vmul.f32 %v638, 0.25
      %v658 = vmul.f32 %v640, 0.25
      %v659 = vmul.f32 %v643, 0.25
      %v660 = vmul.f32 %v645, 0.25
      %v661 = vmul.f32 %v648, 0.25
      %v662 = vmul.f32 %v650, 0.25
      %v663 = vmul.f32 %v653, 0.25
      %v664 = vmul.f32 %v655, 0.25
      %v665 = vsel %vm216, %v657, -inf
      %666 = vmax.xlane.f32.xlu0 %v665
      %v667 = vpop.xlane.xlu0 %666
      %v668 = vsel %vm216, %v658, -inf
      %669 = vmax.xlane.f32.xlu0 %v668
      %v670 = vpop.xlane.xlu0 %669
      %v671 = vsel %vm216, %v659, -inf
      %672 = vmax.xlane.f32.xlu0 %v671
      %v673 = vpop.xlane.xlu0 %672
      %v674 = vsel %vm216, %v660, -inf
      %675 = vmax.xlane.f32.xlu0 %v674
      %v676 = vpop.xlane.xlu0 %675
      %v677 = vsel %vm216, %v661, -inf
      %678 = vmax.xlane.f32.xlu0 %v677
      %v679 = vpop.xlane.xlu0 %678
      %v680 = vsel %vm216, %v662, -inf
      %681 = vmax.xlane.f32.xlu0 %v680
      %v682 = vpop.xlane.xlu0 %681
      %v683 = vsel %vm216, %v663, -inf
      %684 = vmax.xlane.f32.xlu0 %v683
      %v685 = vpop.xlane.xlu0 %684
      %v686 = vsel %vm216, %v664, -inf
      %687 = vmax.xlane.f32.xlu0 %v686
      %v688 = vpop.xlane.xlu0 %687
      %v689 = vsub.f32 %v657, %v667
      %v690 = vsub.f32 %v658, %v670
      %v691 = vsub.f32 %v659, %v673
      %v692 = vsub.f32 %v660, %v676
      %v693 = vsub.f32 %v661, %v679
      %v694 = vsub.f32 %v662, %v682
      %v695 = vsub.f32 %v663, %v685
      %v696 = vsub.f32 %v664, %v688
      %v697 = vmul.f32 %v689, 1.442695
      %v698 = vpow.pop %v697
      %v699 = vmul.f32 %v690, 1.442695
      %v700 = vpow.pop %v699
      %v701 = vmul.f32 %v691, 1.442695
      %v702 = vpow.pop %v701
      %v703 = vmul.f32 %v692, 1.442695
      %v704 = vpow.pop %v703
      %v705 = vmul.f32 %v693, 1.442695
      %v706 = vpow.pop %v705
      %v707 = vmul.f32 %v694, 1.442695
      %v708 = vpow.pop %v707
      %v709 = vmul.f32 %v695, 1.442695
      %v710 = vpow.pop %v709
      %v711 = vmul.f32 %v696, 1.442695
      %v712 = vpow.pop %v711
      %v713 = vsel %vm216, %v698, 0.0
      %714 = vadd.xlane.f32.xlu0 %v713
      %v715 = vpop.xlane.xlu0 %714
      %v716 = vsel %vm216, %v700, 0.0
      %717 = vadd.xlane.f32.xlu0 %v716
      %v718 = vpop.xlane.xlu0 %717
      %v719 = vsel %vm216, %v702, 0.0
      %720 = vadd.xlane.f32.xlu0 %v719
      %v721 = vpop.xlane.xlu0 %720
      %v722 = vsel %vm216, %v704, 0.0
      %723 = vadd.xlane.f32.xlu0 %v722
      %v724 = vpop.xlane.xlu0 %723
      %v725 = vsel %vm216, %v706, 0.0
      %726 = vadd.xlane.f32.xlu0 %v725
      %v727 = vpop.xlane.xlu0 %726
      %v728 = vsel %vm216, %v708, 0.0
      %729 = vadd.xlane.f32.xlu0 %v728
      %v730 = vpop.xlane.xlu0 %729
      %v731 = vsel %vm216, %v710, 0.0
      %732 = vadd.xlane.f32.xlu0 %v731
      %v733 = vpop.xlane.xlu0 %732
      %v734 = vsel %vm216, %v712, 0.0
      %735 = vadd.xlane.f32.xlu0 %v734
      %v736 = vpop.xlane.xlu0 %735
      %v737 = vrcp.pop %v715
      %v738 = vrcp.pop %v718
      %v739 = vrcp.pop %v721
      %v740 = vrcp.pop %v724
      %v741 = vrcp.pop %v727
      %v742 = vrcp.pop %v730
      %v743 = vrcp.pop %v733
      %v744 = vrcp.pop %v736
      %v745 = vpack.c.bf16 %v700, %v698
      %v746 = vpack.c.bf16 %v704, %v702
      %v747 = vpack.c.bf16 %v708, %v706
      %v748 = vpack.c.bf16 %v712, %v710
      %749 = vrot.lane.b32.xlu0 %v309, 96
      %v750 = vpop.permute.xlu0 %749
      %751 = vrot.lane.b32.xlu0 %v310, 96
      %v752 = vpop.permute.xlu0 %751
      %753 = vrot.lane.b32.xlu0 %v311, 96
      %v754 = vpop.permute.xlu0 %753
      %755 = vrot.lane.b32.xlu0 %v312, 96
      %v756 = vpop.permute.xlu0 %755
      %v762 = vsel %vm216, %v745, 0
      %v765 = vsel %vm216, %v746, 0
      %v768 = vsel %vm216, %v747, 0
      %v771 = vsel %vm216, %v748, 0
      %773 = vmatpush.bf16.msra.mxu0 0
      %774 = vmatpush.bf16.msra.mxu0 0
      %775 = vmatpush.bf16.msra.mxu0 0
      %776 = vmatpush.bf16.msra.mxu0 0
      %777 = vmatpush.bf16.msra.mxu0 %v756
      %778 = vmatpush.bf16.msra.mxu0 %v754
      %779 = vmatpush.bf16.msra.mxu0 %v752
      %780 = vmatpush.bf16.msra.mxu0 %v750
      %781 = vmatmul.bf16.gmra.mxu0 %v762
      %v782 = vpop.f32.mrf.mxu0
      %v783 = vadd.f32 0.0, %v782
      %v784 = vpop.f32.mrf.mxu0
      %v785 = vadd.f32 0.0, %v784
      %786 = vmatmul.bf16.gmra.mxu0 %v765
      %v787 = vpop.f32.mrf.mxu0
      %v788 = vadd.f32 0.0, %v787
      %v789 = vpop.f32.mrf.mxu0
      %v790 = vadd.f32 0.0, %v789
      %791 = vmatmul.bf16.gmra.mxu0 %v768
      %v792 = vpop.f32.mrf.mxu0
      %v793 = vadd.f32 0.0, %v792
      %v794 = vpop.f32.mrf.mxu0
      %v795 = vadd.f32 0.0, %v794
      %796 = vmatmul.bf16.gmra.mxu0 %v771
      %v797 = vpop.f32.mrf.mxu0
      %v798 = vadd.f32 0.0, %v797
      %v799 = vpop.f32.mrf.mxu0
      %v800 = vadd.f32 0.0, %v799
      %801 = vdwg.mxu0
      %v802 = vmul.f32 %v783, %v737
      %v803 = vmul.f32 %v785, %v738
      %v804 = vmul.f32 %v788, %v739
      %v805 = vmul.f32 %v790, %v740
      %v806 = vmul.f32 %v793, %v741
      %v807 = vmul.f32 %v795, %v742
      %v808 = vmul.f32 %v798, %v743
      %v809 = vmul.f32 %v800, %v744
      %810 = vrot.lane.b32.xlu0 %v142, 80
      %v811 = vpop.permute.xlu0 %810
      %812 = vrot.lane.b32.xlu0 %v143, 80
      %v813 = vpop.permute.xlu0 %812
      %814 = vrot.lane.b32.xlu0 %v144, 80
      %v815 = vpop.permute.xlu0 %814
      %816 = vrot.lane.b32.xlu0 %v145, 80
      %v817 = vpop.permute.xlu0 %816
      %818 = vrot.lane.b32.xlu0 %v142, 16
      %v819 = vpop.permute.xlu0 %818
      %820 = vrot.lane.b32.xlu0 %v143, 16
      %v821 = vpop.permute.xlu0 %820
      %822 = vrot.lane.b32.xlu0 %v144, 16
      %v823 = vpop.permute.xlu0 %822
      %824 = vrot.lane.b32.xlu0 %v145, 16
      %v825 = vpop.permute.xlu0 %824
      %v827 = vsel %vm154, %v811, 0
      %v830 = vsel %vm154, %v813, 0
      %v833 = vsel %vm154, %v815, 0
      %v836 = vsel %vm154, %v817, 0
      %v839 = vsel %vm154, %v819, 0
      %v842 = vsel %vm154, %v821, 0
      %v845 = vsel %vm154, %v823, 0
      %v848 = vsel %vm154, %v825, 0
      %850 = vmatpush.bf16.xpose.msra.mxu0 0
      %851 = vmatpush.bf16.xpose.msra.mxu0 0
      %852 = vmatpush.bf16.xpose.msra.mxu0 0
      %853 = vmatpush.bf16.xpose.msra.mxu0 0
      %854 = vmatpush.bf16.xpose.msra.mxu0 %v848
      %855 = vmatpush.bf16.xpose.msra.mxu0 %v845
      %856 = vmatpush.bf16.xpose.msra.mxu0 %v842
      %857 = vmatpush.bf16.xpose.msra.mxu0 %v839
      %858 = vmatmul.bf16.gmra.mxu0 %v827
      %v859 = vpop.f32.mrf.mxu0
      %v860 = vadd.f32 0.0, %v859
      %v861 = vpop.f32.mrf.mxu0
      %v862 = vadd.f32 0.0, %v861
      %863 = vmatmul.bf16.gmra.mxu0 %v830
      %v864 = vpop.f32.mrf.mxu0
      %v865 = vadd.f32 0.0, %v864
      %v866 = vpop.f32.mrf.mxu0
      %v867 = vadd.f32 0.0, %v866
      %868 = vmatmul.bf16.gmra.mxu0 %v833
      %v869 = vpop.f32.mrf.mxu0
      %v870 = vadd.f32 0.0, %v869
      %v871 = vpop.f32.mrf.mxu0
      %v872 = vadd.f32 0.0, %v871
      %873 = vmatmul.bf16.gmra.mxu0 %v836
      %v874 = vpop.f32.mrf.mxu0
      %v875 = vadd.f32 0.0, %v874
      %v876 = vpop.f32.mrf.mxu0
      %v877 = vadd.f32 0.0, %v876
      %878 = vdwg.mxu0
      %v879 = vmul.f32 %v860, 0.25
      %v880 = vmul.f32 %v862, 0.25
      %v881 = vmul.f32 %v865, 0.25
      %v882 = vmul.f32 %v867, 0.25
      %v883 = vmul.f32 %v870, 0.25
      %v884 = vmul.f32 %v872, 0.25
      %v885 = vmul.f32 %v875, 0.25
      %v886 = vmul.f32 %v877, 0.25
      %v887 = vsel %vm216, %v879, -inf
      %888 = vmax.xlane.f32.xlu0 %v887
      %v889 = vpop.xlane.xlu0 %888
      %v890 = vsel %vm216, %v880, -inf
      %891 = vmax.xlane.f32.xlu0 %v890
      %v892 = vpop.xlane.xlu0 %891
      %v893 = vsel %vm216, %v881, -inf
      %894 = vmax.xlane.f32.xlu0 %v893
      %v895 = vpop.xlane.xlu0 %894
      %v896 = vsel %vm216, %v882, -inf
      %897 = vmax.xlane.f32.xlu0 %v896
      %v898 = vpop.xlane.xlu0 %897
      %v899 = vsel %vm216, %v883, -inf
      %900 = vmax.xlane.f32.xlu0 %v899
      %v901 = vpop.xlane.xlu0 %900
      %v902 = vsel %vm216, %v884, -inf
      %903 = vmax.xlane.f32.xlu0 %v902
      %v904 = vpop.xlane.xlu0 %903
      %v905 = vsel %vm216, %v885, -inf
      %906 = vmax.xlane.f32.xlu0 %v905
      %v907 = vpop.xlane.xlu0 %906
      %v908 = vsel %vm216, %v886, -inf
      %909 = vmax.xlane.f32.xlu0 %v908
      %v910 = vpop.xlane.xlu0 %909
      %v911 = vsub.f32 %v879, %v889
      %v912 = vsub.f32 %v880, %v892
      %v913 = vsub.f32 %v881, %v895
      %v914 = vsub.f32 %v882, %v898
      %v915 = vsub.f32 %v883, %v901
      %v916 = vsub.f32 %v884, %v904
      %v917 = vsub.f32 %v885, %v907
      %v918 = vsub.f32 %v886, %v910
      %v919 = vmul.f32 %v911, 1.442695
      %v920 = vpow.pop %v919
      %v921 = vmul.f32 %v912, 1.442695
      %v922 = vpow.pop %v921
      %v923 = vmul.f32 %v913, 1.442695
      %v924 = vpow.pop %v923
      %v925 = vmul.f32 %v914, 1.442695
      %v926 = vpow.pop %v925
      %v927 = vmul.f32 %v915, 1.442695
      %v928 = vpow.pop %v927
      %v929 = vmul.f32 %v916, 1.442695
      %v930 = vpow.pop %v929
      %v931 = vmul.f32 %v917, 1.442695
      %v932 = vpow.pop %v931
      %v933 = vmul.f32 %v918, 1.442695
      %v934 = vpow.pop %v933
      %v935 = vsel %vm216, %v920, 0.0
      %936 = vadd.xlane.f32.xlu0 %v935
      %v937 = vpop.xlane.xlu0 %936
      %v938 = vsel %vm216, %v922, 0.0
      %939 = vadd.xlane.f32.xlu0 %v938
      %v940 = vpop.xlane.xlu0 %939
      %v941 = vsel %vm216, %v924, 0.0
      %942 = vadd.xlane.f32.xlu0 %v941
      %v943 = vpop.xlane.xlu0 %942
      %v944 = vsel %vm216, %v926, 0.0
      %945 = vadd.xlane.f32.xlu0 %v944
      %v946 = vpop.xlane.xlu0 %945
      %v947 = vsel %vm216, %v928, 0.0
      %948 = vadd.xlane.f32.xlu0 %v947
      %v949 = vpop.xlane.xlu0 %948
      %v950 = vsel %vm216, %v930, 0.0
      %951 = vadd.xlane.f32.xlu0 %v950
      %v952 = vpop.xlane.xlu0 %951
      %v953 = vsel %vm216, %v932, 0.0
      %954 = vadd.xlane.f32.xlu0 %v953
      %v955 = vpop.xlane.xlu0 %954
      %v956 = vsel %vm216, %v934, 0.0
      %957 = vadd.xlane.f32.xlu0 %v956
      %v958 = vpop.xlane.xlu0 %957
      %v959 = vrcp.pop %v937
      %v960 = vrcp.pop %v940
      %v961 = vrcp.pop %v943
      %v962 = vrcp.pop %v946
      %v963 = vrcp.pop %v949
      %v964 = vrcp.pop %v952
      %v965 = vrcp.pop %v955
      %v966 = vrcp.pop %v958
      %v967 = vpack.c.bf16 %v922, %v920
      %v968 = vpack.c.bf16 %v926, %v924
      %v969 = vpack.c.bf16 %v930, %v928
      %v970 = vpack.c.bf16 %v934, %v932
      %971 = vrot.lane.b32.xlu0 %v309, 80
      %v972 = vpop.permute.xlu0 %971
      %973 = vrot.lane.b32.xlu0 %v310, 80
      %v974 = vpop.permute.xlu0 %973
      %975 = vrot.lane.b32.xlu0 %v311, 80
      %v976 = vpop.permute.xlu0 %975
      %977 = vrot.lane.b32.xlu0 %v312, 80
      %v978 = vpop.permute.xlu0 %977
      %v984 = vsel %vm216, %v967, 0
      %v987 = vsel %vm216, %v968, 0
      %v990 = vsel %vm216, %v969, 0
      %v993 = vsel %vm216, %v970, 0
      %995 = vmatpush.bf16.msra.mxu0 0
      %996 = vmatpush.bf16.msra.mxu0 0
      %997 = vmatpush.bf16.msra.mxu0 0
      %998 = vmatpush.bf16.msra.mxu0 0
      %999 = vmatpush.bf16.msra.mxu0 %v978
      %1000 = vmatpush.bf16.msra.mxu0 %v976
      %1001 = vmatpush.bf16.msra.mxu0 %v974
      %1002 = vmatpush.bf16.msra.mxu0 %v972
      %1003 = vmatmul.bf16.gmra.mxu0 %v984
      %v1004 = vpop.f32.mrf.mxu0
      %v1005 = vadd.f32 0.0, %v1004
      %v1006 = vpop.f32.mrf.mxu0
      %v1007 = vadd.f32 0.0, %v1006
      %1008 = vmatmul.bf16.gmra.mxu0 %v987
      %v1009 = vpop.f32.mrf.mxu0
      %v1010 = vadd.f32 0.0, %v1009
      %v1011 = vpop.f32.mrf.mxu0
      %v1012 = vadd.f32 0.0, %v1011
      %1013 = vmatmul.bf16.gmra.mxu0 %v990
      %v1014 = vpop.f32.mrf.mxu0
      %v1015 = vadd.f32 0.0, %v1014
      %v1016 = vpop.f32.mrf.mxu0
      %v1017 = vadd.f32 0.0, %v1016
      %1018 = vmatmul.bf16.gmra.mxu0 %v993
      %v1019 = vpop.f32.mrf.mxu0
      %v1020 = vadd.f32 0.0, %v1019
      %v1021 = vpop.f32.mrf.mxu0
      %v1022 = vadd.f32 0.0, %v1021
      %1023 = vdwg.mxu0
      %v1024 = vmul.f32 %v1005, %v959
      %v1025 = vmul.f32 %v1007, %v960
      %v1026 = vmul.f32 %v1010, %v961
      %v1027 = vmul.f32 %v1012, %v962
      %v1028 = vmul.f32 %v1015, %v963
      %v1029 = vmul.f32 %v1017, %v964
      %v1030 = vmul.f32 %v1020, %v965
      %v1031 = vmul.f32 %v1022, %v966
      %1040 = vrot.lane.b32.xlu0 %v580, 16
      %v1041 = vpop.permute.xlu0 %1040
      %1042 = vrot.lane.b32.xlu0 %v581, 16
      %v1043 = vpop.permute.xlu0 %1042
      %1044 = vrot.lane.b32.xlu0 %v582, 16
      %v1045 = vpop.permute.xlu0 %1044
      %1046 = vrot.lane.b32.xlu0 %v583, 16
      %v1047 = vpop.permute.xlu0 %1046
      %1048 = vrot.lane.b32.xlu0 %v584, 16
      %v1049 = vpop.permute.xlu0 %1048
      %1050 = vrot.lane.b32.xlu0 %v585, 16
      %v1051 = vpop.permute.xlu0 %1050
      %1052 = vrot.lane.b32.xlu0 %v586, 16
      %v1053 = vpop.permute.xlu0 %1052
      %1054 = vrot.lane.b32.xlu0 %v587, 16
      %v1055 = vpop.permute.xlu0 %1054
      %1072 = vrot.lane.b32.xlu0 %v802, 32
      %v1073 = vpop.permute.xlu0 %1072
      %1074 = vrot.lane.b32.xlu0 %v803, 32
      %v1075 = vpop.permute.xlu0 %1074
      %1076 = vrot.lane.b32.xlu0 %v804, 32
      %v1077 = vpop.permute.xlu0 %1076
      %1078 = vrot.lane.b32.xlu0 %v805, 32
      %v1079 = vpop.permute.xlu0 %1078
      %1080 = vrot.lane.b32.xlu0 %v806, 32
      %v1081 = vpop.permute.xlu0 %1080
      %1082 = vrot.lane.b32.xlu0 %v807, 32
      %v1083 = vpop.permute.xlu0 %1082
      %1084 = vrot.lane.b32.xlu0 %v808, 32
      %v1085 = vpop.permute.xlu0 %1084
      %1086 = vrot.lane.b32.xlu0 %v809, 32
      %v1087 = vpop.permute.xlu0 %1086
      %1104 = vrot.lane.b32.xlu0 %v1024, 48
      %v1105 = vpop.permute.xlu0 %1104
      %1106 = vrot.lane.b32.xlu0 %v1025, 48
      %v1107 = vpop.permute.xlu0 %1106
      %1108 = vrot.lane.b32.xlu0 %v1026, 48
      %v1109 = vpop.permute.xlu0 %1108
      %1110 = vrot.lane.b32.xlu0 %v1027, 48
      %v1111 = vpop.permute.xlu0 %1110
      %1112 = vrot.lane.b32.xlu0 %v1028, 48
      %v1113 = vpop.permute.xlu0 %1112
      %1114 = vrot.lane.b32.xlu0 %v1029, 48
      %v1115 = vpop.permute.xlu0 %1114
      %1116 = vrot.lane.b32.xlu0 %v1030, 48
      %v1117 = vpop.permute.xlu0 %1116
      %1118 = vrot.lane.b32.xlu0 %v1031, 48
      %v1119 = vpop.permute.xlu0 %1118
      %v1128 = vsel %vm154, %v358, %v1041
      %v1129 = vsel %vm154, %v359, %v1043
      %v1130 = vsel %vm154, %v360, %v1045
      %v1131 = vsel %vm154, %v361, %v1047
      %v1132 = vsel %vm154, %v362, %v1049
      %v1133 = vsel %vm154, %v363, %v1051
      %v1134 = vsel %vm154, %v364, %v1053
      %v1135 = vsel %vm154, %v365, %v1055
      %vm1136 = vcmask 261120
      %v1137 = vsel %vm1136, %v1128, %v1073
      %v1138 = vsel %vm1136, %v1129, %v1075
      %v1139 = vsel %vm1136, %v1130, %v1077
      %v1140 = vsel %vm1136, %v1131, %v1079
      %v1141 = vsel %vm1136, %v1132, %v1081
      %v1142 = vsel %vm1136, %v1133, %v1083
      %v1143 = vsel %vm1136, %v1134, %v1085
      %v1144 = vsel %vm1136, %v1135, %v1087
      %vm1145 = vcmask 392192
      %v1146 = vsel %vm1145, %v1137, %v1105
      %v1147 = vsel %vm1145, %v1138, %v1107
      %v1148 = vsel %vm1145, %v1139, %v1109
      %v1149 = vsel %vm1145, %v1140, %v1111
      %v1150 = vsel %vm1145, %v1141, %v1113
      %v1151 = vsel %vm1145, %v1142, %v1115
      %v1152 = vsel %vm1145, %v1143, %v1117
      %v1153 = vsel %vm1145, %v1144, %v1119
      %v1154 = vpack.c.bf16 %v1146, %v1146
      %v1155 = vpack.c.bf16 %v1147, %v1147
      %v1156 = vpack.c.bf16 %v1148, %v1148
      %v1157 = vpack.c.bf16 %v1149, %v1149
      %v1158 = vpack.c.bf16 %v1150, %v1150
      %v1159 = vpack.c.bf16 %v1151, %v1151
      %v1160 = vpack.c.bf16 %v1152, %v1152
      %v1161 = vpack.c.bf16 %v1153, %v1153
      %vm1162 = vcmask 519168
      %1163 = vst.msk [vmem:[%s116] sm:$0xf] %vm1162, %v1154
      %1164 = vst.msk [vmem:[%s116 + $0x4] sm:$0xf] %vm1162, %v1155
      %1165 = vst.msk [vmem:[%s116 + $0x8] sm:$0xf] %vm1162, %v1156
      %1166 = vst.msk [vmem:[%s116 + $0xc] sm:$0xf] %vm1162, %v1157
      %1167 = vst.msk [vmem:[%s116 + $0x10] sm:$0xf] %vm1162, %v1158
      %1168 = vst.msk [vmem:[%s116 + $0x14] sm:$0xf] %vm1162, %v1159
      %1169 = vst.msk [vmem:[%s116 + $0x18] sm:$0xf] %vm1162, %v1160
      %1170 = vst.msk [vmem:[%s116 + $0x1c] sm:$0xf] %vm1162, %v1161
      %p1171 = scmp.lt.s32.totalorder %s12, 1
      %s1172 = scalar_select %p1171, %s12, 1
      %s1173 = smul.addr %s1172, 8
      %s1174 = smul.addr %s1173, 4
      %s1175 = scalar_lea.vmem %s1, %s1174
      // Predicated region
      $region25: #{glse_pallas.23} parent=23 // pred_check
        %p1176 = pneg %p56
      $region26: #{glse_pallas.23} parent=23 // pred_check_branch
        %1178 = sbr.rel (%p1176) target = $region28
      $region27: #{glse_pallas.23} parent=23 // pred_region
        _
      $region28: #{glse_pallas.23} parent=23 // pred_fallthru
        _
    $region24: #{glse_pallas.23} parent=5 // pred_fallthru
      _
    %p1179 = scmp.le.s32.totalorder 2, %s7
    // Predicated region
    $region29: #{glse_pallas.23} parent=5 // pred_check
      %p1180 = pneg %p1179
    $region30: #{glse_pallas.23} parent=5 // pred_check_branch
      %1182 = sbr.rel (%p1180) target = $region32
    $region31: #{glse_pallas.23} parent=5 // pred_region
      %s1183 = ssub.s32 %s7, 2
      // Predicated region
      $region33: #{glse_pallas.23} parent=31 // pred_check
        %p1184 = pneg %p62
      $region34: #{glse_pallas.23} parent=31 // pred_check_branch
        %1186 = sbr.rel (%p1184) target = $region36
      $region35: #{glse_pallas.23} parent=31 // pred_region
        %p1187 = scmp.lt.s32.totalorder %s13, 1
        %s1188 = scalar_select %p1187, %s13, 1
        %s1189 = smul.addr %s1188, 8
        %s1190 = smul.addr %s1189, 4
        %s1191 = scalar_lea.vmem %s1, %s1190
      $region36: #{glse_pallas.23} parent=31 // pred_fallthru
        _
    $region32: #{glse_pallas.23} parent=5 // pred_fallthru
      _
  $region6: #{glse_pallas.23} parent=0 // loop_footer
    %s11 = sadd.s32 1, %s7
  $region7: #{glse_pallas.23} parent=0 // loop_footer_branch
    %6 = sbr.rel target = $region3
  $region8: #{glse_pallas.23} parent=0 // loop_exit
    _

// kernel: glse_pallas.24
$region0: #{glse_pallas.24}
  #allocation0 [shape = 'u32[]', space=smem, size = 0x4, offset = 0x4, fixed_abs, tag = 'smem constant byte address 0x4 - core index']
  #allocation1 [shape = 'u32[72,128]{1,0:T(1,128)}', space=vmem, size = 0x9000, scoped, tag = 'internal scratch']
  %s0 = inlined_call_operand.vmem [shape: bf16[128,64], index: 0, kind: input, shape index: {}]
  %s1 = inlined_call_operand.vmem [shape: bf16[64,64], index: 1, kind: input, shape index: {}]
  %s2 = inlined_call_operand.vmem [shape: f32[1,64], index: 2, kind: input, shape index: {}]
  %s3 = inlined_call_operand.vmem [shape: bf16[128,64], index: 3, kind: input, shape index: {}]
  %s4 = inlined_call_operand.vmem [shape: bf16[128,64], index: 4, kind: output, shape index: {}]
  %s5 = sld [smem:[#allocation0]]
  $region49: #{glse_pallas.24} parent=0
    _
  %s7 = ssub.s32 1, %s5
  %s8 = scalar_select 0, %s7, %s5
  loop: start=0, step=1, limit=4
  $region2: #{glse_pallas.24} parent=0 // loop_pre_header
    _
  $region3: #{glse_pallas.24} parent=0 // loop_header
    %s10 = sphi 0, %s14
    %p11 = scmp.ge.s32.totalorder %s10, 4
    %s20 = sphi 0, %s22
    %s23 = sphi 0, %s20
    %s24 = sphi 0, %s23
    %s40 = sphi 0, %s24
    %s44 = sphi 0, %s44
    %s46 = sphi 0, %s44
    %s47 = sphi 0, %s46
    %s61 = sphi 0, %s47
    %s65 = sphi 0, %s65
    %s67 = sphi 0, %s65
    %s68 = sphi 0, %s67
    %s82 = sphi 0, %s68
    %s88 = sphi 0, %s90
    %s91 = sphi 0, %s88
    %s92 = sphi 0, %s91
    %s108 = sphi 0, %s92
    %s114 = sphi 0, %s116
    %s117 = sphi 0, %s114
    %s118 = sphi 0, %s117
    %s134 = sphi 0, %s118
  $region4: #{glse_pallas.24} parent=0 // loop_header_branch
    %13 = sbr.rel (%p11) target = $region8
  $region5: #{glse_pallas.24} parent=0 // loop_body
    %s15 = ssub.s32 %s10, 1
    %s16 = ssub.s32 %s10, 2
    %s17 = sadd.s32 %s10, 1
    %s18 = ssub.s32 %s10, %s17
    %p19 = scmp.eq.s32.totalorder %s18, 0
    %s21 = sadd.s32 %s20, 1
    %s22 = scalar_select %p19, %s20, %s21
    %p25 = pneg %p19
    %p26 = scmp.eq.s32.totalorder %s10, 1
    %p27 = por %p25, %p26
    %p28 = scmp.ne.s32.totalorder %s20, %s23
    %p29 = scmp.eq.s32.totalorder %s10, 0
    %p30 = por %p28, %p29
    %p31 = scmp.ne.s32.totalorder %s20, %s23
    %p32 = scmp.eq.s32.totalorder %s15, 1
    %p33 = por %p31, %p32
    %p34 = scmp.ne.s32.totalorder %s23, %s24
    %p35 = scmp.eq.s32.totalorder %s15, 0
    %p36 = por %p34, %p35
    %p37 = scmp.ne.s32.totalorder %s23, %s24
    %p38 = scmp.eq.s32.totalorder %s16, 1
    %p39 = por %p37, %p38
    %p41 = scmp.ne.s32.totalorder %s24, %s40
    %p42 = scmp.eq.s32.totalorder %s16, 0
    %p43 = por %p41, %p42
    %s45 = sadd.s32 %s44, 1
    %p48 = scmp.eq.s32.totalorder %s10, 1
    %p49 = scmp.ne.s32.totalorder %s44, %s46
    %p50 = scmp.eq.s32.totalorder %s10, 0
    %p51 = por %p49, %p50
    %p52 = scmp.ne.s32.totalorder %s44, %s46
    %p53 = scmp.eq.s32.totalorder %s15, 1
    %p54 = por %p52, %p53
    %p55 = scmp.ne.s32.totalorder %s46, %s47
    %p56 = scmp.eq.s32.totalorder %s15, 0
    %p57 = por %p55, %p56
    %p58 = scmp.ne.s32.totalorder %s46, %s47
    %p59 = scmp.eq.s32.totalorder %s16, 1
    %p60 = por %p58, %p59
    %p62 = scmp.ne.s32.totalorder %s47, %s61
    %p63 = scmp.eq.s32.totalorder %s16, 0
    %p64 = por %p62, %p63
    %s66 = sadd.s32 %s65, 1
    %p69 = scmp.eq.s32.totalorder %s10, 1
    %p70 = scmp.ne.s32.totalorder %s65, %s67
    %p71 = scmp.eq.s32.totalorder %s10, 0
    %p72 = por %p70, %p71
    %p73 = scmp.ne.s32.totalorder %s65, %s67
    %p74 = scmp.eq.s32.totalorder %s15, 1
    %p75 = por %p73, %p74
    %p76 = scmp.ne.s32.totalorder %s67, %s68
    %p77 = scmp.eq.s32.totalorder %s15, 0
    %p78 = por %p76, %p77
    %p79 = scmp.ne.s32.totalorder %s67, %s68
    %p80 = scmp.eq.s32.totalorder %s16, 1
    %p81 = por %p79, %p80
    %p83 = scmp.ne.s32.totalorder %s68, %s82
    %p84 = scmp.eq.s32.totalorder %s16, 0
    %p85 = por %p83, %p84
    %s86 = ssub.s32 %s10, %s17
    %p87 = scmp.eq.s32.totalorder %s86, 0
    %s89 = sadd.s32 %s88, 1
    %s90 = scalar_select %p87, %s88, %s89
    %p93 = pneg %p87
    %p94 = scmp.eq.s32.totalorder %s10, 1
    %p95 = por %p93, %p94
    %p96 = scmp.ne.s32.totalorder %s88, %s91
    %p97 = scmp.eq.s32.totalorder %s10, 0
    %p98 = por %p96, %p97
    %p99 = scmp.ne.s32.totalorder %s88, %s91
    %p100 = scmp.eq.s32.totalorder %s15, 1
    %p101 = por %p99, %p100
    %p102 = scmp.ne.s32.totalorder %s91, %s92
    %p103 = scmp.eq.s32.totalorder %s15, 0
    %p104 = por %p102, %p103
    %p105 = scmp.ne.s32.totalorder %s91, %s92
    %p106 = scmp.eq.s32.totalorder %s16, 1
    %p107 = por %p105, %p106
    %p109 = scmp.ne.s32.totalorder %s92, %s108
    %p110 = scmp.eq.s32.totalorder %s16, 0
    %p111 = por %p109, %p110
    %s112 = ssub.s32 %s10, %s17
    %p113 = scmp.eq.s32.totalorder %s112, 0
    %s115 = sadd.s32 %s114, 1
    %s116 = scalar_select %p113, %s114, %s115
    %p119 = pneg %p113
    %p120 = scmp.eq.s32.totalorder %s10, 1
    %p121 = por %p119, %p120
    %p122 = scmp.ne.s32.totalorder %s114, %s117
    %p123 = scmp.eq.s32.totalorder %s10, 0
    %p124 = por %p122, %p123
    %p125 = scmp.ne.s32.totalorder %s114, %s117
    %p126 = scmp.eq.s32.totalorder %s15, 1
    %p127 = por %p125, %p126
    %p128 = scmp.ne.s32.totalorder %s117, %s118
    %p129 = scmp.eq.s32.totalorder %s15, 0
    %p130 = por %p128, %p129
    %p131 = scmp.ne.s32.totalorder %s117, %s118
    %p132 = scmp.eq.s32.totalorder %s16, 1
    %p133 = por %p131, %p132
    %p135 = scmp.ne.s32.totalorder %s118, %s134
    %p136 = scmp.eq.s32.totalorder %s16, 0
    %p137 = por %p135, %p136
    %p138 = scmp.le.s32.totalorder 1, %s10
    %p139 = scmp.lt.s32.totalorder %s10, 3
    %p140 = pnand %p138, %p139
    %p141 = pneg %p140
    // Predicated region
    $region9: #{glse_pallas.24} parent=5 // pred_check
      _
    $region10: #{glse_pallas.24} parent=5 // pred_check_branch
      %143 = sbr.rel (%p140) target = $region12
    $region11: #{glse_pallas.24} parent=5 // pred_region
      %s144 = ssub.s32 %s10, 1
      // Predicated region
      $region13: #{glse_pallas.24} parent=11 // pred_check
        %p145 = pneg %p57
      $region14: #{glse_pallas.24} parent=11 // pred_check_branch
        %147 = sbr.rel (%p145) target = $region16
      $region15: #{glse_pallas.24} parent=11 // pred_region
        _
      $region16: #{glse_pallas.24} parent=11 // pred_fallthru
        _
      // Predicated region
      $region17: #{glse_pallas.24} parent=11 // pred_check
        %p148 = pneg %p78
      $region18: #{glse_pallas.24} parent=11 // pred_check_branch
        %150 = sbr.rel (%p148) target = $region20
      $region19: #{glse_pallas.24} parent=11 // pred_region
        _
      $region20: #{glse_pallas.24} parent=11 // pred_fallthru
        _
    $region12: #{glse_pallas.24} parent=5 // pred_fallthru
      _
    %p151 = scmp.lt.s32.totalorder %s10, 2
    // Predicated region
    $region21: #{glse_pallas.24} parent=5 // pred_check
      %p152 = pneg %p151
    $region22: #{glse_pallas.24} parent=5 // pred_check_branch
      %154 = sbr.rel (%p152) target = $region24
    $region23: #{glse_pallas.24} parent=5 // pred_region
      // Predicated region
      $region25: #{glse_pallas.24} parent=23 // pred_check
        %p155 = pneg %p30
      $region26: #{glse_pallas.24} parent=23 // pred_check_branch
        %157 = sbr.rel (%p155) target = $region28
      $region27: #{glse_pallas.24} parent=23 // pred_region
        %s158 = smul.u32 8, %s10
        %p159 = scmp.lt.s32.totalorder %s158, 15
        %s160 = scalar_select %p159, %s158, 15
        %s161 = smul.addr %s160, 4
        %s162 = scalar_lea.vmem %s0, %s161
        %s163 = smul.u32 8, %s10
      $region28: #{glse_pallas.24} parent=23 // pred_fallthru
        _
      // Predicated region
      $region29: #{glse_pallas.24} parent=23 // pred_check
        %p164 = pneg %p98
      $region30: #{glse_pallas.24} parent=23 // pred_check_branch
        %166 = sbr.rel (%p164) target = $region32
      $region31: #{glse_pallas.24} parent=23 // pred_region
        %s167 = smul.u32 8, %s10
        %p168 = scmp.lt.s32.totalorder %s167, 15
        %s169 = scalar_select %p168, %s167, 15
        %s170 = smul.addr %s169, 4
        %s171 = scalar_lea.vmem %s3, %s170
        %s172 = smul.u32 8, %s10
      $region32: #{glse_pallas.24} parent=23 // pred_fallthru
        _
    $region24: #{glse_pallas.24} parent=5 // pred_fallthru
      _
    %p173 = scmp.le.s32.totalorder 1, %s10
    %p174 = scmp.lt.s32.totalorder %s10, 3
    %p175 = pnand %p173, %p174
    %p176 = pneg %p175
    // Predicated region
    $region33: #{glse_pallas.24} parent=5 // pred_check
      _
    $region34: #{glse_pallas.24} parent=5 // pred_check_branch
      %178 = sbr.rel (%p175) target = $region36
    $region35: #{glse_pallas.24} parent=5 // pred_region
      %s179 = ssub.s32 %s10, 1
      %s180 = smul.u32 8, %s15
      %p181 = scmp.lt.s32.totalorder %s180, 15
      %s182 = scalar_select %p181, %s180, 15
      %s183 = smul.addr %s182, 4
      %s184 = scalar_lea.vmem %s0, %s183
      %p185 = pneg %p36
      %p186 = pneg %p33
      %p187 = pneg %p57
      %p188 = pneg %p54
      %p189 = pneg %p78
      %p190 = pneg %p75
      %s191 = smul.u32 8, %s15
      %p192 = scmp.lt.s32.totalorder %s191, 15
      %s193 = scalar_select %p192, %s191, 15
      %s194 = smul.addr %s193, 4
      %s195 = scalar_lea.vmem %s3, %s194
      %p196 = pneg %p104
      %p197 = pneg %p101
      %p198 = pneg %p130
      %p199 = pneg %p127
      %s200 = smul.u32 8, %s15
      %p201 = scmp.lt.s32.totalorder %s200, 15
      %s202 = scalar_select %p201, %s200, 15
      %s203 = smul.addr %s202, 4
      %s204 = scalar_lea.vmem %s4, %s203
      %s205 = smul.u32 8, %s15
      %p206 = scmp.lt.s32.totalorder %s205, 15
      %s207 = scalar_select %p206, %s205, 15
      %s208 = smul.addr %s207, 4
      %s209 = scalar_lea.vmem %s0, %s208
      %s210 = smul.u32 8, %s15
      %s211 = smul.u32 8, %s15
      %p212 = scmp.lt.s32.totalorder %s211, 15
      %s213 = scalar_select %p212, %s211, 15
      %s214 = smul.addr %s213, 4
      %s215 = scalar_lea.vmem %s3, %s214
      %s216 = smul.u32 8, %s15
      %s217 = smul.u32 8, %s15
      %p218 = scmp.lt.s32.totalorder %s217, 15
      %s219 = scalar_select %p218, %s217, 15
      %s220 = smul.addr %s219, 4
      %s221 = scalar_lea.vmem %s4, %s220
      %s222 = smul.u32 8, %s15
      %v224 = vld [vmem:[%s209] sm:$0xf]
      %v225 = vld [vmem:[%s209 + $0x4] sm:$0xf]
      %v226 = vld [vmem:[%s209 + $0x8] sm:$0xf]
      %v227 = vld [vmem:[%s209 + $0xc] sm:$0xf]
      %v228 = vld [vmem:[%s209 + $0x10] sm:$0xf]
      %v229 = vld [vmem:[%s209 + $0x14] sm:$0xf]
      %v230 = vld [vmem:[%s209 + $0x18] sm:$0xf]
      %v231 = vld [vmem:[%s209 + $0x1c] sm:$0xf]
      %v232 = vld [vmem:[%s1] sm:$0xf]
      %v233 = vld [vmem:[%s1 + $0x4] sm:$0xf]
      %v234 = vld [vmem:[%s1 + $0x8] sm:$0xf]
      %v235 = vld [vmem:[%s1 + $0xc] sm:$0xf]
      %v236 = vld [vmem:[%s1 + $0x10] sm:$0xf]
      %v237 = vld [vmem:[%s1 + $0x14] sm:$0xf]
      %v238 = vld [vmem:[%s1 + $0x18] sm:$0xf]
      %v239 = vld [vmem:[%s1 + $0x1c] sm:$0xf]
      %v240 = vld [vmem:[%s2] sm:$0x1]
      %v242 = vperm.slane %v240, 0
      %v252 = vunpack.c.l.b16 %v224
      %v253 = vunpack.c.l.b16 %v225
      %v254 = vunpack.c.l.b16 %v226
      %v255 = vunpack.c.l.b16 %v227
      %v256 = vunpack.c.l.b16 %v228
      %v257 = vunpack.c.l.b16 %v229
      %v258 = vunpack.c.l.b16 %v230
      %v259 = vunpack.c.l.b16 %v231
      %v260 = vpack.c.b16 %v253, %v252
      %v261 = vpack.c.b16 %v255, %v254
      %v262 = vpack.c.b16 %v257, %v256
      %v263 = vpack.c.b16 %v259, %v258
      %v272 = vunpack.c.l.b16 %v232
      %v273 = vunpack.c.l.b16 %v233
      %v274 = vunpack.c.l.b16 %v234
      %v275 = vunpack.c.l.b16 %v235
      %v276 = vunpack.c.l.b16 %v236
      %v277 = vunpack.c.l.b16 %v237
      %v278 = vunpack.c.l.b16 %v238
      %v279 = vunpack.c.l.b16 %v239
      %v280 = vpack.c.b16 %v273, %v272
      %v281 = vpack.c.b16 %v275, %v274
      %v282 = vpack.c.b16 %v277, %v276
      %v283 = vpack.c.b16 %v279, %v278
      %vm288 = vcmask 523264
      %v290 = vsel %vm288, %v260, 0
      %v293 = vsel %vm288, %v261, 0
      %v296 = vsel %vm288, %v262, 0
      %v299 = vsel %vm288, %v263, 0
      %301 = vmatpush.bf16.msra.mxu0 0
      %302 = vmatpush.bf16.msra.mxu0 0
      %303 = vmatpush.bf16.msra.mxu0 0
      %304 = vmatpush.bf16.msra.mxu0 0
      %305 = vmatpush.bf16.msra.mxu0 %v283
      %306 = vmatpush.bf16.msra.mxu0 %v282
      %307 = vmatpush.bf16.msra.mxu0 %v281
      %308 = vmatpush.bf16.msra.mxu0 %v280
      %309 = vmatmul.bf16.gmra.mxu0 %v290
      %v310 = vpop.f32.mrf.mxu0
      %v311 = vadd.f32 %v242, %v310
      %v312 = vpop.f32.mrf.mxu0
      %v313 = vadd.f32 %v242, %v312
      %314 = vmatmul.bf16.gmra.mxu0 %v293
      %v315 = vpop.f32.mrf.mxu0
      %v316 = vadd.f32 %v242, %v315
      %v317 = vpop.f32.mrf.mxu0
      %v318 = vadd.f32 %v242, %v317
      %319 = vmatmul.bf16.gmra.mxu0 %v296
      %v320 = vpop.f32.mrf.mxu0
      %v321 = vadd.f32 %v242, %v320
      %v322 = vpop.f32.mrf.mxu0
      %v323 = vadd.f32 %v242, %v322
      %324 = vmatmul.bf16.gmra.mxu0 %v299
      %v325 = vpop.f32.mrf.mxu0
      %v326 = vadd.f32 %v242, %v325
      %v327 = vpop.f32.mrf.mxu0
      %v328 = vadd.f32 %v242, %v327
      %329 = vdwg.mxu0
      %v330 = vld [vmem:[%s215] sm:$0xf]
      %v331 = vld [vmem:[%s215 + $0x4] sm:$0xf]
      %v332 = vld [vmem:[%s215 + $0x8] sm:$0xf]
      %v333 = vld [vmem:[%s215 + $0xc] sm:$0xf]
      %v334 = vld [vmem:[%s215 + $0x10] sm:$0xf]
      %v335 = vld [vmem:[%s215 + $0x14] sm:$0xf]
      %v336 = vld [vmem:[%s215 + $0x18] sm:$0xf]
      %v337 = vld [vmem:[%s215 + $0x1c] sm:$0xf]
      %v338 = vunpack.c.l.bf16 %v330
      %v339 = vunpack.c.l.bf16 %v331
      %v340 = vunpack.c.l.bf16 %v332
      %v341 = vunpack.c.l.bf16 %v333
      %v342 = vunpack.c.l.bf16 %v334
      %v343 = vunpack.c.l.bf16 %v335
      %v344 = vunpack.c.l.bf16 %v336
      %v345 = vunpack.c.l.bf16 %v337
      %v346 = vadd.f32 %v311, %v338
      %v347 = vadd.f32 %v313, %v339
      %v348 = vadd.f32 %v316, %v340
      %v349 = vadd.f32 %v318, %v341
      %v350 = vadd.f32 %v321, %v342
      %v351 = vadd.f32 %v323, %v343
      %v352 = vadd.f32 %v326, %v344
      %v353 = vadd.f32 %v328, %v345
      %v354 = vpack.c.bf16 %v346, %v346
      %v355 = vpack.c.bf16 %v347, %v347
      %v356 = vpack.c.bf16 %v348, %v348
      %v357 = vpack.c.bf16 %v349, %v349
      %v358 = vpack.c.bf16 %v350, %v350
      %v359 = vpack.c.bf16 %v351, %v351
      %v360 = vpack.c.bf16 %v352, %v352
      %v361 = vpack.c.bf16 %v353, %v353
      %vm362 = vcmask 519168
      %363 = vst.msk [vmem:[%s221] sm:$0xf] %vm362, %v354
      %364 = vst.msk [vmem:[%s221 + $0x4] sm:$0xf] %vm362, %v355
      %365 = vst.msk [vmem:[%s221 + $0x8] sm:$0xf] %vm362, %v356
      %366 = vst.msk [vmem:[%s221 + $0xc] sm:$0xf] %vm362, %v357
      %367 = vst.msk [vmem:[%s221 + $0x10] sm:$0xf] %vm362, %v358
      %368 = vst.msk [vmem:[%s221 + $0x14] sm:$0xf] %vm362, %v359
      %369 = vst.msk [vmem:[%s221 + $0x18] sm:$0xf] %vm362, %v360
      %370 = vst.msk [vmem:[%s221 + $0x1c] sm:$0xf] %vm362, %v361
      %s371 = smul.u32 8, %s15
      %p372 = scmp.lt.s32.totalorder %s371, 15
      %s373 = scalar_select %p372, %s371, 15
      %s374 = smul.addr %s373, 4
      %s375 = scalar_lea.vmem %s4, %s374
      // Predicated region
      $region37: #{glse_pallas.24} parent=35 // pred_check
        %p376 = pneg %p127
      $region38: #{glse_pallas.24} parent=35 // pred_check_branch
        %378 = sbr.rel (%p376) target = $region40
      $region39: #{glse_pallas.24} parent=35 // pred_region
        %s379 = smul.u32 8, %s15
      $region40: #{glse_pallas.24} parent=35 // pred_fallthru
        _
    $region36: #{glse_pallas.24} parent=5 // pred_fallthru
      _
    %p380 = scmp.le.s32.totalorder 2, %s10
    // Predicated region
    $region41: #{glse_pallas.24} parent=5 // pred_check
      %p381 = pneg %p380
    $region42: #{glse_pallas.24} parent=5 // pred_check_branch
      %383 = sbr.rel (%p381) target = $region44
    $region43: #{glse_pallas.24} parent=5 // pred_region
      %s384 = ssub.s32 %s10, 2
      // Predicated region
      $region45: #{glse_pallas.24} parent=43 // pred_check
        %p385 = pneg %p133
      $region46: #{glse_pallas.24} parent=43 // pred_check_branch
        %387 = sbr.rel (%p385) target = $region48
      $region47: #{glse_pallas.24} parent=43 // pred_region
        %s388 = smul.u32 8, %s16
        %p389 = scmp.lt.s32.totalorder %s388, 15
        %s390 = scalar_select %p389, %s388, 15
        %s391 = smul.addr %s390, 4
        %s392 = scalar_lea.vmem %s4, %s391
      $region48: #{glse_pallas.24} parent=43 // pred_fallthru
        _
    $region44: #{glse_pallas.24} parent=5 // pred_fallthru
      _
  $region6: #{glse_pallas.24} parent=0 // loop_footer
    %s14 = sadd.s32 1, %s10
  $region7: #{glse_pallas.24} parent=0 // loop_footer_branch
    %9 = sbr.rel target = $region3
  $region8: #{glse_pallas.24} parent=0 // loop_exit
    _

// kernel: glse_pallas.33
$region0: #{glse_pallas.33}
  #allocation0 [shape = 'u32[]', space=smem, size = 0x4, offset = 0x4, fixed_abs, tag = 'smem constant byte address 0x4 - core index']
  #allocation1 [shape = 'u32[72,128]{1,0:T(1,128)}', space=vmem, size = 0x9000, scoped, tag = 'internal scratch']
  %s0 = inlined_call_operand.vmem [shape: bf16[128,64], index: 0, kind: input, shape index: {}]
  %s1 = inlined_call_operand.vmem [shape: bf16[128,64], index: 1, kind: input, shape index: {}]
  %s2 = inlined_call_operand.vmem [shape: f32[1,64], index: 2, kind: input, shape index: {}]
  %s3 = inlined_call_operand.hbm [shape: f32[1,64], index: 3, kind: input, shape index: {}]
  %s4 = inlined_call_operand.vmem [shape: bf16[64,256], index: 4, kind: input, shape index: {}]
  %s5 = inlined_call_operand.vmem [shape: f32[1,256], index: 5, kind: input, shape index: {}]
  %s6 = inlined_call_operand.vmem [shape: bf16[256,64], index: 6, kind: input, shape index: {}]
  %s7 = inlined_call_operand.hbm [shape: f32[1,64], index: 7, kind: input, shape index: {}]
  %s8 = inlined_call_operand.vmem [shape: bf16[128,64], index: 8, kind: output, shape index: {}]
  %s9 = sld [smem:[#allocation0]]
  $region73: #{glse_pallas.33} parent=0
    _
  %s11 = ssub.s32 1, %s9
  %s12 = scalar_select 0, %s11, %s9
  $region1: #{glse_pallas.33} parent=0
    #allocation2 [shape = 'u8[512]{0}', space=vmem, size = 0x400, scoped, tag = 'input window, operand 3, single buffered']
    #allocation3 [shape = 's32[2]{0}', space=sflag, size = 0x8, scoped, tag = 'scoped memory for glse_pallas.33']
    #allocation4 [shape = 'u8[512]{0}', space=vmem, size = 0x400, scoped, tag = 'input window, operand 7, single buffered']
    #allocation5 [shape = 's32[1]{0}', space=sflag, size = 0x4, scoped, tag = 'scoped memory for glse_pallas.33']
    %13 = vsyncpa [#allocation3], 0
    %14 = vsyncpa [#allocation5], 0
    loop: start=0, step=1, limit=4
    $region2: #{glse_pallas.33} parent=1 // loop_pre_header
      _
    $region3: #{glse_pallas.33} parent=1 // loop_header
      %s16 = sphi 0, %s20
      %p17 = scmp.ge.s32.totalorder %s16, 4
      %s26 = sphi 0, %s28
      %s29 = sphi 0, %s26
      %s30 = sphi 0, %s29
      %s46 = sphi 0, %s30
      %s52 = sphi 0, %s54
      %s55 = sphi 0, %s52
      %s56 = sphi 0, %s55
      %s72 = sphi 0, %s56
      %s76 = sphi 0, %s76
      %s78 = sphi 0, %s76
      %s79 = sphi 0, %s78
      %s93 = sphi 0, %s79
      %s97 = sphi 0, %s97
      %s99 = sphi 0, %s97
      %s100 = sphi 0, %s99
      %s114 = sphi 0, %s100
      %s118 = sphi 0, %s118
      %s120 = sphi 0, %s118
      %s121 = sphi 0, %s120
      %s135 = sphi 0, %s121
      %s139 = sphi 0, %s139
      %s141 = sphi 0, %s139
      %s142 = sphi 0, %s141
      %s156 = sphi 0, %s142
      %s160 = sphi 0, %s160
      %s162 = sphi 0, %s160
      %s163 = sphi 0, %s162
      %s177 = sphi 0, %s163
      %s181 = sphi 0, %s181
      %s183 = sphi 0, %s181
      %s184 = sphi 0, %s183
      %s198 = sphi 0, %s184
      %s204 = sphi 0, %s206
      %s207 = sphi 0, %s204
      %s208 = sphi 0, %s207
      %s224 = sphi 0, %s208
    $region4: #{glse_pallas.33} parent=1 // loop_header_branch
      %19 = sbr.rel (%p17) target = $region8
    $region5: #{glse_pallas.33} parent=1 // loop_body
      %s21 = ssub.s32 %s16, 1
      %s22 = ssub.s32 %s16, 2
      %s23 = sadd.s32 %s16, 1
      %s24 = ssub.s32 %s16, %s23
      %p25 = scmp.eq.s32.totalorder %s24, 0
      %s27 = sadd.s32 %s26, 1
      %s28 = scalar_select %p25, %s26, %s27
      %p31 = pneg %p25
      %p32 = scmp.eq.s32.totalorder %s16, 1
      %p33 = por %p31, %p32
      %p34 = scmp.ne.s32.totalorder %s26, %s29
      %p35 = scmp.eq.s32.totalorder %s16, 0
      %p36 = por %p34, %p35
      %p37 = scmp.ne.s32.totalorder %s26, %s29
      %p38 = scmp.eq.s32.totalorder %s21, 1
      %p39 = por %p37, %p38
      %p40 = scmp.ne.s32.totalorder %s29, %s30
      %p41 = scmp.eq.s32.totalorder %s21, 0
      %p42 = por %p40, %p41
      %p43 = scmp.ne.s32.totalorder %s29, %s30
      %p44 = scmp.eq.s32.totalorder %s22, 1
      %p45 = por %p43, %p44
      %p47 = scmp.ne.s32.totalorder %s30, %s46
      %p48 = scmp.eq.s32.totalorder %s22, 0
      %p49 = por %p47, %p48
      %s50 = ssub.s32 %s16, %s23
      %p51 = scmp.eq.s32.totalorder %s50, 0
      %s53 = sadd.s32 %s52, 1
      %s54 = scalar_select %p51, %s52, %s53
      %p57 = pneg %p51
      %p58 = scmp.eq.s32.totalorder %s16, 1
      %p59 = por %p57, %p58
      %p60 = scmp.ne.s32.totalorder %s52, %s55
      %p61 = scmp.eq.s32.totalorder %s16, 0
      %p62 = por %p60, %p61
      %p63 = scmp.ne.s32.totalorder %s52, %s55
      %p64 = scmp.eq.s32.totalorder %s21, 1
      %p65 = por %p63, %p64
      %p66 = scmp.ne.s32.totalorder %s55, %s56
      %p67 = scmp.eq.s32.totalorder %s21, 0
      %p68 = por %p66, %p67
      %p69 = scmp.ne.s32.totalorder %s55, %s56
      %p70 = scmp.eq.s32.totalorder %s22, 1
      %p71 = por %p69, %p70
      %p73 = scmp.ne.s32.totalorder %s56, %s72
      %p74 = scmp.eq.s32.totalorder %s22, 0
      %p75 = por %p73, %p74
      %s77 = sadd.s32 %s76, 1
      %p80 = scmp.eq.s32.totalorder %s16, 1
      %p81 = scmp.ne.s32.totalorder %s76, %s78
      %p82 = scmp.eq.s32.totalorder %s16, 0
      %p83 = por %p81, %p82
      %p84 = scmp.ne.s32.totalorder %s76, %s78
      %p85 = scmp.eq.s32.totalorder %s21, 1
      %p86 = por %p84, %p85
      %p87 = scmp.ne.s32.totalorder %s78, %s79
      %p88 = scmp.eq.s32.totalorder %s21, 0
      %p89 = por %p87, %p88
      %p90 = scmp.ne.s32.totalorder %s78, %s79
      %p91 = scmp.eq.s32.totalorder %s22, 1
      %p92 = por %p90, %p91
      %p94 = scmp.ne.s32.totalorder %s79, %s93
      %p95 = scmp.eq.s32.totalorder %s22, 0
      %p96 = por %p94, %p95
      %s98 = sadd.s32 %s97, 1
      %p101 = scmp.eq.s32.totalorder %s16, 1
      %p102 = scmp.ne.s32.totalorder %s97, %s99
      %p103 = scmp.eq.s32.totalorder %s16, 0
      %p104 = por %p102, %p103
      %p105 = scmp.ne.s32.totalorder %s97, %s99
      %p106 = scmp.eq.s32.totalorder %s21, 1
      %p107 = por %p105, %p106
      %p108 = scmp.ne.s32.totalorder %s99, %s100
      %p109 = scmp.eq.s32.totalorder %s21, 0
      %p110 = por %p108, %p109
      %p111 = scmp.ne.s32.totalorder %s99, %s100
      %p112 = scmp.eq.s32.totalorder %s22, 1
      %p113 = por %p111, %p112
      %p115 = scmp.ne.s32.totalorder %s100, %s114
      %p116 = scmp.eq.s32.totalorder %s22, 0
      %p117 = por %p115, %p116
      %s119 = sadd.s32 %s118, 1
      %p122 = scmp.eq.s32.totalorder %s16, 1
      %p123 = scmp.ne.s32.totalorder %s118, %s120
      %p124 = scmp.eq.s32.totalorder %s16, 0
      %p125 = por %p123, %p124
      %p126 = scmp.ne.s32.totalorder %s118, %s120
      %p127 = scmp.eq.s32.totalorder %s21, 1
      %p128 = por %p126, %p127
      %p129 = scmp.ne.s32.totalorder %s120, %s121
      %p130 = scmp.eq.s32.totalorder %s21, 0
      %p131 = por %p129, %p130
      %p132 = scmp.ne.s32.totalorder %s120, %s121
      %p133 = scmp.eq.s32.totalorder %s22, 1
      %p134 = por %p132, %p133
      %p136 = scmp.ne.s32.totalorder %s121, %s135
      %p137 = scmp.eq.s32.totalorder %s22, 0
      %p138 = por %p136, %p137
      %s140 = sadd.s32 %s139, 1
      %p143 = scmp.eq.s32.totalorder %s16, 1
      %p144 = scmp.ne.s32.totalorder %s139, %s141
      %p145 = scmp.eq.s32.totalorder %s16, 0
      %p146 = por %p144, %p145
      %p147 = scmp.ne.s32.totalorder %s139, %s141
      %p148 = scmp.eq.s32.totalorder %s21, 1
      %p149 = por %p147, %p148
      %p150 = scmp.ne.s32.totalorder %s141, %s142
      %p151 = scmp.eq.s32.totalorder %s21, 0
      %p152 = por %p150, %p151
      %p153 = scmp.ne.s32.totalorder %s141, %s142
      %p154 = scmp.eq.s32.totalorder %s22, 1
      %p155 = por %p153, %p154
      %p157 = scmp.ne.s32.totalorder %s142, %s156
      %p158 = scmp.eq.s32.totalorder %s22, 0
      %p159 = por %p157, %p158
      %s161 = sadd.s32 %s160, 1
      %p164 = scmp.eq.s32.totalorder %s16, 1
      %p165 = scmp.ne.s32.totalorder %s160, %s162
      %p166 = scmp.eq.s32.totalorder %s16, 0
      %p167 = por %p165, %p166
      %p168 = scmp.ne.s32.totalorder %s160, %s162
      %p169 = scmp.eq.s32.totalorder %s21, 1
      %p170 = por %p168, %p169
      %p171 = scmp.ne.s32.totalorder %s162, %s163
      %p172 = scmp.eq.s32.totalorder %s21, 0
      %p173 = por %p171, %p172
      %p174 = scmp.ne.s32.totalorder %s162, %s163
      %p175 = scmp.eq.s32.totalorder %s22, 1
      %p176 = por %p174, %p175
      %p178 = scmp.ne.s32.totalorder %s163, %s177
      %p179 = scmp.eq.s32.totalorder %s22, 0
      %p180 = por %p178, %p179
      %s182 = sadd.s32 %s181, 1
      %p185 = scmp.eq.s32.totalorder %s16, 1
      %p186 = scmp.ne.s32.totalorder %s181, %s183
      %p187 = scmp.eq.s32.totalorder %s16, 0
      %p188 = por %p186, %p187
      %p189 = scmp.ne.s32.totalorder %s181, %s183
      %p190 = scmp.eq.s32.totalorder %s21, 1
      %p191 = por %p189, %p190
      %p192 = scmp.ne.s32.totalorder %s183, %s184
      %p193 = scmp.eq.s32.totalorder %s21, 0
      %p194 = por %p192, %p193
      %p195 = scmp.ne.s32.totalorder %s183, %s184
      %p196 = scmp.eq.s32.totalorder %s22, 1
      %p197 = por %p195, %p196
      %p199 = scmp.ne.s32.totalorder %s184, %s198
      %p200 = scmp.eq.s32.totalorder %s22, 0
      %p201 = por %p199, %p200
      %s202 = ssub.s32 %s16, %s23
      %p203 = scmp.eq.s32.totalorder %s202, 0
      %s205 = sadd.s32 %s204, 1
      %s206 = scalar_select %p203, %s204, %s205
      %p209 = pneg %p203
      %p210 = scmp.eq.s32.totalorder %s16, 1
      %p211 = por %p209, %p210
      %p212 = scmp.ne.s32.totalorder %s204, %s207
      %p213 = scmp.eq.s32.totalorder %s16, 0
      %p214 = por %p212, %p213
      %p215 = scmp.ne.s32.totalorder %s204, %s207
      %p216 = scmp.eq.s32.totalorder %s21, 1
      %p217 = por %p215, %p216
      %p218 = scmp.ne.s32.totalorder %s207, %s208
      %p219 = scmp.eq.s32.totalorder %s21, 0
      %p220 = por %p218, %p219
      %p221 = scmp.ne.s32.totalorder %s207, %s208
      %p222 = scmp.eq.s32.totalorder %s22, 1
      %p223 = por %p221, %p222
      %p225 = scmp.ne.s32.totalorder %s208, %s224
      %p226 = scmp.eq.s32.totalorder %s22, 0
      %p227 = por %p225, %p226
      %p228 = scmp.le.s32.totalorder 1, %s16
      %p229 = scmp.lt.s32.totalorder %s16, 3
      %p230 = pnand %p228, %p229
      %p231 = pneg %p230
      // Predicated region
      $region9: #{glse_pallas.33} parent=5 // pred_check
        _
      $region10: #{glse_pallas.33} parent=5 // pred_check_branch
        %233 = sbr.rel (%p230) target = $region12
      $region11: #{glse_pallas.33} parent=5 // pred_region
        %s234 = ssub.s32 %s16, 1
        // Predicated region
        $region13: #{glse_pallas.33} parent=11 // pred_check
          %p235 = pneg %p89
        $region14: #{glse_pallas.33} parent=11 // pred_check_branch
          %237 = sbr.rel (%p235) target = $region16
        $region15: #{glse_pallas.33} parent=11 // pred_region
          _
        $region16: #{glse_pallas.33} parent=11 // pred_fallthru
          _
        // Predicated region
        $region17: #{glse_pallas.33} parent=11 // pred_check
          %p238 = pneg %p110
        $region18: #{glse_pallas.33} parent=11 // pred_check_branch
          %240 = sbr.rel (%p238) target = $region20
        $region19: #{glse_pallas.33} parent=11 // pred_region
          %242 = vsyncadd [#allocation3], 0
          %s244 = sshll.u32 %s3, 4
          %s245 = int_to_ptr.hbm [resolvable:$true] %s244
          %s246 = sshll.u32 [#allocation2], 4
          %s247 = int_to_ptr.vmem [resolvable:$true] %s246
          %249 = dma.hbm_to_vmem [thread:$0]  %s245, 16, %s247, [#allocation3]
        $region20: #{glse_pallas.33} parent=11 // pred_fallthru
          _
        // Predicated region
        $region21: #{glse_pallas.33} parent=11 // pred_check
          %p250 = pneg %p131
        $region22: #{glse_pallas.33} parent=11 // pred_check_branch
          %252 = sbr.rel (%p250) target = $region24
        $region23: #{glse_pallas.33} parent=11 // pred_region
          _
        $region24: #{glse_pallas.33} parent=11 // pred_fallthru
          _
        // Predicated region
        $region25: #{glse_pallas.33} parent=11 // pred_check
          %p253 = pneg %p152
        $region26: #{glse_pallas.33} parent=11 // pred_check_branch
          %255 = sbr.rel (%p253) target = $region28
        $region27: #{glse_pallas.33} parent=11 // pred_region
          _
        $region28: #{glse_pallas.33} parent=11 // pred_fallthru
          _
        // Predicated region
        $region29: #{glse_pallas.33} parent=11 // pred_check
          %p256 = pneg %p173
        $region30: #{glse_pallas.33} parent=11 // pred_check_branch
          %258 = sbr.rel (%p256) target = $region32
        $region31: #{glse_pallas.33} parent=11 // pred_region
          _
        $region32: #{glse_pallas.33} parent=11 // pred_fallthru
          _
        // Predicated region
        $region33: #{glse_pallas.33} parent=11 // pred_check
          %p259 = pneg %p194
        $region34: #{glse_pallas.33} parent=11 // pred_check_branch
          %261 = sbr.rel (%p259) target = $region36
        $region35: #{glse_pallas.33} parent=11 // pred_region
          %263 = vsyncadd [#allocation5], 0
          %s265 = sshll.u32 %s7, 4
          %s266 = int_to_ptr.hbm [resolvable:$true] %s265
          %s267 = sshll.u32 [#allocation4], 4
          %s268 = int_to_ptr.vmem [resolvable:$true] %s267
          %270 = dma.hbm_to_vmem [thread:$0]  %s266, 16, %s268, [#allocation5]
        $region36: #{glse_pallas.33} parent=11 // pred_fallthru
          _
      $region12: #{glse_pallas.33} parent=5 // pred_fallthru
        _
      %p271 = scmp.lt.s32.totalorder %s16, 2
      // Predicated region
      $region37: #{glse_pallas.33} parent=5 // pred_check
        %p272 = pneg %p271
      $region38: #{glse_pallas.33} parent=5 // pred_check_branch
        %274 = sbr.rel (%p272) target = $region40
      $region39: #{glse_pallas.33} parent=5 // pred_region
        // Predicated region
        $region41: #{glse_pallas.33} parent=39 // pred_check
          %p275 = pneg %p36
        $region42: #{glse_pallas.33} parent=39 // pred_check_branch
          %277 = sbr.rel (%p275) target = $region44
        $region43: #{glse_pallas.33} parent=39 // pred_region
          %s278 = smul.u32 8, %s16
          %p279 = scmp.lt.s32.totalorder %s278, 15
          %s280 = scalar_select %p279, %s278, 15
          %s281 = smul.addr %s280, 4
          %s282 = scalar_lea.vmem %s0, %s281
          %s283 = smul.u32 8, %s16
        $region44: #{glse_pallas.33} parent=39 // pred_fallthru
          _
        // Predicated region
        $region45: #{glse_pallas.33} parent=39 // pred_check
          %p284 = pneg %p62
        $region46: #{glse_pallas.33} parent=39 // pred_check_branch
          %286 = sbr.rel (%p284) target = $region48
        $region47: #{glse_pallas.33} parent=39 // pred_region
          %s287 = smul.u32 8, %s16
          %p288 = scmp.lt.s32.totalorder %s287, 15
          %s289 = scalar_select %p288, %s287, 15
          %s290 = smul.addr %s289, 4
          %s291 = scalar_lea.vmem %s1, %s290
          %s292 = smul.u32 8, %s16
        $region48: #{glse_pallas.33} parent=39 // pred_fallthru
          _
      $region40: #{glse_pallas.33} parent=5 // pred_fallthru
        _
      %p293 = scmp.le.s32.totalorder 1, %s16
      %p294 = scmp.lt.s32.totalorder %s16, 3
      %p295 = pnand %p293, %p294
      %p296 = pneg %p295
      // Predicated region
      $region49: #{glse_pallas.33} parent=5 // pred_check
        _
      $region50: #{glse_pallas.33} parent=5 // pred_check_branch
        %298 = sbr.rel (%p295) target = $region52
      $region51: #{glse_pallas.33} parent=5 // pred_region
        %s299 = ssub.s32 %s16, 1
        // Predicated region
        $region53: #{glse_pallas.33} parent=51 // pred_check
          %p300 = pneg %p110
        $region54: #{glse_pallas.33} parent=51 // pred_check_branch
          %302 = sbr.rel (%p300) target = $region56
        $region55: #{glse_pallas.33} parent=51 // pred_region
          %304 = dma.done [#allocation3], 16
        $region56: #{glse_pallas.33} parent=51 // pred_fallthru
          _
        // Predicated region
        $region57: #{glse_pallas.33} parent=51 // pred_check
          %p305 = pneg %p194
        $region58: #{glse_pallas.33} parent=51 // pred_check_branch
          %307 = sbr.rel (%p305) target = $region60
        $region59: #{glse_pallas.33} parent=51 // pred_region
          %309 = dma.done [#allocation5], 16
        $region60: #{glse_pallas.33} parent=51 // pred_fallthru
          _
        %s310 = smul.u32 8, %s21
        %p311 = scmp.lt.s32.totalorder %s310, 15
        %s312 = scalar_select %p311, %s310, 15
        %s313 = smul.addr %s312, 4
        %s314 = scalar_lea.vmem %s0, %s313
        %p315 = pneg %p42
        %p316 = pneg %p39
        %s317 = smul.u32 8, %s21
        %p318 = scmp.lt.s32.totalorder %s317, 15
        %s319 = scalar_select %p318, %s317, 15
        %s320 = smul.addr %s319, 4
        %s321 = scalar_lea.vmem %s1, %s320
        %p322 = pneg %p68
        %p323 = pneg %p65
        %p324 = pneg %p89
        %p325 = pneg %p86
        %p326 = pneg %p110
        %p327 = pneg %p107
        %p328 = pneg %p131
        %p329 = pneg %p128
        %p330 = pneg %p152
        %p331 = pneg %p149
        %p332 = pneg %p173
        %p333 = pneg %p170
        %p334 = pneg %p194
        %p335 = pneg %p191
        %p336 = pneg %p220
        %p337 = pneg %p217
        %s338 = smul.u32 8, %s21
        %p339 = scmp.lt.s32.totalorder %s338, 15
        %s340 = scalar_select %p339, %s338, 15
        %s341 = smul.addr %s340, 4
        %s342 = scalar_lea.vmem %s8, %s341
        %s343 = smul.u32 8, %s21
        %p344 = scmp.lt.s32.totalorder %s343, 15
        %s345 = scalar_select %p344, %s343, 15
        %s346 = smul.addr %s345, 4
        %s347 = scalar_lea.vmem %s0, %s346
        %s348 = smul.u32 8, %s21
        %s349 = smul.u32 8, %s21
        %p350 = scmp.lt.s32.totalorder %s349, 15
        %s351 = scalar_select %p350, %s349, 15
        %s352 = smul.addr %s351, 4
        %s353 = scalar_lea.vmem %s1, %s352
        %s354 = smul.u32 8, %s21
        %s355 = smul.u32 8, %s21
        %p356 = scmp.lt.s32.totalorder %s355, 15
        %s357 = scalar_select %p356, %s355, 15
        %s358 = smul.addr %s357, 4
        %s359 = scalar_lea.vmem %s8, %s358
        %s360 = smul.u32 8, %s21
        %v362 = vld [vmem:[%s347] sm:$0xf]
        %v363 = vld [vmem:[%s347 + $0x4] sm:$0xf]
        %v364 = vld [vmem:[%s347 + $0x8] sm:$0xf]
        %v365 = vld [vmem:[%s347 + $0xc] sm:$0xf]
        %v366 = vld [vmem:[%s347 + $0x10] sm:$0xf]
        %v367 = vld [vmem:[%s347 + $0x14] sm:$0xf]
        %v368 = vld [vmem:[%s347 + $0x18] sm:$0xf]
        %v369 = vld [vmem:[%s347 + $0x1c] sm:$0xf]
        %v370 = vunpack.c.l.bf16 %v362
        %v371 = vunpack.c.l.bf16 %v363
        %v372 = vunpack.c.l.bf16 %v364
        %v373 = vunpack.c.l.bf16 %v365
        %v374 = vunpack.c.l.bf16 %v366
        %v375 = vunpack.c.l.bf16 %v367
        %v376 = vunpack.c.l.bf16 %v368
        %v377 = vunpack.c.l.bf16 %v369
        %v378 = vld [vmem:[%s2] sm:$0x1]
        %v379 = vld [vmem:[#allocation2] sm:$0x1]
        %vm380 = vcmask 523264
        %v381 = vsel %vm380, %v370, 0.0
        %382 = vadd.xlane.f32.xlu0 %v381
        %v383 = vpop.xlane.xlu0 %382
        %v384 = vsel %vm380, %v371, 0.0
        %385 = vadd.xlane.f32.xlu0 %v384
        %v386 = vpop.xlane.xlu0 %385
        %v387 = vsel %vm380, %v372, 0.0
        %388 = vadd.xlane.f32.xlu0 %v387
        %v389 = vpop.xlane.xlu0 %388
        %v390 = vsel %vm380, %v373, 0.0
        %391 = vadd.xlane.f32.xlu0 %v390
        %v392 = vpop.xlane.xlu0 %391
        %v393 = vsel %vm380, %v374, 0.0
        %394 = vadd.xlane.f32.xlu0 %v393
        %v395 = vpop.xlane.xlu0 %394
        %v396 = vsel %vm380, %v375, 0.0
        %397 = vadd.xlane.f32.xlu0 %v396
        %v398 = vpop.xlane.xlu0 %397
        %v399 = vsel %vm380, %v376, 0.0
        %400 = vadd.xlane.f32.xlu0 %v399
        %v401 = vpop.xlane.xlu0 %400
        %v402 = vsel %vm380, %v377, 0.0
        %403 = vadd.xlane.f32.xlu0 %v402
        %v404 = vpop.xlane.xlu0 %403
        %v405 = vrcp.pop 64.0
        %v406 = vmul.f32 64.0, %v405
        %v407 = vsub.f32 1.0, %v406
        %v408 = vmul.f32 %v405, %v407
        %v409 = vadd.f32 %v405, %v408
        %vm410 = vweird.f32 %v405
        %v411 = vsel %vm410, %v405, %v409
        %v412 = vmul.f32 %v383, %v411
        %v413 = vmul.f32 %v386, %v411
        %v414 = vmul.f32 %v389, %v411
        %v415 = vmul.f32 %v392, %v411
        %v416 = vmul.f32 %v395, %v411
        %v417 = vmul.f32 %v398, %v411
        %v418 = vmul.f32 %v401, %v411
        %v419 = vmul.f32 %v404, %v411
        %v420 = vsub.f32 %v370, %v412
        %v421 = vsub.f32 %v371, %v413
        %v422 = vsub.f32 %v372, %v414
        %v423 = vsub.f32 %v373, %v415
        %v424 = vsub.f32 %v374, %v416
        %v425 = vsub.f32 %v375, %v417
        %v426 = vsub.f32 %v376, %v418
        %v427 = vsub.f32 %v377, %v419
        %v428 = vmul.f32 %v420, %v420
        %v429 = vmul.f32 %v421, %v421
        %v430 = vmul.f32 %v422, %v422
        %v431 = vmul.f32 %v423, %v423
        %v432 = vmul.f32 %v424, %v424
        %v433 = vmul.f32 %v425, %v425
        %v434 = vmul.f32 %v426, %v426
        %v435 = vmul.f32 %v427, %v427
        %v436 = vsel %vm380, %v428, 0.0
        %437 = vadd.xlane.f32.xlu0 %v436
        %v438 = vpop.xlane.xlu0 %437
        %v439 = vsel %vm380, %v429, 0.0
        %440 = vadd.xlane.f32.xlu0 %v439
        %v441 = vpop.xlane.xlu0 %440
        %v442 = vsel %vm380, %v430, 0.0
        %443 = vadd.xlane.f32.xlu0 %v442
        %v444 = vpop.xlane.xlu0 %443
        %v445 = vsel %vm380, %v431, 0.0
        %446 = vadd.xlane.f32.xlu0 %v445
        %v447 = vpop.xlane.xlu0 %446
        %v448 = vsel %vm380, %v432, 0.0
        %449 = vadd.xlane.f32.xlu0 %v448
        %v450 = vpop.xlane.xlu0 %449
        %v451 = vsel %vm380, %v433, 0.0
        %452 = vadd.xlane.f32.xlu0 %v451
        %v453 = vpop.xlane.xlu0 %452
        %v454 = vsel %vm380, %v434, 0.0
        %455 = vadd.xlane.f32.xlu0 %v454
        %v456 = vpop.xlane.xlu0 %455
        %v457 = vsel %vm380, %v435, 0.0
        %458 = vadd.xlane.f32.xlu0 %v457
        %v459 = vpop.xlane.xlu0 %458
        %v460 = vmul.f32 %v438, %v411
        %v461 = vmul.f32 %v441, %v411
        %v462 = vmul.f32 %v444, %v411
        %v463 = vmul.f32 %v447, %v411
        %v464 = vmul.f32 %v450, %v411
        %v465 = vmul.f32 %v453, %v411
        %v466 = vmul.f32 %v456, %v411
        %v467 = vmul.f32 %v459, %v411
        %v468 = vadd.f32 %v460, 1e-05
        %v469 = vadd.f32 %v461, 1e-05
        %v470 = vadd.f32 %v462, 1e-05
        %v471 = vadd.f32 %v463, 1e-05
        %v472 = vadd.f32 %v464, 1e-05
        %v473 = vadd.f32 %v465, 1e-05
        %v474 = vadd.f32 %v466, 1e-05
        %v475 = vadd.f32 %v467, 1e-05
        %v476 = vrsqrt.pop %v468
        %v477 = vmul.f32 %v476, %v468
        %v478 = vmul.f32 %v477, %v476
        %v479 = vmul.f32 0.5, %v478
        %v480 = vsub.f32 1.5, %v479
        %v481 = vmul.f32 %v476, %v480
        %vm482 = vweird.f32 %v468
        %vm483 = vweird.f32 %v476
        %vm484 = vmor %vm482, %vm483
        %v485 = vsel %vm484, %v476, %v481
        %v486 = vrsqrt.pop %v469
        %v487 = vmul.f32 %v486, %v469
        %v488 = vmul.f32 %v487, %v486
        %v489 = vmul.f32 0.5, %v488
        %v490 = vsub.f32 1.5, %v489
        %v491 = vmul.f32 %v486, %v490
        %vm492 = vweird.f32 %v469
        %vm493 = vweird.f32 %v486
        %vm494 = vmor %vm492, %vm493
        %v495 = vsel %vm494, %v486, %v491
        %v496 = vrsqrt.pop %v470
        %v497 = vmul.f32 %v496, %v470
        %v498 = vmul.f32 %v497, %v496
        %v499 = vmul.f32 0.5, %v498
        %v500 = vsub.f32 1.5, %v499
        %v501 = vmul.f32 %v496, %v500
        %vm502 = vweird.f32 %v470
        %vm503 = vweird.f32 %v496
        %vm504 = vmor %vm502, %vm503
        %v505 = vsel %vm504, %v496, %v501
        %v506 = vrsqrt.pop %v471
        %v507 = vmul.f32 %v506, %v471
        %v508 = vmul.f32 %v507, %v506
        %v509 = vmul.f32 0.5, %v508
        %v510 = vsub.f32 1.5, %v509
        %v511 = vmul.f32 %v506, %v510
        %vm512 = vweird.f32 %v471
        %vm513 = vweird.f32 %v506
        %vm514 = vmor %vm512, %vm513
        %v515 = vsel %vm514, %v506, %v511
        %v516 = vrsqrt.pop %v472
        %v517 = vmul.f32 %v516, %v472
        %v518 = vmul.f32 %v517, %v516
        %v519 = vmul.f32 0.5, %v518
        %v520 = vsub.f32 1.5, %v519
        %v521 = vmul.f32 %v516, %v520
        %vm522 = vweird.f32 %v472
        %vm523 = vweird.f32 %v516
        %vm524 = vmor %vm522, %vm523
        %v525 = vsel %vm524, %v516, %v521
        %v526 = vrsqrt.pop %v473
        %v527 = vmul.f32 %v526, %v473
        %v528 = vmul.f32 %v527, %v526
        %v529 = vmul.f32 0.5, %v528
        %v530 = vsub.f32 1.5, %v529
        %v531 = vmul.f32 %v526, %v530
        %vm532 = vweird.f32 %v473
        %vm533 = vweird.f32 %v526
        %vm534 = vmor %vm532, %vm533
        %v535 = vsel %vm534, %v526, %v531
        %v536 = vrsqrt.pop %v474
        %v537 = vmul.f32 %v536, %v474
        %v538 = vmul.f32 %v537, %v536
        %v539 = vmul.f32 0.5, %v538
        %v540 = vsub.f32 1.5, %v539
        %v541 = vmul.f32 %v536, %v540
        %vm542 = vweird.f32 %v474
        %vm543 = vweird.f32 %v536
        %vm544 = vmor %vm542, %vm543
        %v545 = vsel %vm544, %v536, %v541
        %v546 = vrsqrt.pop %v475
        %v547 = vmul.f32 %v546, %v475
        %v548 = vmul.f32 %v547, %v546
        %v549 = vmul.f32 0.5, %v548
        %v550 = vsub.f32 1.5, %v549
        %v551 = vmul.f32 %v546, %v550
        %vm552 = vweird.f32 %v475
        %vm553 = vweird.f32 %v546
        %vm554 = vmor %vm552, %vm553
        %v555 = vsel %vm554, %v546, %v551
        %v556 = vmul.f32 %v420, %v485
        %v557 = vmul.f32 %v421, %v495
        %v558 = vmul.f32 %v422, %v505
        %v559 = vmul.f32 %v423, %v515
        %v560 = vmul.f32 %v424, %v525
        %v561 = vmul.f32 %v425, %v535
        %v562 = vmul.f32 %v426, %v545
        %v563 = vmul.f32 %v427, %v555
        %v565 = vperm.slane %v378, 0
        %v567 = vmul.f32 %v556, %v565
        %v568 = vmul.f32 %v557, %v565
        %v569 = vmul.f32 %v558, %v565
        %v570 = vmul.f32 %v559, %v565
        %v571 = vmul.f32 %v560, %v565
        %v572 = vmul.f32 %v561, %v565
        %v573 = vmul.f32 %v562, %v565
        %v574 = vmul.f32 %v563, %v565
        %v576 = vperm.slane %v379, 0
        %v578 = vadd.f32 %v567, %v576
        %v579 = vadd.f32 %v568, %v576
        %v580 = vadd.f32 %v569, %v576
        %v581 = vadd.f32 %v570, %v576
        %v582 = vadd.f32 %v571, %v576
        %v583 = vadd.f32 %v572, %v576
        %v584 = vadd.f32 %v573, %v576
        %v585 = vadd.f32 %v574, %v576
        %v586 = vpack.c.bf16 %v579, %v578
        %v587 = vpack.c.bf16 %v581, %v580
        %v588 = vpack.c.bf16 %v583, %v582
        %v589 = vpack.c.bf16 %v585, %v584
        %v590 = vld [vmem:[%s4] sm:$0xff]
        %v591 = vld [vmem:[%s4 + $0x8] sm:$0xff]
        %v592 = vld [vmem:[%s4 + $0x10] sm:$0xff]
        %v593 = vld [vmem:[%s4 + $0x18] sm:$0xff]
        %v594 = vld [vmem:[%s4 + $0x20] sm:$0xff]
        %v595 = vld [vmem:[%s4 + $0x28] sm:$0xff]
        %v596 = vld [vmem:[%s4 + $0x30] sm:$0xff]
        %v597 = vld [vmem:[%s4 + $0x38] sm:$0xff]
        %v598 = vld [vmem:[%s5] sm:$0x3]
        %v600 = vperm.slane %v598, 0
        %v601 = vperm.slane %v598, 1
        %v612 = vunpack.c.l.b16 %v590
        %v613 = vunpack.c.h.b16 %v590
        %v614 = vunpack.c.l.b16 %v591
        %v615 = vunpack.c.h.b16 %v591
        %v616 = vunpack.c.l.b16 %v592
        %v617 = vunpack.c.h.b16 %v592
        %v618 = vunpack.c.l.b16 %v593
        %v619 = vunpack.c.h.b16 %v593
        %v620 = vunpack.c.l.b16 %v594
        %v621 = vunpack.c.h.b16 %v594
        %v622 = vunpack.c.l.b16 %v595
        %v623 = vunpack.c.h.b16 %v595
        %v624 = vunpack.c.l.b16 %v596
        %v625 = vunpack.c.h.b16 %v596
        %v626 = vunpack.c.l.b16 %v597
        %v627 = vunpack.c.h.b16 %v597
        %v628 = vpack.c.b16 %v614, %v612
        %v629 = vpack.c.b16 %v615, %v613
        %v630 = vpack.c.b16 %v618, %v616
        %v631 = vpack.c.b16 %v619, %v617
        %v632 = vpack.c.b16 %v622, %v620
        %v633 = vpack.c.b16 %v623, %v621
        %v634 = vpack.c.b16 %v626, %v624
        %v635 = vpack.c.b16 %v627, %v625
        %v645 = vsel %vm380, %v586, 0
        %v648 = vsel %vm380, %v587, 0
        %v651 = vsel %vm380, %v588, 0
        %v654 = vsel %vm380, %v589, 0
        %656 = vmatpush.bf16.msra.mxu0 0
        %657 = vmatpush.bf16.msra.mxu0 0
        %658 = vmatpush.bf16.msra.mxu0 0
        %659 = vmatpush.bf16.msra.mxu0 0
        %660 = vmatpush.bf16.msra.mxu0 %v634
        %661 = vmatpush.bf16.msra.mxu0 %v632
        %662 = vmatpush.bf16.msra.mxu0 %v630
        %663 = vmatpush.bf16.msra.mxu0 %v628
        %664 = vmatmul.bf16.gmra.mxu0 %v645
        %v665 = vpop.f32.mrf.mxu0
        %v666 = vadd.f32 %v600, %v665
        %v667 = vpop.f32.mrf.mxu0
        %v668 = vadd.f32 %v600, %v667
        %669 = vmatmul.bf16.gmra.mxu0 %v648
        %v670 = vpop.f32.mrf.mxu0
        %v671 = vadd.f32 %v600, %v670
        %v672 = vpop.f32.mrf.mxu0
        %v673 = vadd.f32 %v600, %v672
        %674 = vmatmul.bf16.gmra.mxu0 %v651
        %v675 = vpop.f32.mrf.mxu0
        %v676 = vadd.f32 %v600, %v675
        %v677 = vpop.f32.mrf.mxu0
        %v678 = vadd.f32 %v600, %v677
        %679 = vmatmul.bf16.gmra.mxu0 %v654
        %v680 = vpop.f32.mrf.mxu0
        %v681 = vadd.f32 %v600, %v680
        %v682 = vpop.f32.mrf.mxu0
        %v683 = vadd.f32 %v600, %v682
        %684 = vdwg.mxu0
        %685 = vmatpush.bf16.msra.mxu0 0
        %686 = vmatpush.bf16.msra.mxu0 0
        %687 = vmatpush.bf16.msra.mxu0 0
        %688 = vmatpush.bf16.msra.mxu0 0
        %689 = vmatpush.bf16.msra.mxu0 %v635
        %690 = vmatpush.bf16.msra.mxu0 %v633
        %691 = vmatpush.bf16.msra.mxu0 %v631
        %692 = vmatpush.bf16.msra.mxu0 %v629
        %693 = vmatmul.bf16.gmra.mxu0 %v645
        %v694 = vpop.f32.mrf.mxu0
        %v695 = vadd.f32 %v601, %v694
        %v696 = vpop.f32.mrf.mxu0
        %v697 = vadd.f32 %v601, %v696
        %698 = vmatmul.bf16.gmra.mxu0 %v648
        %v699 = vpop.f32.mrf.mxu0
        %v700 = vadd.f32 %v601, %v699
        %v701 = vpop.f32.mrf.mxu0
        %v702 = vadd.f32 %v601, %v701
        %703 = vmatmul.bf16.gmra.mxu0 %v651
        %v704 = vpop.f32.mrf.mxu0
        %v705 = vadd.f32 %v601, %v704
        %v706 = vpop.f32.mrf.mxu0
        %v707 = vadd.f32 %v601, %v706
        %708 = vmatmul.bf16.gmra.mxu0 %v654
        %v709 = vpop.f32.mrf.mxu0
        %v710 = vadd.f32 %v601, %v709
        %v711 = vpop.f32.mrf.mxu0
        %v712 = vadd.f32 %v601, %v711
        %713 = vdwg.mxu0
        %v714 = vmul.f32 %v666, 0.5
        %v715 = vmul.f32 %v695, 0.5
        %v716 = vmul.f32 %v668, 0.5
        %v717 = vmul.f32 %v697, 0.5
        %v718 = vmul.f32 %v671, 0.5
        %v719 = vmul.f32 %v700, 0.5
        %v720 = vmul.f32 %v673, 0.5
        %v721 = vmul.f32 %v702, 0.5
        %v722 = vmul.f32 %v676, 0.5
        %v723 = vmul.f32 %v705, 0.5
        %v724 = vmul.f32 %v678, 0.5
        %v725 = vmul.f32 %v707, 0.5
        %v726 = vmul.f32 %v681, 0.5
        %v727 = vmul.f32 %v710, 0.5
        %v728 = vmul.f32 %v683, 0.5
        %v729 = vmul.f32 %v712, 0.5
        %v730 = vmul.f32 %v666, 0.70710677
        %v731 = vmul.f32 %v695, 0.70710677
        %v732 = vmul.f32 %v668, 0.70710677
        %v733 = vmul.f32 %v697, 0.70710677
        %v734 = vmul.f32 %v671, 0.70710677
        %v735 = vmul.f32 %v700, 0.70710677
        %v736 = vmul.f32 %v673, 0.70710677
        %v737 = vmul.f32 %v702, 0.70710677
        %v738 = vmul.f32 %v676, 0.70710677
        %v739 = vmul.f32 %v705, 0.70710677
        %v740 = vmul.f32 %v678, 0.70710677
        %v741 = vmul.f32 %v707, 0.70710677
        %v742 = vmul.f32 %v681, 0.70710677
        %v743 = vmul.f32 %v710, 0.70710677
        %v744 = vmul.f32 %v683, 0.70710677
        %v745 = vmul.f32 %v712, 0.70710677
        %v746 = vand.u32 2147483647, %v730
        %v747 = vand.u32 2147483647, %v731
        %v748 = vand.u32 2147483647, %v732
        %v749 = vand.u32 2147483647, %v733
        %v750 = vand.u32 2147483647, %v734
        %v751 = vand.u32 2147483647, %v735
        %v752 = vand.u32 2147483647, %v736
        %v753 = vand.u32 2147483647, %v737
        %v754 = vand.u32 2147483647, %v738
        %v755 = vand.u32 2147483647, %v739
        %v756 = vand.u32 2147483647, %v740
        %v757 = vand.u32 2147483647, %v741
        %v758 = vand.u32 2147483647, %v742
        %v759 = vand.u32 2147483647, %v743
        %v760 = vand.u32 2147483647, %v744
        %v761 = vand.u32 2147483647, %v745
        %v762 = vmul.f32 %v746, 0.3275911
        %v763 = vmul.f32 %v747, 0.3275911
        %v764 = vmul.f32 %v748, 0.3275911
        %v765 = vmul.f32 %v749, 0.3275911
        %v766 = vmul.f32 %v750, 0.3275911
        %v767 = vmul.f32 %v751, 0.3275911
        %v768 = vmul.f32 %v752, 0.3275911
        %v769 = vmul.f32 %v753, 0.3275911
        %v770 = vmul.f32 %v754, 0.3275911
        %v771 = vmul.f32 %v755, 0.3275911
        %v772 = vmul.f32 %v756, 0.3275911
        %v773 = vmul.f32 %v757, 0.3275911
        %v774 = vmul.f32 %v758, 0.3275911
        %v775 = vmul.f32 %v759, 0.3275911
        %v776 = vmul.f32 %v760, 0.3275911
        %v777 = vmul.f32 %v761, 0.3275911
        %v778 = vadd.f32 %v762, 1.0
        %v779 = vadd.f32 %v763, 1.0
        %v780 = vadd.f32 %v764, 1.0
        %v781 = vadd.f32 %v765, 1.0
        %v782 = vadd.f32 %v766, 1.0
        %v783 = vadd.f32 %v767, 1.0
        %v784 = vadd.f32 %v768, 1.0
        %v785 = vadd.f32 %v769, 1.0
        %v786 = vadd.f32 %v770, 1.0
        %v787 = vadd.f32 %v771, 1.0
        %v788 = vadd.f32 %v772, 1.0
        %v789 = vadd.f32 %v773, 1.0
        %v790 = vadd.f32 %v774, 1.0
        %v791 = vadd.f32 %v775, 1.0
        %v792 = vadd.f32 %v776, 1.0
        %v793 = vadd.f32 %v777, 1.0
        %v794 = vrcp.pop %v778
        %v795 = vmul.f32 %v778, %v794
        %v796 = vsub.f32 1.0, %v795
        %v797 = vmul.f32 %v794, %v796
        %v798 = vadd.f32 %v794, %v797
        %vm799 = vweird.f32 %v778
        %vm800 = vweird.f32 %v794
        %vm801 = vmor %vm799, %vm800
        %v802 = vsel %vm801, %v794, %v798
        %v803 = vand.u32 2147483647, %v778
        %vm804 = vcmp.eq.f32.partialorder %v803, 8.507059e+37
        %v805 = vand.u32 %v778, 2147483648
        %v806 = vor.u32 1.1754944e-38, %v805
        %v807 = vsel %vm804, %v806, %v802
        %v808 = vmul.f32 1.0, %v807
        %v809 = vrcp.pop %v779
        %v810 = vmul.f32 %v779, %v809
        %v811 = vsub.f32 1.0, %v810
        %v812 = vmul.f32 %v809, %v811
        %v813 = vadd.f32 %v809, %v812
        %vm814 = vweird.f32 %v779
        %vm815 = vweird.f32 %v809
        %vm816 = vmor %vm814, %vm815
        %v817 = vsel %vm816, %v809, %v813
        %v818 = vand.u32 2147483647, %v779
        %vm819 = vcmp.eq.f32.partialorder %v818, 8.507059e+37
        %v820 = vand.u32 %v779, 2147483648
        %v821 = vor.u32 1.1754944e-38, %v820
        %v822 = vsel %vm819, %v821, %v817
        %v823 = vmul.f32 1.0, %v822
        %v824 = vrcp.pop %v780
        %v825 = vmul.f32 %v780, %v824
        %v826 = vsub.f32 1.0, %v825
        %v827 = vmul.f32 %v824, %v826
        %v828 = vadd.f32 %v824, %v827
        %vm829 = vweird.f32 %v780
        %vm830 = vweird.f32 %v824
        %vm831 = vmor %vm829, %vm830
        %v832 = vsel %vm831, %v824, %v828
        %v833 = vand.u32 2147483647, %v780
        %vm834 = vcmp.eq.f32.partialorder %v833, 8.507059e+37
        %v835 = vand.u32 %v780, 2147483648
        %v836 = vor.u32 1.1754944e-38, %v835
        %v837 = vsel %vm834, %v836, %v832
        %v838 = vmul.f32 1.0, %v837
        %v839 = vrcp.pop %v781
        %v840 = vmul.f32 %v781, %v839
        %v841 = vsub.f32 1.0, %v840
        %v842 = vmul.f32 %v839, %v841
        %v843 = vadd.f32 %v839, %v842
        %vm844 = vweird.f32 %v781
        %vm845 = vweird.f32 %v839
        %vm846 = vmor %vm844, %vm845
        %v847 = vsel %vm846, %v839, %v843
        %v848 = vand.u32 2147483647, %v781
        %vm849 = vcmp.eq.f32.partialorder %v848, 8.507059e+37
        %v850 = vand.u32 %v781, 2147483648
        %v851 = vor.u32 1.1754944e-38, %v850
        %v852 = vsel %vm849, %v851, %v847
        %v853 = vmul.f32 1.0, %v852
        %v854 = vrcp.pop %v782
        %v855 = vmul.f32 %v782, %v854
        %v856 = vsub.f32 1.0, %v855
        %v857 = vmul.f32 %v854, %v856
        %v858 = vadd.f32 %v854, %v857
        %vm859 = vweird.f32 %v782
        %vm860 = vweird.f32 %v854
        %vm861 = vmor %vm859, %vm860
        %v862 = vsel %vm861, %v854, %v858
        %v863 = vand.u32 2147483647, %v782
        %vm864 = vcmp.eq.f32.partialorder %v863, 8.507059e+37
        %v865 = vand.u32 %v782, 2147483648
        %v866 = vor.u32 1.1754944e-38, %v865
        %v867 = vsel %vm864, %v866, %v862
        %v868 = vmul.f32 1.0, %v867
        %v869 = vrcp.pop %v783
        %v870 = vmul.f32 %v783, %v869
        %v871 = vsub.f32 1.0, %v870
        %v872 = vmul.f32 %v869, %v871
        %v873 = vadd.f32 %v869, %v872
        %vm874 = vweird.f32 %v783
        %vm875 = vweird.f32 %v869
        %vm876 = vmor %vm874, %vm875
        %v877 = vsel %vm876, %v869, %v873
        %v878 = vand.u32 2147483647, %v783
        %vm879 = vcmp.eq.f32.partialorder %v878, 8.507059e+37
        %v880 = vand.u32 %v783, 2147483648
        %v881 = vor.u32 1.1754944e-38, %v880
        %v882 = vsel %vm879, %v881, %v877
        %v883 = vmul.f32 1.0, %v882
        %v884 = vrcp.pop %v784
        %v885 = vmul.f32 %v784, %v884
        %v886 = vsub.f32 1.0, %v885
        %v887 = vmul.f32 %v884, %v886
        %v888 = vadd.f32 %v884, %v887
        %vm889 = vweird.f32 %v784
        %vm890 = vweird.f32 %v884
        %vm891 = vmor %vm889, %vm890
        %v892 = vsel %vm891, %v884, %v888
        %v893 = vand.u32 2147483647, %v784
        %vm894 = vcmp.eq.f32.partialorder %v893, 8.507059e+37
        %v895 = vand.u32 %v784, 2147483648
        %v896 = vor.u32 1.1754944e-38, %v895
        %v897 = vsel %vm894, %v896, %v892
        %v898 = vmul.f32 1.0, %v897
        %v899 = vrcp.pop %v785
        %v900 = vmul.f32 %v785, %v899
        %v901 = vsub.f32 1.0, %v900
        %v902 = vmul.f32 %v899, %v901
        %v903 = vadd.f32 %v899, %v902
        %vm904 = vweird.f32 %v785
        %vm905 = vweird.f32 %v899
        %vm906 = vmor %vm904, %vm905
        %v907 = vsel %vm906, %v899, %v903
        %v908 = vand.u32 2147483647, %v785
        %vm909 = vcmp.eq.f32.partialorder %v908, 8.507059e+37
        %v910 = vand.u32 %v785, 2147483648
        %v911 = vor.u32 1.1754944e-38, %v910
        %v912 = vsel %vm909, %v911, %v907
        %v913 = vmul.f32 1.0, %v912
        %v914 = vrcp.pop %v786
        %v915 = vmul.f32 %v786, %v914
        %v916 = vsub.f32 1.0, %v915
        %v917 = vmul.f32 %v914, %v916
        %v918 = vadd.f32 %v914, %v917
        %vm919 = vweird.f32 %v786
        %vm920 = vweird.f32 %v914
        %vm921 = vmor %vm919, %vm920
        %v922 = vsel %vm921, %v914, %v918
        %v923 = vand.u32 2147483647, %v786
        %vm924 = vcmp.eq.f32.partialorder %v923, 8.507059e+37
        %v925 = vand.u32 %v786, 2147483648
        %v926 = vor.u32 1.1754944e-38, %v925
        %v927 = vsel %vm924, %v926, %v922
        %v928 = vmul.f32 1.0, %v927
        %v929 = vrcp.pop %v787
        %v930 = vmul.f32 %v787, %v929
        %v931 = vsub.f32 1.0, %v930
        %v932 = vmul.f32 %v929, %v931
        %v933 = vadd.f32 %v929, %v932
        %vm934 = vweird.f32 %v787
        %vm935 = vweird.f32 %v929
        %vm936 = vmor %vm934, %vm935
        %v937 = vsel %vm936, %v929, %v933
        %v938 = vand.u32 2147483647, %v787
        %vm939 = vcmp.eq.f32.partialorder %v938, 8.507059e+37
        %v940 = vand.u32 %v787, 2147483648
        %v941 = vor.u32 1.1754944e-38, %v940
        %v942 = vsel %vm939, %v941, %v937
        %v943 = vmul.f32 1.0, %v942
        %v944 = vrcp.pop %v788
        %v945 = vmul.f32 %v788, %v944
        %v946 = vsub.f32 1.0, %v945
        %v947 = vmul.f32 %v944, %v946
        %v948 = vadd.f32 %v944, %v947
        %vm949 = vweird.f32 %v788
        %vm950 = vweird.f32 %v944
        %vm951 = vmor %vm949, %vm950
        %v952 = vsel %vm951, %v944, %v948
        %v953 = vand.u32 2147483647, %v788
        %vm954 = vcmp.eq.f32.partialorder %v953, 8.507059e+37
        %v955 = vand.u32 %v788, 2147483648
        %v956 = vor.u32 1.1754944e-38, %v955
        %v957 = vsel %vm954, %v956, %v952
        %v958 = vmul.f32 1.0, %v957
        %v959 = vrcp.pop %v789
        %v960 = vmul.f32 %v789, %v959
        %v961 = vsub.f32 1.0, %v960
        %v962 = vmul.f32 %v959, %v961
        %v963 = vadd.f32 %v959, %v962
        %vm964 = vweird.f32 %v789
        %vm965 = vweird.f32 %v959
        %vm966 = vmor %vm964, %vm965
        %v967 = vsel %vm966, %v959, %v963
        %v968 = vand.u32 2147483647, %v789
        %vm969 = vcmp.eq.f32.partialorder %v968, 8.507059e+37
        %v970 = vand.u32 %v789, 2147483648
        %v971 = vor.u32 1.1754944e-38, %v970
        %v972 = vsel %vm969, %v971, %v967
        %v973 = vmul.f32 1.0, %v972
        %v974 = vrcp.pop %v790
        %v975 = vmul.f32 %v790, %v974
        %v976 = vsub.f32 1.0, %v975
        %v977 = vmul.f32 %v974, %v976
        %v978 = vadd.f32 %v974, %v977
        %vm979 = vweird.f32 %v790
        %vm980 = vweird.f32 %v974
        %vm981 = vmor %vm979, %vm980
        %v982 = vsel %vm981, %v974, %v978
        %v983 = vand.u32 2147483647, %v790
        %vm984 = vcmp.eq.f32.partialorder %v983, 8.507059e+37
        %v985 = vand.u32 %v790, 2147483648
        %v986 = vor.u32 1.1754944e-38, %v985
        %v987 = vsel %vm984, %v986, %v982
        %v988 = vmul.f32 1.0, %v987
        %v989 = vrcp.pop %v791
        %v990 = vmul.f32 %v791, %v989
        %v991 = vsub.f32 1.0, %v990
        %v992 = vmul.f32 %v989, %v991
        %v993 = vadd.f32 %v989, %v992
        %vm994 = vweird.f32 %v791
        %vm995 = vweird.f32 %v989
        %vm996 = vmor %vm994, %vm995
        %v997 = vsel %vm996, %v989, %v993
        %v998 = vand.u32 2147483647, %v791
        %vm999 = vcmp.eq.f32.partialorder %v998, 8.507059e+37
        %v1000 = vand.u32 %v791, 2147483648
        %v1001 = vor.u32 1.1754944e-38, %v1000
        %v1002 = vsel %vm999, %v1001, %v997
        %v1003 = vmul.f32 1.0, %v1002
        %v1004 = vrcp.pop %v792
        %v1005 = vmul.f32 %v792, %v1004
        %v1006 = vsub.f32 1.0, %v1005
        %v1007 = vmul.f32 %v1004, %v1006
        %v1008 = vadd.f32 %v1004, %v1007
        %vm1009 = vweird.f32 %v792
        %vm1010 = vweird.f32 %v1004
        %vm1011 = vmor %vm1009, %vm1010
        %v1012 = vsel %vm1011, %v1004, %v1008
        %v1013 = vand.u32 2147483647, %v792
        %vm1014 = vcmp.eq.f32.partialorder %v1013, 8.507059e+37
        %v1015 = vand.u32 %v792, 2147483648
        %v1016 = vor.u32 1.1754944e-38, %v1015
        %v1017 = vsel %vm1014, %v1016, %v1012
        %v1018 = vmul.f32 1.0, %v1017
        %v1019 = vrcp.pop %v793
        %v1020 = vmul.f32 %v793, %v1019
        %v1021 = vsub.f32 1.0, %v1020
        %v1022 = vmul.f32 %v1019, %v1021
        %v1023 = vadd.f32 %v1019, %v1022
        %vm1024 = vweird.f32 %v793
        %vm1025 = vweird.f32 %v1019
        %vm1026 = vmor %vm1024, %vm1025
        %v1027 = vsel %vm1026, %v1019, %v1023
        %v1028 = vand.u32 2147483647, %v793
        %vm1029 = vcmp.eq.f32.partialorder %v1028, 8.507059e+37
        %v1030 = vand.u32 %v793, 2147483648
        %v1031 = vor.u32 1.1754944e-38, %v1030
        %v1032 = vsel %vm1029, %v1031, %v1027
        %v1033 = vmul.f32 1.0, %v1032
        %v1034 = vmul.f32 %v808, 1.0614054
        %v1035 = vmul.f32 %v823, 1.0614054
        %v1036 = vmul.f32 %v838, 1.0614054
        %v1037 = vmul.f32 %v853, 1.0614054
        %v1038 = vmul.f32 %v868, 1.0614054
        %v1039 = vmul.f32 %v883, 1.0614054
        %v1040 = vmul.f32 %v898, 1.0614054
        %v1041 = vmul.f32 %v913, 1.0614054
        %v1042 = vmul.f32 %v928, 1.0614054
        %v1043 = vmul.f32 %v943, 1.0614054
        %v1044 = vmul.f32 %v958, 1.0614054
        %v1045 = vmul.f32 %v973, 1.0614054
        %v1046 = vmul.f32 %v988, 1.0614054
        %v1047 = vmul.f32 %v1003, 1.0614054
        %v1048 = vmul.f32 %v1018, 1.0614054
        %v1049 = vmul.f32 %v1033, 1.0614054
        %v1050 = vadd.f32 %v1034, -1.4531521
        %v1051 = vadd.f32 %v1035, -1.4531521
        %v1052 = vadd.f32 %v1036, -1.4531521
        %v1053 = vadd.f32 %v1037, -1.4531521
        %v1054 = vadd.f32 %v1038, -1.4531521
        %v1055 = vadd.f32 %v1039, -1.4531521
        %v1056 = vadd.f32 %v1040, -1.4531521
        %v1057 = vadd.f32 %v1041, -1.4531521
        %v1058 = vadd.f32 %v1042, -1.4531521
        %v1059 = vadd.f32 %v1043, -1.4531521
        %v1060 = vadd.f32 %v1044, -1.4531521
        %v1061 = vadd.f32 %v1045, -1.4531521
        %v1062 = vadd.f32 %v1046, -1.4531521
        %v1063 = vadd.f32 %v1047, -1.4531521
        %v1064 = vadd.f32 %v1048, -1.4531521
        %v1065 = vadd.f32 %v1049, -1.4531521
        %v1066 = vmul.f32 %v1050, %v808
        %v1067 = vmul.f32 %v1051, %v823
        %v1068 = vmul.f32 %v1052, %v838
        %v1069 = vmul.f32 %v1053, %v853
        %v1070 = vmul.f32 %v1054, %v868
        %v1071 = vmul.f32 %v1055, %v883
        %v1072 = vmul.f32 %v1056, %v898
        %v1073 = vmul.f32 %v1057, %v913
        %v1074 = vmul.f32 %v1058, %v928
        %v1075 = vmul.f32 %v1059, %v943
        %v1076 = vmul.f32 %v1060, %v958
        %v1077 = vmul.f32 %v1061, %v973
        %v1078 = vmul.f32 %v1062, %v988
        %v1079 = vmul.f32 %v1063, %v1003
        %v1080 = vmul.f32 %v1064, %v1018
        %v1081 = vmul.f32 %v1065, %v1033
        %v1082 = vadd.f32 %v1066, 1.4214138
        %v1083 = vadd.f32 %v1067, 1.4214138
        %v1084 = vadd.f32 %v1068, 1.4214138
        %v1085 = vadd.f32 %v1069, 1.4214138
        %v1086 = vadd.f32 %v1070, 1.4214138
        %v1087 = vadd.f32 %v1071, 1.4214138
        %v1088 = vadd.f32 %v1072, 1.4214138
        %v1089 = vadd.f32 %v1073, 1.4214138
        %v1090 = vadd.f32 %v1074, 1.4214138
        %v1091 = vadd.f32 %v1075, 1.4214138
        %v1092 = vadd.f32 %v1076, 1.4214138
        %v1093 = vadd.f32 %v1077, 1.4214138
        %v1094 = vadd.f32 %v1078, 1.4214138
        %v1095 = vadd.f32 %v1079, 1.4214138
        %v1096 = vadd.f32 %v1080, 1.4214138
        %v1097 = vadd.f32 %v1081, 1.4214138
        %v1098 = vmul.f32 %v1082, %v808
        %v1099 = vmul.f32 %v1083, %v823
        %v1100 = vmul.f32 %v1084, %v838
        %v1101 = vmul.f32 %v1085, %v853
        %v1102 = vmul.f32 %v1086, %v868
        %v1103 = vmul.f32 %v1087, %v883
        %v1104 = vmul.f32 %v1088, %v898
        %v1105 = vmul.f32 %v1089, %v913
        %v1106 = vmul.f32 %v1090, %v928
        %v1107 = vmul.f32 %v1091, %v943
        %v1108 = vmul.f32 %v1092, %v958
        %v1109 = vmul.f32 %v1093, %v973
        %v1110 = vmul.f32 %v1094, %v988
        %v1111 = vmul.f32 %v1095, %v1003
        %v1112 = vmul.f32 %v1096, %v1018
        %v1113 = vmul.f32 %v1097, %v1033
        %v1114 = vadd.f32 %v1098, -0.28449672
        %v1115 = vadd.f32 %v1099, -0.28449672
        %v1116 = vadd.f32 %v1100, -0.28449672
        %v1117 = vadd.f32 %v1101, -0.28449672
        %v1118 = vadd.f32 %v1102, -0.28449672
        %v1119 = vadd.f32 %v1103, -0.28449672
        %v1120 = vadd.f32 %v1104, -0.28449672
        %v1121 = vadd.f32 %v1105, -0.28449672
        %v1122 = vadd.f32 %v1106, -0.28449672
        %v1123 = vadd.f32 %v1107, -0.28449672
        %v1124 = vadd.f32 %v1108, -0.28449672
        %v1125 = vadd.f32 %v1109, -0.28449672
        %v1126 = vadd.f32 %v1110, -0.28449672
        %v1127 = vadd.f32 %v1111, -0.28449672
        %v1128 = vadd.f32 %v1112, -0.28449672
        %v1129 = vadd.f32 %v1113, -0.28449672
        %v1130 = vmul.f32 %v1114, %v808
        %v1131 = vmul.f32 %v1115, %v823
        %v1132 = vmul.f32 %v1116, %v838
        %v1133 = vmul.f32 %v1117, %v853
        %v1134 = vmul.f32 %v1118, %v868
        %v1135 = vmul.f32 %v1119, %v883
        %v1136 = vmul.f32 %v1120, %v898
        %v1137 = vmul.f32 %v1121, %v913
        %v1138 = vmul.f32 %v1122, %v928
        %v1139 = vmul.f32 %v1123, %v943
        %v1140 = vmul.f32 %v1124, %v958
        %v1141 = vmul.f32 %v1125, %v973
        %v1142 = vmul.f32 %v1126, %v988
        %v1143 = vmul.f32 %v1127, %v1003
        %v1144 = vmul.f32 %v1128, %v1018
        %v1145 = vmul.f32 %v1129, %v1033
        %v1146 = vadd.f32 %v1130, 0.2548296
        %v1147 = vadd.f32 %v1131, 0.2548296
        %v1148 = vadd.f32 %v1132, 0.2548296
        %v1149 = vadd.f32 %v1133, 0.2548296
        %v1150 = vadd.f32 %v1134, 0.2548296
        %v1151 = vadd.f32 %v1135, 0.2548296
        %v1152 = vadd.f32 %v1136, 0.2548296
        %v1153 = vadd.f32 %v1137, 0.2548296
        %v1154 = vadd.f32 %v1138, 0.2548296
        %v1155 = vadd.f32 %v1139, 0.2548296
        %v1156 = vadd.f32 %v1140, 0.2548296
        %v1157 = vadd.f32 %v1141, 0.2548296
        %v1158 = vadd.f32 %v1142, 0.2548296
        %v1159 = vadd.f32 %v1143, 0.2548296
        %v1160 = vadd.f32 %v1144, 0.2548296
        %v1161 = vadd.f32 %v1145, 0.2548296
        %v1162 = vmul.f32 %v1146, %v808
        %v1163 = vmul.f32 %v1147, %v823
        %v1164 = vmul.f32 %v1148, %v838
        %v1165 = vmul.f32 %v1149, %v853
        %v1166 = vmul.f32 %v1150, %v868
        %v1167 = vmul.f32 %v1151, %v883
        %v1168 = vmul.f32 %v1152, %v898
        %v1169 = vmul.f32 %v1153, %v913
        %v1170 = vmul.f32 %v1154, %v928
        %v1171 = vmul.f32 %v1155, %v943
        %v1172 = vmul.f32 %v1156, %v958
        %v1173 = vmul.f32 %v1157, %v973
        %v1174 = vmul.f32 %v1158, %v988
        %v1175 = vmul.f32 %v1159, %v1003
        %v1176 = vmul.f32 %v1160, %v1018
        %v1177 = vmul.f32 %v1161, %v1033
        %v1178 = vsub.f32 0.0, %v746
        %v1179 = vsub.f32 0.0, %v747
        %v1180 = vsub.f32 0.0, %v748
        %v1181 = vsub.f32 0.0, %v749
        %v1182 = vsub.f32 0.0, %v750
        %v1183 = vsub.f32 0.0, %v751
        %v1184 = vsub.f32 0.0, %v752
        %v1185 = vsub.f32 0.0, %v753
        %v1186 = vsub.f32 0.0, %v754
        %v1187 = vsub.f32 0.0, %v755
        %v1188 = vsub.f32 0.0, %v756
        %v1189 = vsub.f32 0.0, %v757
        %v1190 = vsub.f32 0.0, %v758
        %v1191 = vsub.f32 0.0, %v759
        %v1192 = vsub.f32 0.0, %v760
        %v1193 = vsub.f32 0.0, %v761
        %v1194 = vmul.f32 %v1178, %v746
        %v1195 = vmul.f32 %v1179, %v747
        %v1196 = vmul.f32 %v1180, %v748
        %v1197 = vmul.f32 %v1181, %v749
        %v1198 = vmul.f32 %v1182, %v750
        %v1199 = vmul.f32 %v1183, %v751
        %v1200 = vmul.f32 %v1184, %v752
        %v1201 = vmul.f32 %v1185, %v753
        %v1202 = vmul.f32 %v1186, %v754
        %v1203 = vmul.f32 %v1187, %v755
        %v1204 = vmul.f32 %v1188, %v756
        %v1205 = vmul.f32 %v1189, %v757
        %v1206 = vmul.f32 %v1190, %v758
        %v1207 = vmul.f32 %v1191, %v759
        %v1208 = vmul.f32 %v1192, %v760
        %v1209 = vmul.f32 %v1193, %v761
        %v1210 = vmul.f32 %v1194, 1.442695
        %v1211 = vpow.pop %v1210
        %v1212 = vmul.f32 %v1195, 1.442695
        %v1213 = vpow.pop %v1212
        %v1214 = vmul.f32 %v1196, 1.442695
        %v1215 = vpow.pop %v1214
        %v1216 = vmul.f32 %v1197, 1.442695
        %v1217 = vpow.pop %v1216
        %v1218 = vmul.f32 %v1198, 1.442695
        %v1219 = vpow.pop %v1218
        %v1220 = vmul.f32 %v1199, 1.442695
        %v1221 = vpow.pop %v1220
        %v1222 = vmul.f32 %v1200, 1.442695
        %v1223 = vpow.pop %v1222
        %v1224 = vmul.f32 %v1201, 1.442695
        %v1225 = vpow.pop %v1224
        %v1226 = vmul.f32 %v1202, 1.442695
        %v1227 = vpow.pop %v1226
        %v1228 = vmul.f32 %v1203, 1.442695
        %v1229 = vpow.pop %v1228
        %v1230 = vmul.f32 %v1204, 1.442695
        %v1231 = vpow.pop %v1230
        %v1232 = vmul.f32 %v1205, 1.442695
        %v1233 = vpow.pop %v1232
        %v1234 = vmul.f32 %v1206, 1.442695
        %v1235 = vpow.pop %v1234
        %v1236 = vmul.f32 %v1207, 1.442695
        %v1237 = vpow.pop %v1236
        %v1238 = vmul.f32 %v1208, 1.442695
        %v1239 = vpow.pop %v1238
        %v1240 = vmul.f32 %v1209, 1.442695
        %v1241 = vpow.pop %v1240
        %v1242 = vmul.f32 %v1162, %v1211
        %v1243 = vmul.f32 %v1163, %v1213
        %v1244 = vmul.f32 %v1164, %v1215
        %v1245 = vmul.f32 %v1165, %v1217
        %v1246 = vmul.f32 %v1166, %v1219
        %v1247 = vmul.f32 %v1167, %v1221
        %v1248 = vmul.f32 %v1168, %v1223
        %v1249 = vmul.f32 %v1169, %v1225
        %v1250 = vmul.f32 %v1170, %v1227
        %v1251 = vmul.f32 %v1171, %v1229
        %v1252 = vmul.f32 %v1172, %v1231
        %v1253 = vmul.f32 %v1173, %v1233
        %v1254 = vmul.f32 %v1174, %v1235
        %v1255 = vmul.f32 %v1175, %v1237
        %v1256 = vmul.f32 %v1176, %v1239
        %v1257 = vmul.f32 %v1177, %v1241
        %v1258 = vsub.f32 1.0, %v1242
        %v1259 = vsub.f32 1.0, %v1243
        %v1260 = vsub.f32 1.0, %v1244
        %v1261 = vsub.f32 1.0, %v1245
        %v1262 = vsub.f32 1.0, %v1246
        %v1263 = vsub.f32 1.0, %v1247
        %v1264 = vsub.f32 1.0, %v1248
        %v1265 = vsub.f32 1.0, %v1249
        %v1266 = vsub.f32 1.0, %v1250
        %v1267 = vsub.f32 1.0, %v1251
        %v1268 = vsub.f32 1.0, %v1252
        %v1269 = vsub.f32 1.0, %v1253
        %v1270 = vsub.f32 1.0, %v1254
        %v1271 = vsub.f32 1.0, %v1255
        %v1272 = vsub.f32 1.0, %v1256
        %v1273 = vsub.f32 1.0, %v1257
        %vm1274 = vcmp.ge.f32.partialorder %v730, 0.0
        %vm1275 = vcmp.ge.f32.partialorder %v731, 0.0
        %vm1276 = vcmp.ge.f32.partialorder %v732, 0.0
        %vm1277 = vcmp.ge.f32.partialorder %v733, 0.0
        %vm1278 = vcmp.ge.f32.partialorder %v734, 0.0
        %vm1279 = vcmp.ge.f32.partialorder %v735, 0.0
        %vm1280 = vcmp.ge.f32.partialorder %v736, 0.0
        %vm1281 = vcmp.ge.f32.partialorder %v737, 0.0
        %vm1282 = vcmp.ge.f32.partialorder %v738, 0.0
        %vm1283 = vcmp.ge.f32.partialorder %v739, 0.0
        %vm1284 = vcmp.ge.f32.partialorder %v740, 0.0
        %vm1285 = vcmp.ge.f32.partialorder %v741, 0.0
        %vm1286 = vcmp.ge.f32.partialorder %v742, 0.0
        %vm1287 = vcmp.ge.f32.partialorder %v743, 0.0
        %vm1288 = vcmp.ge.f32.partialorder %v744, 0.0
        %vm1289 = vcmp.ge.f32.partialorder %v745, 0.0
        %v1290 = vsub.f32 0.0, %v1258
        %v1291 = vsub.f32 0.0, %v1259
        %v1292 = vsub.f32 0.0, %v1260
        %v1293 = vsub.f32 0.0, %v1261
        %v1294 = vsub.f32 0.0, %v1262
        %v1295 = vsub.f32 0.0, %v1263
        %v1296 = vsub.f32 0.0, %v1264
        %v1297 = vsub.f32 0.0, %v1265
        %v1298 = vsub.f32 0.0, %v1266
        %v1299 = vsub.f32 0.0, %v1267
        %v1300 = vsub.f32 0.0, %v1268
        %v1301 = vsub.f32 0.0, %v1269
        %v1302 = vsub.f32 0.0, %v1270
        %v1303 = vsub.f32 0.0, %v1271
        %v1304 = vsub.f32 0.0, %v1272
        %v1305 = vsub.f32 0.0, %v1273
        %v1306 = vsel %vm1274, %v1258, %v1290
        %v1307 = vsel %vm1275, %v1259, %v1291
        %v1308 = vsel %vm1276, %v1260, %v1292
        %v1309 = vsel %vm1277, %v1261, %v1293
        %v1310 = vsel %vm1278, %v1262, %v1294
        %v1311 = vsel %vm1279, %v1263, %v1295
        %v1312 = vsel %vm1280, %v1264, %v1296
        %v1313 = vsel %vm1281, %v1265, %v1297
        %v1314 = vsel %vm1282, %v1266, %v1298
        %v1315 = vsel %vm1283, %v1267, %v1299
        %v1316 = vsel %vm1284, %v1268, %v1300
        %v1317 = vsel %vm1285, %v1269, %v1301
        %v1318 = vsel %vm1286, %v1270, %v1302
        %v1319 = vsel %vm1287, %v1271, %v1303
        %v1320 = vsel %vm1288, %v1272, %v1304
        %v1321 = vsel %vm1289, %v1273, %v1305
        %v1322 = vadd.f32 %v1306, 1.0
        %v1323 = vadd.f32 %v1307, 1.0
        %v1324 = vadd.f32 %v1308, 1.0
        %v1325 = vadd.f32 %v1309, 1.0
        %v1326 = vadd.f32 %v1310, 1.0
        %v1327 = vadd.f32 %v1311, 1.0
        %v1328 = vadd.f32 %v1312, 1.0
        %v1329 = vadd.f32 %v1313, 1.0
        %v1330 = vadd.f32 %v1314, 1.0
        %v1331 = vadd.f32 %v1315, 1.0
        %v1332 = vadd.f32 %v1316, 1.0
        %v1333 = vadd.f32 %v1317, 1.0
        %v1334 = vadd.f32 %v1318, 1.0
        %v1335 = vadd.f32 %v1319, 1.0
        %v1336 = vadd.f32 %v1320, 1.0
        %v1337 = vadd.f32 %v1321, 1.0
        %v1338 = vmul.f32 %v714, %v1322
        %v1339 = vmul.f32 %v715, %v1323
        %v1340 = vmul.f32 %v716, %v1324
        %v1341 = vmul.f32 %v717, %v1325
        %v1342 = vmul.f32 %v718, %v1326
        %v1343 = vmul.f32 %v719, %v1327
        %v1344 = vmul.f32 %v720, %v1328
        %v1345 = vmul.f32 %v721, %v1329
        %v1346 = vmul.f32 %v722, %v1330
        %v1347 = vmul.f32 %v723, %v1331
        %v1348 = vmul.f32 %v724, %v1332
        %v1349 = vmul.f32 %v725, %v1333
        %v1350 = vmul.f32 %v726, %v1334
        %v1351 = vmul.f32 %v727, %v1335
        %v1352 = vmul.f32 %v728, %v1336
        %v1353 = vmul.f32 %v729, %v1337
        %v1354 = vpack.c.bf16 %v1340, %v1338
        %v1355 = vpack.c.bf16 %v1341, %v1339
        %v1356 = vpack.c.bf16 %v1344, %v1342
        %v1357 = vpack.c.bf16 %v1345, %v1343
        %v1358 = vpack.c.bf16 %v1348, %v1346
        %v1359 = vpack.c.bf16 %v1349, %v1347
        %v1360 = vpack.c.bf16 %v1352, %v1350
        %v1361 = vpack.c.bf16 %v1353, %v1351
        %v1362 = vld [vmem:[%s6] sm:$0xf]
        %v1363 = vld [vmem:[%s6 + $0x4] sm:$0xf]
        %v1364 = vld [vmem:[%s6 + $0x8] sm:$0xf]
        %v1365 = vld [vmem:[%s6 + $0xc] sm:$0xf]
        %v1366 = vld [vmem:[%s6 + $0x10] sm:$0xf]
        %v1367 = vld [vmem:[%s6 + $0x14] sm:$0xf]
        %v1368 = vld [vmem:[%s6 + $0x18] sm:$0xf]
        %v1369 = vld [vmem:[%s6 + $0x1c] sm:$0xf]
        %v1370 = vld [vmem:[%s6 + $0x20] sm:$0xf]
        %v1371 = vld [vmem:[%s6 + $0x24] sm:$0xf]
        %v1372 = vld [vmem:[%s6 + $0x28] sm:$0xf]
        %v1373 = vld [vmem:[%s6 + $0x2c] sm:$0xf]
        %v1374 = vld [vmem:[%s6 + $0x30] sm:$0xf]
        %v1375 = vld [vmem:[%s6 + $0x34] sm:$0xf]
        %v1376 = vld [vmem:[%s6 + $0x38] sm:$0xf]
        %v1377 = vld [vmem:[%s6 + $0x3c] sm:$0xf]
        %v1378 = vld [vmem:[%s6 + $0x40] sm:$0xf]
        %v1379 = vld [vmem:[%s6 + $0x44] sm:$0xf]
        %v1380 = vld [vmem:[%s6 + $0x48] sm:$0xf]
        %v1381 = vld [vmem:[%s6 + $0x4c] sm:$0xf]
        %v1382 = vld [vmem:[%s6 + $0x50] sm:$0xf]
        %v1383 = vld [vmem:[%s6 + $0x54] sm:$0xf]
        %v1384 = vld [vmem:[%s6 + $0x58] sm:$0xf]
        %v1385 = vld [vmem:[%s6 + $0x5c] sm:$0xf]
        %v1386 = vld [vmem:[%s6 + $0x60] sm:$0xf]
        %v1387 = vld [vmem:[%s6 + $0x64] sm:$0xf]
        %v1388 = vld [vmem:[%s6 + $0x68] sm:$0xf]
        %v1389 = vld [vmem:[%s6 + $0x6c] sm:$0xf]
        %v1390 = vld [vmem:[%s6 + $0x70] sm:$0xf]
        %v1391 = vld [vmem:[%s6 + $0x74] sm:$0xf]
        %v1392 = vld [vmem:[%s6 + $0x78] sm:$0xf]
        %v1393 = vld [vmem:[%s6 + $0x7c] sm:$0xf]
        %v1394 = vld [vmem:[#allocation4] sm:$0x1]
        %v1396 = vperm.slane %v1394, 0
        %v1430 = vunpack.c.l.b16 %v1362
        %v1431 = vunpack.c.l.b16 %v1363
        %v1432 = vunpack.c.l.b16 %v1364
        %v1433 = vunpack.c.l.b16 %v1365
        %v1434 = vunpack.c.l.b16 %v1366
        %v1435 = vunpack.c.l.b16 %v1367
        %v1436 = vunpack.c.l.b16 %v1368
        %v1437 = vunpack.c.l.b16 %v1369
        %v1438 = vunpack.c.l.b16 %v1370
        %v1439 = vunpack.c.l.b16 %v1371
        %v1440 = vunpack.c.l.b16 %v1372
        %v1441 = vunpack.c.l.b16 %v1373
        %v1442 = vunpack.c.l.b16 %v1374
        %v1443 = vunpack.c.l.b16 %v1375
        %v1444 = vunpack.c.l.b16 %v1376
        %v1445 = vunpack.c.l.b16 %v1377
        %v1446 = vunpack.c.l.b16 %v1378
        %v1447 = vunpack.c.l.b16 %v1379
        %v1448 = vunpack.c.l.b16 %v1380
        %v1449 = vunpack.c.l.b16 %v1381
        %v1450 = vunpack.c.l.b16 %v1382
        %v1451 = vunpack.c.l.b16 %v1383
        %v1452 = vunpack.c.l.b16 %v1384
        %v1453 = vunpack.c.l.b16 %v1385
        %v1454 = vunpack.c.l.b16 %v1386
        %v1455 = vunpack.c.l.b16 %v1387
        %v1456 = vunpack.c.l.b16 %v1388
        %v1457 = vunpack.c.l.b16 %v1389
        %v1458 = vunpack.c.l.b16 %v1390
        %v1459 = vunpack.c.l.b16 %v1391
        %v1460 = vunpack.c.l.b16 %v1392
        %v1461 = vunpack.c.l.b16 %v1393
        %v1462 = vpack.c.b16 %v1431, %v1430
        %v1463 = vpack.c.b16 %v1433, %v1432
        %v1464 = vpack.c.b16 %v1435, %v1434
        %v1465 = vpack.c.b16 %v1437, %v1436
        %v1466 = vpack.c.b16 %v1439, %v1438
        %v1467 = vpack.c.b16 %v1441, %v1440
        %v1468 = vpack.c.b16 %v1443, %v1442
        %v1469 = vpack.c.b16 %v1445, %v1444
        %v1470 = vpack.c.b16 %v1447, %v1446
        %v1471 = vpack.c.b16 %v1449, %v1448
        %v1472 = vpack.c.b16 %v1451, %v1450
        %v1473 = vpack.c.b16 %v1453, %v1452
        %v1474 = vpack.c.b16 %v1455, %v1454
        %v1475 = vpack.c.b16 %v1457, %v1456
        %v1476 = vpack.c.b16 %v1459, %v1458
        %v1477 = vpack.c.b16 %v1461, %v1460
        %1494 = vmatpush.bf16.msra.mxu0 %v1469
        %1495 = vmatpush.bf16.msra.mxu0 %v1468
        %1496 = vmatpush.bf16.msra.mxu0 %v1467
        %1497 = vmatpush.bf16.msra.mxu0 %v1466
        %1498 = vmatpush.bf16.msra.mxu0 %v1465
        %1499 = vmatpush.bf16.msra.mxu0 %v1464
        %1500 = vmatpush.bf16.msra.mxu0 %v1463
        %1501 = vmatpush.bf16.msra.mxu0 %v1462
        %1502 = vmatmul.bf16.gmra.mxu0 %v1354
        %v1503 = vpop.f32.mrf.mxu0
        %v1504 = vadd.f32 %v1396, %v1503
        %v1505 = vpop.f32.mrf.mxu0
        %v1506 = vadd.f32 %v1396, %v1505
        %1507 = vmatmul.bf16.gmra.mxu0 %v1356
        %v1508 = vpop.f32.mrf.mxu0
        %v1509 = vadd.f32 %v1396, %v1508
        %v1510 = vpop.f32.mrf.mxu0
        %v1511 = vadd.f32 %v1396, %v1510
        %1512 = vmatmul.bf16.gmra.mxu0 %v1358
        %v1513 = vpop.f32.mrf.mxu0
        %v1514 = vadd.f32 %v1396, %v1513
        %v1515 = vpop.f32.mrf.mxu0
        %v1516 = vadd.f32 %v1396, %v1515
        %1517 = vmatmul.bf16.gmra.mxu0 %v1360
        %v1518 = vpop.f32.mrf.mxu0
        %v1519 = vadd.f32 %v1396, %v1518
        %v1520 = vpop.f32.mrf.mxu0
        %v1521 = vadd.f32 %v1396, %v1520
        %1522 = vdwg.mxu0
        %1523 = vmatpush.bf16.msra.mxu0 %v1477
        %1524 = vmatpush.bf16.msra.mxu0 %v1476
        %1525 = vmatpush.bf16.msra.mxu0 %v1475
        %1526 = vmatpush.bf16.msra.mxu0 %v1474
        %1527 = vmatpush.bf16.msra.mxu0 %v1473
        %1528 = vmatpush.bf16.msra.mxu0 %v1472
        %1529 = vmatpush.bf16.msra.mxu0 %v1471
        %1530 = vmatpush.bf16.msra.mxu0 %v1470
        %1531 = vmatmul.bf16.gmra.mxu0 %v1355
        %v1532 = vpop.f32.mrf.mxu0
        %v1533 = vadd.f32 %v1504, %v1532
        %v1534 = vpop.f32.mrf.mxu0
        %v1535 = vadd.f32 %v1506, %v1534
        %1536 = vmatmul.bf16.gmra.mxu0 %v1357
        %v1537 = vpop.f32.mrf.mxu0
        %v1538 = vadd.f32 %v1509, %v1537
        %v1539 = vpop.f32.mrf.mxu0
        %v1540 = vadd.f32 %v1511, %v1539
        %1541 = vmatmul.bf16.gmra.mxu0 %v1359
        %v1542 = vpop.f32.mrf.mxu0
        %v1543 = vadd.f32 %v1514, %v1542
        %v1544 = vpop.f32.mrf.mxu0
        %v1545 = vadd.f32 %v1516, %v1544
        %1546 = vmatmul.bf16.gmra.mxu0 %v1361
        %v1547 = vpop.f32.mrf.mxu0
        %v1548 = vadd.f32 %v1519, %v1547
        %v1549 = vpop.f32.mrf.mxu0
        %v1550 = vadd.f32 %v1521, %v1549
        %1551 = vdwg.mxu0
        %v1552 = vld [vmem:[%s353] sm:$0xf]
        %v1553 = vld [vmem:[%s353 + $0x4] sm:$0xf]
        %v1554 = vld [vmem:[%s353 + $0x8] sm:$0xf]
        %v1555 = vld [vmem:[%s353 + $0xc] sm:$0xf]
        %v1556 = vld [vmem:[%s353 + $0x10] sm:$0xf]
        %v1557 = vld [vmem:[%s353 + $0x14] sm:$0xf]
        %v1558 = vld [vmem:[%s353 + $0x18] sm:$0xf]
        %v1559 = vld [vmem:[%s353 + $0x1c] sm:$0xf]
        %v1560 = vunpack.c.l.bf16 %v1552
        %v1561 = vunpack.c.l.bf16 %v1553
        %v1562 = vunpack.c.l.bf16 %v1554
        %v1563 = vunpack.c.l.bf16 %v1555
        %v1564 = vunpack.c.l.bf16 %v1556
        %v1565 = vunpack.c.l.bf16 %v1557
        %v1566 = vunpack.c.l.bf16 %v1558
        %v1567 = vunpack.c.l.bf16 %v1559
        %v1568 = vadd.f32 %v370, %v1560
        %v1569 = vadd.f32 %v371, %v1561
        %v1570 = vadd.f32 %v372, %v1562
        %v1571 = vadd.f32 %v373, %v1563
        %v1572 = vadd.f32 %v374, %v1564
        %v1573 = vadd.f32 %v375, %v1565
        %v1574 = vadd.f32 %v376, %v1566
        %v1575 = vadd.f32 %v377, %v1567
        %v1576 = vadd.f32 %v1568, %v1533
        %v1577 = vadd.f32 %v1569, %v1535
        %v1578 = vadd.f32 %v1570, %v1538
        %v1579 = vadd.f32 %v1571, %v1540
        %v1580 = vadd.f32 %v1572, %v1543
        %v1581 = vadd.f32 %v1573, %v1545
        %v1582 = vadd.f32 %v1574, %v1548
        %v1583 = vadd.f32 %v1575, %v1550
        %v1584 = vpack.c.bf16 %v1576, %v1576
        %v1585 = vpack.c.bf16 %v1577, %v1577
        %v1586 = vpack.c.bf16 %v1578, %v1578
        %v1587 = vpack.c.bf16 %v1579, %v1579
        %v1588 = vpack.c.bf16 %v1580, %v1580
        %v1589 = vpack.c.bf16 %v1581, %v1581
        %v1590 = vpack.c.bf16 %v1582, %v1582
        %v1591 = vpack.c.bf16 %v1583, %v1583
        %vm1592 = vcmask 519168
        %1593 = vst.msk [vmem:[%s359] sm:$0xf] %vm1592, %v1584
        %1594 = vst.msk [vmem:[%s359 + $0x4] sm:$0xf] %vm1592, %v1585
        %1595 = vst.msk [vmem:[%s359 + $0x8] sm:$0xf] %vm1592, %v1586
        %1596 = vst.msk [vmem:[%s359 + $0xc] sm:$0xf] %vm1592, %v1587
        %1597 = vst.msk [vmem:[%s359 + $0x10] sm:$0xf] %vm1592, %v1588
        %1598 = vst.msk [vmem:[%s359 + $0x14] sm:$0xf] %vm1592, %v1589
        %1599 = vst.msk [vmem:[%s359 + $0x18] sm:$0xf] %vm1592, %v1590
        %1600 = vst.msk [vmem:[%s359 + $0x1c] sm:$0xf] %vm1592, %v1591
        %s1601 = smul.u32 8, %s21
        %p1602 = scmp.lt.s32.totalorder %s1601, 15
        %s1603 = scalar_select %p1602, %s1601, 15
        %s1604 = smul.addr %s1603, 4
        %s1605 = scalar_lea.vmem %s8, %s1604
        // Predicated region
        $region61: #{glse_pallas.33} parent=51 // pred_check
          %p1606 = pneg %p217
        $region62: #{glse_pallas.33} parent=51 // pred_check_branch
          %1608 = sbr.rel (%p1606) target = $region64
        $region63: #{glse_pallas.33} parent=51 // pred_region
          %s1609 = smul.u32 8, %s21
        $region64: #{glse_pallas.33} parent=51 // pred_fallthru
          _
      $region52: #{glse_pallas.33} parent=5 // pred_fallthru
        _
      %p1610 = scmp.le.s32.totalorder 2, %s16
      // Predicated region
      $region65: #{glse_pallas.33} parent=5 // pred_check
        %p1611 = pneg %p1610
      $region66: #{glse_pallas.33} parent=5 // pred_check_branch
        %1613 = sbr.rel (%p1611) target = $region68
      $region67: #{glse_pallas.33} parent=5 // pred_region
        %s1614 = ssub.s32 %s16, 2
        // Predicated region
        $region69: #{glse_pallas.33} parent=67 // pred_check
          %p1615 = pneg %p223
        $region70: #{glse_pallas.33} parent=67 // pred_check_branch
          %1617 = sbr.rel (%p1615) target = $region72
        $region71: #{glse_pallas.33} parent=67 // pred_region
          %s1618 = smul.u32 8, %s22
          %p1619 = scmp.lt.s32.totalorder %s1618, 15
          %s1620 = scalar_select %p1619, %s1618, 15
          %s1621 = smul.addr %s1620, 4
          %s1622 = scalar_lea.vmem %s8, %s1621
        $region72: #{glse_pallas.33} parent=67 // pred_fallthru
          _
      $region68: #{glse_pallas.33} parent=5 // pred_fallthru
        _
    $region6: #{glse_pallas.33} parent=1 // loop_footer
      %s20 = sadd.s32 1, %s16
    $region7: #{glse_pallas.33} parent=1 // loop_footer_branch
      %15 = sbr.rel target = $region3
    $region8: #{glse_pallas.33} parent=1 // loop_exit
      _
    %1623 = vsyncpa [#allocation3], 1
    %s1624 = scalar_lea.sflag [#allocation3], 1
    %1625 = vsyncpa %s1624, 1
    %1626 = vsyncpa [#allocation5], 1

// kernel: glse_pallas.34
$region0: #{glse_pallas.34}
  #allocation0 [shape = 'u32[]', space=smem, size = 0x4, offset = 0x4, fixed_abs, tag = 'smem constant byte address 0x4 - core index']
  #allocation1 [shape = 'u32[72,128]{1,0:T(1,128)}', space=vmem, size = 0x9000, scoped, tag = 'internal scratch']
  %s0 = inlined_call_operand.vmem [shape: bf16[128,64], index: 0, kind: input, shape index: {}]
  %s1 = inlined_call_operand.hbm [shape: f32[1,64], index: 1, kind: input, shape index: {}]
  %s2 = inlined_call_operand.hbm [shape: f32[1,64], index: 2, kind: input, shape index: {}]
  %s3 = inlined_call_operand.vmem [shape: bf16[64,192], index: 3, kind: input, shape index: {}]
  %s4 = inlined_call_operand.vmem [shape: f32[1,192], index: 4, kind: input, shape index: {}]
  %s5 = inlined_call_operand.vmem [shape: bf16[128,64], index: 5, kind: output, shape index: {0}]
  %s6 = inlined_call_operand.vmem [shape: bf16[128,192], index: 6, kind: output, shape index: {1}]
  %7 = xla_tuple %s5, %s6
  %s8 = sld [smem:[#allocation0]]
  $region69: #{glse_pallas.34} parent=0
    _
  %s10 = ssub.s32 1, %s8
  %s11 = scalar_select 0, %s10, %s8
  $region1: #{glse_pallas.34} parent=0
    #allocation2 [shape = 'u8[512]{0}', space=vmem, size = 0x400, scoped, tag = 'input window, operand 1, single buffered']
    #allocation3 [shape = 's32[2]{0}', space=sflag, size = 0x8, scoped, tag = 'scoped memory for glse_pallas.34']
    #allocation4 [shape = 'u8[512]{0}', space=vmem, size = 0x400, scoped, tag = 'input window, operand 2, single buffered']
    #allocation5 [shape = 's32[1]{0}', space=sflag, size = 0x4, scoped, tag = 'scoped memory for glse_pallas.34']
    %12 = vsyncpa [#allocation3], 0
    %13 = vsyncpa [#allocation5], 0
    loop: start=0, step=1, limit=4
    $region2: #{glse_pallas.34} parent=1 // loop_pre_header
      _
    $region3: #{glse_pallas.34} parent=1 // loop_header
      %s15 = sphi 0, %s19
      %p16 = scmp.ge.s32.totalorder %s15, 4
      %s25 = sphi 0, %s27
      %s28 = sphi 0, %s25
      %s29 = sphi 0, %s28
      %s45 = sphi 0, %s29
      %s49 = sphi 0, %s49
      %s51 = sphi 0, %s49
      %s52 = sphi 0, %s51
      %s66 = sphi 0, %s52
      %s70 = sphi 0, %s70
      %s72 = sphi 0, %s70
      %s73 = sphi 0, %s72
      %s87 = sphi 0, %s73
      %s91 = sphi 0, %s91
      %s93 = sphi 0, %s91
      %s94 = sphi 0, %s93
      %s108 = sphi 0, %s94
      %s112 = sphi 0, %s112
      %s114 = sphi 0, %s112
      %s115 = sphi 0, %s114
      %s129 = sphi 0, %s115
      %s135 = sphi 0, %s137
      %s138 = sphi 0, %s135
      %s139 = sphi 0, %s138
      %s155 = sphi 0, %s139
      %s161 = sphi 0, %s163
      %s164 = sphi 0, %s161
      %s165 = sphi 0, %s164
      %s181 = sphi 0, %s165
    $region4: #{glse_pallas.34} parent=1 // loop_header_branch
      %18 = sbr.rel (%p16) target = $region8
    $region5: #{glse_pallas.34} parent=1 // loop_body
      %s20 = ssub.s32 %s15, 1
      %s21 = ssub.s32 %s15, 2
      %s22 = sadd.s32 %s15, 1
      %s23 = ssub.s32 %s15, %s22
      %p24 = scmp.eq.s32.totalorder %s23, 0
      %s26 = sadd.s32 %s25, 1
      %s27 = scalar_select %p24, %s25, %s26
      %p30 = pneg %p24
      %p31 = scmp.eq.s32.totalorder %s15, 1
      %p32 = por %p30, %p31
      %p33 = scmp.ne.s32.totalorder %s25, %s28
      %p34 = scmp.eq.s32.totalorder %s15, 0
      %p35 = por %p33, %p34
      %p36 = scmp.ne.s32.totalorder %s25, %s28
      %p37 = scmp.eq.s32.totalorder %s20, 1
      %p38 = por %p36, %p37
      %p39 = scmp.ne.s32.totalorder %s28, %s29
      %p40 = scmp.eq.s32.totalorder %s20, 0
      %p41 = por %p39, %p40
      %p42 = scmp.ne.s32.totalorder %s28, %s29
      %p43 = scmp.eq.s32.totalorder %s21, 1
      %p44 = por %p42, %p43
      %p46 = scmp.ne.s32.totalorder %s29, %s45
      %p47 = scmp.eq.s32.totalorder %s21, 0
      %p48 = por %p46, %p47
      %s50 = sadd.s32 %s49, 1
      %p53 = scmp.eq.s32.totalorder %s15, 1
      %p54 = scmp.ne.s32.totalorder %s49, %s51
      %p55 = scmp.eq.s32.totalorder %s15, 0
      %p56 = por %p54, %p55
      %p57 = scmp.ne.s32.totalorder %s49, %s51
      %p58 = scmp.eq.s32.totalorder %s20, 1
      %p59 = por %p57, %p58
      %p60 = scmp.ne.s32.totalorder %s51, %s52
      %p61 = scmp.eq.s32.totalorder %s20, 0
      %p62 = por %p60, %p61
      %p63 = scmp.ne.s32.totalorder %s51, %s52
      %p64 = scmp.eq.s32.totalorder %s21, 1
      %p65 = por %p63, %p64
      %p67 = scmp.ne.s32.totalorder %s52, %s66
      %p68 = scmp.eq.s32.totalorder %s21, 0
      %p69 = por %p67, %p68
      %s71 = sadd.s32 %s70, 1
      %p74 = scmp.eq.s32.totalorder %s15, 1
      %p75 = scmp.ne.s32.totalorder %s70, %s72
      %p76 = scmp.eq.s32.totalorder %s15, 0
      %p77 = por %p75, %p76
      %p78 = scmp.ne.s32.totalorder %s70, %s72
      %p79 = scmp.eq.s32.totalorder %s20, 1
      %p80 = por %p78, %p79
      %p81 = scmp.ne.s32.totalorder %s72, %s73
      %p82 = scmp.eq.s32.totalorder %s20, 0
      %p83 = por %p81, %p82
      %p84 = scmp.ne.s32.totalorder %s72, %s73
      %p85 = scmp.eq.s32.totalorder %s21, 1
      %p86 = por %p84, %p85
      %p88 = scmp.ne.s32.totalorder %s73, %s87
      %p89 = scmp.eq.s32.totalorder %s21, 0
      %p90 = por %p88, %p89
      %s92 = sadd.s32 %s91, 1
      %p95 = scmp.eq.s32.totalorder %s15, 1
      %p96 = scmp.ne.s32.totalorder %s91, %s93
      %p97 = scmp.eq.s32.totalorder %s15, 0
      %p98 = por %p96, %p97
      %p99 = scmp.ne.s32.totalorder %s91, %s93
      %p100 = scmp.eq.s32.totalorder %s20, 1
      %p101 = por %p99, %p100
      %p102 = scmp.ne.s32.totalorder %s93, %s94
      %p103 = scmp.eq.s32.totalorder %s20, 0
      %p104 = por %p102, %p103
      %p105 = scmp.ne.s32.totalorder %s93, %s94
      %p106 = scmp.eq.s32.totalorder %s21, 1
      %p107 = por %p105, %p106
      %p109 = scmp.ne.s32.totalorder %s94, %s108
      %p110 = scmp.eq.s32.totalorder %s21, 0
      %p111 = por %p109, %p110
      %s113 = sadd.s32 %s112, 1
      %p116 = scmp.eq.s32.totalorder %s15, 1
      %p117 = scmp.ne.s32.totalorder %s112, %s114
      %p118 = scmp.eq.s32.totalorder %s15, 0
      %p119 = por %p117, %p118
      %p120 = scmp.ne.s32.totalorder %s112, %s114
      %p121 = scmp.eq.s32.totalorder %s20, 1
      %p122 = por %p120, %p121
      %p123 = scmp.ne.s32.totalorder %s114, %s115
      %p124 = scmp.eq.s32.totalorder %s20, 0
      %p125 = por %p123, %p124
      %p126 = scmp.ne.s32.totalorder %s114, %s115
      %p127 = scmp.eq.s32.totalorder %s21, 1
      %p128 = por %p126, %p127
      %p130 = scmp.ne.s32.totalorder %s115, %s129
      %p131 = scmp.eq.s32.totalorder %s21, 0
      %p132 = por %p130, %p131
      %s133 = ssub.s32 %s15, %s22
      %p134 = scmp.eq.s32.totalorder %s133, 0
      %s136 = sadd.s32 %s135, 1
      %s137 = scalar_select %p134, %s135, %s136
      %p140 = pneg %p134
      %p141 = scmp.eq.s32.totalorder %s15, 1
      %p142 = por %p140, %p141
      %p143 = scmp.ne.s32.totalorder %s135, %s138
      %p144 = scmp.eq.s32.totalorder %s15, 0
      %p145 = por %p143, %p144
      %p146 = scmp.ne.s32.totalorder %s135, %s138
      %p147 = scmp.eq.s32.totalorder %s20, 1
      %p148 = por %p146, %p147
      %p149 = scmp.ne.s32.totalorder %s138, %s139
      %p150 = scmp.eq.s32.totalorder %s20, 0
      %p151 = por %p149, %p150
      %p152 = scmp.ne.s32.totalorder %s138, %s139
      %p153 = scmp.eq.s32.totalorder %s21, 1
      %p154 = por %p152, %p153
      %p156 = scmp.ne.s32.totalorder %s139, %s155
      %p157 = scmp.eq.s32.totalorder %s21, 0
      %p158 = por %p156, %p157
      %s159 = ssub.s32 %s15, %s22
      %p160 = scmp.eq.s32.totalorder %s159, 0
      %s162 = sadd.s32 %s161, 1
      %s163 = scalar_select %p160, %s161, %s162
      %p166 = pneg %p160
      %p167 = scmp.eq.s32.totalorder %s15, 1
      %p168 = por %p166, %p167
      %p169 = scmp.ne.s32.totalorder %s161, %s164
      %p170 = scmp.eq.s32.totalorder %s15, 0
      %p171 = por %p169, %p170
      %p172 = scmp.ne.s32.totalorder %s161, %s164
      %p173 = scmp.eq.s32.totalorder %s20, 1
      %p174 = por %p172, %p173
      %p175 = scmp.ne.s32.totalorder %s164, %s165
      %p176 = scmp.eq.s32.totalorder %s20, 0
      %p177 = por %p175, %p176
      %p178 = scmp.ne.s32.totalorder %s164, %s165
      %p179 = scmp.eq.s32.totalorder %s21, 1
      %p180 = por %p178, %p179
      %p182 = scmp.ne.s32.totalorder %s165, %s181
      %p183 = scmp.eq.s32.totalorder %s21, 0
      %p184 = por %p182, %p183
      %p185 = scmp.le.s32.totalorder 1, %s15
      %p186 = scmp.lt.s32.totalorder %s15, 3
      %p187 = pnand %p185, %p186
      %p188 = pneg %p187
      // Predicated region
      $region9: #{glse_pallas.34} parent=5 // pred_check
        _
      $region10: #{glse_pallas.34} parent=5 // pred_check_branch
        %190 = sbr.rel (%p187) target = $region12
      $region11: #{glse_pallas.34} parent=5 // pred_region
        %s191 = ssub.s32 %s15, 1
        // Predicated region
        $region13: #{glse_pallas.34} parent=11 // pred_check
          %p192 = pneg %p62
        $region14: #{glse_pallas.34} parent=11 // pred_check_branch
          %194 = sbr.rel (%p192) target = $region16
        $region15: #{glse_pallas.34} parent=11 // pred_region
          %196 = vsyncadd [#allocation3], 0
          %s198 = sshll.u32 %s1, 4
          %s199 = int_to_ptr.hbm [resolvable:$true] %s198
          %s200 = sshll.u32 [#allocation2], 4
          %s201 = int_to_ptr.vmem [resolvable:$true] %s200
          %203 = dma.hbm_to_vmem [thread:$0]  %s199, 16, %s201, [#allocation3]
        $region16: #{glse_pallas.34} parent=11 // pred_fallthru
          _
        // Predicated region
        $region17: #{glse_pallas.34} parent=11 // pred_check
          %p204 = pneg %p83
        $region18: #{glse_pallas.34} parent=11 // pred_check_branch
          %206 = sbr.rel (%p204) target = $region20
        $region19: #{glse_pallas.34} parent=11 // pred_region
          %208 = vsyncadd [#allocation5], 0
          %s210 = sshll.u32 %s2, 4
          %s211 = int_to_ptr.hbm [resolvable:$true] %s210
          %s212 = sshll.u32 [#allocation4], 4
          %s213 = int_to_ptr.vmem [resolvable:$true] %s212
          %215 = dma.hbm_to_vmem [thread:$0]  %s211, 16, %s213, [#allocation5]
        $region20: #{glse_pallas.34} parent=11 // pred_fallthru
          _
        // Predicated region
        $region21: #{glse_pallas.34} parent=11 // pred_check
          %p216 = pneg %p104
        $region22: #{glse_pallas.34} parent=11 // pred_check_branch
          %218 = sbr.rel (%p216) target = $region24
        $region23: #{glse_pallas.34} parent=11 // pred_region
          _
        $region24: #{glse_pallas.34} parent=11 // pred_fallthru
          _
        // Predicated region
        $region25: #{glse_pallas.34} parent=11 // pred_check
          %p219 = pneg %p125
        $region26: #{glse_pallas.34} parent=11 // pred_check_branch
          %221 = sbr.rel (%p219) target = $region28
        $region27: #{glse_pallas.34} parent=11 // pred_region
          _
        $region28: #{glse_pallas.34} parent=11 // pred_fallthru
          _
      $region12: #{glse_pallas.34} parent=5 // pred_fallthru
        _
      %p222 = scmp.lt.s32.totalorder %s15, 2
      // Predicated region
      $region29: #{glse_pallas.34} parent=5 // pred_check
        %p223 = pneg %p222
      $region30: #{glse_pallas.34} parent=5 // pred_check_branch
        %225 = sbr.rel (%p223) target = $region32
      $region31: #{glse_pallas.34} parent=5 // pred_region
        // Predicated region
        $region33: #{glse_pallas.34} parent=31 // pred_check
          %p226 = pneg %p35
        $region34: #{glse_pallas.34} parent=31 // pred_check_branch
          %228 = sbr.rel (%p226) target = $region36
        $region35: #{glse_pallas.34} parent=31 // pred_region
          %s229 = smul.u32 8, %s15
          %p230 = scmp.lt.s32.totalorder %s229, 15
          %s231 = scalar_select %p230, %s229, 15
          %s232 = smul.addr %s231, 4
          %s233 = scalar_lea.vmem %s0, %s232
          %s234 = smul.u32 8, %s15
        $region36: #{glse_pallas.34} parent=31 // pred_fallthru
          _
      $region32: #{glse_pallas.34} parent=5 // pred_fallthru
        _
      %p235 = scmp.le.s32.totalorder 1, %s15
      %p236 = scmp.lt.s32.totalorder %s15, 3
      %p237 = pnand %p235, %p236
      %p238 = pneg %p237
      // Predicated region
      $region37: #{glse_pallas.34} parent=5 // pred_check
        _
      $region38: #{glse_pallas.34} parent=5 // pred_check_branch
        %240 = sbr.rel (%p237) target = $region40
      $region39: #{glse_pallas.34} parent=5 // pred_region
        %s241 = ssub.s32 %s15, 1
        // Predicated region
        $region41: #{glse_pallas.34} parent=39 // pred_check
          %p242 = pneg %p62
        $region42: #{glse_pallas.34} parent=39 // pred_check_branch
          %244 = sbr.rel (%p242) target = $region44
        $region43: #{glse_pallas.34} parent=39 // pred_region
          %246 = dma.done [#allocation3], 16
        $region44: #{glse_pallas.34} parent=39 // pred_fallthru
          _
        // Predicated region
        $region45: #{glse_pallas.34} parent=39 // pred_check
          %p247 = pneg %p83
        $region46: #{glse_pallas.34} parent=39 // pred_check_branch
          %249 = sbr.rel (%p247) target = $region48
        $region47: #{glse_pallas.34} parent=39 // pred_region
          %251 = dma.done [#allocation5], 16
        $region48: #{glse_pallas.34} parent=39 // pred_fallthru
          _
        %s252 = smul.u32 8, %s20
        %p253 = scmp.lt.s32.totalorder %s252, 15
        %s254 = scalar_select %p253, %s252, 15
        %s255 = smul.addr %s254, 4
        %s256 = scalar_lea.vmem %s0, %s255
        %p257 = pneg %p41
        %p258 = pneg %p38
        %p259 = pneg %p62
        %p260 = pneg %p59
        %p261 = pneg %p83
        %p262 = pneg %p80
        %p263 = pneg %p104
        %p264 = pneg %p101
        %p265 = pneg %p125
        %p266 = pneg %p122
        %p267 = pneg %p151
        %p268 = pneg %p148
        %s269 = smul.u32 8, %s20
        %p270 = scmp.lt.s32.totalorder %s269, 15
        %s271 = scalar_select %p270, %s269, 15
        %s272 = smul.addr %s271, 4
        %s273 = scalar_lea.vmem %s5, %s272
        %p274 = pneg %p177
        %p275 = pneg %p174
        %s276 = smul.u32 8, %s20
        %p277 = scmp.lt.s32.totalorder %s276, 15
        %s278 = scalar_select %p277, %s276, 15
        %s279 = smul.addr %s278, 2
        %s280 = smul.addr %s279, 4
        %s281 = scalar_lea.vmem %s6, %s280
        %s282 = smul.u32 8, %s20
        %p283 = scmp.lt.s32.totalorder %s282, 15
        %s284 = scalar_select %p283, %s282, 15
        %s285 = smul.addr %s284, 4
        %s286 = scalar_lea.vmem %s0, %s285
        %s287 = smul.u32 8, %s20
        %s288 = smul.u32 8, %s20
        %p289 = scmp.lt.s32.totalorder %s288, 15
        %s290 = scalar_select %p289, %s288, 15
        %s291 = smul.addr %s290, 4
        %s292 = scalar_lea.vmem %s5, %s291
        %s293 = smul.u32 8, %s20
        %s294 = smul.u32 8, %s20
        %p295 = scmp.lt.s32.totalorder %s294, 15
        %s296 = scalar_select %p295, %s294, 15
        %s297 = smul.addr %s296, 2
        %s298 = smul.addr %s297, 4
        %s299 = scalar_lea.vmem %s6, %s298
        %s300 = smul.u32 8, %s20
        %v302 = vld [vmem:[%s286] sm:$0xf]
        %v303 = vld [vmem:[%s286 + $0x4] sm:$0xf]
        %v304 = vld [vmem:[%s286 + $0x8] sm:$0xf]
        %v305 = vld [vmem:[%s286 + $0xc] sm:$0xf]
        %v306 = vld [vmem:[%s286 + $0x10] sm:$0xf]
        %v307 = vld [vmem:[%s286 + $0x14] sm:$0xf]
        %v308 = vld [vmem:[%s286 + $0x18] sm:$0xf]
        %v309 = vld [vmem:[%s286 + $0x1c] sm:$0xf]
        %v310 = vunpack.c.l.bf16 %v302
        %v311 = vunpack.c.l.bf16 %v303
        %v312 = vunpack.c.l.bf16 %v304
        %v313 = vunpack.c.l.bf16 %v305
        %v314 = vunpack.c.l.bf16 %v306
        %v315 = vunpack.c.l.bf16 %v307
        %v316 = vunpack.c.l.bf16 %v308
        %v317 = vunpack.c.l.bf16 %v309
        %v318 = vld [vmem:[#allocation2] sm:$0x1]
        %v319 = vld [vmem:[#allocation4] sm:$0x1]
        %vm320 = vcmask 523264
        %v321 = vsel %vm320, %v310, 0.0
        %322 = vadd.xlane.f32.xlu0 %v321
        %v323 = vpop.xlane.xlu0 %322
        %v324 = vsel %vm320, %v311, 0.0
        %325 = vadd.xlane.f32.xlu0 %v324
        %v326 = vpop.xlane.xlu0 %325
        %v327 = vsel %vm320, %v312, 0.0
        %328 = vadd.xlane.f32.xlu0 %v327
        %v329 = vpop.xlane.xlu0 %328
        %v330 = vsel %vm320, %v313, 0.0
        %331 = vadd.xlane.f32.xlu0 %v330
        %v332 = vpop.xlane.xlu0 %331
        %v333 = vsel %vm320, %v314, 0.0
        %334 = vadd.xlane.f32.xlu0 %v333
        %v335 = vpop.xlane.xlu0 %334
        %v336 = vsel %vm320, %v315, 0.0
        %337 = vadd.xlane.f32.xlu0 %v336
        %v338 = vpop.xlane.xlu0 %337
        %v339 = vsel %vm320, %v316, 0.0
        %340 = vadd.xlane.f32.xlu0 %v339
        %v341 = vpop.xlane.xlu0 %340
        %v342 = vsel %vm320, %v317, 0.0
        %343 = vadd.xlane.f32.xlu0 %v342
        %v344 = vpop.xlane.xlu0 %343
        %v345 = vrcp.pop 64.0
        %v346 = vmul.f32 64.0, %v345
        %v347 = vsub.f32 1.0, %v346
        %v348 = vmul.f32 %v345, %v347
        %v349 = vadd.f32 %v345, %v348
        %vm350 = vweird.f32 %v345
        %v351 = vsel %vm350, %v345, %v349
        %v352 = vmul.f32 %v323, %v351
        %v353 = vmul.f32 %v326, %v351
        %v354 = vmul.f32 %v329, %v351
        %v355 = vmul.f32 %v332, %v351
        %v356 = vmul.f32 %v335, %v351
        %v357 = vmul.f32 %v338, %v351
        %v358 = vmul.f32 %v341, %v351
        %v359 = vmul.f32 %v344, %v351
        %v360 = vsub.f32 %v310, %v352
        %v361 = vsub.f32 %v311, %v353
        %v362 = vsub.f32 %v312, %v354
        %v363 = vsub.f32 %v313, %v355
        %v364 = vsub.f32 %v314, %v356
        %v365 = vsub.f32 %v315, %v357
        %v366 = vsub.f32 %v316, %v358
        %v367 = vsub.f32 %v317, %v359
        %v368 = vmul.f32 %v360, %v360
        %v369 = vmul.f32 %v361, %v361
        %v370 = vmul.f32 %v362, %v362
        %v371 = vmul.f32 %v363, %v363
        %v372 = vmul.f32 %v364, %v364
        %v373 = vmul.f32 %v365, %v365
        %v374 = vmul.f32 %v366, %v366
        %v375 = vmul.f32 %v367, %v367
        %v376 = vsel %vm320, %v368, 0.0
        %377 = vadd.xlane.f32.xlu0 %v376
        %v378 = vpop.xlane.xlu0 %377
        %v379 = vsel %vm320, %v369, 0.0
        %380 = vadd.xlane.f32.xlu0 %v379
        %v381 = vpop.xlane.xlu0 %380
        %v382 = vsel %vm320, %v370, 0.0
        %383 = vadd.xlane.f32.xlu0 %v382
        %v384 = vpop.xlane.xlu0 %383
        %v385 = vsel %vm320, %v371, 0.0
        %386 = vadd.xlane.f32.xlu0 %v385
        %v387 = vpop.xlane.xlu0 %386
        %v388 = vsel %vm320, %v372, 0.0
        %389 = vadd.xlane.f32.xlu0 %v388
        %v390 = vpop.xlane.xlu0 %389
        %v391 = vsel %vm320, %v373, 0.0
        %392 = vadd.xlane.f32.xlu0 %v391
        %v393 = vpop.xlane.xlu0 %392
        %v394 = vsel %vm320, %v374, 0.0
        %395 = vadd.xlane.f32.xlu0 %v394
        %v396 = vpop.xlane.xlu0 %395
        %v397 = vsel %vm320, %v375, 0.0
        %398 = vadd.xlane.f32.xlu0 %v397
        %v399 = vpop.xlane.xlu0 %398
        %v400 = vmul.f32 %v378, %v351
        %v401 = vmul.f32 %v381, %v351
        %v402 = vmul.f32 %v384, %v351
        %v403 = vmul.f32 %v387, %v351
        %v404 = vmul.f32 %v390, %v351
        %v405 = vmul.f32 %v393, %v351
        %v406 = vmul.f32 %v396, %v351
        %v407 = vmul.f32 %v399, %v351
        %v408 = vadd.f32 %v400, 1e-05
        %v409 = vadd.f32 %v401, 1e-05
        %v410 = vadd.f32 %v402, 1e-05
        %v411 = vadd.f32 %v403, 1e-05
        %v412 = vadd.f32 %v404, 1e-05
        %v413 = vadd.f32 %v405, 1e-05
        %v414 = vadd.f32 %v406, 1e-05
        %v415 = vadd.f32 %v407, 1e-05
        %v416 = vrsqrt.pop %v408
        %v417 = vmul.f32 %v416, %v408
        %v418 = vmul.f32 %v417, %v416
        %v419 = vmul.f32 0.5, %v418
        %v420 = vsub.f32 1.5, %v419
        %v421 = vmul.f32 %v416, %v420
        %vm422 = vweird.f32 %v408
        %vm423 = vweird.f32 %v416
        %vm424 = vmor %vm422, %vm423
        %v425 = vsel %vm424, %v416, %v421
        %v426 = vrsqrt.pop %v409
        %v427 = vmul.f32 %v426, %v409
        %v428 = vmul.f32 %v427, %v426
        %v429 = vmul.f32 0.5, %v428
        %v430 = vsub.f32 1.5, %v429
        %v431 = vmul.f32 %v426, %v430
        %vm432 = vweird.f32 %v409
        %vm433 = vweird.f32 %v426
        %vm434 = vmor %vm432, %vm433
        %v435 = vsel %vm434, %v426, %v431
        %v436 = vrsqrt.pop %v410
        %v437 = vmul.f32 %v436, %v410
        %v438 = vmul.f32 %v437, %v436
        %v439 = vmul.f32 0.5, %v438
        %v440 = vsub.f32 1.5, %v439
        %v441 = vmul.f32 %v436, %v440
        %vm442 = vweird.f32 %v410
        %vm443 = vweird.f32 %v436
        %vm444 = vmor %vm442, %vm443
        %v445 = vsel %vm444, %v436, %v441
        %v446 = vrsqrt.pop %v411
        %v447 = vmul.f32 %v446, %v411
        %v448 = vmul.f32 %v447, %v446
        %v449 = vmul.f32 0.5, %v448
        %v450 = vsub.f32 1.5, %v449
        %v451 = vmul.f32 %v446, %v450
        %vm452 = vweird.f32 %v411
        %vm453 = vweird.f32 %v446
        %vm454 = vmor %vm452, %vm453
        %v455 = vsel %vm454, %v446, %v451
        %v456 = vrsqrt.pop %v412
        %v457 = vmul.f32 %v456, %v412
        %v458 = vmul.f32 %v457, %v456
        %v459 = vmul.f32 0.5, %v458
        %v460 = vsub.f32 1.5, %v459
        %v461 = vmul.f32 %v456, %v460
        %vm462 = vweird.f32 %v412
        %vm463 = vweird.f32 %v456
        %vm464 = vmor %vm462, %vm463
        %v465 = vsel %vm464, %v456, %v461
        %v466 = vrsqrt.pop %v413
        %v467 = vmul.f32 %v466, %v413
        %v468 = vmul.f32 %v467, %v466
        %v469 = vmul.f32 0.5, %v468
        %v470 = vsub.f32 1.5, %v469
        %v471 = vmul.f32 %v466, %v470
        %vm472 = vweird.f32 %v413
        %vm473 = vweird.f32 %v466
        %vm474 = vmor %vm472, %vm473
        %v475 = vsel %vm474, %v466, %v471
        %v476 = vrsqrt.pop %v414
        %v477 = vmul.f32 %v476, %v414
        %v478 = vmul.f32 %v477, %v476
        %v479 = vmul.f32 0.5, %v478
        %v480 = vsub.f32 1.5, %v479
        %v481 = vmul.f32 %v476, %v480
        %vm482 = vweird.f32 %v414
        %vm483 = vweird.f32 %v476
        %vm484 = vmor %vm482, %vm483
        %v485 = vsel %vm484, %v476, %v481
        %v486 = vrsqrt.pop %v415
        %v487 = vmul.f32 %v486, %v415
        %v488 = vmul.f32 %v487, %v486
        %v489 = vmul.f32 0.5, %v488
        %v490 = vsub.f32 1.5, %v489
        %v491 = vmul.f32 %v486, %v490
        %vm492 = vweird.f32 %v415
        %vm493 = vweird.f32 %v486
        %vm494 = vmor %vm492, %vm493
        %v495 = vsel %vm494, %v486, %v491
        %v496 = vmul.f32 %v360, %v425
        %v497 = vmul.f32 %v361, %v435
        %v498 = vmul.f32 %v362, %v445
        %v499 = vmul.f32 %v363, %v455
        %v500 = vmul.f32 %v364, %v465
        %v501 = vmul.f32 %v365, %v475
        %v502 = vmul.f32 %v366, %v485
        %v503 = vmul.f32 %v367, %v495
        %v505 = vperm.slane %v318, 0
        %v507 = vmul.f32 %v496, %v505
        %v508 = vmul.f32 %v497, %v505
        %v509 = vmul.f32 %v498, %v505
        %v510 = vmul.f32 %v499, %v505
        %v511 = vmul.f32 %v500, %v505
        %v512 = vmul.f32 %v501, %v505
        %v513 = vmul.f32 %v502, %v505
        %v514 = vmul.f32 %v503, %v505
        %v516 = vperm.slane %v319, 0
        %v518 = vadd.f32 %v507, %v516
        %v519 = vadd.f32 %v508, %v516
        %v520 = vadd.f32 %v509, %v516
        %v521 = vadd.f32 %v510, %v516
        %v522 = vadd.f32 %v511, %v516
        %v523 = vadd.f32 %v512, %v516
        %v524 = vadd.f32 %v513, %v516
        %v525 = vadd.f32 %v514, %v516
        %v526 = vpack.c.bf16 %v518, %v518
        %v527 = vpack.c.bf16 %v519, %v519
        %v528 = vpack.c.bf16 %v520, %v520
        %v529 = vpack.c.bf16 %v521, %v521
        %v530 = vpack.c.bf16 %v522, %v522
        %v531 = vpack.c.bf16 %v523, %v523
        %v532 = vpack.c.bf16 %v524, %v524
        %v533 = vpack.c.bf16 %v525, %v525
        %vm534 = vcmask 519168
        %535 = vst.msk [vmem:[%s292] sm:$0xf] %vm534, %v526
        %536 = vst.msk [vmem:[%s292 + $0x4] sm:$0xf] %vm534, %v527
        %537 = vst.msk [vmem:[%s292 + $0x8] sm:$0xf] %vm534, %v528
        %538 = vst.msk [vmem:[%s292 + $0xc] sm:$0xf] %vm534, %v529
        %539 = vst.msk [vmem:[%s292 + $0x10] sm:$0xf] %vm534, %v530
        %540 = vst.msk [vmem:[%s292 + $0x14] sm:$0xf] %vm534, %v531
        %541 = vst.msk [vmem:[%s292 + $0x18] sm:$0xf] %vm534, %v532
        %542 = vst.msk [vmem:[%s292 + $0x1c] sm:$0xf] %vm534, %v533
        %v543 = vld [vmem:[%s3] sm:$0xff]
        %v544 = vld [vmem:[%s3 + $0x8] sm:$0xff]
        %v545 = vld [vmem:[%s3 + $0x10] sm:$0xff]
        %v546 = vld [vmem:[%s3 + $0x18] sm:$0xff]
        %v547 = vld [vmem:[%s3 + $0x20] sm:$0xff]
        %v548 = vld [vmem:[%s3 + $0x28] sm:$0xff]
        %v549 = vld [vmem:[%s3 + $0x30] sm:$0xff]
        %v550 = vld [vmem:[%s3 + $0x38] sm:$0xff]
        %v551 = vld [vmem:[%s4] sm:$0x3]
        %v553 = vperm.slane %v551, 0
        %v554 = vperm.slane %v551, 1
        %v565 = vunpack.c.l.b16 %v526
        %v566 = vunpack.c.l.b16 %v527
        %v567 = vunpack.c.l.b16 %v528
        %v568 = vunpack.c.l.b16 %v529
        %v569 = vunpack.c.l.b16 %v530
        %v570 = vunpack.c.l.b16 %v531
        %v571 = vunpack.c.l.b16 %v532
        %v572 = vunpack.c.l.b16 %v533
        %v573 = vpack.c.b16 %v566, %v565
        %v574 = vpack.c.b16 %v568, %v567
        %v575 = vpack.c.b16 %v570, %v569
        %v576 = vpack.c.b16 %v572, %v571
        %v585 = vunpack.c.l.b16 %v543
        %v586 = vunpack.c.h.b16 %v543
        %v587 = vunpack.c.l.b16 %v544
        %v588 = vunpack.c.h.b16 %v544
        %v589 = vunpack.c.l.b16 %v545
        %v590 = vunpack.c.h.b16 %v545
        %v591 = vunpack.c.l.b16 %v546
        %v592 = vunpack.c.h.b16 %v546
        %v593 = vunpack.c.l.b16 %v547
        %v594 = vunpack.c.h.b16 %v547
        %v595 = vunpack.c.l.b16 %v548
        %v596 = vunpack.c.h.b16 %v548
        %v597 = vunpack.c.l.b16 %v549
        %v598 = vunpack.c.h.b16 %v549
        %v599 = vunpack.c.l.b16 %v550
        %v600 = vunpack.c.h.b16 %v550
        %v601 = vpack.c.b16 %v587, %v585
        %v602 = vpack.c.b16 %v588, %v586
        %v603 = vpack.c.b16 %v591, %v589
        %v604 = vpack.c.b16 %v592, %v590
        %v605 = vpack.c.b16 %v595, %v593
        %v606 = vpack.c.b16 %v596, %v594
        %v607 = vpack.c.b16 %v599, %v597
        %v608 = vpack.c.b16 %v600, %v598
        %v618 = vsel %vm320, %v573, 0
        %v621 = vsel %vm320, %v574, 0
        %v624 = vsel %vm320, %v575, 0
        %v627 = vsel %vm320, %v576, 0
        %629 = vmatpush.bf16.msra.mxu0 0
        %630 = vmatpush.bf16.msra.mxu0 0
        %631 = vmatpush.bf16.msra.mxu0 0
        %632 = vmatpush.bf16.msra.mxu0 0
        %633 = vmatpush.bf16.msra.mxu0 %v607
        %634 = vmatpush.bf16.msra.mxu0 %v605
        %635 = vmatpush.bf16.msra.mxu0 %v603
        %636 = vmatpush.bf16.msra.mxu0 %v601
        %637 = vmatmul.bf16.gmra.mxu0 %v618
        %v638 = vpop.f32.mrf.mxu0
        %v639 = vadd.f32 %v553, %v638
        %v640 = vpop.f32.mrf.mxu0
        %v641 = vadd.f32 %v553, %v640
        %642 = vmatmul.bf16.gmra.mxu0 %v621
        %v643 = vpop.f32.mrf.mxu0
        %v644 = vadd.f32 %v553, %v643
        %v645 = vpop.f32.mrf.mxu0
        %v646 = vadd.f32 %v553, %v645
        %647 = vmatmul.bf16.gmra.mxu0 %v624
        %v648 = vpop.f32.mrf.mxu0
        %v649 = vadd.f32 %v553, %v648
        %v650 = vpop.f32.mrf.mxu0
        %v651 = vadd.f32 %v553, %v650
        %652 = vmatmul.bf16.gmra.mxu0 %v627
        %v653 = vpop.f32.mrf.mxu0
        %v654 = vadd.f32 %v553, %v653
        %v655 = vpop.f32.mrf.mxu0
        %v656 = vadd.f32 %v553, %v655
        %657 = vdwg.mxu0
        %658 = vmatpush.bf16.msra.mxu0 0
        %659 = vmatpush.bf16.msra.mxu0 0
        %660 = vmatpush.bf16.msra.mxu0 0
        %661 = vmatpush.bf16.msra.mxu0 0
        %662 = vmatpush.bf16.msra.mxu0 %v608
        %663 = vmatpush.bf16.msra.mxu0 %v606
        %664 = vmatpush.bf16.msra.mxu0 %v604
        %665 = vmatpush.bf16.msra.mxu0 %v602
        %666 = vmatmul.bf16.gmra.mxu0 %v618
        %v667 = vpop.f32.mrf.mxu0
        %v668 = vadd.f32 %v554, %v667
        %v669 = vpop.f32.mrf.mxu0
        %v670 = vadd.f32 %v554, %v669
        %671 = vmatmul.bf16.gmra.mxu0 %v621
        %v672 = vpop.f32.mrf.mxu0
        %v673 = vadd.f32 %v554, %v672
        %v674 = vpop.f32.mrf.mxu0
        %v675 = vadd.f32 %v554, %v674
        %676 = vmatmul.bf16.gmra.mxu0 %v624
        %v677 = vpop.f32.mrf.mxu0
        %v678 = vadd.f32 %v554, %v677
        %v679 = vpop.f32.mrf.mxu0
        %v680 = vadd.f32 %v554, %v679
        %681 = vmatmul.bf16.gmra.mxu0 %v627
        %v682 = vpop.f32.mrf.mxu0
        %v683 = vadd.f32 %v554, %v682
        %v684 = vpop.f32.mrf.mxu0
        %v685 = vadd.f32 %v554, %v684
        %686 = vdwg.mxu0
        %v687 = vpack.c.bf16 %v668, %v639
        %v688 = vpack.c.bf16 %v670, %v641
        %v689 = vpack.c.bf16 %v673, %v644
        %v690 = vpack.c.bf16 %v675, %v646
        %v691 = vpack.c.bf16 %v678, %v649
        %v692 = vpack.c.bf16 %v680, %v651
        %v693 = vpack.c.bf16 %v683, %v654
        %v694 = vpack.c.bf16 %v685, %v656
        %vm695 = vcmask 1043456
        %vm696 = vcmask 523268
        %vm697 = vmor %vm696, %vm695
        %698 = vst.msk [vmem:[%s299] sm:$0xff] %vm697, %v687
        %699 = vst.msk [vmem:[%s299 + $0x8] sm:$0xff] %vm697, %v688
        %700 = vst.msk [vmem:[%s299 + $0x10] sm:$0xff] %vm697, %v689
        %701 = vst.msk [vmem:[%s299 + $0x18] sm:$0xff] %vm697, %v690
        %702 = vst.msk [vmem:[%s299 + $0x20] sm:$0xff] %vm697, %v691
        %703 = vst.msk [vmem:[%s299 + $0x28] sm:$0xff] %vm697, %v692
        %704 = vst.msk [vmem:[%s299 + $0x30] sm:$0xff] %vm697, %v693
        %705 = vst.msk [vmem:[%s299 + $0x38] sm:$0xff] %vm697, %v694
        %s706 = smul.u32 8, %s20
        %p707 = scmp.lt.s32.totalorder %s706, 15
        %s708 = scalar_select %p707, %s706, 15
        %s709 = smul.addr %s708, 4
        %s710 = scalar_lea.vmem %s5, %s709
        %s711 = smul.u32 8, %s20
        %p712 = scmp.lt.s32.totalorder %s711, 15
        %s713 = scalar_select %p712, %s711, 15
        %s714 = smul.addr %s713, 2
        %s715 = smul.addr %s714, 4
        %s716 = scalar_lea.vmem %s6, %s715
        // Predicated region
        $region49: #{glse_pallas.34} parent=39 // pred_check
          %p717 = pneg %p148
        $region50: #{glse_pallas.34} parent=39 // pred_check_branch
          %719 = sbr.rel (%p717) target = $region52
        $region51: #{glse_pallas.34} parent=39 // pred_region
          %s720 = smul.u32 8, %s20
        $region52: #{glse_pallas.34} parent=39 // pred_fallthru
          _
        // Predicated region
        $region53: #{glse_pallas.34} parent=39 // pred_check
          %p721 = pneg %p174
        $region54: #{glse_pallas.34} parent=39 // pred_check_branch
          %723 = sbr.rel (%p721) target = $region56
        $region55: #{glse_pallas.34} parent=39 // pred_region
          %s724 = smul.u32 8, %s20
        $region56: #{glse_pallas.34} parent=39 // pred_fallthru
          _
      $region40: #{glse_pallas.34} parent=5 // pred_fallthru
        _
      %p725 = scmp.le.s32.totalorder 2, %s15
      // Predicated region
      $region57: #{glse_pallas.34} parent=5 // pred_check
        %p726 = pneg %p725
      $region58: #{glse_pallas.34} parent=5 // pred_check_branch
        %728 = sbr.rel (%p726) target = $region60
      $region59: #{glse_pallas.34} parent=5 // pred_region
        %s729 = ssub.s32 %s15, 2
        // Predicated region
        $region61: #{glse_pallas.34} parent=59 // pred_check
          %p730 = pneg %p154
        $region62: #{glse_pallas.34} parent=59 // pred_check_branch
          %732 = sbr.rel (%p730) target = $region64
        $region63: #{glse_pallas.34} parent=59 // pred_region
          %s733 = smul.u32 8, %s21
          %p734 = scmp.lt.s32.totalorder %s733, 15
          %s735 = scalar_select %p734, %s733, 15
          %s736 = smul.addr %s735, 4
          %s737 = scalar_lea.vmem %s5, %s736
        $region64: #{glse_pallas.34} parent=59 // pred_fallthru
          _
        // Predicated region
        $region65: #{glse_pallas.34} parent=59 // pred_check
          %p738 = pneg %p180
        $region66: #{glse_pallas.34} parent=59 // pred_check_branch
          %740 = sbr.rel (%p738) target = $region68
        $region67: #{glse_pallas.34} parent=59 // pred_region
          %s741 = smul.u32 8, %s21
          %p742 = scmp.lt.s32.totalorder %s741, 15
          %s743 = scalar_select %p742, %s741, 15
          %s744 = smul.addr %s743, 2
          %s745 = smul.addr %s744, 4
          %s746 = scalar_lea.vmem %s6, %s745
        $region68: #{glse_pallas.34} parent=59 // pred_fallthru
          _
      $region60: #{glse_pallas.34} parent=5 // pred_fallthru
        _
    $region6: #{glse_pallas.34} parent=1 // loop_footer
      %s19 = sadd.s32 1, %s15
    $region7: #{glse_pallas.34} parent=1 // loop_footer_branch
      %14 = sbr.rel target = $region3
    $region8: #{glse_pallas.34} parent=1 // loop_exit
      _
    %747 = vsyncpa [#allocation3], 1
    %s748 = scalar_lea.sflag [#allocation3], 1
    %749 = vsyncpa %s748, 1
    %750 = vsyncpa [#allocation5], 1

// kernel: glse_pallas.25
$region0: #{glse_pallas.25}
  #allocation0 [shape = 'u32[]', space=smem, size = 0x4, offset = 0x4, fixed_abs, tag = 'smem constant byte address 0x4 - core index']
  #allocation1 [shape = 'u32[72,128]{1,0:T(1,128)}', space=vmem, size = 0x9000, scoped, tag = 'internal scratch']
  %s0 = inlined_call_operand.vmem [shape: bf16[128,64], index: 0, kind: input, shape index: {}]
  %s1 = inlined_call_operand.vmem [shape: bf16[128,64], index: 1, kind: input, shape index: {}]
  %s2 = inlined_call_operand.vmem [shape: f32[1,64], index: 2, kind: input, shape index: {}]
  %s3 = inlined_call_operand.vmem [shape: f32[1,64], index: 3, kind: input, shape index: {}]
  %s4 = inlined_call_operand.vmem [shape: bf16[64,256], index: 4, kind: input, shape index: {}]
  %s5 = inlined_call_operand.vmem [shape: f32[1,256], index: 5, kind: input, shape index: {}]
  %s6 = inlined_call_operand.vmem [shape: bf16[256,64], index: 6, kind: input, shape index: {}]
  %s7 = inlined_call_operand.vmem [shape: f32[1,64], index: 7, kind: input, shape index: {}]
  %s8 = inlined_call_operand.vmem [shape: bf16[128,64], index: 8, kind: output, shape index: {}]
  %s9 = sld [smem:[#allocation0]]
  $region65: #{glse_pallas.25} parent=0
    _
  %s11 = ssub.s32 1, %s9
  %s12 = scalar_select 0, %s11, %s9
  loop: start=0, step=1, limit=4
  $region2: #{glse_pallas.25} parent=0 // loop_pre_header
    _
  $region3: #{glse_pallas.25} parent=0 // loop_header
    %s14 = sphi 0, %s18
    %p15 = scmp.ge.s32.totalorder %s14, 4
    %s24 = sphi 0, %s26
    %s27 = sphi 0, %s24
    %s28 = sphi 0, %s27
    %s44 = sphi 0, %s28
    %s50 = sphi 0, %s52
    %s53 = sphi 0, %s50
    %s54 = sphi 0, %s53
    %s70 = sphi 0, %s54
    %s74 = sphi 0, %s74
    %s76 = sphi 0, %s74
    %s77 = sphi 0, %s76
    %s91 = sphi 0, %s77
    %s95 = sphi 0, %s95
    %s97 = sphi 0, %s95
    %s98 = sphi 0, %s97
    %s112 = sphi 0, %s98
    %s116 = sphi 0, %s116
    %s118 = sphi 0, %s116
    %s119 = sphi 0, %s118
    %s133 = sphi 0, %s119
    %s137 = sphi 0, %s137
    %s139 = sphi 0, %s137
    %s140 = sphi 0, %s139
    %s154 = sphi 0, %s140
    %s158 = sphi 0, %s158
    %s160 = sphi 0, %s158
    %s161 = sphi 0, %s160
    %s175 = sphi 0, %s161
    %s179 = sphi 0, %s179
    %s181 = sphi 0, %s179
    %s182 = sphi 0, %s181
    %s196 = sphi 0, %s182
    %s202 = sphi 0, %s204
    %s205 = sphi 0, %s202
    %s206 = sphi 0, %s205
    %s222 = sphi 0, %s206
  $region4: #{glse_pallas.25} parent=0 // loop_header_branch
    %17 = sbr.rel (%p15) target = $region8
  $region5: #{glse_pallas.25} parent=0 // loop_body
    %s19 = ssub.s32 %s14, 1
    %s20 = ssub.s32 %s14, 2
    %s21 = sadd.s32 %s14, 1
    %s22 = ssub.s32 %s14, %s21
    %p23 = scmp.eq.s32.totalorder %s22, 0
    %s25 = sadd.s32 %s24, 1
    %s26 = scalar_select %p23, %s24, %s25
    %p29 = pneg %p23
    %p30 = scmp.eq.s32.totalorder %s14, 1
    %p31 = por %p29, %p30
    %p32 = scmp.ne.s32.totalorder %s24, %s27
    %p33 = scmp.eq.s32.totalorder %s14, 0
    %p34 = por %p32, %p33
    %p35 = scmp.ne.s32.totalorder %s24, %s27
    %p36 = scmp.eq.s32.totalorder %s19, 1
    %p37 = por %p35, %p36
    %p38 = scmp.ne.s32.totalorder %s27, %s28
    %p39 = scmp.eq.s32.totalorder %s19, 0
    %p40 = por %p38, %p39
    %p41 = scmp.ne.s32.totalorder %s27, %s28
    %p42 = scmp.eq.s32.totalorder %s20, 1
    %p43 = por %p41, %p42
    %p45 = scmp.ne.s32.totalorder %s28, %s44
    %p46 = scmp.eq.s32.totalorder %s20, 0
    %p47 = por %p45, %p46
    %s48 = ssub.s32 %s14, %s21
    %p49 = scmp.eq.s32.totalorder %s48, 0
    %s51 = sadd.s32 %s50, 1
    %s52 = scalar_select %p49, %s50, %s51
    %p55 = pneg %p49
    %p56 = scmp.eq.s32.totalorder %s14, 1
    %p57 = por %p55, %p56
    %p58 = scmp.ne.s32.totalorder %s50, %s53
    %p59 = scmp.eq.s32.totalorder %s14, 0
    %p60 = por %p58, %p59
    %p61 = scmp.ne.s32.totalorder %s50, %s53
    %p62 = scmp.eq.s32.totalorder %s19, 1
    %p63 = por %p61, %p62
    %p64 = scmp.ne.s32.totalorder %s53, %s54
    %p65 = scmp.eq.s32.totalorder %s19, 0
    %p66 = por %p64, %p65
    %p67 = scmp.ne.s32.totalorder %s53, %s54
    %p68 = scmp.eq.s32.totalorder %s20, 1
    %p69 = por %p67, %p68
    %p71 = scmp.ne.s32.totalorder %s54, %s70
    %p72 = scmp.eq.s32.totalorder %s20, 0
    %p73 = por %p71, %p72
    %s75 = sadd.s32 %s74, 1
    %p78 = scmp.eq.s32.totalorder %s14, 1
    %p79 = scmp.ne.s32.totalorder %s74, %s76
    %p80 = scmp.eq.s32.totalorder %s14, 0
    %p81 = por %p79, %p80
    %p82 = scmp.ne.s32.totalorder %s74, %s76
    %p83 = scmp.eq.s32.totalorder %s19, 1
    %p84 = por %p82, %p83
    %p85 = scmp.ne.s32.totalorder %s76, %s77
    %p86 = scmp.eq.s32.totalorder %s19, 0
    %p87 = por %p85, %p86
    %p88 = scmp.ne.s32.totalorder %s76, %s77
    %p89 = scmp.eq.s32.totalorder %s20, 1
    %p90 = por %p88, %p89
    %p92 = scmp.ne.s32.totalorder %s77, %s91
    %p93 = scmp.eq.s32.totalorder %s20, 0
    %p94 = por %p92, %p93
    %s96 = sadd.s32 %s95, 1
    %p99 = scmp.eq.s32.totalorder %s14, 1
    %p100 = scmp.ne.s32.totalorder %s95, %s97
    %p101 = scmp.eq.s32.totalorder %s14, 0
    %p102 = por %p100, %p101
    %p103 = scmp.ne.s32.totalorder %s95, %s97
    %p104 = scmp.eq.s32.totalorder %s19, 1
    %p105 = por %p103, %p104
    %p106 = scmp.ne.s32.totalorder %s97, %s98
    %p107 = scmp.eq.s32.totalorder %s19, 0
    %p108 = por %p106, %p107
    %p109 = scmp.ne.s32.totalorder %s97, %s98
    %p110 = scmp.eq.s32.totalorder %s20, 1
    %p111 = por %p109, %p110
    %p113 = scmp.ne.s32.totalorder %s98, %s112
    %p114 = scmp.eq.s32.totalorder %s20, 0
    %p115 = por %p113, %p114
    %s117 = sadd.s32 %s116, 1
    %p120 = scmp.eq.s32.totalorder %s14, 1
    %p121 = scmp.ne.s32.totalorder %s116, %s118
    %p122 = scmp.eq.s32.totalorder %s14, 0
    %p123 = por %p121, %p122
    %p124 = scmp.ne.s32.totalorder %s116, %s118
    %p125 = scmp.eq.s32.totalorder %s19, 1
    %p126 = por %p124, %p125
    %p127 = scmp.ne.s32.totalorder %s118, %s119
    %p128 = scmp.eq.s32.totalorder %s19, 0
    %p129 = por %p127, %p128
    %p130 = scmp.ne.s32.totalorder %s118, %s119
    %p131 = scmp.eq.s32.totalorder %s20, 1
    %p132 = por %p130, %p131
    %p134 = scmp.ne.s32.totalorder %s119, %s133
    %p135 = scmp.eq.s32.totalorder %s20, 0
    %p136 = por %p134, %p135
    %s138 = sadd.s32 %s137, 1
    %p141 = scmp.eq.s32.totalorder %s14, 1
    %p142 = scmp.ne.s32.totalorder %s137, %s139
    %p143 = scmp.eq.s32.totalorder %s14, 0
    %p144 = por %p142, %p143
    %p145 = scmp.ne.s32.totalorder %s137, %s139
    %p146 = scmp.eq.s32.totalorder %s19, 1
    %p147 = por %p145, %p146
    %p148 = scmp.ne.s32.totalorder %s139, %s140
    %p149 = scmp.eq.s32.totalorder %s19, 0
    %p150 = por %p148, %p149
    %p151 = scmp.ne.s32.totalorder %s139, %s140
    %p152 = scmp.eq.s32.totalorder %s20, 1
    %p153 = por %p151, %p152
    %p155 = scmp.ne.s32.totalorder %s140, %s154
    %p156 = scmp.eq.s32.totalorder %s20, 0
    %p157 = por %p155, %p156
    %s159 = sadd.s32 %s158, 1
    %p162 = scmp.eq.s32.totalorder %s14, 1
    %p163 = scmp.ne.s32.totalorder %s158, %s160
    %p164 = scmp.eq.s32.totalorder %s14, 0
    %p165 = por %p163, %p164
    %p166 = scmp.ne.s32.totalorder %s158, %s160
    %p167 = scmp.eq.s32.totalorder %s19, 1
    %p168 = por %p166, %p167
    %p169 = scmp.ne.s32.totalorder %s160, %s161
    %p170 = scmp.eq.s32.totalorder %s19, 0
    %p171 = por %p169, %p170
    %p172 = scmp.ne.s32.totalorder %s160, %s161
    %p173 = scmp.eq.s32.totalorder %s20, 1
    %p174 = por %p172, %p173
    %p176 = scmp.ne.s32.totalorder %s161, %s175
    %p177 = scmp.eq.s32.totalorder %s20, 0
    %p178 = por %p176, %p177
    %s180 = sadd.s32 %s179, 1
    %p183 = scmp.eq.s32.totalorder %s14, 1
    %p184 = scmp.ne.s32.totalorder %s179, %s181
    %p185 = scmp.eq.s32.totalorder %s14, 0
    %p186 = por %p184, %p185
    %p187 = scmp.ne.s32.totalorder %s179, %s181
    %p188 = scmp.eq.s32.totalorder %s19, 1
    %p189 = por %p187, %p188
    %p190 = scmp.ne.s32.totalorder %s181, %s182
    %p191 = scmp.eq.s32.totalorder %s19, 0
    %p192 = por %p190, %p191
    %p193 = scmp.ne.s32.totalorder %s181, %s182
    %p194 = scmp.eq.s32.totalorder %s20, 1
    %p195 = por %p193, %p194
    %p197 = scmp.ne.s32.totalorder %s182, %s196
    %p198 = scmp.eq.s32.totalorder %s20, 0
    %p199 = por %p197, %p198
    %s200 = ssub.s32 %s14, %s21
    %p201 = scmp.eq.s32.totalorder %s200, 0
    %s203 = sadd.s32 %s202, 1
    %s204 = scalar_select %p201, %s202, %s203
    %p207 = pneg %p201
    %p208 = scmp.eq.s32.totalorder %s14, 1
    %p209 = por %p207, %p208
    %p210 = scmp.ne.s32.totalorder %s202, %s205
    %p211 = scmp.eq.s32.totalorder %s14, 0
    %p212 = por %p210, %p211
    %p213 = scmp.ne.s32.totalorder %s202, %s205
    %p214 = scmp.eq.s32.totalorder %s19, 1
    %p215 = por %p213, %p214
    %p216 = scmp.ne.s32.totalorder %s205, %s206
    %p217 = scmp.eq.s32.totalorder %s19, 0
    %p218 = por %p216, %p217
    %p219 = scmp.ne.s32.totalorder %s205, %s206
    %p220 = scmp.eq.s32.totalorder %s20, 1
    %p221 = por %p219, %p220
    %p223 = scmp.ne.s32.totalorder %s206, %s222
    %p224 = scmp.eq.s32.totalorder %s20, 0
    %p225 = por %p223, %p224
    %p226 = scmp.le.s32.totalorder 1, %s14
    %p227 = scmp.lt.s32.totalorder %s14, 3
    %p228 = pnand %p226, %p227
    %p229 = pneg %p228
    // Predicated region
    $region9: #{glse_pallas.25} parent=5 // pred_check
      _
    $region10: #{glse_pallas.25} parent=5 // pred_check_branch
      %231 = sbr.rel (%p228) target = $region12
    $region11: #{glse_pallas.25} parent=5 // pred_region
      %s232 = ssub.s32 %s14, 1
      // Predicated region
      $region13: #{glse_pallas.25} parent=11 // pred_check
        %p233 = pneg %p87
      $region14: #{glse_pallas.25} parent=11 // pred_check_branch
        %235 = sbr.rel (%p233) target = $region16
      $region15: #{glse_pallas.25} parent=11 // pred_region
        _
      $region16: #{glse_pallas.25} parent=11 // pred_fallthru
        _
      // Predicated region
      $region17: #{glse_pallas.25} parent=11 // pred_check
        %p236 = pneg %p108
      $region18: #{glse_pallas.25} parent=11 // pred_check_branch
        %238 = sbr.rel (%p236) target = $region20
      $region19: #{glse_pallas.25} parent=11 // pred_region
        _
      $region20: #{glse_pallas.25} parent=11 // pred_fallthru
        _
      // Predicated region
      $region21: #{glse_pallas.25} parent=11 // pred_check
        %p239 = pneg %p129
      $region22: #{glse_pallas.25} parent=11 // pred_check_branch
        %241 = sbr.rel (%p239) target = $region24
      $region23: #{glse_pallas.25} parent=11 // pred_region
        _
      $region24: #{glse_pallas.25} parent=11 // pred_fallthru
        _
      // Predicated region
      $region25: #{glse_pallas.25} parent=11 // pred_check
        %p242 = pneg %p150
      $region26: #{glse_pallas.25} parent=11 // pred_check_branch
        %244 = sbr.rel (%p242) target = $region28
      $region27: #{glse_pallas.25} parent=11 // pred_region
        _
      $region28: #{glse_pallas.25} parent=11 // pred_fallthru
        _
      // Predicated region
      $region29: #{glse_pallas.25} parent=11 // pred_check
        %p245 = pneg %p171
      $region30: #{glse_pallas.25} parent=11 // pred_check_branch
        %247 = sbr.rel (%p245) target = $region32
      $region31: #{glse_pallas.25} parent=11 // pred_region
        _
      $region32: #{glse_pallas.25} parent=11 // pred_fallthru
        _
      // Predicated region
      $region33: #{glse_pallas.25} parent=11 // pred_check
        %p248 = pneg %p192
      $region34: #{glse_pallas.25} parent=11 // pred_check_branch
        %250 = sbr.rel (%p248) target = $region36
      $region35: #{glse_pallas.25} parent=11 // pred_region
        _
      $region36: #{glse_pallas.25} parent=11 // pred_fallthru
        _
    $region12: #{glse_pallas.25} parent=5 // pred_fallthru
      _
    %p251 = scmp.lt.s32.totalorder %s14, 2
    // Predicated region
    $region37: #{glse_pallas.25} parent=5 // pred_check
      %p252 = pneg %p251
    $region38: #{glse_pallas.25} parent=5 // pred_check_branch
      %254 = sbr.rel (%p252) target = $region40
    $region39: #{glse_pallas.25} parent=5 // pred_region
      // Predicated region
      $region41: #{glse_pallas.25} parent=39 // pred_check
        %p255 = pneg %p34
      $region42: #{glse_pallas.25} parent=39 // pred_check_branch
        %257 = sbr.rel (%p255) target = $region44
      $region43: #{glse_pallas.25} parent=39 // pred_region
        %s258 = smul.u32 8, %s14
        %p259 = scmp.lt.s32.totalorder %s258, 15
        %s260 = scalar_select %p259, %s258, 15
        %s261 = smul.addr %s260, 4
        %s262 = scalar_lea.vmem %s0, %s261
        %s263 = smul.u32 8, %s14
      $region44: #{glse_pallas.25} parent=39 // pred_fallthru
        _
      // Predicated region
      $region45: #{glse_pallas.25} parent=39 // pred_check
        %p264 = pneg %p60
      $region46: #{glse_pallas.25} parent=39 // pred_check_branch
        %266 = sbr.rel (%p264) target = $region48
      $region47: #{glse_pallas.25} parent=39 // pred_region
        %s267 = smul.u32 8, %s14
        %p268 = scmp.lt.s32.totalorder %s267, 15
        %s269 = scalar_select %p268, %s267, 15
        %s270 = smul.addr %s269, 4
        %s271 = scalar_lea.vmem %s1, %s270
        %s272 = smul.u32 8, %s14
      $region48: #{glse_pallas.25} parent=39 // pred_fallthru
        _
    $region40: #{glse_pallas.25} parent=5 // pred_fallthru
      _
    %p273 = scmp.le.s32.totalorder 1, %s14
    %p274 = scmp.lt.s32.totalorder %s14, 3
    %p275 = pnand %p273, %p274
    %p276 = pneg %p275
    // Predicated region
    $region49: #{glse_pallas.25} parent=5 // pred_check
      _
    $region50: #{glse_pallas.25} parent=5 // pred_check_branch
      %278 = sbr.rel (%p275) target = $region52
    $region51: #{glse_pallas.25} parent=5 // pred_region
      %s279 = ssub.s32 %s14, 1
      %s280 = smul.u32 8, %s19
      %p281 = scmp.lt.s32.totalorder %s280, 15
      %s282 = scalar_select %p281, %s280, 15
      %s283 = smul.addr %s282, 4
      %s284 = scalar_lea.vmem %s0, %s283
      %p285 = pneg %p40
      %p286 = pneg %p37
      %s287 = smul.u32 8, %s19
      %p288 = scmp.lt.s32.totalorder %s287, 15
      %s289 = scalar_select %p288, %s287, 15
      %s290 = smul.addr %s289, 4
      %s291 = scalar_lea.vmem %s1, %s290
      %p292 = pneg %p66
      %p293 = pneg %p63
      %p294 = pneg %p87
      %p295 = pneg %p84
      %p296 = pneg %p108
      %p297 = pneg %p105
      %p298 = pneg %p129
      %p299 = pneg %p126
      %p300 = pneg %p150
      %p301 = pneg %p147
      %p302 = pneg %p171
      %p303 = pneg %p168
      %p304 = pneg %p192
      %p305 = pneg %p189
      %p306 = pneg %p218
      %p307 = pneg %p215
      %s308 = smul.u32 8, %s19
      %p309 = scmp.lt.s32.totalorder %s308, 15
      %s310 = scalar_select %p309, %s308, 15
      %s311 = smul.addr %s310, 4
      %s312 = scalar_lea.vmem %s8, %s311
      %s313 = smul.u32 8, %s19
      %p314 = scmp.lt.s32.totalorder %s313, 15
      %s315 = scalar_select %p314, %s313, 15
      %s316 = smul.addr %s315, 4
      %s317 = scalar_lea.vmem %s0, %s316
      %s318 = smul.u32 8, %s19
      %s319 = smul.u32 8, %s19
      %p320 = scmp.lt.s32.totalorder %s319, 15
      %s321 = scalar_select %p320, %s319, 15
      %s322 = smul.addr %s321, 4
      %s323 = scalar_lea.vmem %s1, %s322
      %s324 = smul.u32 8, %s19
      %s325 = smul.u32 8, %s19
      %p326 = scmp.lt.s32.totalorder %s325, 15
      %s327 = scalar_select %p326, %s325, 15
      %s328 = smul.addr %s327, 4
      %s329 = scalar_lea.vmem %s8, %s328
      %s330 = smul.u32 8, %s19
      %v332 = vld [vmem:[%s317] sm:$0xf]
      %v333 = vld [vmem:[%s317 + $0x4] sm:$0xf]
      %v334 = vld [vmem:[%s317 + $0x8] sm:$0xf]
      %v335 = vld [vmem:[%s317 + $0xc] sm:$0xf]
      %v336 = vld [vmem:[%s317 + $0x10] sm:$0xf]
      %v337 = vld [vmem:[%s317 + $0x14] sm:$0xf]
      %v338 = vld [vmem:[%s317 + $0x18] sm:$0xf]
      %v339 = vld [vmem:[%s317 + $0x1c] sm:$0xf]
      %v340 = vunpack.c.l.bf16 %v332
      %v341 = vunpack.c.l.bf16 %v333
      %v342 = vunpack.c.l.bf16 %v334
      %v343 = vunpack.c.l.bf16 %v335
      %v344 = vunpack.c.l.bf16 %v336
      %v345 = vunpack.c.l.bf16 %v337
      %v346 = vunpack.c.l.bf16 %v338
      %v347 = vunpack.c.l.bf16 %v339
      %v348 = vld [vmem:[%s2] sm:$0x1]
      %v349 = vld [vmem:[%s3] sm:$0x1]
      %vm350 = vcmask 523264
      %v351 = vsel %vm350, %v340, 0.0
      %352 = vadd.xlane.f32.xlu0 %v351
      %v353 = vpop.xlane.xlu0 %352
      %v354 = vsel %vm350, %v341, 0.0
      %355 = vadd.xlane.f32.xlu0 %v354
      %v356 = vpop.xlane.xlu0 %355
      %v357 = vsel %vm350, %v342, 0.0
      %358 = vadd.xlane.f32.xlu0 %v357
      %v359 = vpop.xlane.xlu0 %358
      %v360 = vsel %vm350, %v343, 0.0
      %361 = vadd.xlane.f32.xlu0 %v360
      %v362 = vpop.xlane.xlu0 %361
      %v363 = vsel %vm350, %v344, 0.0
      %364 = vadd.xlane.f32.xlu0 %v363
      %v365 = vpop.xlane.xlu0 %364
      %v366 = vsel %vm350, %v345, 0.0
      %367 = vadd.xlane.f32.xlu0 %v366
      %v368 = vpop.xlane.xlu0 %367
      %v369 = vsel %vm350, %v346, 0.0
      %370 = vadd.xlane.f32.xlu0 %v369
      %v371 = vpop.xlane.xlu0 %370
      %v372 = vsel %vm350, %v347, 0.0
      %373 = vadd.xlane.f32.xlu0 %v372
      %v374 = vpop.xlane.xlu0 %373
      %v375 = vrcp.pop 64.0
      %v376 = vmul.f32 64.0, %v375
      %v377 = vsub.f32 1.0, %v376
      %v378 = vmul.f32 %v375, %v377
      %v379 = vadd.f32 %v375, %v378
      %vm380 = vweird.f32 %v375
      %v381 = vsel %vm380, %v375, %v379
      %v382 = vmul.f32 %v353, %v381
      %v383 = vmul.f32 %v356, %v381
      %v384 = vmul.f32 %v359, %v381
      %v385 = vmul.f32 %v362, %v381
      %v386 = vmul.f32 %v365, %v381
      %v387 = vmul.f32 %v368, %v381
      %v388 = vmul.f32 %v371, %v381
      %v389 = vmul.f32 %v374, %v381
      %v390 = vsub.f32 %v340, %v382
      %v391 = vsub.f32 %v341, %v383
      %v392 = vsub.f32 %v342, %v384
      %v393 = vsub.f32 %v343, %v385
      %v394 = vsub.f32 %v344, %v386
      %v395 = vsub.f32 %v345, %v387
      %v396 = vsub.f32 %v346, %v388
      %v397 = vsub.f32 %v347, %v389
      %v398 = vmul.f32 %v390, %v390
      %v399 = vmul.f32 %v391, %v391
      %v400 = vmul.f32 %v392, %v392
      %v401 = vmul.f32 %v393, %v393
      %v402 = vmul.f32 %v394, %v394
      %v403 = vmul.f32 %v395, %v395
      %v404 = vmul.f32 %v396, %v396
      %v405 = vmul.f32 %v397, %v397
      %v406 = vsel %vm350, %v398, 0.0
      %407 = vadd.xlane.f32.xlu0 %v406
      %v408 = vpop.xlane.xlu0 %407
      %v409 = vsel %vm350, %v399, 0.0
      %410 = vadd.xlane.f32.xlu0 %v409
      %v411 = vpop.xlane.xlu0 %410
      %v412 = vsel %vm350, %v400, 0.0
      %413 = vadd.xlane.f32.xlu0 %v412
      %v414 = vpop.xlane.xlu0 %413
      %v415 = vsel %vm350, %v401, 0.0
      %416 = vadd.xlane.f32.xlu0 %v415
      %v417 = vpop.xlane.xlu0 %416
      %v418 = vsel %vm350, %v402, 0.0
      %419 = vadd.xlane.f32.xlu0 %v418
      %v420 = vpop.xlane.xlu0 %419
      %v421 = vsel %vm350, %v403, 0.0
      %422 = vadd.xlane.f32.xlu0 %v421
      %v423 = vpop.xlane.xlu0 %422
      %v424 = vsel %vm350, %v404, 0.0
      %425 = vadd.xlane.f32.xlu0 %v424
      %v426 = vpop.xlane.xlu0 %425
      %v427 = vsel %vm350, %v405, 0.0
      %428 = vadd.xlane.f32.xlu0 %v427
      %v429 = vpop.xlane.xlu0 %428
      %v430 = vmul.f32 %v408, %v381
      %v431 = vmul.f32 %v411, %v381
      %v432 = vmul.f32 %v414, %v381
      %v433 = vmul.f32 %v417, %v381
      %v434 = vmul.f32 %v420, %v381
      %v435 = vmul.f32 %v423, %v381
      %v436 = vmul.f32 %v426, %v381
      %v437 = vmul.f32 %v429, %v381
      %v438 = vadd.f32 %v430, 1e-05
      %v439 = vadd.f32 %v431, 1e-05
      %v440 = vadd.f32 %v432, 1e-05
      %v441 = vadd.f32 %v433, 1e-05
      %v442 = vadd.f32 %v434, 1e-05
      %v443 = vadd.f32 %v435, 1e-05
      %v444 = vadd.f32 %v436, 1e-05
      %v445 = vadd.f32 %v437, 1e-05
      %v446 = vrsqrt.pop %v438
      %v447 = vmul.f32 %v446, %v438
      %v448 = vmul.f32 %v447, %v446
      %v449 = vmul.f32 0.5, %v448
      %v450 = vsub.f32 1.5, %v449
      %v451 = vmul.f32 %v446, %v450
      %vm452 = vweird.f32 %v438
      %vm453 = vweird.f32 %v446
      %vm454 = vmor %vm452, %vm453
      %v455 = vsel %vm454, %v446, %v451
      %v456 = vrsqrt.pop %v439
      %v457 = vmul.f32 %v456, %v439
      %v458 = vmul.f32 %v457, %v456
      %v459 = vmul.f32 0.5, %v458
      %v460 = vsub.f32 1.5, %v459
      %v461 = vmul.f32 %v456, %v460
      %vm462 = vweird.f32 %v439
      %vm463 = vweird.f32 %v456
      %vm464 = vmor %vm462, %vm463
      %v465 = vsel %vm464, %v456, %v461
      %v466 = vrsqrt.pop %v440
      %v467 = vmul.f32 %v466, %v440
      %v468 = vmul.f32 %v467, %v466
      %v469 = vmul.f32 0.5, %v468
      %v470 = vsub.f32 1.5, %v469
      %v471 = vmul.f32 %v466, %v470
      %vm472 = vweird.f32 %v440
      %vm473 = vweird.f32 %v466
      %vm474 = vmor %vm472, %vm473
      %v475 = vsel %vm474, %v466, %v471
      %v476 = vrsqrt.pop %v441
      %v477 = vmul.f32 %v476, %v441
      %v478 = vmul.f32 %v477, %v476
      %v479 = vmul.f32 0.5, %v478
      %v480 = vsub.f32 1.5, %v479
      %v481 = vmul.f32 %v476, %v480
      %vm482 = vweird.f32 %v441
      %vm483 = vweird.f32 %v476
      %vm484 = vmor %vm482, %vm483
      %v485 = vsel %vm484, %v476, %v481
      %v486 = vrsqrt.pop %v442
      %v487 = vmul.f32 %v486, %v442
      %v488 = vmul.f32 %v487, %v486
      %v489 = vmul.f32 0.5, %v488
      %v490 = vsub.f32 1.5, %v489
      %v491 = vmul.f32 %v486, %v490
      %vm492 = vweird.f32 %v442
      %vm493 = vweird.f32 %v486
      %vm494 = vmor %vm492, %vm493
      %v495 = vsel %vm494, %v486, %v491
      %v496 = vrsqrt.pop %v443
      %v497 = vmul.f32 %v496, %v443
      %v498 = vmul.f32 %v497, %v496
      %v499 = vmul.f32 0.5, %v498
      %v500 = vsub.f32 1.5, %v499
      %v501 = vmul.f32 %v496, %v500
      %vm502 = vweird.f32 %v443
      %vm503 = vweird.f32 %v496
      %vm504 = vmor %vm502, %vm503
      %v505 = vsel %vm504, %v496, %v501
      %v506 = vrsqrt.pop %v444
      %v507 = vmul.f32 %v506, %v444
      %v508 = vmul.f32 %v507, %v506
      %v509 = vmul.f32 0.5, %v508
      %v510 = vsub.f32 1.5, %v509
      %v511 = vmul.f32 %v506, %v510
      %vm512 = vweird.f32 %v444
      %vm513 = vweird.f32 %v506
      %vm514 = vmor %vm512, %vm513
      %v515 = vsel %vm514, %v506, %v511
      %v516 = vrsqrt.pop %v445
      %v517 = vmul.f32 %v516, %v445
      %v518 = vmul.f32 %v517, %v516
      %v519 = vmul.f32 0.5, %v518
      %v520 = vsub.f32 1.5, %v519
      %v521 = vmul.f32 %v516, %v520
      %vm522 = vweird.f32 %v445
      %vm523 = vweird.f32 %v516
      %vm524 = vmor %vm522, %vm523
      %v525 = vsel %vm524, %v516, %v521
      %v526 = vmul.f32 %v390, %v455
      %v527 = vmul.f32 %v391, %v465
      %v528 = vmul.f32 %v392, %v475
      %v529 = vmul.f32 %v393, %v485
      %v530 = vmul.f32 %v394, %v495
      %v531 = vmul.f32 %v395, %v505
      %v532 = vmul.f32 %v396, %v515
      %v533 = vmul.f32 %v397, %v525
      %v535 = vperm.slane %v348, 0
      %v537 = vmul.f32 %v526, %v535
      %v538 = vmul.f32 %v527, %v535
      %v539 = vmul.f32 %v528, %v535
      %v540 = vmul.f32 %v529, %v535
      %v541 = vmul.f32 %v530, %v535
      %v542 = vmul.f32 %v531, %v535
      %v543 = vmul.f32 %v532, %v535
      %v544 = vmul.f32 %v533, %v535
      %v546 = vperm.slane %v349, 0
      %v548 = vadd.f32 %v537, %v546
      %v549 = vadd.f32 %v538, %v546
      %v550 = vadd.f32 %v539, %v546
      %v551 = vadd.f32 %v540, %v546
      %v552 = vadd.f32 %v541, %v546
      %v553 = vadd.f32 %v542, %v546
      %v554 = vadd.f32 %v543, %v546
      %v555 = vadd.f32 %v544, %v546
      %v556 = vpack.c.bf16 %v549, %v548
      %v557 = vpack.c.bf16 %v551, %v550
      %v558 = vpack.c.bf16 %v553, %v552
      %v559 = vpack.c.bf16 %v555, %v554
      %v560 = vld [vmem:[%s4] sm:$0xff]
      %v561 = vld [vmem:[%s4 + $0x8] sm:$0xff]
      %v562 = vld [vmem:[%s4 + $0x10] sm:$0xff]
      %v563 = vld [vmem:[%s4 + $0x18] sm:$0xff]
      %v564 = vld [vmem:[%s4 + $0x20] sm:$0xff]
      %v565 = vld [vmem:[%s4 + $0x28] sm:$0xff]
      %v566 = vld [vmem:[%s4 + $0x30] sm:$0xff]
      %v567 = vld [vmem:[%s4 + $0x38] sm:$0xff]
      %v568 = vld [vmem:[%s5] sm:$0x3]
      %v570 = vperm.slane %v568, 0
      %v571 = vperm.slane %v568, 1
      %v582 = vunpack.c.l.b16 %v560
      %v583 = vunpack.c.h.b16 %v560
      %v584 = vunpack.c.l.b16 %v561
      %v585 = vunpack.c.h.b16 %v561
      %v586 = vunpack.c.l.b16 %v562
      %v587 = vunpack.c.h.b16 %v562
      %v588 = vunpack.c.l.b16 %v563
      %v589 = vunpack.c.h.b16 %v563
      %v590 = vunpack.c.l.b16 %v564
      %v591 = vunpack.c.h.b16 %v564
      %v592 = vunpack.c.l.b16 %v565
      %v593 = vunpack.c.h.b16 %v565
      %v594 = vunpack.c.l.b16 %v566
      %v595 = vunpack.c.h.b16 %v566
      %v596 = vunpack.c.l.b16 %v567
      %v597 = vunpack.c.h.b16 %v567
      %v598 = vpack.c.b16 %v584, %v582
      %v599 = vpack.c.b16 %v585, %v583
      %v600 = vpack.c.b16 %v588, %v586
      %v601 = vpack.c.b16 %v589, %v587
      %v602 = vpack.c.b16 %v592, %v590
      %v603 = vpack.c.b16 %v593, %v591
      %v604 = vpack.c.b16 %v596, %v594
      %v605 = vpack.c.b16 %v597, %v595
      %v615 = vsel %vm350, %v556, 0
      %v618 = vsel %vm350, %v557, 0
      %v621 = vsel %vm350, %v558, 0
      %v624 = vsel %vm350, %v559, 0
      %626 = vmatpush.bf16.msra.mxu0 0
      %627 = vmatpush.bf16.msra.mxu0 0
      %628 = vmatpush.bf16.msra.mxu0 0
      %629 = vmatpush.bf16.msra.mxu0 0
      %630 = vmatpush.bf16.msra.mxu0 %v604
      %631 = vmatpush.bf16.msra.mxu0 %v602
      %632 = vmatpush.bf16.msra.mxu0 %v600
      %633 = vmatpush.bf16.msra.mxu0 %v598
      %634 = vmatmul.bf16.gmra.mxu0 %v615
      %v635 = vpop.f32.mrf.mxu0
      %v636 = vadd.f32 %v570, %v635
      %v637 = vpop.f32.mrf.mxu0
      %v638 = vadd.f32 %v570, %v637
      %639 = vmatmul.bf16.gmra.mxu0 %v618
      %v640 = vpop.f32.mrf.mxu0
      %v641 = vadd.f32 %v570, %v640
      %v642 = vpop.f32.mrf.mxu0
      %v643 = vadd.f32 %v570, %v642
      %644 = vmatmul.bf16.gmra.mxu0 %v621
      %v645 = vpop.f32.mrf.mxu0
      %v646 = vadd.f32 %v570, %v645
      %v647 = vpop.f32.mrf.mxu0
      %v648 = vadd.f32 %v570, %v647
      %649 = vmatmul.bf16.gmra.mxu0 %v624
      %v650 = vpop.f32.mrf.mxu0
      %v651 = vadd.f32 %v570, %v650
      %v652 = vpop.f32.mrf.mxu0
      %v653 = vadd.f32 %v570, %v652
      %654 = vdwg.mxu0
      %655 = vmatpush.bf16.msra.mxu0 0
      %656 = vmatpush.bf16.msra.mxu0 0
      %657 = vmatpush.bf16.msra.mxu0 0
      %658 = vmatpush.bf16.msra.mxu0 0
      %659 = vmatpush.bf16.msra.mxu0 %v605
      %660 = vmatpush.bf16.msra.mxu0 %v603
      %661 = vmatpush.bf16.msra.mxu0 %v601
      %662 = vmatpush.bf16.msra.mxu0 %v599
      %663 = vmatmul.bf16.gmra.mxu0 %v615
      %v664 = vpop.f32.mrf.mxu0
      %v665 = vadd.f32 %v571, %v664
      %v666 = vpop.f32.mrf.mxu0
      %v667 = vadd.f32 %v571, %v666
      %668 = vmatmul.bf16.gmra.mxu0 %v618
      %v669 = vpop.f32.mrf.mxu0
      %v670 = vadd.f32 %v571, %v669
      %v671 = vpop.f32.mrf.mxu0
      %v672 = vadd.f32 %v571, %v671
      %673 = vmatmul.bf16.gmra.mxu0 %v621
      %v674 = vpop.f32.mrf.mxu0
      %v675 = vadd.f32 %v571, %v674
      %v676 = vpop.f32.mrf.mxu0
      %v677 = vadd.f32 %v571, %v676
      %678 = vmatmul.bf16.gmra.mxu0 %v624
      %v679 = vpop.f32.mrf.mxu0
      %v680 = vadd.f32 %v571, %v679
      %v681 = vpop.f32.mrf.mxu0
      %v682 = vadd.f32 %v571, %v681
      %683 = vdwg.mxu0
      %v684 = vmul.f32 %v636, 0.5
      %v685 = vmul.f32 %v665, 0.5
      %v686 = vmul.f32 %v638, 0.5
      %v687 = vmul.f32 %v667, 0.5
      %v688 = vmul.f32 %v641, 0.5
      %v689 = vmul.f32 %v670, 0.5
      %v690 = vmul.f32 %v643, 0.5
      %v691 = vmul.f32 %v672, 0.5
      %v692 = vmul.f32 %v646, 0.5
      %v693 = vmul.f32 %v675, 0.5
      %v694 = vmul.f32 %v648, 0.5
      %v695 = vmul.f32 %v677, 0.5
      %v696 = vmul.f32 %v651, 0.5
      %v697 = vmul.f32 %v680, 0.5
      %v698 = vmul.f32 %v653, 0.5
      %v699 = vmul.f32 %v682, 0.5
      %v700 = vmul.f32 %v636, 0.70710677
      %v701 = vmul.f32 %v665, 0.70710677
      %v702 = vmul.f32 %v638, 0.70710677
      %v703 = vmul.f32 %v667, 0.70710677
      %v704 = vmul.f32 %v641, 0.70710677
      %v705 = vmul.f32 %v670, 0.70710677
      %v706 = vmul.f32 %v643, 0.70710677
      %v707 = vmul.f32 %v672, 0.70710677
      %v708 = vmul.f32 %v646, 0.70710677
      %v709 = vmul.f32 %v675, 0.70710677
      %v710 = vmul.f32 %v648, 0.70710677
      %v711 = vmul.f32 %v677, 0.70710677
      %v712 = vmul.f32 %v651, 0.70710677
      %v713 = vmul.f32 %v680, 0.70710677
      %v714 = vmul.f32 %v653, 0.70710677
      %v715 = vmul.f32 %v682, 0.70710677
      %v716 = vand.u32 2147483647, %v700
      %v717 = vand.u32 2147483647, %v701
      %v718 = vand.u32 2147483647, %v702
      %v719 = vand.u32 2147483647, %v703
      %v720 = vand.u32 2147483647, %v704
      %v721 = vand.u32 2147483647, %v705
      %v722 = vand.u32 2147483647, %v706
      %v723 = vand.u32 2147483647, %v707
      %v724 = vand.u32 2147483647, %v708
      %v725 = vand.u32 2147483647, %v709
      %v726 = vand.u32 2147483647, %v710
      %v727 = vand.u32 2147483647, %v711
      %v728 = vand.u32 2147483647, %v712
      %v729 = vand.u32 2147483647, %v713
      %v730 = vand.u32 2147483647, %v714
      %v731 = vand.u32 2147483647, %v715
      %v732 = vmul.f32 %v716, 0.3275911
      %v733 = vmul.f32 %v717, 0.3275911
      %v734 = vmul.f32 %v718, 0.3275911
      %v735 = vmul.f32 %v719, 0.3275911
      %v736 = vmul.f32 %v720, 0.3275911
      %v737 = vmul.f32 %v721, 0.3275911
      %v738 = vmul.f32 %v722, 0.3275911
      %v739 = vmul.f32 %v723, 0.3275911
      %v740 = vmul.f32 %v724, 0.3275911
      %v741 = vmul.f32 %v725, 0.3275911
      %v742 = vmul.f32 %v726, 0.3275911
      %v743 = vmul.f32 %v727, 0.3275911
      %v744 = vmul.f32 %v728, 0.3275911
      %v745 = vmul.f32 %v729, 0.3275911
      %v746 = vmul.f32 %v730, 0.3275911
      %v747 = vmul.f32 %v731, 0.3275911
      %v748 = vadd.f32 %v732, 1.0
      %v749 = vadd.f32 %v733, 1.0
      %v750 = vadd.f32 %v734, 1.0
      %v751 = vadd.f32 %v735, 1.0
      %v752 = vadd.f32 %v736, 1.0
      %v753 = vadd.f32 %v737, 1.0
      %v754 = vadd.f32 %v738, 1.0
      %v755 = vadd.f32 %v739, 1.0
      %v756 = vadd.f32 %v740, 1.0
      %v757 = vadd.f32 %v741, 1.0
      %v758 = vadd.f32 %v742, 1.0
      %v759 = vadd.f32 %v743, 1.0
      %v760 = vadd.f32 %v744, 1.0
      %v761 = vadd.f32 %v745, 1.0
      %v762 = vadd.f32 %v746, 1.0
      %v763 = vadd.f32 %v747, 1.0
      %v764 = vrcp.pop %v748
      %v765 = vmul.f32 %v748, %v764
      %v766 = vsub.f32 1.0, %v765
      %v767 = vmul.f32 %v764, %v766
      %v768 = vadd.f32 %v764, %v767
      %vm769 = vweird.f32 %v748
      %vm770 = vweird.f32 %v764
      %vm771 = vmor %vm769, %vm770
      %v772 = vsel %vm771, %v764, %v768
      %v773 = vand.u32 2147483647, %v748
      %vm774 = vcmp.eq.f32.partialorder %v773, 8.507059e+37
      %v775 = vand.u32 %v748, 2147483648
      %v776 = vor.u32 1.1754944e-38, %v775
      %v777 = vsel %vm774, %v776, %v772
      %v778 = vmul.f32 1.0, %v777
      %v779 = vrcp.pop %v749
      %v780 = vmul.f32 %v749, %v779
      %v781 = vsub.f32 1.0, %v780
      %v782 = vmul.f32 %v779, %v781
      %v783 = vadd.f32 %v779, %v782
      %vm784 = vweird.f32 %v749
      %vm785 = vweird.f32 %v779
      %vm786 = vmor %vm784, %vm785
      %v787 = vsel %vm786, %v779, %v783
      %v788 = vand.u32 2147483647, %v749
      %vm789 = vcmp.eq.f32.partialorder %v788, 8.507059e+37
      %v790 = vand.u32 %v749, 2147483648
      %v791 = vor.u32 1.1754944e-38, %v790
      %v792 = vsel %vm789, %v791, %v787
      %v793 = vmul.f32 1.0, %v792
      %v794 = vrcp.pop %v750
      %v795 = vmul.f32 %v750, %v794
      %v796 = vsub.f32 1.0, %v795
      %v797 = vmul.f32 %v794, %v796
      %v798 = vadd.f32 %v794, %v797
      %vm799 = vweird.f32 %v750
      %vm800 = vweird.f32 %v794
      %vm801 = vmor %vm799, %vm800
      %v802 = vsel %vm801, %v794, %v798
      %v803 = vand.u32 2147483647, %v750
      %vm804 = vcmp.eq.f32.partialorder %v803, 8.507059e+37
      %v805 = vand.u32 %v750, 2147483648
      %v806 = vor.u32 1.1754944e-38, %v805
      %v807 = vsel %vm804, %v806, %v802
      %v808 = vmul.f32 1.0, %v807
      %v809 = vrcp.pop %v751
      %v810 = vmul.f32 %v751, %v809
      %v811 = vsub.f32 1.0, %v810
      %v812 = vmul.f32 %v809, %v811
      %v813 = vadd.f32 %v809, %v812
      %vm814 = vweird.f32 %v751
      %vm815 = vweird.f32 %v809
      %vm816 = vmor %vm814, %vm815
      %v817 = vsel %vm816, %v809, %v813
      %v818 = vand.u32 2147483647, %v751
      %vm819 = vcmp.eq.f32.partialorder %v818, 8.507059e+37
      %v820 = vand.u32 %v751, 2147483648
      %v821 = vor.u32 1.1754944e-38, %v820
      %v822 = vsel %vm819, %v821, %v817
      %v823 = vmul.f32 1.0, %v822
      %v824 = vrcp.pop %v752
      %v825 = vmul.f32 %v752, %v824
      %v826 = vsub.f32 1.0, %v825
      %v827 = vmul.f32 %v824, %v826
      %v828 = vadd.f32 %v824, %v827
      %vm829 = vweird.f32 %v752
      %vm830 = vweird.f32 %v824
      %vm831 = vmor %vm829, %vm830
      %v832 = vsel %vm831, %v824, %v828
      %v833 = vand.u32 2147483647, %v752
      %vm834 = vcmp.eq.f32.partialorder %v833, 8.507059e+37
      %v835 = vand.u32 %v752, 2147483648
      %v836 = vor.u32 1.1754944e-38, %v835
      %v837 = vsel %vm834, %v836, %v832
      %v838 = vmul.f32 1.0, %v837
      %v839 = vrcp.pop %v753
      %v840 = vmul.f32 %v753, %v839
      %v841 = vsub.f32 1.0, %v840
      %v842 = vmul.f32 %v839, %v841
      %v843 = vadd.f32 %v839, %v842
      %vm844 = vweird.f32 %v753
      %vm845 = vweird.f32 %v839
      %vm846 = vmor %vm844, %vm845
      %v847 = vsel %vm846, %v839, %v843
      %v848 = vand.u32 2147483647, %v753
      %vm849 = vcmp.eq.f32.partialorder %v848, 8.507059e+37
      %v850 = vand.u32 %v753, 2147483648
      %v851 = vor.u32 1.1754944e-38, %v850
      %v852 = vsel %vm849, %v851, %v847
      %v853 = vmul.f32 1.0, %v852
      %v854 = vrcp.pop %v754
      %v855 = vmul.f32 %v754, %v854
      %v856 = vsub.f32 1.0, %v855
      %v857 = vmul.f32 %v854, %v856
      %v858 = vadd.f32 %v854, %v857
      %vm859 = vweird.f32 %v754
      %vm860 = vweird.f32 %v854
      %vm861 = vmor %vm859, %vm860
      %v862 = vsel %vm861, %v854, %v858
      %v863 = vand.u32 2147483647, %v754
      %vm864 = vcmp.eq.f32.partialorder %v863, 8.507059e+37
      %v865 = vand.u32 %v754, 2147483648
      %v866 = vor.u32 1.1754944e-38, %v865
      %v867 = vsel %vm864, %v866, %v862
      %v868 = vmul.f32 1.0, %v867
      %v869 = vrcp.pop %v755
      %v870 = vmul.f32 %v755, %v869
      %v871 = vsub.f32 1.0, %v870
      %v872 = vmul.f32 %v869, %v871
      %v873 = vadd.f32 %v869, %v872
      %vm874 = vweird.f32 %v755
      %vm875 = vweird.f32 %v869
      %vm876 = vmor %vm874, %vm875
      %v877 = vsel %vm876, %v869, %v873
      %v878 = vand.u32 2147483647, %v755
      %vm879 = vcmp.eq.f32.partialorder %v878, 8.507059e+37
      %v880 = vand.u32 %v755, 2147483648
      %v881 = vor.u32 1.1754944e-38, %v880
      %v882 = vsel %vm879, %v881, %v877
      %v883 = vmul.f32 1.0, %v882
      %v884 = vrcp.pop %v756
      %v885 = vmul.f32 %v756, %v884
      %v886 = vsub.f32 1.0, %v885
      %v887 = vmul.f32 %v884, %v886
      %v888 = vadd.f32 %v884, %v887
      %vm889 = vweird.f32 %v756
      %vm890 = vweird.f32 %v884
      %vm891 = vmor %vm889, %vm890
      %v892 = vsel %vm891, %v884, %v888
      %v893 = vand.u32 2147483647, %v756
      %vm894 = vcmp.eq.f32.partialorder %v893, 8.507059e+37
      %v895 = vand.u32 %v756, 2147483648
      %v896 = vor.u32 1.1754944e-38, %v895
      %v897 = vsel %vm894, %v896, %v892
      %v898 = vmul.f32 1.0, %v897
      %v899 = vrcp.pop %v757
      %v900 = vmul.f32 %v757, %v899
      %v901 = vsub.f32 1.0, %v900
      %v902 = vmul.f32 %v899, %v901
      %v903 = vadd.f32 %v899, %v902
      %vm904 = vweird.f32 %v757
      %vm905 = vweird.f32 %v899
      %vm906 = vmor %vm904, %vm905
      %v907 = vsel %vm906, %v899, %v903
      %v908 = vand.u32 2147483647, %v757
      %vm909 = vcmp.eq.f32.partialorder %v908, 8.507059e+37
      %v910 = vand.u32 %v757, 2147483648
      %v911 = vor.u32 1.1754944e-38, %v910
      %v912 = vsel %vm909, %v911, %v907
      %v913 = vmul.f32 1.0, %v912
      %v914 = vrcp.pop %v758
      %v915 = vmul.f32 %v758, %v914
      %v916 = vsub.f32 1.0, %v915
      %v917 = vmul.f32 %v914, %v916
      %v918 = vadd.f32 %v914, %v917
      %vm919 = vweird.f32 %v758
      %vm920 = vweird.f32 %v914
      %vm921 = vmor %vm919, %vm920
      %v922 = vsel %vm921, %v914, %v918
      %v923 = vand.u32 2147483647, %v758
      %vm924 = vcmp.eq.f32.partialorder %v923, 8.507059e+37
      %v925 = vand.u32 %v758, 2147483648
      %v926 = vor.u32 1.1754944e-38, %v925
      %v927 = vsel %vm924, %v926, %v922
      %v928 = vmul.f32 1.0, %v927
      %v929 = vrcp.pop %v759
      %v930 = vmul.f32 %v759, %v929
      %v931 = vsub.f32 1.0, %v930
      %v932 = vmul.f32 %v929, %v931
      %v933 = vadd.f32 %v929, %v932
      %vm934 = vweird.f32 %v759
      %vm935 = vweird.f32 %v929
      %vm936 = vmor %vm934, %vm935
      %v937 = vsel %vm936, %v929, %v933
      %v938 = vand.u32 2147483647, %v759
      %vm939 = vcmp.eq.f32.partialorder %v938, 8.507059e+37
      %v940 = vand.u32 %v759, 2147483648
      %v941 = vor.u32 1.1754944e-38, %v940
      %v942 = vsel %vm939, %v941, %v937
      %v943 = vmul.f32 1.0, %v942
      %v944 = vrcp.pop %v760
      %v945 = vmul.f32 %v760, %v944
      %v946 = vsub.f32 1.0, %v945
      %v947 = vmul.f32 %v944, %v946
      %v948 = vadd.f32 %v944, %v947
      %vm949 = vweird.f32 %v760
      %vm950 = vweird.f32 %v944
      %vm951 = vmor %vm949, %vm950
      %v952 = vsel %vm951, %v944, %v948
      %v953 = vand.u32 2147483647, %v760
      %vm954 = vcmp.eq.f32.partialorder %v953, 8.507059e+37
      %v955 = vand.u32 %v760, 2147483648
      %v956 = vor.u32 1.1754944e-38, %v955
      %v957 = vsel %vm954, %v956, %v952
      %v958 = vmul.f32 1.0, %v957
      %v959 = vrcp.pop %v761
      %v960 = vmul.f32 %v761, %v959
      %v961 = vsub.f32 1.0, %v960
      %v962 = vmul.f32 %v959, %v961
      %v963 = vadd.f32 %v959, %v962
      %vm964 = vweird.f32 %v761
      %vm965 = vweird.f32 %v959
      %vm966 = vmor %vm964, %vm965
      %v967 = vsel %vm966, %v959, %v963
      %v968 = vand.u32 2147483647, %v761
      %vm969 = vcmp.eq.f32.partialorder %v968, 8.507059e+37
      %v970 = vand.u32 %v761, 2147483648
      %v971 = vor.u32 1.1754944e-38, %v970
      %v972 = vsel %vm969, %v971, %v967
      %v973 = vmul.f32 1.0, %v972
      %v974 = vrcp.pop %v762
      %v975 = vmul.f32 %v762, %v974
      %v976 = vsub.f32 1.0, %v975
      %v977 = vmul.f32 %v974, %v976
      %v978 = vadd.f32 %v974, %v977
      %vm979 = vweird.f32 %v762
      %vm980 = vweird.f32 %v974
      %vm981 = vmor %vm979, %vm980
      %v982 = vsel %vm981, %v974, %v978
      %v983 = vand.u32 2147483647, %v762
      %vm984 = vcmp.eq.f32.partialorder %v983, 8.507059e+37
      %v985 = vand.u32 %v762, 2147483648
      %v986 = vor.u32 1.1754944e-38, %v985
      %v987 = vsel %vm984, %v986, %v982
      %v988 = vmul.f32 1.0, %v987
      %v989 = vrcp.pop %v763
      %v990 = vmul.f32 %v763, %v989
      %v991 = vsub.f32 1.0, %v990
      %v992 = vmul.f32 %v989, %v991
      %v993 = vadd.f32 %v989, %v992
      %vm994 = vweird.f32 %v763
      %vm995 = vweird.f32 %v989
      %vm996 = vmor %vm994, %vm995
      %v997 = vsel %vm996, %v989, %v993
      %v998 = vand.u32 2147483647, %v763
      %vm999 = vcmp.eq.f32.partialorder %v998, 8.507059e+37
      %v1000 = vand.u32 %v763, 2147483648
      %v1001 = vor.u32 1.1754944e-38, %v1000
      %v1002 = vsel %vm999, %v1001, %v997
      %v1003 = vmul.f32 1.0, %v1002
      %v1004 = vmul.f32 %v778, 1.0614054
      %v1005 = vmul.f32 %v793, 1.0614054
      %v1006 = vmul.f32 %v808, 1.0614054
      %v1007 = vmul.f32 %v823, 1.0614054
      %v1008 = vmul.f32 %v838, 1.0614054
      %v1009 = vmul.f32 %v853, 1.0614054
      %v1010 = vmul.f32 %v868, 1.0614054
      %v1011 = vmul.f32 %v883, 1.0614054
      %v1012 = vmul.f32 %v898, 1.0614054
      %v1013 = vmul.f32 %v913, 1.0614054
      %v1014 = vmul.f32 %v928, 1.0614054
      %v1015 = vmul.f32 %v943, 1.0614054
      %v1016 = vmul.f32 %v958, 1.0614054
      %v1017 = vmul.f32 %v973, 1.0614054
      %v1018 = vmul.f32 %v988, 1.0614054
      %v1019 = vmul.f32 %v1003, 1.0614054
      %v1020 = vadd.f32 %v1004, -1.4531521
      %v1021 = vadd.f32 %v1005, -1.4531521
      %v1022 = vadd.f32 %v1006, -1.4531521
      %v1023 = vadd.f32 %v1007, -1.4531521
      %v1024 = vadd.f32 %v1008, -1.4531521
      %v1025 = vadd.f32 %v1009, -1.4531521
      %v1026 = vadd.f32 %v1010, -1.4531521
      %v1027 = vadd.f32 %v1011, -1.4531521
      %v1028 = vadd.f32 %v1012, -1.4531521
      %v1029 = vadd.f32 %v1013, -1.4531521
      %v1030 = vadd.f32 %v1014, -1.4531521
      %v1031 = vadd.f32 %v1015, -1.4531521
      %v1032 = vadd.f32 %v1016, -1.4531521
      %v1033 = vadd.f32 %v1017, -1.4531521
      %v1034 = vadd.f32 %v1018, -1.4531521
      %v1035 = vadd.f32 %v1019, -1.4531521
      %v1036 = vmul.f32 %v1020, %v778
      %v1037 = vmul.f32 %v1021, %v793
      %v1038 = vmul.f32 %v1022, %v808
      %v1039 = vmul.f32 %v1023, %v823
      %v1040 = vmul.f32 %v1024, %v838
      %v1041 = vmul.f32 %v1025, %v853
      %v1042 = vmul.f32 %v1026, %v868
      %v1043 = vmul.f32 %v1027, %v883
      %v1044 = vmul.f32 %v1028, %v898
      %v1045 = vmul.f32 %v1029, %v913
      %v1046 = vmul.f32 %v1030, %v928
      %v1047 = vmul.f32 %v1031, %v943
      %v1048 = vmul.f32 %v1032, %v958
      %v1049 = vmul.f32 %v1033, %v973
      %v1050 = vmul.f32 %v1034, %v988
      %v1051 = vmul.f32 %v1035, %v1003
      %v1052 = vadd.f32 %v1036, 1.4214138
      %v1053 = vadd.f32 %v1037, 1.4214138
      %v1054 = vadd.f32 %v1038, 1.4214138
      %v1055 = vadd.f32 %v1039, 1.4214138
      %v1056 = vadd.f32 %v1040, 1.4214138
      %v1057 = vadd.f32 %v1041, 1.4214138
      %v1058 = vadd.f32 %v1042, 1.4214138
      %v1059 = vadd.f32 %v1043, 1.4214138
      %v1060 = vadd.f32 %v1044, 1.4214138
      %v1061 = vadd.f32 %v1045, 1.4214138
      %v1062 = vadd.f32 %v1046, 1.4214138
      %v1063 = vadd.f32 %v1047, 1.4214138
      %v1064 = vadd.f32 %v1048, 1.4214138
      %v1065 = vadd.f32 %v1049, 1.4214138
      %v1066 = vadd.f32 %v1050, 1.4214138
      %v1067 = vadd.f32 %v1051, 1.4214138
      %v1068 = vmul.f32 %v1052, %v778
      %v1069 = vmul.f32 %v1053, %v793
      %v1070 = vmul.f32 %v1054, %v808
      %v1071 = vmul.f32 %v1055, %v823
      %v1072 = vmul.f32 %v1056, %v838
      %v1073 = vmul.f32 %v1057, %v853
      %v1074 = vmul.f32 %v1058, %v868
      %v1075 = vmul.f32 %v1059, %v883
      %v1076 = vmul.f32 %v1060, %v898
      %v1077 = vmul.f32 %v1061, %v913
      %v1078 = vmul.f32 %v1062, %v928
      %v1079 = vmul.f32 %v1063, %v943
      %v1080 = vmul.f32 %v1064, %v958
      %v1081 = vmul.f32 %v1065, %v973
      %v1082 = vmul.f32 %v1066, %v988
      %v1083 = vmul.f32 %v1067, %v1003
      %v1084 = vadd.f32 %v1068, -0.28449672
      %v1085 = vadd.f32 %v1069, -0.28449672
      %v1086 = vadd.f32 %v1070, -0.28449672
      %v1087 = vadd.f32 %v1071, -0.28449672
      %v1088 = vadd.f32 %v1072, -0.28449672
      %v1089 = vadd.f32 %v1073, -0.28449672
      %v1090 = vadd.f32 %v1074, -0.28449672
      %v1091 = vadd.f32 %v1075, -0.28449672
      %v1092 = vadd.f32 %v1076, -0.28449672
      %v1093 = vadd.f32 %v1077, -0.28449672
      %v1094 = vadd.f32 %v1078, -0.28449672
      %v1095 = vadd.f32 %v1079, -0.28449672
      %v1096 = vadd.f32 %v1080, -0.28449672
      %v1097 = vadd.f32 %v1081, -0.28449672
      %v1098 = vadd.f32 %v1082, -0.28449672
      %v1099 = vadd.f32 %v1083, -0.28449672
      %v1100 = vmul.f32 %v1084, %v778
      %v1101 = vmul.f32 %v1085, %v793
      %v1102 = vmul.f32 %v1086, %v808
      %v1103 = vmul.f32 %v1087, %v823
      %v1104 = vmul.f32 %v1088, %v838
      %v1105 = vmul.f32 %v1089, %v853
      %v1106 = vmul.f32 %v1090, %v868
      %v1107 = vmul.f32 %v1091, %v883
      %v1108 = vmul.f32 %v1092, %v898
      %v1109 = vmul.f32 %v1093, %v913
      %v1110 = vmul.f32 %v1094, %v928
      %v1111 = vmul.f32 %v1095, %v943
      %v1112 = vmul.f32 %v1096, %v958
      %v1113 = vmul.f32 %v1097, %v973
      %v1114 = vmul.f32 %v1098, %v988
      %v1115 = vmul.f32 %v1099, %v1003
      %v1116 = vadd.f32 %v1100, 0.2548296
      %v1117 = vadd.f32 %v1101, 0.2548296
      %v1118 = vadd.f32 %v1102, 0.2548296
      %v1119 = vadd.f32 %v1103, 0.2548296
      %v1120 = vadd.f32 %v1104, 0.2548296
      %v1121 = vadd.f32 %v1105, 0.2548296
      %v1122 = vadd.f32 %v1106, 0.2548296
      %v1123 = vadd.f32 %v1107, 0.2548296
      %v1124 = vadd.f32 %v1108, 0.2548296
      %v1125 = vadd.f32 %v1109, 0.2548296
      %v1126 = vadd.f32 %v1110, 0.2548296
      %v1127 = vadd.f32 %v1111, 0.2548296
      %v1128 = vadd.f32 %v1112, 0.2548296
      %v1129 = vadd.f32 %v1113, 0.2548296
      %v1130 = vadd.f32 %v1114, 0.2548296
      %v1131 = vadd.f32 %v1115, 0.2548296
      %v1132 = vmul.f32 %v1116, %v778
      %v1133 = vmul.f32 %v1117, %v793
      %v1134 = vmul.f32 %v1118, %v808
      %v1135 = vmul.f32 %v1119, %v823
      %v1136 = vmul.f32 %v1120, %v838
      %v1137 = vmul.f32 %v1121, %v853
      %v1138 = vmul.f32 %v1122, %v868
      %v1139 = vmul.f32 %v1123, %v883
      %v1140 = vmul.f32 %v1124, %v898
      %v1141 = vmul.f32 %v1125, %v913
      %v1142 = vmul.f32 %v1126, %v928
      %v1143 = vmul.f32 %v1127, %v943
      %v1144 = vmul.f32 %v1128, %v958
      %v1145 = vmul.f32 %v1129, %v973
      %v1146 = vmul.f32 %v1130, %v988
      %v1147 = vmul.f32 %v1131, %v1003
      %v1148 = vsub.f32 0.0, %v716
      %v1149 = vsub.f32 0.0, %v717
      %v1150 = vsub.f32 0.0, %v718
      %v1151 = vsub.f32 0.0, %v719
      %v1152 = vsub.f32 0.0, %v720
      %v1153 = vsub.f32 0.0, %v721
      %v1154 = vsub.f32 0.0, %v722
      %v1155 = vsub.f32 0.0, %v723
      %v1156 = vsub.f32 0.0, %v724
      %v1157 = vsub.f32 0.0, %v725
      %v1158 = vsub.f32 0.0, %v726
      %v1159 = vsub.f32 0.0, %v727
      %v1160 = vsub.f32 0.0, %v728
      %v1161 = vsub.f32 0.0, %v729
      %v1162 = vsub.f32 0.0, %v730
      %v1163 = vsub.f32 0.0, %v731
      %v1164 = vmul.f32 %v1148, %v716
      %v1165 = vmul.f32 %v1149, %v717
      %v1166 = vmul.f32 %v1150, %v718
      %v1167 = vmul.f32 %v1151, %v719
      %v1168 = vmul.f32 %v1152, %v720
      %v1169 = vmul.f32 %v1153, %v721
      %v1170 = vmul.f32 %v1154, %v722
      %v1171 = vmul.f32 %v1155, %v723
      %v1172 = vmul.f32 %v1156, %v724
      %v1173 = vmul.f32 %v1157, %v725
      %v1174 = vmul.f32 %v1158, %v726
      %v1175 = vmul.f32 %v1159, %v727
      %v1176 = vmul.f32 %v1160, %v728
      %v1177 = vmul.f32 %v1161, %v729
      %v1178 = vmul.f32 %v1162, %v730
      %v1179 = vmul.f32 %v1163, %v731
      %v1180 = vmul.f32 %v1164, 1.442695
      %v1181 = vpow.pop %v1180
      %v1182 = vmul.f32 %v1165, 1.442695
      %v1183 = vpow.pop %v1182
      %v1184 = vmul.f32 %v1166, 1.442695
      %v1185 = vpow.pop %v1184
      %v1186 = vmul.f32 %v1167, 1.442695
      %v1187 = vpow.pop %v1186
      %v1188 = vmul.f32 %v1168, 1.442695
      %v1189 = vpow.pop %v1188
      %v1190 = vmul.f32 %v1169, 1.442695
      %v1191 = vpow.pop %v1190
      %v1192 = vmul.f32 %v1170, 1.442695
      %v1193 = vpow.pop %v1192
      %v1194 = vmul.f32 %v1171, 1.442695
      %v1195 = vpow.pop %v1194
      %v1196 = vmul.f32 %v1172, 1.442695
      %v1197 = vpow.pop %v1196
      %v1198 = vmul.f32 %v1173, 1.442695
      %v1199 = vpow.pop %v1198
      %v1200 = vmul.f32 %v1174, 1.442695
      %v1201 = vpow.pop %v1200
      %v1202 = vmul.f32 %v1175, 1.442695
      %v1203 = vpow.pop %v1202
      %v1204 = vmul.f32 %v1176, 1.442695
      %v1205 = vpow.pop %v1204
      %v1206 = vmul.f32 %v1177, 1.442695
      %v1207 = vpow.pop %v1206
      %v1208 = vmul.f32 %v1178, 1.442695
      %v1209 = vpow.pop %v1208
      %v1210 = vmul.f32 %v1179, 1.442695
      %v1211 = vpow.pop %v1210
      %v1212 = vmul.f32 %v1132, %v1181
      %v1213 = vmul.f32 %v1133, %v1183
      %v1214 = vmul.f32 %v1134, %v1185
      %v1215 = vmul.f32 %v1135, %v1187
      %v1216 = vmul.f32 %v1136, %v1189
      %v1217 = vmul.f32 %v1137, %v1191
      %v1218 = vmul.f32 %v1138, %v1193
      %v1219 = vmul.f32 %v1139, %v1195
      %v1220 = vmul.f32 %v1140, %v1197
      %v1221 = vmul.f32 %v1141, %v1199
      %v1222 = vmul.f32 %v1142, %v1201
      %v1223 = vmul.f32 %v1143, %v1203
      %v1224 = vmul.f32 %v1144, %v1205
      %v1225 = vmul.f32 %v1145, %v1207
      %v1226 = vmul.f32 %v1146, %v1209
      %v1227 = vmul.f32 %v1147, %v1211
      %v1228 = vsub.f32 1.0, %v1212
      %v1229 = vsub.f32 1.0, %v1213
      %v1230 = vsub.f32 1.0, %v1214
      %v1231 = vsub.f32 1.0, %v1215
      %v1232 = vsub.f32 1.0, %v1216
      %v1233 = vsub.f32 1.0, %v1217
      %v1234 = vsub.f32 1.0, %v1218
      %v1235 = vsub.f32 1.0, %v1219
      %v1236 = vsub.f32 1.0, %v1220
      %v1237 = vsub.f32 1.0, %v1221
      %v1238 = vsub.f32 1.0, %v1222
      %v1239 = vsub.f32 1.0, %v1223
      %v1240 = vsub.f32 1.0, %v1224
      %v1241 = vsub.f32 1.0, %v1225
      %v1242 = vsub.f32 1.0, %v1226
      %v1243 = vsub.f32 1.0, %v1227
      %vm1244 = vcmp.ge.f32.partialorder %v700, 0.0
      %vm1245 = vcmp.ge.f32.partialorder %v701, 0.0
      %vm1246 = vcmp.ge.f32.partialorder %v702, 0.0
      %vm1247 = vcmp.ge.f32.partialorder %v703, 0.0
      %vm1248 = vcmp.ge.f32.partialorder %v704, 0.0
      %vm1249 = vcmp.ge.f32.partialorder %v705, 0.0
      %vm1250 = vcmp.ge.f32.partialorder %v706, 0.0
      %vm1251 = vcmp.ge.f32.partialorder %v707, 0.0
      %vm1252 = vcmp.ge.f32.partialorder %v708, 0.0
      %vm1253 = vcmp.ge.f32.partialorder %v709, 0.0
      %vm1254 = vcmp.ge.f32.partialorder %v710, 0.0
      %vm1255 = vcmp.ge.f32.partialorder %v711, 0.0
      %vm1256 = vcmp.ge.f32.partialorder %v712, 0.0
      %vm1257 = vcmp.ge.f32.partialorder %v713, 0.0
      %vm1258 = vcmp.ge.f32.partialorder %v714, 0.0
      %vm1259 = vcmp.ge.f32.partialorder %v715, 0.0
      %v1260 = vsub.f32 0.0, %v1228
      %v1261 = vsub.f32 0.0, %v1229
      %v1262 = vsub.f32 0.0, %v1230
      %v1263 = vsub.f32 0.0, %v1231
      %v1264 = vsub.f32 0.0, %v1232
      %v1265 = vsub.f32 0.0, %v1233
      %v1266 = vsub.f32 0.0, %v1234
      %v1267 = vsub.f32 0.0, %v1235
      %v1268 = vsub.f32 0.0, %v1236
      %v1269 = vsub.f32 0.0, %v1237
      %v1270 = vsub.f32 0.0, %v1238
      %v1271 = vsub.f32 0.0, %v1239
      %v1272 = vsub.f32 0.0, %v1240
      %v1273 = vsub.f32 0.0, %v1241
      %v1274 = vsub.f32 0.0, %v1242
      %v1275 = vsub.f32 0.0, %v1243
      %v1276 = vsel %vm1244, %v1228, %v1260
      %v1277 = vsel %vm1245, %v1229, %v1261
      %v1278 = vsel %vm1246, %v1230, %v1262
      %v1279 = vsel %vm1247, %v1231, %v1263
      %v1280 = vsel %vm1248, %v1232, %v1264
      %v1281 = vsel %vm1249, %v1233, %v1265
      %v1282 = vsel %vm1250, %v1234, %v1266
      %v1283 = vsel %vm1251, %v1235, %v1267
      %v1284 = vsel %vm1252, %v1236, %v1268
      %v1285 = vsel %vm1253, %v1237, %v1269
      %v1286 = vsel %vm1254, %v1238, %v1270
      %v1287 = vsel %vm1255, %v1239, %v1271
      %v1288 = vsel %vm1256, %v1240, %v1272
      %v1289 = vsel %vm1257, %v1241, %v1273
      %v1290 = vsel %vm1258, %v1242, %v1274
      %v1291 = vsel %vm1259, %v1243, %v1275
      %v1292 = vadd.f32 %v1276, 1.0
      %v1293 = vadd.f32 %v1277, 1.0
      %v1294 = vadd.f32 %v1278, 1.0
      %v1295 = vadd.f32 %v1279, 1.0
      %v1296 = vadd.f32 %v1280, 1.0
      %v1297 = vadd.f32 %v1281, 1.0
      %v1298 = vadd.f32 %v1282, 1.0
      %v1299 = vadd.f32 %v1283, 1.0
      %v1300 = vadd.f32 %v1284, 1.0
      %v1301 = vadd.f32 %v1285, 1.0
      %v1302 = vadd.f32 %v1286, 1.0
      %v1303 = vadd.f32 %v1287, 1.0
      %v1304 = vadd.f32 %v1288, 1.0
      %v1305 = vadd.f32 %v1289, 1.0
      %v1306 = vadd.f32 %v1290, 1.0
      %v1307 = vadd.f32 %v1291, 1.0
      %v1308 = vmul.f32 %v684, %v1292
      %v1309 = vmul.f32 %v685, %v1293
      %v1310 = vmul.f32 %v686, %v1294
      %v1311 = vmul.f32 %v687, %v1295
      %v1312 = vmul.f32 %v688, %v1296
      %v1313 = vmul.f32 %v689, %v1297
      %v1314 = vmul.f32 %v690, %v1298
      %v1315 = vmul.f32 %v691, %v1299
      %v1316 = vmul.f32 %v692, %v1300
      %v1317 = vmul.f32 %v693, %v1301
      %v1318 = vmul.f32 %v694, %v1302
      %v1319 = vmul.f32 %v695, %v1303
      %v1320 = vmul.f32 %v696, %v1304
      %v1321 = vmul.f32 %v697, %v1305
      %v1322 = vmul.f32 %v698, %v1306
      %v1323 = vmul.f32 %v699, %v1307
      %v1324 = vpack.c.bf16 %v1310, %v1308
      %v1325 = vpack.c.bf16 %v1311, %v1309
      %v1326 = vpack.c.bf16 %v1314, %v1312
      %v1327 = vpack.c.bf16 %v1315, %v1313
      %v1328 = vpack.c.bf16 %v1318, %v1316
      %v1329 = vpack.c.bf16 %v1319, %v1317
      %v1330 = vpack.c.bf16 %v1322, %v1320
      %v1331 = vpack.c.bf16 %v1323, %v1321
      %v1332 = vld [vmem:[%s6] sm:$0xf]
      %v1333 = vld [vmem:[%s6 + $0x4] sm:$0xf]
      %v1334 = vld [vmem:[%s6 + $0x8] sm:$0xf]
      %v1335 = vld [vmem:[%s6 + $0xc] sm:$0xf]
      %v1336 = vld [vmem:[%s6 + $0x10] sm:$0xf]
      %v1337 = vld [vmem:[%s6 + $0x14] sm:$0xf]
      %v1338 = vld [vmem:[%s6 + $0x18] sm:$0xf]
      %v1339 = vld [vmem:[%s6 + $0x1c] sm:$0xf]
      %v1340 = vld [vmem:[%s6 + $0x20] sm:$0xf]
      %v1341 = vld [vmem:[%s6 + $0x24] sm:$0xf]
      %v1342 = vld [vmem:[%s6 + $0x28] sm:$0xf]
      %v1343 = vld [vmem:[%s6 + $0x2c] sm:$0xf]
      %v1344 = vld [vmem:[%s6 + $0x30] sm:$0xf]
      %v1345 = vld [vmem:[%s6 + $0x34] sm:$0xf]
      %v1346 = vld [vmem:[%s6 + $0x38] sm:$0xf]
      %v1347 = vld [vmem:[%s6 + $0x3c] sm:$0xf]
      %v1348 = vld [vmem:[%s6 + $0x40] sm:$0xf]
      %v1349 = vld [vmem:[%s6 + $0x44] sm:$0xf]
      %v1350 = vld [vmem:[%s6 + $0x48] sm:$0xf]
      %v1351 = vld [vmem:[%s6 + $0x4c] sm:$0xf]
      %v1352 = vld [vmem:[%s6 + $0x50] sm:$0xf]
      %v1353 = vld [vmem:[%s6 + $0x54] sm:$0xf]
      %v1354 = vld [vmem:[%s6 + $0x58] sm:$0xf]
      %v1355 = vld [vmem:[%s6 + $0x5c] sm:$0xf]
      %v1356 = vld [vmem:[%s6 + $0x60] sm:$0xf]
      %v1357 = vld [vmem:[%s6 + $0x64] sm:$0xf]
      %v1358 = vld [vmem:[%s6 + $0x68] sm:$0xf]
      %v1359 = vld [vmem:[%s6 + $0x6c] sm:$0xf]
      %v1360 = vld [vmem:[%s6 + $0x70] sm:$0xf]
      %v1361 = vld [vmem:[%s6 + $0x74] sm:$0xf]
      %v1362 = vld [vmem:[%s6 + $0x78] sm:$0xf]
      %v1363 = vld [vmem:[%s6 + $0x7c] sm:$0xf]
      %v1364 = vld [vmem:[%s7] sm:$0x1]
      %v1366 = vperm.slane %v1364, 0
      %v1400 = vunpack.c.l.b16 %v1332
      %v1401 = vunpack.c.l.b16 %v1333
      %v1402 = vunpack.c.l.b16 %v1334
      %v1403 = vunpack.c.l.b16 %v1335
      %v1404 = vunpack.c.l.b16 %v1336
      %v1405 = vunpack.c.l.b16 %v1337
      %v1406 = vunpack.c.l.b16 %v1338
      %v1407 = vunpack.c.l.b16 %v1339
      %v1408 = vunpack.c.l.b16 %v1340
      %v1409 = vunpack.c.l.b16 %v1341
      %v1410 = vunpack.c.l.b16 %v1342
      %v1411 = vunpack.c.l.b16 %v1343
      %v1412 = vunpack.c.l.b16 %v1344
      %v1413 = vunpack.c.l.b16 %v1345
      %v1414 = vunpack.c.l.b16 %v1346
      %v1415 = vunpack.c.l.b16 %v1347
      %v1416 = vunpack.c.l.b16 %v1348
      %v1417 = vunpack.c.l.b16 %v1349
      %v1418 = vunpack.c.l.b16 %v1350
      %v1419 = vunpack.c.l.b16 %v1351
      %v1420 = vunpack.c.l.b16 %v1352
      %v1421 = vunpack.c.l.b16 %v1353
      %v1422 = vunpack.c.l.b16 %v1354
      %v1423 = vunpack.c.l.b16 %v1355
      %v1424 = vunpack.c.l.b16 %v1356
      %v1425 = vunpack.c.l.b16 %v1357
      %v1426 = vunpack.c.l.b16 %v1358
      %v1427 = vunpack.c.l.b16 %v1359
      %v1428 = vunpack.c.l.b16 %v1360
      %v1429 = vunpack.c.l.b16 %v1361
      %v1430 = vunpack.c.l.b16 %v1362
      %v1431 = vunpack.c.l.b16 %v1363
      %v1432 = vpack.c.b16 %v1401, %v1400
      %v1433 = vpack.c.b16 %v1403, %v1402
      %v1434 = vpack.c.b16 %v1405, %v1404
      %v1435 = vpack.c.b16 %v1407, %v1406
      %v1436 = vpack.c.b16 %v1409, %v1408
      %v1437 = vpack.c.b16 %v1411, %v1410
      %v1438 = vpack.c.b16 %v1413, %v1412
      %v1439 = vpack.c.b16 %v1415, %v1414
      %v1440 = vpack.c.b16 %v1417, %v1416
      %v1441 = vpack.c.b16 %v1419, %v1418
      %v1442 = vpack.c.b16 %v1421, %v1420
      %v1443 = vpack.c.b16 %v1423, %v1422
      %v1444 = vpack.c.b16 %v1425, %v1424
      %v1445 = vpack.c.b16 %v1427, %v1426
      %v1446 = vpack.c.b16 %v1429, %v1428
      %v1447 = vpack.c.b16 %v1431, %v1430
      %1464 = vmatpush.bf16.msra.mxu0 %v1439
      %1465 = vmatpush.bf16.msra.mxu0 %v1438
      %1466 = vmatpush.bf16.msra.mxu0 %v1437
      %1467 = vmatpush.bf16.msra.mxu0 %v1436
      %1468 = vmatpush.bf16.msra.mxu0 %v1435
      %1469 = vmatpush.bf16.msra.mxu0 %v1434
      %1470 = vmatpush.bf16.msra.mxu0 %v1433
      %1471 = vmatpush.bf16.msra.mxu0 %v1432
      %1472 = vmatmul.bf16.gmra.mxu0 %v1324
      %v1473 = vpop.f32.mrf.mxu0
      %v1474 = vadd.f32 %v1366, %v1473
      %v1475 = vpop.f32.mrf.mxu0
      %v1476 = vadd.f32 %v1366, %v1475
      %1477 = vmatmul.bf16.gmra.mxu0 %v1326
      %v1478 = vpop.f32.mrf.mxu0
      %v1479 = vadd.f32 %v1366, %v1478
      %v1480 = vpop.f32.mrf.mxu0
      %v1481 = vadd.f32 %v1366, %v1480
      %1482 = vmatmul.bf16.gmra.mxu0 %v1328
      %v1483 = vpop.f32.mrf.mxu0
      %v1484 = vadd.f32 %v1366, %v1483
      %v1485 = vpop.f32.mrf.mxu0
      %v1486 = vadd.f32 %v1366, %v1485
      %1487 = vmatmul.bf16.gmra.mxu0 %v1330
      %v1488 = vpop.f32.mrf.mxu0
      %v1489 = vadd.f32 %v1366, %v1488
      %v1490 = vpop.f32.mrf.mxu0
      %v1491 = vadd.f32 %v1366, %v1490
      %1492 = vdwg.mxu0
      %1493 = vmatpush.bf16.msra.mxu0 %v1447
      %1494 = vmatpush.bf16.msra.mxu0 %v1446
      %1495 = vmatpush.bf16.msra.mxu0 %v1445
      %1496 = vmatpush.bf16.msra.mxu0 %v1444
      %1497 = vmatpush.bf16.msra.mxu0 %v1443
      %1498 = vmatpush.bf16.msra.mxu0 %v1442
      %1499 = vmatpush.bf16.msra.mxu0 %v1441
      %1500 = vmatpush.bf16.msra.mxu0 %v1440
      %1501 = vmatmul.bf16.gmra.mxu0 %v1325
      %v1502 = vpop.f32.mrf.mxu0
      %v1503 = vadd.f32 %v1474, %v1502
      %v1504 = vpop.f32.mrf.mxu0
      %v1505 = vadd.f32 %v1476, %v1504
      %1506 = vmatmul.bf16.gmra.mxu0 %v1327
      %v1507 = vpop.f32.mrf.mxu0
      %v1508 = vadd.f32 %v1479, %v1507
      %v1509 = vpop.f32.mrf.mxu0
      %v1510 = vadd.f32 %v1481, %v1509
      %1511 = vmatmul.bf16.gmra.mxu0 %v1329
      %v1512 = vpop.f32.mrf.mxu0
      %v1513 = vadd.f32 %v1484, %v1512
      %v1514 = vpop.f32.mrf.mxu0
      %v1515 = vadd.f32 %v1486, %v1514
      %1516 = vmatmul.bf16.gmra.mxu0 %v1331
      %v1517 = vpop.f32.mrf.mxu0
      %v1518 = vadd.f32 %v1489, %v1517
      %v1519 = vpop.f32.mrf.mxu0
      %v1520 = vadd.f32 %v1491, %v1519
      %1521 = vdwg.mxu0
      %v1522 = vld [vmem:[%s323] sm:$0xf]
      %v1523 = vld [vmem:[%s323 + $0x4] sm:$0xf]
      %v1524 = vld [vmem:[%s323 + $0x8] sm:$0xf]
      %v1525 = vld [vmem:[%s323 + $0xc] sm:$0xf]
      %v1526 = vld [vmem:[%s323 + $0x10] sm:$0xf]
      %v1527 = vld [vmem:[%s323 + $0x14] sm:$0xf]
      %v1528 = vld [vmem:[%s323 + $0x18] sm:$0xf]
      %v1529 = vld [vmem:[%s323 + $0x1c] sm:$0xf]
      %v1530 = vunpack.c.l.bf16 %v1522
      %v1531 = vunpack.c.l.bf16 %v1523
      %v1532 = vunpack.c.l.bf16 %v1524
      %v1533 = vunpack.c.l.bf16 %v1525
      %v1534 = vunpack.c.l.bf16 %v1526
      %v1535 = vunpack.c.l.bf16 %v1527
      %v1536 = vunpack.c.l.bf16 %v1528
      %v1537 = vunpack.c.l.bf16 %v1529
      %v1538 = vadd.f32 %v340, %v1530
      %v1539 = vadd.f32 %v341, %v1531
      %v1540 = vadd.f32 %v342, %v1532
      %v1541 = vadd.f32 %v343, %v1533
      %v1542 = vadd.f32 %v344, %v1534
      %v1543 = vadd.f32 %v345, %v1535
      %v1544 = vadd.f32 %v346, %v1536
      %v1545 = vadd.f32 %v347, %v1537
      %v1546 = vadd.f32 %v1538, %v1503
      %v1547 = vadd.f32 %v1539, %v1505
      %v1548 = vadd.f32 %v1540, %v1508
      %v1549 = vadd.f32 %v1541, %v1510
      %v1550 = vadd.f32 %v1542, %v1513
      %v1551 = vadd.f32 %v1543, %v1515
      %v1552 = vadd.f32 %v1544, %v1518
      %v1553 = vadd.f32 %v1545, %v1520
      %v1554 = vpack.c.bf16 %v1546, %v1546
      %v1555 = vpack.c.bf16 %v1547, %v1547
      %v1556 = vpack.c.bf16 %v1548, %v1548
      %v1557 = vpack.c.bf16 %v1549, %v1549
      %v1558 = vpack.c.bf16 %v1550, %v1550
      %v1559 = vpack.c.bf16 %v1551, %v1551
      %v1560 = vpack.c.bf16 %v1552, %v1552
      %v1561 = vpack.c.bf16 %v1553, %v1553
      %vm1562 = vcmask 519168
      %1563 = vst.msk [vmem:[%s329] sm:$0xf] %vm1562, %v1554
      %1564 = vst.msk [vmem:[%s329 + $0x4] sm:$0xf] %vm1562, %v1555
      %1565 = vst.msk [vmem:[%s329 + $0x8] sm:$0xf] %vm1562, %v1556
      %1566 = vst.msk [vmem:[%s329 + $0xc] sm:$0xf] %vm1562, %v1557
      %1567 = vst.msk [vmem:[%s329 + $0x10] sm:$0xf] %vm1562, %v1558
      %1568 = vst.msk [vmem:[%s329 + $0x14] sm:$0xf] %vm1562, %v1559
      %1569 = vst.msk [vmem:[%s329 + $0x18] sm:$0xf] %vm1562, %v1560
      %1570 = vst.msk [vmem:[%s329 + $0x1c] sm:$0xf] %vm1562, %v1561
      %s1571 = smul.u32 8, %s19
      %p1572 = scmp.lt.s32.totalorder %s1571, 15
      %s1573 = scalar_select %p1572, %s1571, 15
      %s1574 = smul.addr %s1573, 4
      %s1575 = scalar_lea.vmem %s8, %s1574
      // Predicated region
      $region53: #{glse_pallas.25} parent=51 // pred_check
        %p1576 = pneg %p215
      $region54: #{glse_pallas.25} parent=51 // pred_check_branch
        %1578 = sbr.rel (%p1576) target = $region56
      $region55: #{glse_pallas.25} parent=51 // pred_region
        %s1579 = smul.u32 8, %s19
      $region56: #{glse_pallas.25} parent=51 // pred_fallthru
        _
    $region52: #{glse_pallas.25} parent=5 // pred_fallthru
      _
    %p1580 = scmp.le.s32.totalorder 2, %s14
    // Predicated region
    $region57: #{glse_pallas.25} parent=5 // pred_check
      %p1581 = pneg %p1580
    $region58: #{glse_pallas.25} parent=5 // pred_check_branch
      %1583 = sbr.rel (%p1581) target = $region60
    $region59: #{glse_pallas.25} parent=5 // pred_region
      %s1584 = ssub.s32 %s14, 2
      // Predicated region
      $region61: #{glse_pallas.25} parent=59 // pred_check
        %p1585 = pneg %p221
      $region62: #{glse_pallas.25} parent=59 // pred_check_branch
        %1587 = sbr.rel (%p1585) target = $region64
      $region63: #{glse_pallas.25} parent=59 // pred_region
        %s1588 = smul.u32 8, %s20
        %p1589 = scmp.lt.s32.totalorder %s1588, 15
        %s1590 = scalar_select %p1589, %s1588, 15
        %s1591 = smul.addr %s1590, 4
        %s1592 = scalar_lea.vmem %s8, %s1591
      $region64: #{glse_pallas.25} parent=59 // pred_fallthru
        _
    $region60: #{glse_pallas.25} parent=5 // pred_fallthru
      _
  $region6: #{glse_pallas.25} parent=0 // loop_footer
    %s18 = sadd.s32 1, %s14
  $region7: #{glse_pallas.25} parent=0 // loop_footer_branch
    %13 = sbr.rel target = $region3
  $region8: #{glse_pallas.25} parent=0 // loop_exit
    _

// kernel: glse_pallas.38
$region0: #{glse_pallas.38}
  #allocation0 [shape = 'u32[]', space=smem, size = 0x4, offset = 0x4, fixed_abs, tag = 'smem constant byte address 0x4 - core index']
  #allocation1 [shape = 'u32[72,128]{1,0:T(1,128)}', space=vmem, size = 0x9000, scoped, tag = 'internal scratch']
  %s0 = inlined_call_operand.vmem [shape: bf16[128,640], index: 0, kind: input, shape index: {}]
  %s1 = inlined_call_operand.vmem [shape: bf16[640,64], index: 1, kind: input, shape index: {}]
  %s2 = inlined_call_operand.vmem [shape: f32[1,64], index: 2, kind: input, shape index: {}]
  %s3 = inlined_call_operand.vmem [shape: f32[1,64], index: 3, kind: input, shape index: {}]
  %s4 = inlined_call_operand.vmem [shape: f32[1,64], index: 4, kind: input, shape index: {}]
  %s5 = inlined_call_operand.vmem [shape: bf16[128,64], index: 5, kind: output, shape index: {}]
  %s6 = sld [smem:[#allocation0]]
  $region53: #{glse_pallas.38} parent=0
    _
  %s8 = ssub.s32 1, %s6
  %s9 = scalar_select 0, %s8, %s6
  loop: start=0, step=1, limit=4
  $region2: #{glse_pallas.38} parent=0 // loop_pre_header
    _
  $region3: #{glse_pallas.38} parent=0 // loop_header
    %s11 = sphi 0, %s15
    %p12 = scmp.ge.s32.totalorder %s11, 4
    %s21 = sphi 0, %s23
    %s24 = sphi 0, %s21
    %s25 = sphi 0, %s24
    %s41 = sphi 0, %s25
    %s45 = sphi 0, %s45
    %s47 = sphi 0, %s45
    %s48 = sphi 0, %s47
    %s62 = sphi 0, %s48
    %s66 = sphi 0, %s66
    %s68 = sphi 0, %s66
    %s69 = sphi 0, %s68
    %s83 = sphi 0, %s69
    %s87 = sphi 0, %s87
    %s89 = sphi 0, %s87
    %s90 = sphi 0, %s89
    %s104 = sphi 0, %s90
    %s108 = sphi 0, %s108
    %s110 = sphi 0, %s108
    %s111 = sphi 0, %s110
    %s125 = sphi 0, %s111
    %s131 = sphi 0, %s133
    %s134 = sphi 0, %s131
    %s135 = sphi 0, %s134
    %s151 = sphi 0, %s135
  $region4: #{glse_pallas.38} parent=0 // loop_header_branch
    %14 = sbr.rel (%p12) target = $region8
  $region5: #{glse_pallas.38} parent=0 // loop_body
    %s16 = ssub.s32 %s11, 1
    %s17 = ssub.s32 %s11, 2
    %s18 = sadd.s32 %s11, 1
    %s19 = ssub.s32 %s11, %s18
    %p20 = scmp.eq.s32.totalorder %s19, 0
    %s22 = sadd.s32 %s21, 1
    %s23 = scalar_select %p20, %s21, %s22
    %p26 = pneg %p20
    %p27 = scmp.eq.s32.totalorder %s11, 1
    %p28 = por %p26, %p27
    %p29 = scmp.ne.s32.totalorder %s21, %s24
    %p30 = scmp.eq.s32.totalorder %s11, 0
    %p31 = por %p29, %p30
    %p32 = scmp.ne.s32.totalorder %s21, %s24
    %p33 = scmp.eq.s32.totalorder %s16, 1
    %p34 = por %p32, %p33
    %p35 = scmp.ne.s32.totalorder %s24, %s25
    %p36 = scmp.eq.s32.totalorder %s16, 0
    %p37 = por %p35, %p36
    %p38 = scmp.ne.s32.totalorder %s24, %s25
    %p39 = scmp.eq.s32.totalorder %s17, 1
    %p40 = por %p38, %p39
    %p42 = scmp.ne.s32.totalorder %s25, %s41
    %p43 = scmp.eq.s32.totalorder %s17, 0
    %p44 = por %p42, %p43
    %s46 = sadd.s32 %s45, 1
    %p49 = scmp.eq.s32.totalorder %s11, 1
    %p50 = scmp.ne.s32.totalorder %s45, %s47
    %p51 = scmp.eq.s32.totalorder %s11, 0
    %p52 = por %p50, %p51
    %p53 = scmp.ne.s32.totalorder %s45, %s47
    %p54 = scmp.eq.s32.totalorder %s16, 1
    %p55 = por %p53, %p54
    %p56 = scmp.ne.s32.totalorder %s47, %s48
    %p57 = scmp.eq.s32.totalorder %s16, 0
    %p58 = por %p56, %p57
    %p59 = scmp.ne.s32.totalorder %s47, %s48
    %p60 = scmp.eq.s32.totalorder %s17, 1
    %p61 = por %p59, %p60
    %p63 = scmp.ne.s32.totalorder %s48, %s62
    %p64 = scmp.eq.s32.totalorder %s17, 0
    %p65 = por %p63, %p64
    %s67 = sadd.s32 %s66, 1
    %p70 = scmp.eq.s32.totalorder %s11, 1
    %p71 = scmp.ne.s32.totalorder %s66, %s68
    %p72 = scmp.eq.s32.totalorder %s11, 0
    %p73 = por %p71, %p72
    %p74 = scmp.ne.s32.totalorder %s66, %s68
    %p75 = scmp.eq.s32.totalorder %s16, 1
    %p76 = por %p74, %p75
    %p77 = scmp.ne.s32.totalorder %s68, %s69
    %p78 = scmp.eq.s32.totalorder %s16, 0
    %p79 = por %p77, %p78
    %p80 = scmp.ne.s32.totalorder %s68, %s69
    %p81 = scmp.eq.s32.totalorder %s17, 1
    %p82 = por %p80, %p81
    %p84 = scmp.ne.s32.totalorder %s69, %s83
    %p85 = scmp.eq.s32.totalorder %s17, 0
    %p86 = por %p84, %p85
    %s88 = sadd.s32 %s87, 1
    %p91 = scmp.eq.s32.totalorder %s11, 1
    %p92 = scmp.ne.s32.totalorder %s87, %s89
    %p93 = scmp.eq.s32.totalorder %s11, 0
    %p94 = por %p92, %p93
    %p95 = scmp.ne.s32.totalorder %s87, %s89
    %p96 = scmp.eq.s32.totalorder %s16, 1
    %p97 = por %p95, %p96
    %p98 = scmp.ne.s32.totalorder %s89, %s90
    %p99 = scmp.eq.s32.totalorder %s16, 0
    %p100 = por %p98, %p99
    %p101 = scmp.ne.s32.totalorder %s89, %s90
    %p102 = scmp.eq.s32.totalorder %s17, 1
    %p103 = por %p101, %p102
    %p105 = scmp.ne.s32.totalorder %s90, %s104
    %p106 = scmp.eq.s32.totalorder %s17, 0
    %p107 = por %p105, %p106
    %s109 = sadd.s32 %s108, 1
    %p112 = scmp.eq.s32.totalorder %s11, 1
    %p113 = scmp.ne.s32.totalorder %s108, %s110
    %p114 = scmp.eq.s32.totalorder %s11, 0
    %p115 = por %p113, %p114
    %p116 = scmp.ne.s32.totalorder %s108, %s110
    %p117 = scmp.eq.s32.totalorder %s16, 1
    %p118 = por %p116, %p117
    %p119 = scmp.ne.s32.totalorder %s110, %s111
    %p120 = scmp.eq.s32.totalorder %s16, 0
    %p121 = por %p119, %p120
    %p122 = scmp.ne.s32.totalorder %s110, %s111
    %p123 = scmp.eq.s32.totalorder %s17, 1
    %p124 = por %p122, %p123
    %p126 = scmp.ne.s32.totalorder %s111, %s125
    %p127 = scmp.eq.s32.totalorder %s17, 0
    %p128 = por %p126, %p127
    %s129 = ssub.s32 %s11, %s18
    %p130 = scmp.eq.s32.totalorder %s129, 0
    %s132 = sadd.s32 %s131, 1
    %s133 = scalar_select %p130, %s131, %s132
    %p136 = pneg %p130
    %p137 = scmp.eq.s32.totalorder %s11, 1
    %p138 = por %p136, %p137
    %p139 = scmp.ne.s32.totalorder %s131, %s134
    %p140 = scmp.eq.s32.totalorder %s11, 0
    %p141 = por %p139, %p140
    %p142 = scmp.ne.s32.totalorder %s131, %s134
    %p143 = scmp.eq.s32.totalorder %s16, 1
    %p144 = por %p142, %p143
    %p145 = scmp.ne.s32.totalorder %s134, %s135
    %p146 = scmp.eq.s32.totalorder %s16, 0
    %p147 = por %p145, %p146
    %p148 = scmp.ne.s32.totalorder %s134, %s135
    %p149 = scmp.eq.s32.totalorder %s17, 1
    %p150 = por %p148, %p149
    %p152 = scmp.ne.s32.totalorder %s135, %s151
    %p153 = scmp.eq.s32.totalorder %s17, 0
    %p154 = por %p152, %p153
    %p155 = scmp.le.s32.totalorder 1, %s11
    %p156 = scmp.lt.s32.totalorder %s11, 3
    %p157 = pnand %p155, %p156
    %p158 = pneg %p157
    // Predicated region
    $region9: #{glse_pallas.38} parent=5 // pred_check
      _
    $region10: #{glse_pallas.38} parent=5 // pred_check_branch
      %160 = sbr.rel (%p157) target = $region12
    $region11: #{glse_pallas.38} parent=5 // pred_region
      %s161 = ssub.s32 %s11, 1
      // Predicated region
      $region13: #{glse_pallas.38} parent=11 // pred_check
        %p162 = pneg %p58
      $region14: #{glse_pallas.38} parent=11 // pred_check_branch
        %164 = sbr.rel (%p162) target = $region16
      $region15: #{glse_pallas.38} parent=11 // pred_region
        _
      $region16: #{glse_pallas.38} parent=11 // pred_fallthru
        _
      // Predicated region
      $region17: #{glse_pallas.38} parent=11 // pred_check
        %p165 = pneg %p79
      $region18: #{glse_pallas.38} parent=11 // pred_check_branch
        %167 = sbr.rel (%p165) target = $region20
      $region19: #{glse_pallas.38} parent=11 // pred_region
        _
      $region20: #{glse_pallas.38} parent=11 // pred_fallthru
        _
      // Predicated region
      $region21: #{glse_pallas.38} parent=11 // pred_check
        %p168 = pneg %p100
      $region22: #{glse_pallas.38} parent=11 // pred_check_branch
        %170 = sbr.rel (%p168) target = $region24
      $region23: #{glse_pallas.38} parent=11 // pred_region
        _
      $region24: #{glse_pallas.38} parent=11 // pred_fallthru
        _
      // Predicated region
      $region25: #{glse_pallas.38} parent=11 // pred_check
        %p171 = pneg %p121
      $region26: #{glse_pallas.38} parent=11 // pred_check_branch
        %173 = sbr.rel (%p171) target = $region28
      $region27: #{glse_pallas.38} parent=11 // pred_region
        _
      $region28: #{glse_pallas.38} parent=11 // pred_fallthru
        _
    $region12: #{glse_pallas.38} parent=5 // pred_fallthru
      _
    %p174 = scmp.lt.s32.totalorder %s11, 2
    // Predicated region
    $region29: #{glse_pallas.38} parent=5 // pred_check
      %p175 = pneg %p174
    $region30: #{glse_pallas.38} parent=5 // pred_check_branch
      %177 = sbr.rel (%p175) target = $region32
    $region31: #{glse_pallas.38} parent=5 // pred_region
      // Predicated region
      $region33: #{glse_pallas.38} parent=31 // pred_check
        %p178 = pneg %p31
      $region34: #{glse_pallas.38} parent=31 // pred_check_branch
        %180 = sbr.rel (%p178) target = $region36
      $region35: #{glse_pallas.38} parent=31 // pred_region
        %s181 = smul.u32 8, %s11
        %p182 = scmp.lt.s32.totalorder %s181, 15
        %s183 = scalar_select %p182, %s181, 15
        %s184 = smul.addr %s183, 5
        %s185 = smul.addr %s184, 4
        %s186 = scalar_lea.vmem %s0, %s185
        %s187 = smul.u32 8, %s11
      $region36: #{glse_pallas.38} parent=31 // pred_fallthru
        _
    $region32: #{glse_pallas.38} parent=5 // pred_fallthru
      _
    %p188 = scmp.le.s32.totalorder 1, %s11
    %p189 = scmp.lt.s32.totalorder %s11, 3
    %p190 = pnand %p188, %p189
    %p191 = pneg %p190
    // Predicated region
    $region37: #{glse_pallas.38} parent=5 // pred_check
      _
    $region38: #{glse_pallas.38} parent=5 // pred_check_branch
      %193 = sbr.rel (%p190) target = $region40
    $region39: #{glse_pallas.38} parent=5 // pred_region
      %s194 = ssub.s32 %s11, 1
      %s195 = smul.u32 8, %s16
      %p196 = scmp.lt.s32.totalorder %s195, 15
      %s197 = scalar_select %p196, %s195, 15
      %s198 = smul.addr %s197, 5
      %s199 = smul.addr %s198, 4
      %s200 = scalar_lea.vmem %s0, %s199
      %p201 = pneg %p37
      %p202 = pneg %p34
      %p203 = pneg %p58
      %p204 = pneg %p55
      %p205 = pneg %p79
      %p206 = pneg %p76
      %p207 = pneg %p100
      %p208 = pneg %p97
      %p209 = pneg %p121
      %p210 = pneg %p118
      %p211 = pneg %p147
      %p212 = pneg %p144
      %s213 = smul.u32 8, %s16
      %p214 = scmp.lt.s32.totalorder %s213, 15
      %s215 = scalar_select %p214, %s213, 15
      %s216 = smul.addr %s215, 4
      %s217 = scalar_lea.vmem %s5, %s216
      %s218 = smul.u32 8, %s16
      %p219 = scmp.lt.s32.totalorder %s218, 15
      %s220 = scalar_select %p219, %s218, 15
      %s221 = smul.addr %s220, 5
      %s222 = smul.addr %s221, 4
      %s223 = scalar_lea.vmem %s0, %s222
      %s224 = smul.u32 8, %s16
      %s225 = smul.u32 8, %s16
      %p226 = scmp.lt.s32.totalorder %s225, 15
      %s227 = scalar_select %p226, %s225, 15
      %s228 = smul.addr %s227, 4
      %s229 = scalar_lea.vmem %s5, %s228
      %s230 = smul.u32 8, %s16
      %v231 = vld [vmem:[%s223] sm:$0xff]
      %v232 = vld [vmem:[%s223 + $0x8] sm:$0xff]
      %v233 = vld [vmem:[%s223 + $0x10] sm:$0xf]
      %v234 = vld [vmem:[%s223 + $0x14] sm:$0xff]
      %v235 = vld [vmem:[%s223 + $0x1c] sm:$0xff]
      %v236 = vld [vmem:[%s223 + $0x24] sm:$0xf]
      %v237 = vld [vmem:[%s223 + $0x28] sm:$0xff]
      %v238 = vld [vmem:[%s223 + $0x30] sm:$0xff]
      %v239 = vld [vmem:[%s223 + $0x38] sm:$0xf]
      %v240 = vld [vmem:[%s223 + $0x3c] sm:$0xff]
      %v241 = vld [vmem:[%s223 + $0x44] sm:$0xff]
      %v242 = vld [vmem:[%s223 + $0x4c] sm:$0xf]
      %v243 = vld [vmem:[%s223 + $0x50] sm:$0xff]
      %v244 = vld [vmem:[%s223 + $0x58] sm:$0xff]
      %v245 = vld [vmem:[%s223 + $0x60] sm:$0xf]
      %v246 = vld [vmem:[%s223 + $0x64] sm:$0xff]
      %v247 = vld [vmem:[%s223 + $0x6c] sm:$0xff]
      %v248 = vld [vmem:[%s223 + $0x74] sm:$0xf]
      %v249 = vld [vmem:[%s223 + $0x78] sm:$0xff]
      %v250 = vld [vmem:[%s223 + $0x80] sm:$0xff]
      %v251 = vld [vmem:[%s223 + $0x88] sm:$0xf]
      %v252 = vld [vmem:[%s223 + $0x8c] sm:$0xff]
      %v253 = vld [vmem:[%s223 + $0x94] sm:$0xff]
      %v254 = vld [vmem:[%s223 + $0x9c] sm:$0xf]
      %v255 = vld [vmem:[%s1] sm:$0xf]
      %v256 = vld [vmem:[%s1 + $0x4] sm:$0xf]
      %v257 = vld [vmem:[%s1 + $0x8] sm:$0xf]
      %v258 = vld [vmem:[%s1 + $0xc] sm:$0xf]
      %v259 = vld [vmem:[%s1 + $0x10] sm:$0xf]
      %v260 = vld [vmem:[%s1 + $0x14] sm:$0xf]
      %v261 = vld [vmem:[%s1 + $0x18] sm:$0xf]
      %v262 = vld [vmem:[%s1 + $0x1c] sm:$0xf]
      %v263 = vld [vmem:[%s1 + $0x20] sm:$0xf]
      %v264 = vld [vmem:[%s1 + $0x24] sm:$0xf]
      %v265 = vld [vmem:[%s1 + $0x28] sm:$0xf]
      %v266 = vld [vmem:[%s1 + $0x2c] sm:$0xf]
      %v267 = vld [vmem:[%s1 + $0x30] sm:$0xf]
      %v268 = vld [vmem:[%s1 + $0x34] sm:$0xf]
      %v269 = vld [vmem:[%s1 + $0x38] sm:$0xf]
      %v270 = vld [vmem:[%s1 + $0x3c] sm:$0xf]
      %v271 = vld [vmem:[%s1 + $0x40] sm:$0xf]
      %v272 = vld [vmem:[%s1 + $0x44] sm:$0xf]
      %v273 = vld [vmem:[%s1 + $0x48] sm:$0xf]
      %v274 = vld [vmem:[%s1 + $0x4c] sm:$0xf]
      %v275 = vld [vmem:[%s1 + $0x50] sm:$0xf]
      %v276 = vld [vmem:[%s1 + $0x54] sm:$0xf]
      %v277 = vld [vmem:[%s1 + $0x58] sm:$0xf]
      %v278 = vld [vmem:[%s1 + $0x5c] sm:$0xf]
      %v279 = vld [vmem:[%s1 + $0x60] sm:$0xf]
      %v280 = vld [vmem:[%s1 + $0x64] sm:$0xf]
      %v281 = vld [vmem:[%s1 + $0x68] sm:$0xf]
      %v282 = vld [vmem:[%s1 + $0x6c] sm:$0xf]
      %v283 = vld [vmem:[%s1 + $0x70] sm:$0xf]
      %v284 = vld [vmem:[%s1 + $0x74] sm:$0xf]
      %v285 = vld [vmem:[%s1 + $0x78] sm:$0xf]
      %v286 = vld [vmem:[%s1 + $0x7c] sm:$0xf]
      %v287 = vld [vmem:[%s1 + $0x80] sm:$0xf]
      %v288 = vld [vmem:[%s1 + $0x84] sm:$0xf]
      %v289 = vld [vmem:[%s1 + $0x88] sm:$0xf]
      %v290 = vld [vmem:[%s1 + $0x8c] sm:$0xf]
      %v291 = vld [vmem:[%s1 + $0x90] sm:$0xf]
      %v292 = vld [vmem:[%s1 + $0x94] sm:$0xf]
      %v293 = vld [vmem:[%s1 + $0x98] sm:$0xf]
      %v294 = vld [vmem:[%s1 + $0x9c] sm:$0xf]
      %v295 = vld [vmem:[%s1 + $0xa0] sm:$0xf]
      %v296 = vld [vmem:[%s1 + $0xa4] sm:$0xf]
      %v297 = vld [vmem:[%s1 + $0xa8] sm:$0xf]
      %v298 = vld [vmem:[%s1 + $0xac] sm:$0xf]
      %v299 = vld [vmem:[%s1 + $0xb0] sm:$0xf]
      %v300 = vld [vmem:[%s1 + $0xb4] sm:$0xf]
      %v301 = vld [vmem:[%s1 + $0xb8] sm:$0xf]
      %v302 = vld [vmem:[%s1 + $0xbc] sm:$0xf]
      %v303 = vld [vmem:[%s1 + $0xc0] sm:$0xf]
      %v304 = vld [vmem:[%s1 + $0xc4] sm:$0xf]
      %v305 = vld [vmem:[%s1 + $0xc8] sm:$0xf]
      %v306 = vld [vmem:[%s1 + $0xcc] sm:$0xf]
      %v307 = vld [vmem:[%s1 + $0xd0] sm:$0xf]
      %v308 = vld [vmem:[%s1 + $0xd4] sm:$0xf]
      %v309 = vld [vmem:[%s1 + $0xd8] sm:$0xf]
      %v310 = vld [vmem:[%s1 + $0xdc] sm:$0xf]
      %v311 = vld [vmem:[%s1 + $0xe0] sm:$0xf]
      %v312 = vld [vmem:[%s1 + $0xe4] sm:$0xf]
      %v313 = vld [vmem:[%s1 + $0xe8] sm:$0xf]
      %v314 = vld [vmem:[%s1 + $0xec] sm:$0xf]
      %v315 = vld [vmem:[%s1 + $0xf0] sm:$0xf]
      %v316 = vld [vmem:[%s1 + $0xf4] sm:$0xf]
      %v317 = vld [vmem:[%s1 + $0xf8] sm:$0xf]
      %v318 = vld [vmem:[%s1 + $0xfc] sm:$0xf]
      %v319 = vld [vmem:[%s1 + $0x100] sm:$0xf]
      %v320 = vld [vmem:[%s1 + $0x104] sm:$0xf]
      %v321 = vld [vmem:[%s1 + $0x108] sm:$0xf]
      %v322 = vld [vmem:[%s1 + $0x10c] sm:$0xf]
      %v323 = vld [vmem:[%s1 + $0x110] sm:$0xf]
      %v324 = vld [vmem:[%s1 + $0x114] sm:$0xf]
      %v325 = vld [vmem:[%s1 + $0x118] sm:$0xf]
      %v326 = vld [vmem:[%s1 + $0x11c] sm:$0xf]
      %v327 = vld [vmem:[%s1 + $0x120] sm:$0xf]
      %v328 = vld [vmem:[%s1 + $0x124] sm:$0xf]
      %v329 = vld [vmem:[%s1 + $0x128] sm:$0xf]
      %v330 = vld [vmem:[%s1 + $0x12c] sm:$0xf]
      %v331 = vld [vmem:[%s1 + $0x130] sm:$0xf]
      %v332 = vld [vmem:[%s1 + $0x134] sm:$0xf]
      %v333 = vld [vmem:[%s1 + $0x138] sm:$0xf]
      %v334 = vld [vmem:[%s1 + $0x13c] sm:$0xf]
      %v335 = vld [vmem:[%s2] sm:$0x1]
      %v337 = vperm.slane %v335, 0
      %v363 = vunpack.c.l.b16 %v231
      %v364 = vunpack.c.h.b16 %v231
      %v365 = vunpack.c.l.b16 %v232
      %v366 = vunpack.c.h.b16 %v232
      %v367 = vunpack.c.l.b16 %v233
      %v368 = vunpack.c.l.b16 %v234
      %v369 = vunpack.c.h.b16 %v234
      %v370 = vunpack.c.l.b16 %v235
      %v371 = vunpack.c.h.b16 %v235
      %v372 = vunpack.c.l.b16 %v236
      %v373 = vunpack.c.l.b16 %v237
      %v374 = vunpack.c.h.b16 %v237
      %v375 = vunpack.c.l.b16 %v238
      %v376 = vunpack.c.h.b16 %v238
      %v377 = vunpack.c.l.b16 %v239
      %v378 = vunpack.c.l.b16 %v240
      %v379 = vunpack.c.h.b16 %v240
      %v380 = vunpack.c.l.b16 %v241
      %v381 = vunpack.c.h.b16 %v241
      %v382 = vunpack.c.l.b16 %v242
      %v383 = vunpack.c.l.b16 %v243
      %v384 = vunpack.c.h.b16 %v243
      %v385 = vunpack.c.l.b16 %v244
      %v386 = vunpack.c.h.b16 %v244
      %v387 = vunpack.c.l.b16 %v245
      %v388 = vunpack.c.l.b16 %v246
      %v389 = vunpack.c.h.b16 %v246
      %v390 = vunpack.c.l.b16 %v247
      %v391 = vunpack.c.h.b16 %v247
      %v392 = vunpack.c.l.b16 %v248
      %v393 = vunpack.c.l.b16 %v249
      %v394 = vunpack.c.h.b16 %v249
      %v395 = vunpack.c.l.b16 %v250
      %v396 = vunpack.c.h.b16 %v250
      %v397 = vunpack.c.l.b16 %v251
      %v398 = vunpack.c.l.b16 %v252
      %v399 = vunpack.c.h.b16 %v252
      %v400 = vunpack.c.l.b16 %v253
      %v401 = vunpack.c.h.b16 %v253
      %v402 = vunpack.c.l.b16 %v254
      %v403 = vpack.c.b16 %v368, %v363
      %v404 = vpack.c.b16 %v369, %v364
      %v405 = vpack.c.b16 %v370, %v365
      %v406 = vpack.c.b16 %v371, %v366
      %v407 = vpack.c.b16 %v372, %v367
      %v408 = vpack.c.b16 %v378, %v373
      %v409 = vpack.c.b16 %v379, %v374
      %v410 = vpack.c.b16 %v380, %v375
      %v411 = vpack.c.b16 %v381, %v376
      %v412 = vpack.c.b16 %v382, %v377
      %v413 = vpack.c.b16 %v388, %v383
      %v414 = vpack.c.b16 %v389, %v384
      %v415 = vpack.c.b16 %v390, %v385
      %v416 = vpack.c.b16 %v391, %v386
      %v417 = vpack.c.b16 %v392, %v387
      %v418 = vpack.c.b16 %v398, %v393
      %v419 = vpack.c.b16 %v399, %v394
      %v420 = vpack.c.b16 %v400, %v395
      %v421 = vpack.c.b16 %v401, %v396
      %v422 = vpack.c.b16 %v402, %v397
      %v523 = vunpack.c.l.b16 %v255
      %v524 = vunpack.c.l.b16 %v256
      %v525 = vunpack.c.l.b16 %v257
      %v526 = vunpack.c.l.b16 %v258
      %v527 = vunpack.c.l.b16 %v259
      %v528 = vunpack.c.l.b16 %v260
      %v529 = vunpack.c.l.b16 %v261
      %v530 = vunpack.c.l.b16 %v262
      %v531 = vunpack.c.l.b16 %v263
      %v532 = vunpack.c.l.b16 %v264
      %v533 = vunpack.c.l.b16 %v265
      %v534 = vunpack.c.l.b16 %v266
      %v535 = vunpack.c.l.b16 %v267
      %v536 = vunpack.c.l.b16 %v268
      %v537 = vunpack.c.l.b16 %v269
      %v538 = vunpack.c.l.b16 %v270
      %v539 = vunpack.c.l.b16 %v271
      %v540 = vunpack.c.l.b16 %v272
      %v541 = vunpack.c.l.b16 %v273
      %v542 = vunpack.c.l.b16 %v274
      %v543 = vunpack.c.l.b16 %v275
      %v544 = vunpack.c.l.b16 %v276
      %v545 = vunpack.c.l.b16 %v277
      %v546 = vunpack.c.l.b16 %v278
      %v547 = vunpack.c.l.b16 %v279
      %v548 = vunpack.c.l.b16 %v280
      %v549 = vunpack.c.l.b16 %v281
      %v550 = vunpack.c.l.b16 %v282
      %v551 = vunpack.c.l.b16 %v283
      %v552 = vunpack.c.l.b16 %v284
      %v553 = vunpack.c.l.b16 %v285
      %v554 = vunpack.c.l.b16 %v286
      %v555 = vunpack.c.l.b16 %v287
      %v556 = vunpack.c.l.b16 %v288
      %v557 = vunpack.c.l.b16 %v289
      %v558 = vunpack.c.l.b16 %v290
      %v559 = vunpack.c.l.b16 %v291
      %v560 = vunpack.c.l.b16 %v292
      %v561 = vunpack.c.l.b16 %v293
      %v562 = vunpack.c.l.b16 %v294
      %v563 = vunpack.c.l.b16 %v295
      %v564 = vunpack.c.l.b16 %v296
      %v565 = vunpack.c.l.b16 %v297
      %v566 = vunpack.c.l.b16 %v298
      %v567 = vunpack.c.l.b16 %v299
      %v568 = vunpack.c.l.b16 %v300
      %v569 = vunpack.c.l.b16 %v301
      %v570 = vunpack.c.l.b16 %v302
      %v571 = vunpack.c.l.b16 %v303
      %v572 = vunpack.c.l.b16 %v304
      %v573 = vunpack.c.l.b16 %v305
      %v574 = vunpack.c.l.b16 %v306
      %v575 = vunpack.c.l.b16 %v307
      %v576 = vunpack.c.l.b16 %v308
      %v577 = vunpack.c.l.b16 %v309
      %v578 = vunpack.c.l.b16 %v310
      %v579 = vunpack.c.l.b16 %v311
      %v580 = vunpack.c.l.b16 %v312
      %v581 = vunpack.c.l.b16 %v313
      %v582 = vunpack.c.l.b16 %v314
      %v583 = vunpack.c.l.b16 %v315
      %v584 = vunpack.c.l.b16 %v316
      %v585 = vunpack.c.l.b16 %v317
      %v586 = vunpack.c.l.b16 %v318
      %v587 = vunpack.c.l.b16 %v319
      %v588 = vunpack.c.l.b16 %v320
      %v589 = vunpack.c.l.b16 %v321
      %v590 = vunpack.c.l.b16 %v322
      %v591 = vunpack.c.l.b16 %v323
      %v592 = vunpack.c.l.b16 %v324
      %v593 = vunpack.c.l.b16 %v325
      %v594 = vunpack.c.l.b16 %v326
      %v595 = vunpack.c.l.b16 %v327
      %v596 = vunpack.c.l.b16 %v328
      %v597 = vunpack.c.l.b16 %v329
      %v598 = vunpack.c.l.b16 %v330
      %v599 = vunpack.c.l.b16 %v331
      %v600 = vunpack.c.l.b16 %v332
      %v601 = vunpack.c.l.b16 %v333
      %v602 = vunpack.c.l.b16 %v334
      %v603 = vpack.c.b16 %v524, %v523
      %v604 = vpack.c.b16 %v526, %v525
      %v605 = vpack.c.b16 %v528, %v527
      %v606 = vpack.c.b16 %v530, %v529
      %v607 = vpack.c.b16 %v532, %v531
      %v608 = vpack.c.b16 %v534, %v533
      %v609 = vpack.c.b16 %v536, %v535
      %v610 = vpack.c.b16 %v538, %v537
      %v611 = vpack.c.b16 %v540, %v539
      %v612 = vpack.c.b16 %v542, %v541
      %v613 = vpack.c.b16 %v544, %v543
      %v614 = vpack.c.b16 %v546, %v545
      %v615 = vpack.c.b16 %v548, %v547
      %v616 = vpack.c.b16 %v550, %v549
      %v617 = vpack.c.b16 %v552, %v551
      %v618 = vpack.c.b16 %v554, %v553
      %v619 = vpack.c.b16 %v556, %v555
      %v620 = vpack.c.b16 %v558, %v557
      %v621 = vpack.c.b16 %v560, %v559
      %v622 = vpack.c.b16 %v562, %v561
      %v623 = vpack.c.b16 %v564, %v563
      %v624 = vpack.c.b16 %v566, %v565
      %v625 = vpack.c.b16 %v568, %v567
      %v626 = vpack.c.b16 %v570, %v569
      %v627 = vpack.c.b16 %v572, %v571
      %v628 = vpack.c.b16 %v574, %v573
      %v629 = vpack.c.b16 %v576, %v575
      %v630 = vpack.c.b16 %v578, %v577
      %v631 = vpack.c.b16 %v580, %v579
      %v632 = vpack.c.b16 %v582, %v581
      %v633 = vpack.c.b16 %v584, %v583
      %v634 = vpack.c.b16 %v586, %v585
      %v635 = vpack.c.b16 %v588, %v587
      %v636 = vpack.c.b16 %v590, %v589
      %v637 = vpack.c.b16 %v592, %v591
      %v638 = vpack.c.b16 %v594, %v593
      %v639 = vpack.c.b16 %v596, %v595
      %v640 = vpack.c.b16 %v598, %v597
      %v641 = vpack.c.b16 %v600, %v599
      %v642 = vpack.c.b16 %v602, %v601
      %683 = vmatpush.bf16.msra.mxu0 %v610
      %684 = vmatpush.bf16.msra.mxu0 %v609
      %685 = vmatpush.bf16.msra.mxu0 %v608
      %686 = vmatpush.bf16.msra.mxu0 %v607
      %687 = vmatpush.bf16.msra.mxu0 %v606
      %688 = vmatpush.bf16.msra.mxu0 %v605
      %689 = vmatpush.bf16.msra.mxu0 %v604
      %690 = vmatpush.bf16.msra.mxu0 %v603
      %691 = vmatmul.bf16.gmra.mxu0 %v403
      %v692 = vpop.f32.mrf.mxu0
      %v693 = vadd.f32 %v337, %v692
      %v694 = vpop.f32.mrf.mxu0
      %v695 = vadd.f32 %v337, %v694
      %696 = vmatmul.bf16.gmra.mxu0 %v408
      %v697 = vpop.f32.mrf.mxu0
      %v698 = vadd.f32 %v337, %v697
      %v699 = vpop.f32.mrf.mxu0
      %v700 = vadd.f32 %v337, %v699
      %701 = vmatmul.bf16.gmra.mxu0 %v413
      %v702 = vpop.f32.mrf.mxu0
      %v703 = vadd.f32 %v337, %v702
      %v704 = vpop.f32.mrf.mxu0
      %v705 = vadd.f32 %v337, %v704
      %706 = vmatmul.bf16.gmra.mxu0 %v418
      %v707 = vpop.f32.mrf.mxu0
      %v708 = vadd.f32 %v337, %v707
      %v709 = vpop.f32.mrf.mxu0
      %v710 = vadd.f32 %v337, %v709
      %711 = vdwg.mxu0
      %712 = vmatpush.bf16.msra.mxu0 %v618
      %713 = vmatpush.bf16.msra.mxu0 %v617
      %714 = vmatpush.bf16.msra.mxu0 %v616
      %715 = vmatpush.bf16.msra.mxu0 %v615
      %716 = vmatpush.bf16.msra.mxu0 %v614
      %717 = vmatpush.bf16.msra.mxu0 %v613
      %718 = vmatpush.bf16.msra.mxu0 %v612
      %719 = vmatpush.bf16.msra.mxu0 %v611
      %720 = vmatmul.bf16.gmra.mxu0 %v404
      %v721 = vpop.f32.mrf.mxu0
      %v722 = vadd.f32 %v693, %v721
      %v723 = vpop.f32.mrf.mxu0
      %v724 = vadd.f32 %v695, %v723
      %725 = vmatmul.bf16.gmra.mxu0 %v409
      %v726 = vpop.f32.mrf.mxu0
      %v727 = vadd.f32 %v698, %v726
      %v728 = vpop.f32.mrf.mxu0
      %v729 = vadd.f32 %v700, %v728
      %730 = vmatmul.bf16.gmra.mxu0 %v414
      %v731 = vpop.f32.mrf.mxu0
      %v732 = vadd.f32 %v703, %v731
      %v733 = vpop.f32.mrf.mxu0
      %v734 = vadd.f32 %v705, %v733
      %735 = vmatmul.bf16.gmra.mxu0 %v419
      %v736 = vpop.f32.mrf.mxu0
      %v737 = vadd.f32 %v708, %v736
      %v738 = vpop.f32.mrf.mxu0
      %v739 = vadd.f32 %v710, %v738
      %740 = vdwg.mxu0
      %741 = vmatpush.bf16.msra.mxu0 %v626
      %742 = vmatpush.bf16.msra.mxu0 %v625
      %743 = vmatpush.bf16.msra.mxu0 %v624
      %744 = vmatpush.bf16.msra.mxu0 %v623
      %745 = vmatpush.bf16.msra.mxu0 %v622
      %746 = vmatpush.bf16.msra.mxu0 %v621
      %747 = vmatpush.bf16.msra.mxu0 %v620
      %748 = vmatpush.bf16.msra.mxu0 %v619
      %749 = vmatmul.bf16.gmra.mxu0 %v405
      %v750 = vpop.f32.mrf.mxu0
      %v751 = vadd.f32 %v722, %v750
      %v752 = vpop.f32.mrf.mxu0
      %v753 = vadd.f32 %v724, %v752
      %754 = vmatmul.bf16.gmra.mxu0 %v410
      %v755 = vpop.f32.mrf.mxu0
      %v756 = vadd.f32 %v727, %v755
      %v757 = vpop.f32.mrf.mxu0
      %v758 = vadd.f32 %v729, %v757
      %759 = vmatmul.bf16.gmra.mxu0 %v415
      %v760 = vpop.f32.mrf.mxu0
      %v761 = vadd.f32 %v732, %v760
      %v762 = vpop.f32.mrf.mxu0
      %v763 = vadd.f32 %v734, %v762
      %764 = vmatmul.bf16.gmra.mxu0 %v420
      %v765 = vpop.f32.mrf.mxu0
      %v766 = vadd.f32 %v737, %v765
      %v767 = vpop.f32.mrf.mxu0
      %v768 = vadd.f32 %v739, %v767
      %769 = vdwg.mxu0
      %770 = vmatpush.bf16.msra.mxu0 %v634
      %771 = vmatpush.bf16.msra.mxu0 %v633
      %772 = vmatpush.bf16.msra.mxu0 %v632
      %773 = vmatpush.bf16.msra.mxu0 %v631
      %774 = vmatpush.bf16.msra.mxu0 %v630
      %775 = vmatpush.bf16.msra.mxu0 %v629
      %776 = vmatpush.bf16.msra.mxu0 %v628
      %777 = vmatpush.bf16.msra.mxu0 %v627
      %778 = vmatmul.bf16.gmra.mxu0 %v406
      %v779 = vpop.f32.mrf.mxu0
      %v780 = vadd.f32 %v751, %v779
      %v781 = vpop.f32.mrf.mxu0
      %v782 = vadd.f32 %v753, %v781
      %783 = vmatmul.bf16.gmra.mxu0 %v411
      %v784 = vpop.f32.mrf.mxu0
      %v785 = vadd.f32 %v756, %v784
      %v786 = vpop.f32.mrf.mxu0
      %v787 = vadd.f32 %v758, %v786
      %788 = vmatmul.bf16.gmra.mxu0 %v416
      %v789 = vpop.f32.mrf.mxu0
      %v790 = vadd.f32 %v761, %v789
      %v791 = vpop.f32.mrf.mxu0
      %v792 = vadd.f32 %v763, %v791
      %793 = vmatmul.bf16.gmra.mxu0 %v421
      %v794 = vpop.f32.mrf.mxu0
      %v795 = vadd.f32 %v766, %v794
      %v796 = vpop.f32.mrf.mxu0
      %v797 = vadd.f32 %v768, %v796
      %798 = vdwg.mxu0
      %799 = vmatpush.bf16.msra.mxu0 %v642
      %800 = vmatpush.bf16.msra.mxu0 %v641
      %801 = vmatpush.bf16.msra.mxu0 %v640
      %802 = vmatpush.bf16.msra.mxu0 %v639
      %803 = vmatpush.bf16.msra.mxu0 %v638
      %804 = vmatpush.bf16.msra.mxu0 %v637
      %805 = vmatpush.bf16.msra.mxu0 %v636
      %806 = vmatpush.bf16.msra.mxu0 %v635
      %807 = vmatmul.bf16.gmra.mxu0 %v407
      %v808 = vpop.f32.mrf.mxu0
      %v809 = vadd.f32 %v780, %v808
      %v810 = vpop.f32.mrf.mxu0
      %v811 = vadd.f32 %v782, %v810
      %812 = vmatmul.bf16.gmra.mxu0 %v412
      %v813 = vpop.f32.mrf.mxu0
      %v814 = vadd.f32 %v785, %v813
      %v815 = vpop.f32.mrf.mxu0
      %v816 = vadd.f32 %v787, %v815
      %817 = vmatmul.bf16.gmra.mxu0 %v417
      %v818 = vpop.f32.mrf.mxu0
      %v819 = vadd.f32 %v790, %v818
      %v820 = vpop.f32.mrf.mxu0
      %v821 = vadd.f32 %v792, %v820
      %822 = vmatmul.bf16.gmra.mxu0 %v422
      %v823 = vpop.f32.mrf.mxu0
      %v824 = vadd.f32 %v795, %v823
      %v825 = vpop.f32.mrf.mxu0
      %v826 = vadd.f32 %v797, %v825
      %827 = vdwg.mxu0
      %v828 = vld [vmem:[%s3] sm:$0x1]
      %v829 = vld [vmem:[%s4] sm:$0x1]
      %vm830 = vcmask 523264
      %v831 = vsel %vm830, %v809, 0.0
      %832 = vadd.xlane.f32.xlu0 %v831
      %v833 = vpop.xlane.xlu0 %832
      %v834 = vsel %vm830, %v811, 0.0
      %835 = vadd.xlane.f32.xlu0 %v834
      %v836 = vpop.xlane.xlu0 %835
      %v837 = vsel %vm830, %v814, 0.0
      %838 = vadd.xlane.f32.xlu0 %v837
      %v839 = vpop.xlane.xlu0 %838
      %v840 = vsel %vm830, %v816, 0.0
      %841 = vadd.xlane.f32.xlu0 %v840
      %v842 = vpop.xlane.xlu0 %841
      %v843 = vsel %vm830, %v819, 0.0
      %844 = vadd.xlane.f32.xlu0 %v843
      %v845 = vpop.xlane.xlu0 %844
      %v846 = vsel %vm830, %v821, 0.0
      %847 = vadd.xlane.f32.xlu0 %v846
      %v848 = vpop.xlane.xlu0 %847
      %v849 = vsel %vm830, %v824, 0.0
      %850 = vadd.xlane.f32.xlu0 %v849
      %v851 = vpop.xlane.xlu0 %850
      %v852 = vsel %vm830, %v826, 0.0
      %853 = vadd.xlane.f32.xlu0 %v852
      %v854 = vpop.xlane.xlu0 %853
      %v855 = vrcp.pop 64.0
      %v856 = vmul.f32 64.0, %v855
      %v857 = vsub.f32 1.0, %v856
      %v858 = vmul.f32 %v855, %v857
      %v859 = vadd.f32 %v855, %v858
      %vm860 = vweird.f32 %v855
      %v861 = vsel %vm860, %v855, %v859
      %v862 = vmul.f32 %v833, %v861
      %v863 = vmul.f32 %v836, %v861
      %v864 = vmul.f32 %v839, %v861
      %v865 = vmul.f32 %v842, %v861
      %v866 = vmul.f32 %v845, %v861
      %v867 = vmul.f32 %v848, %v861
      %v868 = vmul.f32 %v851, %v861
      %v869 = vmul.f32 %v854, %v861
      %v870 = vsub.f32 %v809, %v862
      %v871 = vsub.f32 %v811, %v863
      %v872 = vsub.f32 %v814, %v864
      %v873 = vsub.f32 %v816, %v865
      %v874 = vsub.f32 %v819, %v866
      %v875 = vsub.f32 %v821, %v867
      %v876 = vsub.f32 %v824, %v868
      %v877 = vsub.f32 %v826, %v869
      %v878 = vmul.f32 %v870, %v870
      %v879 = vmul.f32 %v871, %v871
      %v880 = vmul.f32 %v872, %v872
      %v881 = vmul.f32 %v873, %v873
      %v882 = vmul.f32 %v874, %v874
      %v883 = vmul.f32 %v875, %v875
      %v884 = vmul.f32 %v876, %v876
      %v885 = vmul.f32 %v877, %v877
      %v886 = vsel %vm830, %v878, 0.0
      %887 = vadd.xlane.f32.xlu0 %v886
      %v888 = vpop.xlane.xlu0 %887
      %v889 = vsel %vm830, %v879, 0.0
      %890 = vadd.xlane.f32.xlu0 %v889
      %v891 = vpop.xlane.xlu0 %890
      %v892 = vsel %vm830, %v880, 0.0
      %893 = vadd.xlane.f32.xlu0 %v892
      %v894 = vpop.xlane.xlu0 %893
      %v895 = vsel %vm830, %v881, 0.0
      %896 = vadd.xlane.f32.xlu0 %v895
      %v897 = vpop.xlane.xlu0 %896
      %v898 = vsel %vm830, %v882, 0.0
      %899 = vadd.xlane.f32.xlu0 %v898
      %v900 = vpop.xlane.xlu0 %899
      %v901 = vsel %vm830, %v883, 0.0
      %902 = vadd.xlane.f32.xlu0 %v901
      %v903 = vpop.xlane.xlu0 %902
      %v904 = vsel %vm830, %v884, 0.0
      %905 = vadd.xlane.f32.xlu0 %v904
      %v906 = vpop.xlane.xlu0 %905
      %v907 = vsel %vm830, %v885, 0.0
      %908 = vadd.xlane.f32.xlu0 %v907
      %v909 = vpop.xlane.xlu0 %908
      %v910 = vmul.f32 %v888, %v861
      %v911 = vmul.f32 %v891, %v861
      %v912 = vmul.f32 %v894, %v861
      %v913 = vmul.f32 %v897, %v861
      %v914 = vmul.f32 %v900, %v861
      %v915 = vmul.f32 %v903, %v861
      %v916 = vmul.f32 %v906, %v861
      %v917 = vmul.f32 %v909, %v861
      %v918 = vadd.f32 %v910, 1e-05
      %v919 = vadd.f32 %v911, 1e-05
      %v920 = vadd.f32 %v912, 1e-05
      %v921 = vadd.f32 %v913, 1e-05
      %v922 = vadd.f32 %v914, 1e-05
      %v923 = vadd.f32 %v915, 1e-05
      %v924 = vadd.f32 %v916, 1e-05
      %v925 = vadd.f32 %v917, 1e-05
      %v926 = vrsqrt.pop %v918
      %v927 = vmul.f32 %v926, %v918
      %v928 = vmul.f32 %v927, %v926
      %v929 = vmul.f32 0.5, %v928
      %v930 = vsub.f32 1.5, %v929
      %v931 = vmul.f32 %v926, %v930
      %vm932 = vweird.f32 %v918
      %vm933 = vweird.f32 %v926
      %vm934 = vmor %vm932, %vm933
      %v935 = vsel %vm934, %v926, %v931
      %v936 = vrsqrt.pop %v919
      %v937 = vmul.f32 %v936, %v919
      %v938 = vmul.f32 %v937, %v936
      %v939 = vmul.f32 0.5, %v938
      %v940 = vsub.f32 1.5, %v939
      %v941 = vmul.f32 %v936, %v940
      %vm942 = vweird.f32 %v919
      %vm943 = vweird.f32 %v936
      %vm944 = vmor %vm942, %vm943
      %v945 = vsel %vm944, %v936, %v941
      %v946 = vrsqrt.pop %v920
      %v947 = vmul.f32 %v946, %v920
      %v948 = vmul.f32 %v947, %v946
      %v949 = vmul.f32 0.5, %v948
      %v950 = vsub.f32 1.5, %v949
      %v951 = vmul.f32 %v946, %v950
      %vm952 = vweird.f32 %v920
      %vm953 = vweird.f32 %v946
      %vm954 = vmor %vm952, %vm953
      %v955 = vsel %vm954, %v946, %v951
      %v956 = vrsqrt.pop %v921
      %v957 = vmul.f32 %v956, %v921
      %v958 = vmul.f32 %v957, %v956
      %v959 = vmul.f32 0.5, %v958
      %v960 = vsub.f32 1.5, %v959
      %v961 = vmul.f32 %v956, %v960
      %vm962 = vweird.f32 %v921
      %vm963 = vweird.f32 %v956
      %vm964 = vmor %vm962, %vm963
      %v965 = vsel %vm964, %v956, %v961
      %v966 = vrsqrt.pop %v922
      %v967 = vmul.f32 %v966, %v922
      %v968 = vmul.f32 %v967, %v966
      %v969 = vmul.f32 0.5, %v968
      %v970 = vsub.f32 1.5, %v969
      %v971 = vmul.f32 %v966, %v970
      %vm972 = vweird.f32 %v922
      %vm973 = vweird.f32 %v966
      %vm974 = vmor %vm972, %vm973
      %v975 = vsel %vm974, %v966, %v971
      %v976 = vrsqrt.pop %v923
      %v977 = vmul.f32 %v976, %v923
      %v978 = vmul.f32 %v977, %v976
      %v979 = vmul.f32 0.5, %v978
      %v980 = vsub.f32 1.5, %v979
      %v981 = vmul.f32 %v976, %v980
      %vm982 = vweird.f32 %v923
      %vm983 = vweird.f32 %v976
      %vm984 = vmor %vm982, %vm983
      %v985 = vsel %vm984, %v976, %v981
      %v986 = vrsqrt.pop %v924
      %v987 = vmul.f32 %v986, %v924
      %v988 = vmul.f32 %v987, %v986
      %v989 = vmul.f32 0.5, %v988
      %v990 = vsub.f32 1.5, %v989
      %v991 = vmul.f32 %v986, %v990
      %vm992 = vweird.f32 %v924
      %vm993 = vweird.f32 %v986
      %vm994 = vmor %vm992, %vm993
      %v995 = vsel %vm994, %v986, %v991
      %v996 = vrsqrt.pop %v925
      %v997 = vmul.f32 %v996, %v925
      %v998 = vmul.f32 %v997, %v996
      %v999 = vmul.f32 0.5, %v998
      %v1000 = vsub.f32 1.5, %v999
      %v1001 = vmul.f32 %v996, %v1000
      %vm1002 = vweird.f32 %v925
      %vm1003 = vweird.f32 %v996
      %vm1004 = vmor %vm1002, %vm1003
      %v1005 = vsel %vm1004, %v996, %v1001
      %v1006 = vmul.f32 %v870, %v935
      %v1007 = vmul.f32 %v871, %v945
      %v1008 = vmul.f32 %v872, %v955
      %v1009 = vmul.f32 %v873, %v965
      %v1010 = vmul.f32 %v874, %v975
      %v1011 = vmul.f32 %v875, %v985
      %v1012 = vmul.f32 %v876, %v995
      %v1013 = vmul.f32 %v877, %v1005
      %v1015 = vperm.slane %v828, 0
      %v1017 = vmul.f32 %v1006, %v1015
      %v1018 = vmul.f32 %v1007, %v1015
      %v1019 = vmul.f32 %v1008, %v1015
      %v1020 = vmul.f32 %v1009, %v1015
      %v1021 = vmul.f32 %v1010, %v1015
      %v1022 = vmul.f32 %v1011, %v1015
      %v1023 = vmul.f32 %v1012, %v1015
      %v1024 = vmul.f32 %v1013, %v1015
      %v1026 = vperm.slane %v829, 0
      %v1028 = vadd.f32 %v1017, %v1026
      %v1029 = vadd.f32 %v1018, %v1026
      %v1030 = vadd.f32 %v1019, %v1026
      %v1031 = vadd.f32 %v1020, %v1026
      %v1032 = vadd.f32 %v1021, %v1026
      %v1033 = vadd.f32 %v1022, %v1026
      %v1034 = vadd.f32 %v1023, %v1026
      %v1035 = vadd.f32 %v1024, %v1026
      %v1036 = vpack.c.bf16 %v1028, %v1028
      %v1037 = vpack.c.bf16 %v1029, %v1029
      %v1038 = vpack.c.bf16 %v1030, %v1030
      %v1039 = vpack.c.bf16 %v1031, %v1031
      %v1040 = vpack.c.bf16 %v1032, %v1032
      %v1041 = vpack.c.bf16 %v1033, %v1033
      %v1042 = vpack.c.bf16 %v1034, %v1034
      %v1043 = vpack.c.bf16 %v1035, %v1035
      %vm1044 = vcmask 519168
      %1045 = vst.msk [vmem:[%s229] sm:$0xf] %vm1044, %v1036
      %1046 = vst.msk [vmem:[%s229 + $0x4] sm:$0xf] %vm1044, %v1037
      %1047 = vst.msk [vmem:[%s229 + $0x8] sm:$0xf] %vm1044, %v1038
      %1048 = vst.msk [vmem:[%s229 + $0xc] sm:$0xf] %vm1044, %v1039
      %1049 = vst.msk [vmem:[%s229 + $0x10] sm:$0xf] %vm1044, %v1040
      %1050 = vst.msk [vmem:[%s229 + $0x14] sm:$0xf] %vm1044, %v1041
      %1051 = vst.msk [vmem:[%s229 + $0x18] sm:$0xf] %vm1044, %v1042
      %1052 = vst.msk [vmem:[%s229 + $0x1c] sm:$0xf] %vm1044, %v1043
      %s1053 = smul.u32 8, %s16
      %p1054 = scmp.lt.s32.totalorder %s1053, 15
      %s1055 = scalar_select %p1054, %s1053, 15
      %s1056 = smul.addr %s1055, 4
      %s1057 = scalar_lea.vmem %s5, %s1056
      // Predicated region
      $region41: #{glse_pallas.38} parent=39 // pred_check
        %p1058 = pneg %p144
      $region42: #{glse_pallas.38} parent=39 // pred_check_branch
        %1060 = sbr.rel (%p1058) target = $region44
      $region43: #{glse_pallas.38} parent=39 // pred_region
        %s1061 = smul.u32 8, %s16
      $region44: #{glse_pallas.38} parent=39 // pred_fallthru
        _
    $region40: #{glse_pallas.38} parent=5 // pred_fallthru
      _
    %p1062 = scmp.le.s32.totalorder 2, %s11
    // Predicated region
    $region45: #{glse_pallas.38} parent=5 // pred_check
      %p1063 = pneg %p1062
    $region46: #{glse_pallas.38} parent=5 // pred_check_branch
      %1065 = sbr.rel (%p1063) target = $region48
    $region47: #{glse_pallas.38} parent=5 // pred_region
      %s1066 = ssub.s32 %s11, 2
      // Predicated region
      $region49: #{glse_pallas.38} parent=47 // pred_check
        %p1067 = pneg %p150
      $region50: #{glse_pallas.38} parent=47 // pred_check_branch
        %1069 = sbr.rel (%p1067) target = $region52
      $region51: #{glse_pallas.38} parent=47 // pred_region
        %s1070 = smul.u32 8, %s17
        %p1071 = scmp.lt.s32.totalorder %s1070, 15
        %s1072 = scalar_select %p1071, %s1070, 15
        %s1073 = smul.addr %s1072, 4
        %s1074 = scalar_lea.vmem %s5, %s1073
      $region52: #{glse_pallas.38} parent=47 // pred_fallthru
        _
    $region48: #{glse_pallas.38} parent=5 // pred_fallthru
      _
  $region6: #{glse_pallas.38} parent=0 // loop_footer
    %s15 = sadd.s32 1, %s11
  $region7: #{glse_pallas.38} parent=0 // loop_footer_branch
    %10 = sbr.rel target = $region3
  $region8: #{glse_pallas.38} parent=0 // loop_exit
    _

// kernel: glse_pallas.20
$region0: #{glse_pallas.20}
  #allocation0 [shape = 'u32[]', space=smem, size = 0x4, offset = 0x4, fixed_abs, tag = 'smem constant byte address 0x4 - core index']
  #allocation1 [shape = 'u32[72,128]{1,0:T(1,128)}', space=vmem, size = 0x9000, scoped, tag = 'internal scratch']
  %s0 = inlined_call_operand.vmem [shape: bf16[2048,256], index: 0, kind: input, shape index: {}]
  %s1 = inlined_call_operand.vmem [shape: bf16[256,32], index: 1, kind: input, shape index: {}]
  %s2 = inlined_call_operand.vmem [shape: f32[1,32], index: 2, kind: input, shape index: {}]
  %s3 = inlined_call_operand.vmem [shape: f32[2048,32], index: 3, kind: output, shape index: {}]
  %s4 = sld [smem:[#allocation0]]
  $region45: #{glse_pallas.20} parent=0
    _
  %s6 = ssub.s32 1, %s4
  %s7 = scalar_select 0, %s6, %s4
  loop: start=0, step=1, limit=6
  $region2: #{glse_pallas.20} parent=0 // loop_pre_header
    _
  $region3: #{glse_pallas.20} parent=0 // loop_header
    %s9 = sphi 0, %s13
    %p10 = scmp.ge.s32.totalorder %s9, 6
    %s19 = sphi 0, %s21
    %s22 = sphi 0, %s19
    %s23 = sphi 0, %s22
    %s39 = sphi 0, %s23
    %s43 = sphi 0, %s43
    %s45 = sphi 0, %s43
    %s46 = sphi 0, %s45
    %s60 = sphi 0, %s46
    %s64 = sphi 0, %s64
    %s66 = sphi 0, %s64
    %s67 = sphi 0, %s66
    %s81 = sphi 0, %s67
    %s87 = sphi 0, %s89
    %s90 = sphi 0, %s87
    %s91 = sphi 0, %s90
    %s107 = sphi 0, %s91
  $region4: #{glse_pallas.20} parent=0 // loop_header_branch
    %12 = sbr.rel (%p10) target = $region8
  $region5: #{glse_pallas.20} parent=0 // loop_body
    %s14 = ssub.s32 %s9, 1
    %s15 = ssub.s32 %s9, 2
    %s16 = sadd.s32 %s9, 1
    %s17 = ssub.s32 %s9, %s16
    %p18 = scmp.eq.s32.totalorder %s17, 0
    %s20 = sadd.s32 %s19, 1
    %s21 = scalar_select %p18, %s19, %s20
    %p24 = pneg %p18
    %p25 = scmp.eq.s32.totalorder %s9, 3
    %p26 = por %p24, %p25
    %p27 = scmp.ne.s32.totalorder %s19, %s22
    %p28 = scmp.eq.s32.totalorder %s9, 0
    %p29 = por %p27, %p28
    %p30 = scmp.ne.s32.totalorder %s19, %s22
    %p31 = scmp.eq.s32.totalorder %s14, 3
    %p32 = por %p30, %p31
    %p33 = scmp.ne.s32.totalorder %s22, %s23
    %p34 = scmp.eq.s32.totalorder %s14, 0
    %p35 = por %p33, %p34
    %p36 = scmp.ne.s32.totalorder %s22, %s23
    %p37 = scmp.eq.s32.totalorder %s15, 3
    %p38 = por %p36, %p37
    %p40 = scmp.ne.s32.totalorder %s23, %s39
    %p41 = scmp.eq.s32.totalorder %s15, 0
    %p42 = por %p40, %p41
    %s44 = sadd.s32 %s43, 1
    %p47 = scmp.eq.s32.totalorder %s9, 3
    %p48 = scmp.ne.s32.totalorder %s43, %s45
    %p49 = scmp.eq.s32.totalorder %s9, 0
    %p50 = por %p48, %p49
    %p51 = scmp.ne.s32.totalorder %s43, %s45
    %p52 = scmp.eq.s32.totalorder %s14, 3
    %p53 = por %p51, %p52
    %p54 = scmp.ne.s32.totalorder %s45, %s46
    %p55 = scmp.eq.s32.totalorder %s14, 0
    %p56 = por %p54, %p55
    %p57 = scmp.ne.s32.totalorder %s45, %s46
    %p58 = scmp.eq.s32.totalorder %s15, 3
    %p59 = por %p57, %p58
    %p61 = scmp.ne.s32.totalorder %s46, %s60
    %p62 = scmp.eq.s32.totalorder %s15, 0
    %p63 = por %p61, %p62
    %s65 = sadd.s32 %s64, 1
    %p68 = scmp.eq.s32.totalorder %s9, 3
    %p69 = scmp.ne.s32.totalorder %s64, %s66
    %p70 = scmp.eq.s32.totalorder %s9, 0
    %p71 = por %p69, %p70
    %p72 = scmp.ne.s32.totalorder %s64, %s66
    %p73 = scmp.eq.s32.totalorder %s14, 3
    %p74 = por %p72, %p73
    %p75 = scmp.ne.s32.totalorder %s66, %s67
    %p76 = scmp.eq.s32.totalorder %s14, 0
    %p77 = por %p75, %p76
    %p78 = scmp.ne.s32.totalorder %s66, %s67
    %p79 = scmp.eq.s32.totalorder %s15, 3
    %p80 = por %p78, %p79
    %p82 = scmp.ne.s32.totalorder %s67, %s81
    %p83 = scmp.eq.s32.totalorder %s15, 0
    %p84 = por %p82, %p83
    %s85 = ssub.s32 %s9, %s16
    %p86 = scmp.eq.s32.totalorder %s85, 0
    %s88 = sadd.s32 %s87, 1
    %s89 = scalar_select %p86, %s87, %s88
    %p92 = pneg %p86
    %p93 = scmp.eq.s32.totalorder %s9, 3
    %p94 = por %p92, %p93
    %p95 = scmp.ne.s32.totalorder %s87, %s90
    %p96 = scmp.eq.s32.totalorder %s9, 0
    %p97 = por %p95, %p96
    %p98 = scmp.ne.s32.totalorder %s87, %s90
    %p99 = scmp.eq.s32.totalorder %s14, 3
    %p100 = por %p98, %p99
    %p101 = scmp.ne.s32.totalorder %s90, %s91
    %p102 = scmp.eq.s32.totalorder %s14, 0
    %p103 = por %p101, %p102
    %p104 = scmp.ne.s32.totalorder %s90, %s91
    %p105 = scmp.eq.s32.totalorder %s15, 3
    %p106 = por %p104, %p105
    %p108 = scmp.ne.s32.totalorder %s91, %s107
    %p109 = scmp.eq.s32.totalorder %s15, 0
    %p110 = por %p108, %p109
    %p111 = scmp.le.s32.totalorder 1, %s9
    %p112 = scmp.lt.s32.totalorder %s9, 5
    %p113 = pnand %p111, %p112
    %p114 = pneg %p113
    // Predicated region
    $region9: #{glse_pallas.20} parent=5 // pred_check
      _
    $region10: #{glse_pallas.20} parent=5 // pred_check_branch
      %116 = sbr.rel (%p113) target = $region12
    $region11: #{glse_pallas.20} parent=5 // pred_region
      %s117 = ssub.s32 %s9, 1
      // Predicated region
      $region13: #{glse_pallas.20} parent=11 // pred_check
        %p118 = pneg %p56
      $region14: #{glse_pallas.20} parent=11 // pred_check_branch
        %120 = sbr.rel (%p118) target = $region16
      $region15: #{glse_pallas.20} parent=11 // pred_region
        _
      $region16: #{glse_pallas.20} parent=11 // pred_fallthru
        _
      // Predicated region
      $region17: #{glse_pallas.20} parent=11 // pred_check
        %p121 = pneg %p77
      $region18: #{glse_pallas.20} parent=11 // pred_check_branch
        %123 = sbr.rel (%p121) target = $region20
      $region19: #{glse_pallas.20} parent=11 // pred_region
        _
      $region20: #{glse_pallas.20} parent=11 // pred_fallthru
        _
    $region12: #{glse_pallas.20} parent=5 // pred_fallthru
      _
    %p124 = scmp.lt.s32.totalorder %s9, 4
    // Predicated region
    $region21: #{glse_pallas.20} parent=5 // pred_check
      %p125 = pneg %p124
    $region22: #{glse_pallas.20} parent=5 // pred_check_branch
      %127 = sbr.rel (%p125) target = $region24
    $region23: #{glse_pallas.20} parent=5 // pred_region
      // Predicated region
      $region25: #{glse_pallas.20} parent=23 // pred_check
        %p128 = pneg %p29
      $region26: #{glse_pallas.20} parent=23 // pred_check_branch
        %130 = sbr.rel (%p128) target = $region28
      $region27: #{glse_pallas.20} parent=23 // pred_region
        %s131 = smul.u32 64, %s9
        %p132 = scmp.lt.s32.totalorder %s131, 255
        %s133 = scalar_select %p132, %s131, 255
        %s134 = smul.addr %s133, 2
        %s135 = smul.addr %s134, 4
        %s136 = scalar_lea.vmem %s0, %s135
        %s137 = smul.u32 64, %s9
      $region28: #{glse_pallas.20} parent=23 // pred_fallthru
        _
    $region24: #{glse_pallas.20} parent=5 // pred_fallthru
      _
    %p138 = scmp.le.s32.totalorder 1, %s9
    %p139 = scmp.lt.s32.totalorder %s9, 5
    %p140 = pnand %p138, %p139
    %p141 = pneg %p140
    // Predicated region
    $region29: #{glse_pallas.20} parent=5 // pred_check
      _
    $region30: #{glse_pallas.20} parent=5 // pred_check_branch
      %143 = sbr.rel (%p140) target = $region32
    $region31: #{glse_pallas.20} parent=5 // pred_region
      %s144 = ssub.s32 %s9, 1
      %s145 = smul.u32 64, %s14
      %p146 = scmp.lt.s32.totalorder %s145, 255
      %s147 = scalar_select %p146, %s145, 255
      %s148 = smul.addr %s147, 2
      %s149 = smul.addr %s148, 4
      %s150 = scalar_lea.vmem %s0, %s149
      %p151 = pneg %p35
      %p152 = pneg %p32
      %p153 = pneg %p56
      %p154 = pneg %p53
      %p155 = pneg %p77
      %p156 = pneg %p74
      %p157 = pneg %p103
      %p158 = pneg %p100
      %s159 = smul.u32 64, %s14
      %p160 = scmp.lt.s32.totalorder %s159, 255
      %s161 = scalar_select %p160, %s159, 255
      %s162 = smul.addr %s161, 8
      %s163 = scalar_lea.vmem %s3, %s162
      %s164 = smul.u32 64, %s14
      %p165 = scmp.lt.s32.totalorder %s164, 255
      %s166 = scalar_select %p165, %s164, 255
      %s167 = smul.addr %s166, 2
      %s168 = smul.addr %s167, 4
      %s169 = scalar_lea.vmem %s0, %s168
      %s170 = smul.u32 64, %s14
      %s171 = smul.u32 64, %s14
      %p172 = scmp.lt.s32.totalorder %s171, 255
      %s173 = scalar_select %p172, %s171, 255
      %s174 = smul.addr %s173, 8
      %s175 = scalar_lea.vmem %s3, %s174
      %s176 = smul.u32 64, %s14
      %v177 = vld [vmem:[%s169] sm:$0xff]
      %v178 = vld [vmem:[%s169 + $0x8] sm:$0xff]
      %v179 = vld [vmem:[%s169 + $0x10] sm:$0xff]
      %v180 = vld [vmem:[%s169 + $0x18] sm:$0xff]
      %v181 = vld [vmem:[%s169 + $0x20] sm:$0xff]
      %v182 = vld [vmem:[%s169 + $0x28] sm:$0xff]
      %v183 = vld [vmem:[%s169 + $0x30] sm:$0xff]
      %v184 = vld [vmem:[%s169 + $0x38] sm:$0xff]
      %v185 = vld [vmem:[%s169 + $0x40] sm:$0xff]
      %v186 = vld [vmem:[%s169 + $0x48] sm:$0xff]
      %v187 = vld [vmem:[%s169 + $0x50] sm:$0xff]
      %v188 = vld [vmem:[%s169 + $0x58] sm:$0xff]
      %v189 = vld [vmem:[%s169 + $0x60] sm:$0xff]
      %v190 = vld [vmem:[%s169 + $0x68] sm:$0xff]
      %v191 = vld [vmem:[%s169 + $0x70] sm:$0xff]
      %v192 = vld [vmem:[%s169 + $0x78] sm:$0xff]
      %v193 = vld [vmem:[%s169 + $0x80] sm:$0xff]
      %v194 = vld [vmem:[%s169 + $0x88] sm:$0xff]
      %v195 = vld [vmem:[%s169 + $0x90] sm:$0xff]
      %v196 = vld [vmem:[%s169 + $0x98] sm:$0xff]
      %v197 = vld [vmem:[%s169 + $0xa0] sm:$0xff]
      %v198 = vld [vmem:[%s169 + $0xa8] sm:$0xff]
      %v199 = vld [vmem:[%s169 + $0xb0] sm:$0xff]
      %v200 = vld [vmem:[%s169 + $0xb8] sm:$0xff]
      %v201 = vld [vmem:[%s169 + $0xc0] sm:$0xff]
      %v202 = vld [vmem:[%s169 + $0xc8] sm:$0xff]
      %v203 = vld [vmem:[%s169 + $0xd0] sm:$0xff]
      %v204 = vld [vmem:[%s169 + $0xd8] sm:$0xff]
      %v205 = vld [vmem:[%s169 + $0xe0] sm:$0xff]
      %v206 = vld [vmem:[%s169 + $0xe8] sm:$0xff]
      %v207 = vld [vmem:[%s169 + $0xf0] sm:$0xff]
      %v208 = vld [vmem:[%s169 + $0xf8] sm:$0xff]
      %v209 = vld [vmem:[%s169 + $0x100] sm:$0xff]
      %v210 = vld [vmem:[%s169 + $0x108] sm:$0xff]
      %v211 = vld [vmem:[%s169 + $0x110] sm:$0xff]
      %v212 = vld [vmem:[%s169 + $0x118] sm:$0xff]
      %v213 = vld [vmem:[%s169 + $0x120] sm:$0xff]
      %v214 = vld [vmem:[%s169 + $0x128] sm:$0xff]
      %v215 = vld [vmem:[%s169 + $0x130] sm:$0xff]
      %v216 = vld [vmem:[%s169 + $0x138] sm:$0xff]
      %v217 = vld [vmem:[%s169 + $0x140] sm:$0xff]
      %v218 = vld [vmem:[%s169 + $0x148] sm:$0xff]
      %v219 = vld [vmem:[%s169 + $0x150] sm:$0xff]
      %v220 = vld [vmem:[%s169 + $0x158] sm:$0xff]
      %v221 = vld [vmem:[%s169 + $0x160] sm:$0xff]
      %v222 = vld [vmem:[%s169 + $0x168] sm:$0xff]
      %v223 = vld [vmem:[%s169 + $0x170] sm:$0xff]
      %v224 = vld [vmem:[%s169 + $0x178] sm:$0xff]
      %v225 = vld [vmem:[%s169 + $0x180] sm:$0xff]
      %v226 = vld [vmem:[%s169 + $0x188] sm:$0xff]
      %v227 = vld [vmem:[%s169 + $0x190] sm:$0xff]
      %v228 = vld [vmem:[%s169 + $0x198] sm:$0xff]
      %v229 = vld [vmem:[%s169 + $0x1a0] sm:$0xff]
      %v230 = vld [vmem:[%s169 + $0x1a8] sm:$0xff]
      %v231 = vld [vmem:[%s169 + $0x1b0] sm:$0xff]
      %v232 = vld [vmem:[%s169 + $0x1b8] sm:$0xff]
      %v233 = vld [vmem:[%s169 + $0x1c0] sm:$0xff]
      %v234 = vld [vmem:[%s169 + $0x1c8] sm:$0xff]
      %v235 = vld [vmem:[%s169 + $0x1d0] sm:$0xff]
      %v236 = vld [vmem:[%s169 + $0x1d8] sm:$0xff]
      %v237 = vld [vmem:[%s169 + $0x1e0] sm:$0xff]
      %v238 = vld [vmem:[%s169 + $0x1e8] sm:$0xff]
      %v239 = vld [vmem:[%s169 + $0x1f0] sm:$0xff]
      %v240 = vld [vmem:[%s169 + $0x1f8] sm:$0xff]
      %v241 = vld [vmem:[%s1] sm:$0xf]
      %v242 = vld [vmem:[%s1 + $0x4] sm:$0xf]
      %v243 = vld [vmem:[%s1 + $0x8] sm:$0xf]
      %v244 = vld [vmem:[%s1 + $0xc] sm:$0xf]
      %v245 = vld [vmem:[%s1 + $0x10] sm:$0xf]
      %v246 = vld [vmem:[%s1 + $0x14] sm:$0xf]
      %v247 = vld [vmem:[%s1 + $0x18] sm:$0xf]
      %v248 = vld [vmem:[%s1 + $0x1c] sm:$0xf]
      %v249 = vld [vmem:[%s1 + $0x20] sm:$0xf]
      %v250 = vld [vmem:[%s1 + $0x24] sm:$0xf]
      %v251 = vld [vmem:[%s1 + $0x28] sm:$0xf]
      %v252 = vld [vmem:[%s1 + $0x2c] sm:$0xf]
      %v253 = vld [vmem:[%s1 + $0x30] sm:$0xf]
      %v254 = vld [vmem:[%s1 + $0x34] sm:$0xf]
      %v255 = vld [vmem:[%s1 + $0x38] sm:$0xf]
      %v256 = vld [vmem:[%s1 + $0x3c] sm:$0xf]
      %v257 = vld [vmem:[%s1 + $0x40] sm:$0xf]
      %v258 = vld [vmem:[%s1 + $0x44] sm:$0xf]
      %v259 = vld [vmem:[%s1 + $0x48] sm:$0xf]
      %v260 = vld [vmem:[%s1 + $0x4c] sm:$0xf]
      %v261 = vld [vmem:[%s1 + $0x50] sm:$0xf]
      %v262 = vld [vmem:[%s1 + $0x54] sm:$0xf]
      %v263 = vld [vmem:[%s1 + $0x58] sm:$0xf]
      %v264 = vld [vmem:[%s1 + $0x5c] sm:$0xf]
      %v265 = vld [vmem:[%s1 + $0x60] sm:$0xf]
      %v266 = vld [vmem:[%s1 + $0x64] sm:$0xf]
      %v267 = vld [vmem:[%s1 + $0x68] sm:$0xf]
      %v268 = vld [vmem:[%s1 + $0x6c] sm:$0xf]
      %v269 = vld [vmem:[%s1 + $0x70] sm:$0xf]
      %v270 = vld [vmem:[%s1 + $0x74] sm:$0xf]
      %v271 = vld [vmem:[%s1 + $0x78] sm:$0xf]
      %v272 = vld [vmem:[%s1 + $0x7c] sm:$0xf]
      %v273 = vld [vmem:[%s2] sm:$0x1]
      %v275 = vperm.slane %v273, 0
      %v341 = vunpack.c.l.b16 %v177
      %v342 = vunpack.c.h.b16 %v177
      %v343 = vunpack.c.l.b16 %v178
      %v344 = vunpack.c.h.b16 %v178
      %v345 = vunpack.c.l.b16 %v179
      %v346 = vunpack.c.h.b16 %v179
      %v347 = vunpack.c.l.b16 %v180
      %v348 = vunpack.c.h.b16 %v180
      %v349 = vunpack.c.l.b16 %v181
      %v350 = vunpack.c.h.b16 %v181
      %v351 = vunpack.c.l.b16 %v182
      %v352 = vunpack.c.h.b16 %v182
      %v353 = vunpack.c.l.b16 %v183
      %v354 = vunpack.c.h.b16 %v183
      %v355 = vunpack.c.l.b16 %v184
      %v356 = vunpack.c.h.b16 %v184
      %v357 = vunpack.c.l.b16 %v185
      %v358 = vunpack.c.h.b16 %v185
      %v359 = vunpack.c.l.b16 %v186
      %v360 = vunpack.c.h.b16 %v186
      %v361 = vunpack.c.l.b16 %v187
      %v362 = vunpack.c.h.b16 %v187
      %v363 = vunpack.c.l.b16 %v188
      %v364 = vunpack.c.h.b16 %v188
      %v365 = vunpack.c.l.b16 %v189
      %v366 = vunpack.c.h.b16 %v189
      %v367 = vunpack.c.l.b16 %v190
      %v368 = vunpack.c.h.b16 %v190
      %v369 = vunpack.c.l.b16 %v191
      %v370 = vunpack.c.h.b16 %v191
      %v371 = vunpack.c.l.b16 %v192
      %v372 = vunpack.c.h.b16 %v192
      %v373 = vunpack.c.l.b16 %v193
      %v374 = vunpack.c.h.b16 %v193
      %v375 = vunpack.c.l.b16 %v194
      %v376 = vunpack.c.h.b16 %v194
      %v377 = vunpack.c.l.b16 %v195
      %v378 = vunpack.c.h.b16 %v195
      %v379 = vunpack.c.l.b16 %v196
      %v380 = vunpack.c.h.b16 %v196
      %v381 = vunpack.c.l.b16 %v197
      %v382 = vunpack.c.h.b16 %v197
      %v383 = vunpack.c.l.b16 %v198
      %v384 = vunpack.c.h.b16 %v198
      %v385 = vunpack.c.l.b16 %v199
      %v386 = vunpack.c.h.b16 %v199
      %v387 = vunpack.c.l.b16 %v200
      %v388 = vunpack.c.h.b16 %v200
      %v389 = vunpack.c.l.b16 %v201
      %v390 = vunpack.c.h.b16 %v201
      %v391 = vunpack.c.l.b16 %v202
      %v392 = vunpack.c.h.b16 %v202
      %v393 = vunpack.c.l.b16 %v203
      %v394 = vunpack.c.h.b16 %v203
      %v395 = vunpack.c.l.b16 %v204
      %v396 = vunpack.c.h.b16 %v204
      %v397 = vunpack.c.l.b16 %v205
      %v398 = vunpack.c.h.b16 %v205
      %v399 = vunpack.c.l.b16 %v206
      %v400 = vunpack.c.h.b16 %v206
      %v401 = vunpack.c.l.b16 %v207
      %v402 = vunpack.c.h.b16 %v207
      %v403 = vunpack.c.l.b16 %v208
      %v404 = vunpack.c.h.b16 %v208
      %v405 = vunpack.c.l.b16 %v209
      %v406 = vunpack.c.h.b16 %v209
      %v407 = vunpack.c.l.b16 %v210
      %v408 = vunpack.c.h.b16 %v210
      %v409 = vunpack.c.l.b16 %v211
      %v410 = vunpack.c.h.b16 %v211
      %v411 = vunpack.c.l.b16 %v212
      %v412 = vunpack.c.h.b16 %v212
      %v413 = vunpack.c.l.b16 %v213
      %v414 = vunpack.c.h.b16 %v213
      %v415 = vunpack.c.l.b16 %v214
      %v416 = vunpack.c.h.b16 %v214
      %v417 = vunpack.c.l.b16 %v215
      %v418 = vunpack.c.h.b16 %v215
      %v419 = vunpack.c.l.b16 %v216
      %v420 = vunpack.c.h.b16 %v216
      %v421 = vunpack.c.l.b16 %v217
      %v422 = vunpack.c.h.b16 %v217
      %v423 = vunpack.c.l.b16 %v218
      %v424 = vunpack.c.h.b16 %v218
      %v425 = vunpack.c.l.b16 %v219
      %v426 = vunpack.c.h.b16 %v219
      %v427 = vunpack.c.l.b16 %v220
      %v428 = vunpack.c.h.b16 %v220
      %v429 = vunpack.c.l.b16 %v221
      %v430 = vunpack.c.h.b16 %v221
      %v431 = vunpack.c.l.b16 %v222
      %v432 = vunpack.c.h.b16 %v222
      %v433 = vunpack.c.l.b16 %v223
      %v434 = vunpack.c.h.b16 %v223
      %v435 = vunpack.c.l.b16 %v224
      %v436 = vunpack.c.h.b16 %v224
      %v437 = vunpack.c.l.b16 %v225
      %v438 = vunpack.c.h.b16 %v225
      %v439 = vunpack.c.l.b16 %v226
      %v440 = vunpack.c.h.b16 %v226
      %v441 = vunpack.c.l.b16 %v227
      %v442 = vunpack.c.h.b16 %v227
      %v443 = vunpack.c.l.b16 %v228
      %v444 = vunpack.c.h.b16 %v228
      %v445 = vunpack.c.l.b16 %v229
      %v446 = vunpack.c.h.b16 %v229
      %v447 = vunpack.c.l.b16 %v230
      %v448 = vunpack.c.h.b16 %v230
      %v449 = vunpack.c.l.b16 %v231
      %v450 = vunpack.c.h.b16 %v231
      %v451 = vunpack.c.l.b16 %v232
      %v452 = vunpack.c.h.b16 %v232
      %v453 = vunpack.c.l.b16 %v233
      %v454 = vunpack.c.h.b16 %v233
      %v455 = vunpack.c.l.b16 %v234
      %v456 = vunpack.c.h.b16 %v234
      %v457 = vunpack.c.l.b16 %v235
      %v458 = vunpack.c.h.b16 %v235
      %v459 = vunpack.c.l.b16 %v236
      %v460 = vunpack.c.h.b16 %v236
      %v461 = vunpack.c.l.b16 %v237
      %v462 = vunpack.c.h.b16 %v237
      %v463 = vunpack.c.l.b16 %v238
      %v464 = vunpack.c.h.b16 %v238
      %v465 = vunpack.c.l.b16 %v239
      %v466 = vunpack.c.h.b16 %v239
      %v467 = vunpack.c.l.b16 %v240
      %v468 = vunpack.c.h.b16 %v240
      %v469 = vpack.c.b16 %v343, %v341
      %v470 = vpack.c.b16 %v344, %v342
      %v471 = vpack.c.b16 %v347, %v345
      %v472 = vpack.c.b16 %v348, %v346
      %v473 = vpack.c.b16 %v351, %v349
      %v474 = vpack.c.b16 %v352, %v350
      %v475 = vpack.c.b16 %v355, %v353
      %v476 = vpack.c.b16 %v356, %v354
      %v477 = vpack.c.b16 %v359, %v357
      %v478 = vpack.c.b16 %v360, %v358
      %v479 = vpack.c.b16 %v363, %v361
      %v480 = vpack.c.b16 %v364, %v362
      %v481 = vpack.c.b16 %v367, %v365
      %v482 = vpack.c.b16 %v368, %v366
      %v483 = vpack.c.b16 %v371, %v369
      %v484 = vpack.c.b16 %v372, %v370
      %v485 = vpack.c.b16 %v375, %v373
      %v486 = vpack.c.b16 %v376, %v374
      %v487 = vpack.c.b16 %v379, %v377
      %v488 = vpack.c.b16 %v380, %v378
      %v489 = vpack.c.b16 %v383, %v381
      %v490 = vpack.c.b16 %v384, %v382
      %v491 = vpack.c.b16 %v387, %v385
      %v492 = vpack.c.b16 %v388, %v386
      %v493 = vpack.c.b16 %v391, %v389
      %v494 = vpack.c.b16 %v392, %v390
      %v495 = vpack.c.b16 %v395, %v393
      %v496 = vpack.c.b16 %v396, %v394
      %v497 = vpack.c.b16 %v399, %v397
      %v498 = vpack.c.b16 %v400, %v398
      %v499 = vpack.c.b16 %v403, %v401
      %v500 = vpack.c.b16 %v404, %v402
      %v501 = vpack.c.b16 %v407, %v405
      %v502 = vpack.c.b16 %v408, %v406
      %v503 = vpack.c.b16 %v411, %v409
      %v504 = vpack.c.b16 %v412, %v410
      %v505 = vpack.c.b16 %v415, %v413
      %v506 = vpack.c.b16 %v416, %v414
      %v507 = vpack.c.b16 %v419, %v417
      %v508 = vpack.c.b16 %v420, %v418
      %v509 = vpack.c.b16 %v423, %v421
      %v510 = vpack.c.b16 %v424, %v422
      %v511 = vpack.c.b16 %v427, %v425
      %v512 = vpack.c.b16 %v428, %v426
      %v513 = vpack.c.b16 %v431, %v429
      %v514 = vpack.c.b16 %v432, %v430
      %v515 = vpack.c.b16 %v435, %v433
      %v516 = vpack.c.b16 %v436, %v434
      %v517 = vpack.c.b16 %v439, %v437
      %v518 = vpack.c.b16 %v440, %v438
      %v519 = vpack.c.b16 %v443, %v441
      %v520 = vpack.c.b16 %v444, %v442
      %v521 = vpack.c.b16 %v447, %v445
      %v522 = vpack.c.b16 %v448, %v446
      %v523 = vpack.c.b16 %v451, %v449
      %v524 = vpack.c.b16 %v452, %v450
      %v525 = vpack.c.b16 %v455, %v453
      %v526 = vpack.c.b16 %v456, %v454
      %v527 = vpack.c.b16 %v459, %v457
      %v528 = vpack.c.b16 %v460, %v458
      %v529 = vpack.c.b16 %v463, %v461
      %v530 = vpack.c.b16 %v464, %v462
      %v531 = vpack.c.b16 %v467, %v465
      %v532 = vpack.c.b16 %v468, %v466
      %v629 = vunpack.c.l.b16 %v241
      %v630 = vunpack.c.l.b16 %v242
      %v631 = vunpack.c.l.b16 %v243
      %v632 = vunpack.c.l.b16 %v244
      %v633 = vunpack.c.l.b16 %v245
      %v634 = vunpack.c.l.b16 %v246
      %v635 = vunpack.c.l.b16 %v247
      %v636 = vunpack.c.l.b16 %v248
      %v637 = vunpack.c.l.b16 %v249
      %v638 = vunpack.c.l.b16 %v250
      %v639 = vunpack.c.l.b16 %v251
      %v640 = vunpack.c.l.b16 %v252
      %v641 = vunpack.c.l.b16 %v253
      %v642 = vunpack.c.l.b16 %v254
      %v643 = vunpack.c.l.b16 %v255
      %v644 = vunpack.c.l.b16 %v256
      %v645 = vunpack.c.l.b16 %v257
      %v646 = vunpack.c.l.b16 %v258
      %v647 = vunpack.c.l.b16 %v259
      %v648 = vunpack.c.l.b16 %v260
      %v649 = vunpack.c.l.b16 %v261
      %v650 = vunpack.c.l.b16 %v262
      %v651 = vunpack.c.l.b16 %v263
      %v652 = vunpack.c.l.b16 %v264
      %v653 = vunpack.c.l.b16 %v265
      %v654 = vunpack.c.l.b16 %v266
      %v655 = vunpack.c.l.b16 %v267
      %v656 = vunpack.c.l.b16 %v268
      %v657 = vunpack.c.l.b16 %v269
      %v658 = vunpack.c.l.b16 %v270
      %v659 = vunpack.c.l.b16 %v271
      %v660 = vunpack.c.l.b16 %v272
      %v661 = vpack.c.b16 %v630, %v629
      %v662 = vpack.c.b16 %v632, %v631
      %v663 = vpack.c.b16 %v634, %v633
      %v664 = vpack.c.b16 %v636, %v635
      %v665 = vpack.c.b16 %v638, %v637
      %v666 = vpack.c.b16 %v640, %v639
      %v667 = vpack.c.b16 %v642, %v641
      %v668 = vpack.c.b16 %v644, %v643
      %v669 = vpack.c.b16 %v646, %v645
      %v670 = vpack.c.b16 %v648, %v647
      %v671 = vpack.c.b16 %v650, %v649
      %v672 = vpack.c.b16 %v652, %v651
      %v673 = vpack.c.b16 %v654, %v653
      %v674 = vpack.c.b16 %v656, %v655
      %v675 = vpack.c.b16 %v658, %v657
      %v676 = vpack.c.b16 %v660, %v659
      %693 = vmatpush.bf16.msra.mxu0 %v668
      %694 = vmatpush.bf16.msra.mxu0 %v667
      %695 = vmatpush.bf16.msra.mxu0 %v666
      %696 = vmatpush.bf16.msra.mxu0 %v665
      %697 = vmatpush.bf16.msra.mxu0 %v664
      %698 = vmatpush.bf16.msra.mxu0 %v663
      %699 = vmatpush.bf16.msra.mxu0 %v662
      %700 = vmatpush.bf16.msra.mxu0 %v661
      %701 = vmatmul.bf16.gmra.mxu0 %v469
      %v702 = vpop.f32.mrf.mxu0
      %v703 = vadd.f32 %v275, %v702
      %v704 = vpop.f32.mrf.mxu0
      %v705 = vadd.f32 %v275, %v704
      %706 = vmatmul.bf16.gmra.mxu0 %v471
      %v707 = vpop.f32.mrf.mxu0
      %v708 = vadd.f32 %v275, %v707
      %v709 = vpop.f32.mrf.mxu0
      %v710 = vadd.f32 %v275, %v709
      %711 = vmatmul.bf16.gmra.mxu0 %v473
      %v712 = vpop.f32.mrf.mxu0
      %v713 = vadd.f32 %v275, %v712
      %v714 = vpop.f32.mrf.mxu0
      %v715 = vadd.f32 %v275, %v714
      %716 = vmatmul.bf16.gmra.mxu0 %v475
      %v717 = vpop.f32.mrf.mxu0
      %v718 = vadd.f32 %v275, %v717
      %v719 = vpop.f32.mrf.mxu0
      %v720 = vadd.f32 %v275, %v719
      %721 = vmatmul.bf16.gmra.mxu0 %v477
      %v722 = vpop.f32.mrf.mxu0
      %v723 = vadd.f32 %v275, %v722
      %v724 = vpop.f32.mrf.mxu0
      %v725 = vadd.f32 %v275, %v724
      %726 = vmatmul.bf16.gmra.mxu0 %v479
      %v727 = vpop.f32.mrf.mxu0
      %v728 = vadd.f32 %v275, %v727
      %v729 = vpop.f32.mrf.mxu0
      %v730 = vadd.f32 %v275, %v729
      %731 = vmatmul.bf16.gmra.mxu0 %v481
      %v732 = vpop.f32.mrf.mxu0
      %v733 = vadd.f32 %v275, %v732
      %v734 = vpop.f32.mrf.mxu0
      %v735 = vadd.f32 %v275, %v734
      %736 = vmatmul.bf16.gmra.mxu0 %v483
      %v737 = vpop.f32.mrf.mxu0
      %v738 = vadd.f32 %v275, %v737
      %v739 = vpop.f32.mrf.mxu0
      %v740 = vadd.f32 %v275, %v739
      %741 = vmatmul.bf16.gmra.mxu0 %v485
      %v742 = vpop.f32.mrf.mxu0
      %v743 = vadd.f32 %v275, %v742
      %v744 = vpop.f32.mrf.mxu0
      %v745 = vadd.f32 %v275, %v744
      %746 = vmatmul.bf16.gmra.mxu0 %v487
      %v747 = vpop.f32.mrf.mxu0
      %v748 = vadd.f32 %v275, %v747
      %v749 = vpop.f32.mrf.mxu0
      %v750 = vadd.f32 %v275, %v749
      %751 = vmatmul.bf16.gmra.mxu0 %v489
      %v752 = vpop.f32.mrf.mxu0
      %v753 = vadd.f32 %v275, %v752
      %v754 = vpop.f32.mrf.mxu0
      %v755 = vadd.f32 %v275, %v754
      %756 = vmatmul.bf16.gmra.mxu0 %v491
      %v757 = vpop.f32.mrf.mxu0
      %v758 = vadd.f32 %v275, %v757
      %v759 = vpop.f32.mrf.mxu0
      %v760 = vadd.f32 %v275, %v759
      %761 = vmatmul.bf16.gmra.mxu0 %v493
      %v762 = vpop.f32.mrf.mxu0
      %v763 = vadd.f32 %v275, %v762
      %v764 = vpop.f32.mrf.mxu0
      %v765 = vadd.f32 %v275, %v764
      %766 = vmatmul.bf16.gmra.mxu0 %v495
      %v767 = vpop.f32.mrf.mxu0
      %v768 = vadd.f32 %v275, %v767
      %v769 = vpop.f32.mrf.mxu0
      %v770 = vadd.f32 %v275, %v769
      %771 = vmatmul.bf16.gmra.mxu0 %v497
      %v772 = vpop.f32.mrf.mxu0
      %v773 = vadd.f32 %v275, %v772
      %v774 = vpop.f32.mrf.mxu0
      %v775 = vadd.f32 %v275, %v774
      %776 = vmatmul.bf16.gmra.mxu0 %v499
      %v777 = vpop.f32.mrf.mxu0
      %v778 = vadd.f32 %v275, %v777
      %v779 = vpop.f32.mrf.mxu0
      %v780 = vadd.f32 %v275, %v779
      %781 = vmatmul.bf16.gmra.mxu0 %v501
      %v782 = vpop.f32.mrf.mxu0
      %v783 = vadd.f32 %v275, %v782
      %v784 = vpop.f32.mrf.mxu0
      %v785 = vadd.f32 %v275, %v784
      %786 = vmatmul.bf16.gmra.mxu0 %v503
      %v787 = vpop.f32.mrf.mxu0
      %v788 = vadd.f32 %v275, %v787
      %v789 = vpop.f32.mrf.mxu0
      %v790 = vadd.f32 %v275, %v789
      %791 = vmatmul.bf16.gmra.mxu0 %v505
      %v792 = vpop.f32.mrf.mxu0
      %v793 = vadd.f32 %v275, %v792
      %v794 = vpop.f32.mrf.mxu0
      %v795 = vadd.f32 %v275, %v794
      %796 = vmatmul.bf16.gmra.mxu0 %v507
      %v797 = vpop.f32.mrf.mxu0
      %v798 = vadd.f32 %v275, %v797
      %v799 = vpop.f32.mrf.mxu0
      %v800 = vadd.f32 %v275, %v799
      %801 = vmatmul.bf16.gmra.mxu0 %v509
      %v802 = vpop.f32.mrf.mxu0
      %v803 = vadd.f32 %v275, %v802
      %v804 = vpop.f32.mrf.mxu0
      %v805 = vadd.f32 %v275, %v804
      %806 = vmatmul.bf16.gmra.mxu0 %v511
      %v807 = vpop.f32.mrf.mxu0
      %v808 = vadd.f32 %v275, %v807
      %v809 = vpop.f32.mrf.mxu0
      %v810 = vadd.f32 %v275, %v809
      %811 = vmatmul.bf16.gmra.mxu0 %v513
      %v812 = vpop.f32.mrf.mxu0
      %v813 = vadd.f32 %v275, %v812
      %v814 = vpop.f32.mrf.mxu0
      %v815 = vadd.f32 %v275, %v814
      %816 = vmatmul.bf16.gmra.mxu0 %v515
      %v817 = vpop.f32.mrf.mxu0
      %v818 = vadd.f32 %v275, %v817
      %v819 = vpop.f32.mrf.mxu0
      %v820 = vadd.f32 %v275, %v819
      %821 = vmatmul.bf16.gmra.mxu0 %v517
      %v822 = vpop.f32.mrf.mxu0
      %v823 = vadd.f32 %v275, %v822
      %v824 = vpop.f32.mrf.mxu0
      %v825 = vadd.f32 %v275, %v824
      %826 = vmatmul.bf16.gmra.mxu0 %v519
      %v827 = vpop.f32.mrf.mxu0
      %v828 = vadd.f32 %v275, %v827
      %v829 = vpop.f32.mrf.mxu0
      %v830 = vadd.f32 %v275, %v829
      %831 = vmatmul.bf16.gmra.mxu0 %v521
      %v832 = vpop.f32.mrf.mxu0
      %v833 = vadd.f32 %v275, %v832
      %v834 = vpop.f32.mrf.mxu0
      %v835 = vadd.f32 %v275, %v834
      %836 = vmatmul.bf16.gmra.mxu0 %v523
      %v837 = vpop.f32.mrf.mxu0
      %v838 = vadd.f32 %v275, %v837
      %v839 = vpop.f32.mrf.mxu0
      %v840 = vadd.f32 %v275, %v839
      %841 = vmatmul.bf16.gmra.mxu0 %v525
      %v842 = vpop.f32.mrf.mxu0
      %v843 = vadd.f32 %v275, %v842
      %v844 = vpop.f32.mrf.mxu0
      %v845 = vadd.f32 %v275, %v844
      %846 = vmatmul.bf16.gmra.mxu0 %v527
      %v847 = vpop.f32.mrf.mxu0
      %v848 = vadd.f32 %v275, %v847
      %v849 = vpop.f32.mrf.mxu0
      %v850 = vadd.f32 %v275, %v849
      %851 = vmatmul.bf16.gmra.mxu0 %v529
      %v852 = vpop.f32.mrf.mxu0
      %v853 = vadd.f32 %v275, %v852
      %v854 = vpop.f32.mrf.mxu0
      %v855 = vadd.f32 %v275, %v854
      %856 = vmatmul.bf16.gmra.mxu0 %v531
      %v857 = vpop.f32.mrf.mxu0
      %v858 = vadd.f32 %v275, %v857
      %v859 = vpop.f32.mrf.mxu0
      %v860 = vadd.f32 %v275, %v859
      %861 = vdwg.mxu0
      %862 = vmatpush.bf16.msra.mxu0 %v676
      %863 = vmatpush.bf16.msra.mxu0 %v675
      %864 = vmatpush.bf16.msra.mxu0 %v674
      %865 = vmatpush.bf16.msra.mxu0 %v673
      %866 = vmatpush.bf16.msra.mxu0 %v672
      %867 = vmatpush.bf16.msra.mxu0 %v671
      %868 = vmatpush.bf16.msra.mxu0 %v670
      %869 = vmatpush.bf16.msra.mxu0 %v669
      %870 = vmatmul.bf16.gmra.mxu0 %v470
      %v871 = vpop.f32.mrf.mxu0
      %v872 = vadd.f32 %v703, %v871
      %v873 = vpop.f32.mrf.mxu0
      %v874 = vadd.f32 %v705, %v873
      %875 = vmatmul.bf16.gmra.mxu0 %v472
      %v876 = vpop.f32.mrf.mxu0
      %v877 = vadd.f32 %v708, %v876
      %v878 = vpop.f32.mrf.mxu0
      %v879 = vadd.f32 %v710, %v878
      %880 = vmatmul.bf16.gmra.mxu0 %v474
      %v881 = vpop.f32.mrf.mxu0
      %v882 = vadd.f32 %v713, %v881
      %v883 = vpop.f32.mrf.mxu0
      %v884 = vadd.f32 %v715, %v883
      %885 = vmatmul.bf16.gmra.mxu0 %v476
      %v886 = vpop.f32.mrf.mxu0
      %v887 = vadd.f32 %v718, %v886
      %v888 = vpop.f32.mrf.mxu0
      %v889 = vadd.f32 %v720, %v888
      %890 = vmatmul.bf16.gmra.mxu0 %v478
      %v891 = vpop.f32.mrf.mxu0
      %v892 = vadd.f32 %v723, %v891
      %v893 = vpop.f32.mrf.mxu0
      %v894 = vadd.f32 %v725, %v893
      %895 = vmatmul.bf16.gmra.mxu0 %v480
      %v896 = vpop.f32.mrf.mxu0
      %v897 = vadd.f32 %v728, %v896
      %v898 = vpop.f32.mrf.mxu0
      %v899 = vadd.f32 %v730, %v898
      %900 = vmatmul.bf16.gmra.mxu0 %v482
      %v901 = vpop.f32.mrf.mxu0
      %v902 = vadd.f32 %v733, %v901
      %v903 = vpop.f32.mrf.mxu0
      %v904 = vadd.f32 %v735, %v903
      %905 = vmatmul.bf16.gmra.mxu0 %v484
      %v906 = vpop.f32.mrf.mxu0
      %v907 = vadd.f32 %v738, %v906
      %v908 = vpop.f32.mrf.mxu0
      %v909 = vadd.f32 %v740, %v908
      %910 = vmatmul.bf16.gmra.mxu0 %v486
      %v911 = vpop.f32.mrf.mxu0
      %v912 = vadd.f32 %v743, %v911
      %v913 = vpop.f32.mrf.mxu0
      %v914 = vadd.f32 %v745, %v913
      %915 = vmatmul.bf16.gmra.mxu0 %v488
      %v916 = vpop.f32.mrf.mxu0
      %v917 = vadd.f32 %v748, %v916
      %v918 = vpop.f32.mrf.mxu0
      %v919 = vadd.f32 %v750, %v918
      %920 = vmatmul.bf16.gmra.mxu0 %v490
      %v921 = vpop.f32.mrf.mxu0
      %v922 = vadd.f32 %v753, %v921
      %v923 = vpop.f32.mrf.mxu0
      %v924 = vadd.f32 %v755, %v923
      %925 = vmatmul.bf16.gmra.mxu0 %v492
      %v926 = vpop.f32.mrf.mxu0
      %v927 = vadd.f32 %v758, %v926
      %v928 = vpop.f32.mrf.mxu0
      %v929 = vadd.f32 %v760, %v928
      %930 = vmatmul.bf16.gmra.mxu0 %v494
      %v931 = vpop.f32.mrf.mxu0
      %v932 = vadd.f32 %v763, %v931
      %v933 = vpop.f32.mrf.mxu0
      %v934 = vadd.f32 %v765, %v933
      %935 = vmatmul.bf16.gmra.mxu0 %v496
      %v936 = vpop.f32.mrf.mxu0
      %v937 = vadd.f32 %v768, %v936
      %v938 = vpop.f32.mrf.mxu0
      %v939 = vadd.f32 %v770, %v938
      %940 = vmatmul.bf16.gmra.mxu0 %v498
      %v941 = vpop.f32.mrf.mxu0
      %v942 = vadd.f32 %v773, %v941
      %v943 = vpop.f32.mrf.mxu0
      %v944 = vadd.f32 %v775, %v943
      %945 = vmatmul.bf16.gmra.mxu0 %v500
      %v946 = vpop.f32.mrf.mxu0
      %v947 = vadd.f32 %v778, %v946
      %v948 = vpop.f32.mrf.mxu0
      %v949 = vadd.f32 %v780, %v948
      %950 = vmatmul.bf16.gmra.mxu0 %v502
      %v951 = vpop.f32.mrf.mxu0
      %v952 = vadd.f32 %v783, %v951
      %v953 = vpop.f32.mrf.mxu0
      %v954 = vadd.f32 %v785, %v953
      %955 = vmatmul.bf16.gmra.mxu0 %v504
      %v956 = vpop.f32.mrf.mxu0
      %v957 = vadd.f32 %v788, %v956
      %v958 = vpop.f32.mrf.mxu0
      %v959 = vadd.f32 %v790, %v958
      %960 = vmatmul.bf16.gmra.mxu0 %v506
      %v961 = vpop.f32.mrf.mxu0
      %v962 = vadd.f32 %v793, %v961
      %v963 = vpop.f32.mrf.mxu0
      %v964 = vadd.f32 %v795, %v963
      %965 = vmatmul.bf16.gmra.mxu0 %v508
      %v966 = vpop.f32.mrf.mxu0
      %v967 = vadd.f32 %v798, %v966
      %v968 = vpop.f32.mrf.mxu0
      %v969 = vadd.f32 %v800, %v968
      %970 = vmatmul.bf16.gmra.mxu0 %v510
      %v971 = vpop.f32.mrf.mxu0
      %v972 = vadd.f32 %v803, %v971
      %v973 = vpop.f32.mrf.mxu0
      %v974 = vadd.f32 %v805, %v973
      %975 = vmatmul.bf16.gmra.mxu0 %v512
      %v976 = vpop.f32.mrf.mxu0
      %v977 = vadd.f32 %v808, %v976
      %v978 = vpop.f32.mrf.mxu0
      %v979 = vadd.f32 %v810, %v978
      %980 = vmatmul.bf16.gmra.mxu0 %v514
      %v981 = vpop.f32.mrf.mxu0
      %v982 = vadd.f32 %v813, %v981
      %v983 = vpop.f32.mrf.mxu0
      %v984 = vadd.f32 %v815, %v983
      %985 = vmatmul.bf16.gmra.mxu0 %v516
      %v986 = vpop.f32.mrf.mxu0
      %v987 = vadd.f32 %v818, %v986
      %v988 = vpop.f32.mrf.mxu0
      %v989 = vadd.f32 %v820, %v988
      %990 = vmatmul.bf16.gmra.mxu0 %v518
      %v991 = vpop.f32.mrf.mxu0
      %v992 = vadd.f32 %v823, %v991
      %v993 = vpop.f32.mrf.mxu0
      %v994 = vadd.f32 %v825, %v993
      %995 = vmatmul.bf16.gmra.mxu0 %v520
      %v996 = vpop.f32.mrf.mxu0
      %v997 = vadd.f32 %v828, %v996
      %v998 = vpop.f32.mrf.mxu0
      %v999 = vadd.f32 %v830, %v998
      %1000 = vmatmul.bf16.gmra.mxu0 %v522
      %v1001 = vpop.f32.mrf.mxu0
      %v1002 = vadd.f32 %v833, %v1001
      %v1003 = vpop.f32.mrf.mxu0
      %v1004 = vadd.f32 %v835, %v1003
      %1005 = vmatmul.bf16.gmra.mxu0 %v524
      %v1006 = vpop.f32.mrf.mxu0
      %v1007 = vadd.f32 %v838, %v1006
      %v1008 = vpop.f32.mrf.mxu0
      %v1009 = vadd.f32 %v840, %v1008
      %1010 = vmatmul.bf16.gmra.mxu0 %v526
      %v1011 = vpop.f32.mrf.mxu0
      %v1012 = vadd.f32 %v843, %v1011
      %v1013 = vpop.f32.mrf.mxu0
      %v1014 = vadd.f32 %v845, %v1013
      %1015 = vmatmul.bf16.gmra.mxu0 %v528
      %v1016 = vpop.f32.mrf.mxu0
      %v1017 = vadd.f32 %v848, %v1016
      %v1018 = vpop.f32.mrf.mxu0
      %v1019 = vadd.f32 %v850, %v1018
      %1020 = vmatmul.bf16.gmra.mxu0 %v530
      %v1021 = vpop.f32.mrf.mxu0
      %v1022 = vadd.f32 %v853, %v1021
      %v1023 = vpop.f32.mrf.mxu0
      %v1024 = vadd.f32 %v855, %v1023
      %1025 = vmatmul.bf16.gmra.mxu0 %v532
      %v1026 = vpop.f32.mrf.mxu0
      %v1027 = vadd.f32 %v858, %v1026
      %v1028 = vpop.f32.mrf.mxu0
      %v1029 = vadd.f32 %v860, %v1028
      %1030 = vdwg.mxu0
      %vm1031 = vcmask 261120
      %1032 = vst.msk [vmem:[%s175] sm:$0xff] %vm1031, %v872
      %1033 = vst.msk [vmem:[%s175 + $0x8] sm:$0xff] %vm1031, %v874
      %1034 = vst.msk [vmem:[%s175 + $0x10] sm:$0xff] %vm1031, %v877
      %1035 = vst.msk [vmem:[%s175 + $0x18] sm:$0xff] %vm1031, %v879
      %1036 = vst.msk [vmem:[%s175 + $0x20] sm:$0xff] %vm1031, %v882
      %1037 = vst.msk [vmem:[%s175 + $0x28] sm:$0xff] %vm1031, %v884
      %1038 = vst.msk [vmem:[%s175 + $0x30] sm:$0xff] %vm1031, %v887
      %1039 = vst.msk [vmem:[%s175 + $0x38] sm:$0xff] %vm1031, %v889
      %1040 = vst.msk [vmem:[%s175 + $0x40] sm:$0xff] %vm1031, %v892
      %1041 = vst.msk [vmem:[%s175 + $0x48] sm:$0xff] %vm1031, %v894
      %1042 = vst.msk [vmem:[%s175 + $0x50] sm:$0xff] %vm1031, %v897
      %1043 = vst.msk [vmem:[%s175 + $0x58] sm:$0xff] %vm1031, %v899
      %1044 = vst.msk [vmem:[%s175 + $0x60] sm:$0xff] %vm1031, %v902
      %1045 = vst.msk [vmem:[%s175 + $0x68] sm:$0xff] %vm1031, %v904
      %1046 = vst.msk [vmem:[%s175 + $0x70] sm:$0xff] %vm1031, %v907
      %1047 = vst.msk [vmem:[%s175 + $0x78] sm:$0xff] %vm1031, %v909
      %1048 = vst.msk [vmem:[%s175 + $0x80] sm:$0xff] %vm1031, %v912
      %1049 = vst.msk [vmem:[%s175 + $0x88] sm:$0xff] %vm1031, %v914
      %1050 = vst.msk [vmem:[%s175 + $0x90] sm:$0xff] %vm1031, %v917
      %1051 = vst.msk [vmem:[%s175 + $0x98] sm:$0xff] %vm1031, %v919
      %1052 = vst.msk [vmem:[%s175 + $0xa0] sm:$0xff] %vm1031, %v922
      %1053 = vst.msk [vmem:[%s175 + $0xa8] sm:$0xff] %vm1031, %v924
      %1054 = vst.msk [vmem:[%s175 + $0xb0] sm:$0xff] %vm1031, %v927
      %1055 = vst.msk [vmem:[%s175 + $0xb8] sm:$0xff] %vm1031, %v929
      %1056 = vst.msk [vmem:[%s175 + $0xc0] sm:$0xff] %vm1031, %v932
      %1057 = vst.msk [vmem:[%s175 + $0xc8] sm:$0xff] %vm1031, %v934
      %1058 = vst.msk [vmem:[%s175 + $0xd0] sm:$0xff] %vm1031, %v937
      %1059 = vst.msk [vmem:[%s175 + $0xd8] sm:$0xff] %vm1031, %v939
      %1060 = vst.msk [vmem:[%s175 + $0xe0] sm:$0xff] %vm1031, %v942
      %1061 = vst.msk [vmem:[%s175 + $0xe8] sm:$0xff] %vm1031, %v944
      %1062 = vst.msk [vmem:[%s175 + $0xf0] sm:$0xff] %vm1031, %v947
      %1063 = vst.msk [vmem:[%s175 + $0xf8] sm:$0xff] %vm1031, %v949
      %1064 = vst.msk [vmem:[%s175 + $0x100] sm:$0xff] %vm1031, %v952
      %1065 = vst.msk [vmem:[%s175 + $0x108] sm:$0xff] %vm1031, %v954
      %1066 = vst.msk [vmem:[%s175 + $0x110] sm:$0xff] %vm1031, %v957
      %1067 = vst.msk [vmem:[%s175 + $0x118] sm:$0xff] %vm1031, %v959
      %1068 = vst.msk [vmem:[%s175 + $0x120] sm:$0xff] %vm1031, %v962
      %1069 = vst.msk [vmem:[%s175 + $0x128] sm:$0xff] %vm1031, %v964
      %1070 = vst.msk [vmem:[%s175 + $0x130] sm:$0xff] %vm1031, %v967
      %1071 = vst.msk [vmem:[%s175 + $0x138] sm:$0xff] %vm1031, %v969
      %1072 = vst.msk [vmem:[%s175 + $0x140] sm:$0xff] %vm1031, %v972
      %1073 = vst.msk [vmem:[%s175 + $0x148] sm:$0xff] %vm1031, %v974
      %1074 = vst.msk [vmem:[%s175 + $0x150] sm:$0xff] %vm1031, %v977
      %1075 = vst.msk [vmem:[%s175 + $0x158] sm:$0xff] %vm1031, %v979
      %1076 = vst.msk [vmem:[%s175 + $0x160] sm:$0xff] %vm1031, %v982
      %1077 = vst.msk [vmem:[%s175 + $0x168] sm:$0xff] %vm1031, %v984
      %1078 = vst.msk [vmem:[%s175 + $0x170] sm:$0xff] %vm1031, %v987
      %1079 = vst.msk [vmem:[%s175 + $0x178] sm:$0xff] %vm1031, %v989
      %1080 = vst.msk [vmem:[%s175 + $0x180] sm:$0xff] %vm1031, %v992
      %1081 = vst.msk [vmem:[%s175 + $0x188] sm:$0xff] %vm1031, %v994
      %1082 = vst.msk [vmem:[%s175 + $0x190] sm:$0xff] %vm1031, %v997
      %1083 = vst.msk [vmem:[%s175 + $0x198] sm:$0xff] %vm1031, %v999
      %1084 = vst.msk [vmem:[%s175 + $0x1a0] sm:$0xff] %vm1031, %v1002
      %1085 = vst.msk [vmem:[%s175 + $0x1a8] sm:$0xff] %vm1031, %v1004
      %1086 = vst.msk [vmem:[%s175 + $0x1b0] sm:$0xff] %vm1031, %v1007
      %1087 = vst.msk [vmem:[%s175 + $0x1b8] sm:$0xff] %vm1031, %v1009
      %1088 = vst.msk [vmem:[%s175 + $0x1c0] sm:$0xff] %vm1031, %v1012
      %1089 = vst.msk [vmem:[%s175 + $0x1c8] sm:$0xff] %vm1031, %v1014
      %1090 = vst.msk [vmem:[%s175 + $0x1d0] sm:$0xff] %vm1031, %v1017
      %1091 = vst.msk [vmem:[%s175 + $0x1d8] sm:$0xff] %vm1031, %v1019
      %1092 = vst.msk [vmem:[%s175 + $0x1e0] sm:$0xff] %vm1031, %v1022
      %1093 = vst.msk [vmem:[%s175 + $0x1e8] sm:$0xff] %vm1031, %v1024
      %1094 = vst.msk [vmem:[%s175 + $0x1f0] sm:$0xff] %vm1031, %v1027
      %1095 = vst.msk [vmem:[%s175 + $0x1f8] sm:$0xff] %vm1031, %v1029
      %s1096 = smul.u32 64, %s14
      %p1097 = scmp.lt.s32.totalorder %s1096, 255
      %s1098 = scalar_select %p1097, %s1096, 255
      %s1099 = smul.addr %s1098, 8
      %s1100 = scalar_lea.vmem %s3, %s1099
      // Predicated region
      $region33: #{glse_pallas.20} parent=31 // pred_check
        %p1101 = pneg %p100
      $region34: #{glse_pallas.20} parent=31 // pred_check_branch
        %1103 = sbr.rel (%p1101) target = $region36
      $region35: #{glse_pallas.20} parent=31 // pred_region
        %s1104 = smul.u32 64, %s14
      $region36: #{glse_pallas.20} parent=31 // pred_fallthru
        _
    $region32: #{glse_pallas.20} parent=5 // pred_fallthru
      _
    %p1105 = scmp.le.s32.totalorder 2, %s9
    // Predicated region
    $region37: #{glse_pallas.20} parent=5 // pred_check
      %p1106 = pneg %p1105
    $region38: #{glse_pallas.20} parent=5 // pred_check_branch
      %1108 = sbr.rel (%p1106) target = $region40
    $region39: #{glse_pallas.20} parent=5 // pred_region
      %s1109 = ssub.s32 %s9, 2
      // Predicated region
      $region41: #{glse_pallas.20} parent=39 // pred_check
        %p1110 = pneg %p106
      $region42: #{glse_pallas.20} parent=39 // pred_check_branch
        %1112 = sbr.rel (%p1110) target = $region44
      $region43: #{glse_pallas.20} parent=39 // pred_region
        %s1113 = smul.u32 64, %s15
        %p1114 = scmp.lt.s32.totalorder %s1113, 255
        %s1115 = scalar_select %p1114, %s1113, 255
        %s1116 = smul.addr %s1115, 8
        %s1117 = scalar_lea.vmem %s3, %s1116
      $region44: #{glse_pallas.20} parent=39 // pred_fallthru
        _
    $region40: #{glse_pallas.20} parent=5 // pred_fallthru
      _
  $region6: #{glse_pallas.20} parent=0 // loop_footer
    %s13 = sadd.s32 1, %s9
  $region7: #{glse_pallas.20} parent=0 // loop_footer_branch
    %8 = sbr.rel target = $region3
  $region8: #{glse_pallas.20} parent=0 // loop_exit
    _

// kernel: glse_pallas.39
$region0: #{glse_pallas.39}
  #allocation0 [shape = 'u32[]', space=smem, size = 0x4, offset = 0x4, fixed_abs, tag = 'smem constant byte address 0x4 - core index']
  #allocation1 [shape = 'u32[72,128]{1,0:T(1,128)}', space=vmem, size = 0x9000, scoped, tag = 'internal scratch']
  %s0 = inlined_call_operand.vmem [shape: bf16[1024,64], index: 0, kind: input, shape index: {}]
  %s1 = inlined_call_operand.vmem [shape: bf16[2,64,64], index: 1, kind: input, shape index: {}]
  %s2 = inlined_call_operand.vmem [shape: bf16[64,32], index: 2, kind: input, shape index: {}]
  %s3 = inlined_call_operand.vmem [shape: f32[1,32], index: 3, kind: input, shape index: {}]
  %s4 = inlined_call_operand.vmem [shape: f32[2,1024,32], index: 4, kind: input, shape index: {}]
  %s5 = inlined_call_operand.vmem [shape: f32[2,1024,32], index: 5, kind: output, shape index: {}]
  %s6 = sld [smem:[#allocation0]]
  $region53: #{glse_pallas.39} parent=0
    _
  %s8 = ssub.s32 1, %s6
  %s9 = scalar_select 0, %s8, %s6
  loop: start=0, step=1, limit=6
  $region2: #{glse_pallas.39} parent=0 // loop_pre_header
    _
  $region3: #{glse_pallas.39} parent=0 // loop_header
    %s11 = sphi 0, %s15
    %p12 = scmp.ge.s32.totalorder %s11, 6
    %s18 = sphi 0, %s30
    %s19 = sphi 0, %s26
    %s20 = sphi 0, %s18
    %s21 = sphi 0, %s19
    %s22 = sphi 0, %s20
    %s23 = sphi 0, %s21
    %s33 = sphi 0, %s35
    %s36 = sphi 0, %s33
    %s37 = sphi 0, %s36
    %s53 = sphi 0, %s37
    %s59 = sphi 0, %s61
    %s62 = sphi 0, %s59
    %s63 = sphi 0, %s62
    %s79 = sphi 0, %s63
    %s83 = sphi 0, %s83
    %s85 = sphi 0, %s83
    %s86 = sphi 0, %s85
    %s100 = sphi 0, %s86
    %s104 = sphi 0, %s104
    %s106 = sphi 0, %s104
    %s107 = sphi 0, %s106
    %s121 = sphi 0, %s107
    %s129 = sphi 0, %s131
    %s132 = sphi 0, %s129
    %s133 = sphi 0, %s132
    %s149 = sphi 0, %s133
    %s157 = sphi 0, %s159
    %s160 = sphi 0, %s157
    %s161 = sphi 0, %s160
    %s177 = sphi 0, %s161
  $region4: #{glse_pallas.39} parent=0 // loop_header_branch
    %14 = sbr.rel (%p12) target = $region8
  $region5: #{glse_pallas.39} parent=0 // loop_body
    %s16 = ssub.s32 %s11, 1
    %s17 = ssub.s32 %s11, 2
    %s24 = sadd.s32 1, %s19
    %p25 = scmp.ge.s32.totalorder %s24, 2
    %s26 = scalar_select %p25, 0, %s24
    %s27 = sadd.s32 1, %s18
    %s28 = scalar_select %p25, %s27, %s18
    %p29 = scmp.ge.s32.totalorder %s28, 2
    %s30 = scalar_select %p29, 0, %s28
    %s31 = ssub.s32 %s19, %s26
    %p32 = scmp.eq.s32.totalorder %s31, 0
    %s34 = sadd.s32 %s33, 1
    %s35 = scalar_select %p32, %s33, %s34
    %p38 = pneg %p32
    %p39 = scmp.eq.s32.totalorder %s11, 3
    %p40 = por %p38, %p39
    %p41 = scmp.ne.s32.totalorder %s33, %s36
    %p42 = scmp.eq.s32.totalorder %s11, 0
    %p43 = por %p41, %p42
    %p44 = scmp.ne.s32.totalorder %s33, %s36
    %p45 = scmp.eq.s32.totalorder %s16, 3
    %p46 = por %p44, %p45
    %p47 = scmp.ne.s32.totalorder %s36, %s37
    %p48 = scmp.eq.s32.totalorder %s16, 0
    %p49 = por %p47, %p48
    %p50 = scmp.ne.s32.totalorder %s36, %s37
    %p51 = scmp.eq.s32.totalorder %s17, 3
    %p52 = por %p50, %p51
    %p54 = scmp.ne.s32.totalorder %s37, %s53
    %p55 = scmp.eq.s32.totalorder %s17, 0
    %p56 = por %p54, %p55
    %s57 = ssub.s32 %s18, %s30
    %p58 = scmp.eq.s32.totalorder %s57, 0
    %s60 = sadd.s32 %s59, 1
    %s61 = scalar_select %p58, %s59, %s60
    %p64 = pneg %p58
    %p65 = scmp.eq.s32.totalorder %s11, 3
    %p66 = por %p64, %p65
    %p67 = scmp.ne.s32.totalorder %s59, %s62
    %p68 = scmp.eq.s32.totalorder %s11, 0
    %p69 = por %p67, %p68
    %p70 = scmp.ne.s32.totalorder %s59, %s62
    %p71 = scmp.eq.s32.totalorder %s16, 3
    %p72 = por %p70, %p71
    %p73 = scmp.ne.s32.totalorder %s62, %s63
    %p74 = scmp.eq.s32.totalorder %s16, 0
    %p75 = por %p73, %p74
    %p76 = scmp.ne.s32.totalorder %s62, %s63
    %p77 = scmp.eq.s32.totalorder %s17, 3
    %p78 = por %p76, %p77
    %p80 = scmp.ne.s32.totalorder %s63, %s79
    %p81 = scmp.eq.s32.totalorder %s17, 0
    %p82 = por %p80, %p81
    %s84 = sadd.s32 %s83, 1
    %p87 = scmp.eq.s32.totalorder %s11, 3
    %p88 = scmp.ne.s32.totalorder %s83, %s85
    %p89 = scmp.eq.s32.totalorder %s11, 0
    %p90 = por %p88, %p89
    %p91 = scmp.ne.s32.totalorder %s83, %s85
    %p92 = scmp.eq.s32.totalorder %s16, 3
    %p93 = por %p91, %p92
    %p94 = scmp.ne.s32.totalorder %s85, %s86
    %p95 = scmp.eq.s32.totalorder %s16, 0
    %p96 = por %p94, %p95
    %p97 = scmp.ne.s32.totalorder %s85, %s86
    %p98 = scmp.eq.s32.totalorder %s17, 3
    %p99 = por %p97, %p98
    %p101 = scmp.ne.s32.totalorder %s86, %s100
    %p102 = scmp.eq.s32.totalorder %s17, 0
    %p103 = por %p101, %p102
    %s105 = sadd.s32 %s104, 1
    %p108 = scmp.eq.s32.totalorder %s11, 3
    %p109 = scmp.ne.s32.totalorder %s104, %s106
    %p110 = scmp.eq.s32.totalorder %s11, 0
    %p111 = por %p109, %p110
    %p112 = scmp.ne.s32.totalorder %s104, %s106
    %p113 = scmp.eq.s32.totalorder %s16, 3
    %p114 = por %p112, %p113
    %p115 = scmp.ne.s32.totalorder %s106, %s107
    %p116 = scmp.eq.s32.totalorder %s16, 0
    %p117 = por %p115, %p116
    %p118 = scmp.ne.s32.totalorder %s106, %s107
    %p119 = scmp.eq.s32.totalorder %s17, 3
    %p120 = por %p118, %p119
    %p122 = scmp.ne.s32.totalorder %s107, %s121
    %p123 = scmp.eq.s32.totalorder %s17, 0
    %p124 = por %p122, %p123
    %s125 = ssub.s32 %s18, %s30
    %s126 = ssub.s32 %s19, %s26
    %s127 = sor.u32 %s125, %s126
    %p128 = scmp.eq.s32.totalorder %s127, 0
    %s130 = sadd.s32 %s129, 1
    %s131 = scalar_select %p128, %s129, %s130
    %p134 = pneg %p128
    %p135 = scmp.eq.s32.totalorder %s11, 3
    %p136 = por %p134, %p135
    %p137 = scmp.ne.s32.totalorder %s129, %s132
    %p138 = scmp.eq.s32.totalorder %s11, 0
    %p139 = por %p137, %p138
    %p140 = scmp.ne.s32.totalorder %s129, %s132
    %p141 = scmp.eq.s32.totalorder %s16, 3
    %p142 = por %p140, %p141
    %p143 = scmp.ne.s32.totalorder %s132, %s133
    %p144 = scmp.eq.s32.totalorder %s16, 0
    %p145 = por %p143, %p144
    %p146 = scmp.ne.s32.totalorder %s132, %s133
    %p147 = scmp.eq.s32.totalorder %s17, 3
    %p148 = por %p146, %p147
    %p150 = scmp.ne.s32.totalorder %s133, %s149
    %p151 = scmp.eq.s32.totalorder %s17, 0
    %p152 = por %p150, %p151
    %s153 = ssub.s32 %s18, %s30
    %s154 = ssub.s32 %s19, %s26
    %s155 = sor.u32 %s153, %s154
    %p156 = scmp.eq.s32.totalorder %s155, 0
    %s158 = sadd.s32 %s157, 1
    %s159 = scalar_select %p156, %s157, %s158
    %p162 = pneg %p156
    %p163 = scmp.eq.s32.totalorder %s11, 3
    %p164 = por %p162, %p163
    %p165 = scmp.ne.s32.totalorder %s157, %s160
    %p166 = scmp.eq.s32.totalorder %s11, 0
    %p167 = por %p165, %p166
    %p168 = scmp.ne.s32.totalorder %s157, %s160
    %p169 = scmp.eq.s32.totalorder %s16, 3
    %p170 = por %p168, %p169
    %p171 = scmp.ne.s32.totalorder %s160, %s161
    %p172 = scmp.eq.s32.totalorder %s16, 0
    %p173 = por %p171, %p172
    %p174 = scmp.ne.s32.totalorder %s160, %s161
    %p175 = scmp.eq.s32.totalorder %s17, 3
    %p176 = por %p174, %p175
    %p178 = scmp.ne.s32.totalorder %s161, %s177
    %p179 = scmp.eq.s32.totalorder %s17, 0
    %p180 = por %p178, %p179
    %p181 = scmp.le.s32.totalorder 1, %s11
    %p182 = scmp.lt.s32.totalorder %s11, 5
    %p183 = pnand %p181, %p182
    %p184 = pneg %p183
    // Predicated region
    $region9: #{glse_pallas.39} parent=5 // pred_check
      _
    $region10: #{glse_pallas.39} parent=5 // pred_check_branch
      %186 = sbr.rel (%p183) target = $region12
    $region11: #{glse_pallas.39} parent=5 // pred_region
      %s187 = ssub.s32 %s11, 1
      // Predicated region
      $region13: #{glse_pallas.39} parent=11 // pred_check
        %p188 = pneg %p96
      $region14: #{glse_pallas.39} parent=11 // pred_check_branch
        %190 = sbr.rel (%p188) target = $region16
      $region15: #{glse_pallas.39} parent=11 // pred_region
        _
      $region16: #{glse_pallas.39} parent=11 // pred_fallthru
        _
      // Predicated region
      $region17: #{glse_pallas.39} parent=11 // pred_check
        %p191 = pneg %p117
      $region18: #{glse_pallas.39} parent=11 // pred_check_branch
        %193 = sbr.rel (%p191) target = $region20
      $region19: #{glse_pallas.39} parent=11 // pred_region
        _
      $region20: #{glse_pallas.39} parent=11 // pred_fallthru
        _
    $region12: #{glse_pallas.39} parent=5 // pred_fallthru
      _
    %p194 = scmp.lt.s32.totalorder %s11, 4
    // Predicated region
    $region21: #{glse_pallas.39} parent=5 // pred_check
      %p195 = pneg %p194
    $region22: #{glse_pallas.39} parent=5 // pred_check_branch
      %197 = sbr.rel (%p195) target = $region24
    $region23: #{glse_pallas.39} parent=5 // pred_region
      // Predicated region
      $region25: #{glse_pallas.39} parent=23 // pred_check
        %p198 = pneg %p43
      $region26: #{glse_pallas.39} parent=23 // pred_check_branch
        %200 = sbr.rel (%p198) target = $region28
      $region27: #{glse_pallas.39} parent=23 // pred_region
        %s201 = smul.u32 64, %s19
        %p202 = scmp.lt.s32.totalorder %s201, 127
        %s203 = scalar_select %p202, %s201, 127
        %s204 = smul.addr %s203, 4
        %s205 = scalar_lea.vmem %s0, %s204
        %s206 = smul.u32 64, %s19
      $region28: #{glse_pallas.39} parent=23 // pred_fallthru
        _
      // Predicated region
      $region29: #{glse_pallas.39} parent=23 // pred_check
        %p207 = pneg %p69
      $region30: #{glse_pallas.39} parent=23 // pred_check_branch
        %209 = sbr.rel (%p207) target = $region32
      $region31: #{glse_pallas.39} parent=23 // pred_region
        %p210 = scmp.lt.s32.totalorder %s18, 1
        %s211 = scalar_select %p210, %s18, 1
        %s212 = smul.addr %s211, 8
        %s213 = smul.addr %s212, 4
        %s214 = scalar_lea.vmem %s1, %s213
      $region32: #{glse_pallas.39} parent=23 // pred_fallthru
        _
      // Predicated region
      $region33: #{glse_pallas.39} parent=23 // pred_check
        %p215 = pneg %p139
      $region34: #{glse_pallas.39} parent=23 // pred_check_branch
        %217 = sbr.rel (%p215) target = $region36
      $region35: #{glse_pallas.39} parent=23 // pred_region
        %s218 = smul.u32 64, %s19
        %p219 = scmp.lt.s32.totalorder %s18, 1
        %s220 = scalar_select %p219, %s18, 1
        %p221 = scmp.lt.s32.totalorder %s218, 127
        %s222 = scalar_select %p221, %s218, 127
        %s223 = smul.addr %s220, 128
        %s224 = sadd.s32 %s222, %s223
        %s225 = smul.addr %s224, 8
        %s226 = scalar_lea.vmem %s4, %s225
        %s227 = smul.u32 64, %s19
      $region36: #{glse_pallas.39} parent=23 // pred_fallthru
        _
    $region24: #{glse_pallas.39} parent=5 // pred_fallthru
      _
    %p228 = scmp.le.s32.totalorder 1, %s11
    %p229 = scmp.lt.s32.totalorder %s11, 5
    %p230 = pnand %p228, %p229
    %p231 = pneg %p230
    // Predicated region
    $region37: #{glse_pallas.39} parent=5 // pred_check
      _
    $region38: #{glse_pallas.39} parent=5 // pred_check_branch
      %233 = sbr.rel (%p230) target = $region40
    $region39: #{glse_pallas.39} parent=5 // pred_region
      %s234 = ssub.s32 %s11, 1
      %s235 = smul.u32 64, %s21
      %p236 = scmp.lt.s32.totalorder %s235, 127
      %s237 = scalar_select %p236, %s235, 127
      %s238 = smul.addr %s237, 4
      %s239 = scalar_lea.vmem %s0, %s238
      %p240 = pneg %p49
      %p241 = pneg %p46
      %p242 = scmp.lt.s32.totalorder %s20, 1
      %s243 = scalar_select %p242, %s20, 1
      %s244 = smul.addr %s243, 8
      %s245 = smul.addr %s244, 4
      %s246 = scalar_lea.vmem %s1, %s245
      %p247 = pneg %p75
      %p248 = pneg %p72
      %p249 = pneg %p96
      %p250 = pneg %p93
      %p251 = pneg %p117
      %p252 = pneg %p114
      %s253 = smul.u32 64, %s21
      %p254 = scmp.lt.s32.totalorder %s20, 1
      %s255 = scalar_select %p254, %s20, 1
      %p256 = scmp.lt.s32.totalorder %s253, 127
      %s257 = scalar_select %p256, %s253, 127
      %s258 = smul.addr %s255, 128
      %s259 = sadd.s32 %s257, %s258
      %s260 = smul.addr %s259, 8
      %s261 = scalar_lea.vmem %s4, %s260
      %p262 = pneg %p145
      %p263 = pneg %p142
      %p264 = pneg %p173
      %p265 = pneg %p170
      %s266 = smul.u32 64, %s21
      %p267 = scmp.lt.s32.totalorder %s20, 1
      %s268 = scalar_select %p267, %s20, 1
      %p269 = scmp.lt.s32.totalorder %s266, 127
      %s270 = scalar_select %p269, %s266, 127
      %s271 = smul.addr %s268, 128
      %s272 = sadd.s32 %s270, %s271
      %s273 = smul.addr %s272, 8
      %s274 = scalar_lea.vmem %s5, %s273
      %s275 = smul.u32 64, %s21
      %p276 = scmp.lt.s32.totalorder %s275, 127
      %s277 = scalar_select %p276, %s275, 127
      %s278 = smul.addr %s277, 4
      %s279 = scalar_lea.vmem %s0, %s278
      %s280 = smul.u32 64, %s21
      %p281 = scmp.lt.s32.totalorder %s20, 1
      %s282 = scalar_select %p281, %s20, 1
      %s283 = smul.addr %s282, 8
      %s284 = smul.addr %s283, 4
      %s285 = scalar_lea.vmem %s1, %s284
      %s286 = smul.u32 64, %s21
      %p287 = scmp.lt.s32.totalorder %s20, 1
      %s288 = scalar_select %p287, %s20, 1
      %p289 = scmp.lt.s32.totalorder %s286, 127
      %s290 = scalar_select %p289, %s286, 127
      %s291 = smul.addr %s288, 128
      %s292 = sadd.s32 %s290, %s291
      %s293 = smul.addr %s292, 8
      %s294 = scalar_lea.vmem %s4, %s293
      %s295 = smul.u32 64, %s21
      %s296 = smul.u32 64, %s21
      %p297 = scmp.lt.s32.totalorder %s20, 1
      %s298 = scalar_select %p297, %s20, 1
      %p299 = scmp.lt.s32.totalorder %s296, 127
      %s300 = scalar_select %p299, %s296, 127
      %s301 = smul.addr %s298, 128
      %s302 = sadd.s32 %s300, %s301
      %s303 = smul.addr %s302, 8
      %s304 = scalar_lea.vmem %s5, %s303
      %s305 = smul.u32 64, %s21
      %v307 = vld [vmem:[%s279] sm:$0xf]
      %v308 = vld [vmem:[%s279 + $0x4] sm:$0xf]
      %v309 = vld [vmem:[%s279 + $0x8] sm:$0xf]
      %v310 = vld [vmem:[%s279 + $0xc] sm:$0xf]
      %v311 = vld [vmem:[%s279 + $0x10] sm:$0xf]
      %v312 = vld [vmem:[%s279 + $0x14] sm:$0xf]
      %v313 = vld [vmem:[%s279 + $0x18] sm:$0xf]
      %v314 = vld [vmem:[%s279 + $0x1c] sm:$0xf]
      %v315 = vld [vmem:[%s279 + $0x20] sm:$0xf]
      %v316 = vld [vmem:[%s279 + $0x24] sm:$0xf]
      %v317 = vld [vmem:[%s279 + $0x28] sm:$0xf]
      %v318 = vld [vmem:[%s279 + $0x2c] sm:$0xf]
      %v319 = vld [vmem:[%s279 + $0x30] sm:$0xf]
      %v320 = vld [vmem:[%s279 + $0x34] sm:$0xf]
      %v321 = vld [vmem:[%s279 + $0x38] sm:$0xf]
      %v322 = vld [vmem:[%s279 + $0x3c] sm:$0xf]
      %v323 = vld [vmem:[%s279 + $0x40] sm:$0xf]
      %v324 = vld [vmem:[%s279 + $0x44] sm:$0xf]
      %v325 = vld [vmem:[%s279 + $0x48] sm:$0xf]
      %v326 = vld [vmem:[%s279 + $0x4c] sm:$0xf]
      %v327 = vld [vmem:[%s279 + $0x50] sm:$0xf]
      %v328 = vld [vmem:[%s279 + $0x54] sm:$0xf]
      %v329 = vld [vmem:[%s279 + $0x58] sm:$0xf]
      %v330 = vld [vmem:[%s279 + $0x5c] sm:$0xf]
      %v331 = vld [vmem:[%s279 + $0x60] sm:$0xf]
      %v332 = vld [vmem:[%s279 + $0x64] sm:$0xf]
      %v333 = vld [vmem:[%s279 + $0x68] sm:$0xf]
      %v334 = vld [vmem:[%s279 + $0x6c] sm:$0xf]
      %v335 = vld [vmem:[%s279 + $0x70] sm:$0xf]
      %v336 = vld [vmem:[%s279 + $0x74] sm:$0xf]
      %v337 = vld [vmem:[%s279 + $0x78] sm:$0xf]
      %v338 = vld [vmem:[%s279 + $0x7c] sm:$0xf]
      %v339 = vld [vmem:[%s279 + $0x80] sm:$0xf]
      %v340 = vld [vmem:[%s279 + $0x84] sm:$0xf]
      %v341 = vld [vmem:[%s279 + $0x88] sm:$0xf]
      %v342 = vld [vmem:[%s279 + $0x8c] sm:$0xf]
      %v343 = vld [vmem:[%s279 + $0x90] sm:$0xf]
      %v344 = vld [vmem:[%s279 + $0x94] sm:$0xf]
      %v345 = vld [vmem:[%s279 + $0x98] sm:$0xf]
      %v346 = vld [vmem:[%s279 + $0x9c] sm:$0xf]
      %v347 = vld [vmem:[%s279 + $0xa0] sm:$0xf]
      %v348 = vld [vmem:[%s279 + $0xa4] sm:$0xf]
      %v349 = vld [vmem:[%s279 + $0xa8] sm:$0xf]
      %v350 = vld [vmem:[%s279 + $0xac] sm:$0xf]
      %v351 = vld [vmem:[%s279 + $0xb0] sm:$0xf]
      %v352 = vld [vmem:[%s279 + $0xb4] sm:$0xf]
      %v353 = vld [vmem:[%s279 + $0xb8] sm:$0xf]
      %v354 = vld [vmem:[%s279 + $0xbc] sm:$0xf]
      %v355 = vld [vmem:[%s279 + $0xc0] sm:$0xf]
      %v356 = vld [vmem:[%s279 + $0xc4] sm:$0xf]
      %v357 = vld [vmem:[%s279 + $0xc8] sm:$0xf]
      %v358 = vld [vmem:[%s279 + $0xcc] sm:$0xf]
      %v359 = vld [vmem:[%s279 + $0xd0] sm:$0xf]
      %v360 = vld [vmem:[%s279 + $0xd4] sm:$0xf]
      %v361 = vld [vmem:[%s279 + $0xd8] sm:$0xf]
      %v362 = vld [vmem:[%s279 + $0xdc] sm:$0xf]
      %v363 = vld [vmem:[%s279 + $0xe0] sm:$0xf]
      %v364 = vld [vmem:[%s279 + $0xe4] sm:$0xf]
      %v365 = vld [vmem:[%s279 + $0xe8] sm:$0xf]
      %v366 = vld [vmem:[%s279 + $0xec] sm:$0xf]
      %v367 = vld [vmem:[%s279 + $0xf0] sm:$0xf]
      %v368 = vld [vmem:[%s279 + $0xf4] sm:$0xf]
      %v369 = vld [vmem:[%s279 + $0xf8] sm:$0xf]
      %v370 = vld [vmem:[%s279 + $0xfc] sm:$0xf]
      %v371 = vld [vmem:[%s285] sm:$0xf]
      %v372 = vld [vmem:[%s285 + $0x4] sm:$0xf]
      %v373 = vld [vmem:[%s285 + $0x8] sm:$0xf]
      %v374 = vld [vmem:[%s285 + $0xc] sm:$0xf]
      %v375 = vld [vmem:[%s285 + $0x10] sm:$0xf]
      %v376 = vld [vmem:[%s285 + $0x14] sm:$0xf]
      %v377 = vld [vmem:[%s285 + $0x18] sm:$0xf]
      %v378 = vld [vmem:[%s285 + $0x1c] sm:$0xf]
      %v443 = vunpack.c.l.b16 %v307
      %v444 = vunpack.c.l.b16 %v308
      %v445 = vunpack.c.l.b16 %v309
      %v446 = vunpack.c.l.b16 %v310
      %v447 = vunpack.c.l.b16 %v311
      %v448 = vunpack.c.l.b16 %v312
      %v449 = vunpack.c.l.b16 %v313
      %v450 = vunpack.c.l.b16 %v314
      %v451 = vunpack.c.l.b16 %v315
      %v452 = vunpack.c.l.b16 %v316
      %v453 = vunpack.c.l.b16 %v317
      %v454 = vunpack.c.l.b16 %v318
      %v455 = vunpack.c.l.b16 %v319
      %v456 = vunpack.c.l.b16 %v320
      %v457 = vunpack.c.l.b16 %v321
      %v458 = vunpack.c.l.b16 %v322
      %v459 = vunpack.c.l.b16 %v323
      %v460 = vunpack.c.l.b16 %v324
      %v461 = vunpack.c.l.b16 %v325
      %v462 = vunpack.c.l.b16 %v326
      %v463 = vunpack.c.l.b16 %v327
      %v464 = vunpack.c.l.b16 %v328
      %v465 = vunpack.c.l.b16 %v329
      %v466 = vunpack.c.l.b16 %v330
      %v467 = vunpack.c.l.b16 %v331
      %v468 = vunpack.c.l.b16 %v332
      %v469 = vunpack.c.l.b16 %v333
      %v470 = vunpack.c.l.b16 %v334
      %v471 = vunpack.c.l.b16 %v335
      %v472 = vunpack.c.l.b16 %v336
      %v473 = vunpack.c.l.b16 %v337
      %v474 = vunpack.c.l.b16 %v338
      %v475 = vunpack.c.l.b16 %v339
      %v476 = vunpack.c.l.b16 %v340
      %v477 = vunpack.c.l.b16 %v341
      %v478 = vunpack.c.l.b16 %v342
      %v479 = vunpack.c.l.b16 %v343
      %v480 = vunpack.c.l.b16 %v344
      %v481 = vunpack.c.l.b16 %v345
      %v482 = vunpack.c.l.b16 %v346
      %v483 = vunpack.c.l.b16 %v347
      %v484 = vunpack.c.l.b16 %v348
      %v485 = vunpack.c.l.b16 %v349
      %v486 = vunpack.c.l.b16 %v350
      %v487 = vunpack.c.l.b16 %v351
      %v488 = vunpack.c.l.b16 %v352
      %v489 = vunpack.c.l.b16 %v353
      %v490 = vunpack.c.l.b16 %v354
      %v491 = vunpack.c.l.b16 %v355
      %v492 = vunpack.c.l.b16 %v356
      %v493 = vunpack.c.l.b16 %v357
      %v494 = vunpack.c.l.b16 %v358
      %v495 = vunpack.c.l.b16 %v359
      %v496 = vunpack.c.l.b16 %v360
      %v497 = vunpack.c.l.b16 %v361
      %v498 = vunpack.c.l.b16 %v362
      %v499 = vunpack.c.l.b16 %v363
      %v500 = vunpack.c.l.b16 %v364
      %v501 = vunpack.c.l.b16 %v365
      %v502 = vunpack.c.l.b16 %v366
      %v503 = vunpack.c.l.b16 %v367
      %v504 = vunpack.c.l.b16 %v368
      %v505 = vunpack.c.l.b16 %v369
      %v506 = vunpack.c.l.b16 %v370
      %v507 = vpack.c.b16 %v444, %v443
      %v508 = vpack.c.b16 %v446, %v445
      %v509 = vpack.c.b16 %v448, %v447
      %v510 = vpack.c.b16 %v450, %v449
      %v511 = vpack.c.b16 %v452, %v451
      %v512 = vpack.c.b16 %v454, %v453
      %v513 = vpack.c.b16 %v456, %v455
      %v514 = vpack.c.b16 %v458, %v457
      %v515 = vpack.c.b16 %v460, %v459
      %v516 = vpack.c.b16 %v462, %v461
      %v517 = vpack.c.b16 %v464, %v463
      %v518 = vpack.c.b16 %v466, %v465
      %v519 = vpack.c.b16 %v468, %v467
      %v520 = vpack.c.b16 %v470, %v469
      %v521 = vpack.c.b16 %v472, %v471
      %v522 = vpack.c.b16 %v474, %v473
      %v523 = vpack.c.b16 %v476, %v475
      %v524 = vpack.c.b16 %v478, %v477
      %v525 = vpack.c.b16 %v480, %v479
      %v526 = vpack.c.b16 %v482, %v481
      %v527 = vpack.c.b16 %v484, %v483
      %v528 = vpack.c.b16 %v486, %v485
      %v529 = vpack.c.b16 %v488, %v487
      %v530 = vpack.c.b16 %v490, %v489
      %v531 = vpack.c.b16 %v492, %v491
      %v532 = vpack.c.b16 %v494, %v493
      %v533 = vpack.c.b16 %v496, %v495
      %v534 = vpack.c.b16 %v498, %v497
      %v535 = vpack.c.b16 %v500, %v499
      %v536 = vpack.c.b16 %v502, %v501
      %v537 = vpack.c.b16 %v504, %v503
      %v538 = vpack.c.b16 %v506, %v505
      %v547 = vunpack.c.l.b16 %v371
      %v548 = vunpack.c.l.b16 %v372
      %v549 = vunpack.c.l.b16 %v373
      %v550 = vunpack.c.l.b16 %v374
      %v551 = vunpack.c.l.b16 %v375
      %v552 = vunpack.c.l.b16 %v376
      %v553 = vunpack.c.l.b16 %v377
      %v554 = vunpack.c.l.b16 %v378
      %v555 = vpack.c.b16 %v548, %v547
      %v556 = vpack.c.b16 %v550, %v549
      %v557 = vpack.c.b16 %v552, %v551
      %v558 = vpack.c.b16 %v554, %v553
      %vm563 = vcmask 523264
      %v565 = vsel %vm563, %v507, 0
      %v568 = vsel %vm563, %v508, 0
      %v571 = vsel %vm563, %v509, 0
      %v574 = vsel %vm563, %v510, 0
      %v577 = vsel %vm563, %v511, 0
      %v580 = vsel %vm563, %v512, 0
      %v583 = vsel %vm563, %v513, 0
      %v586 = vsel %vm563, %v514, 0
      %v589 = vsel %vm563, %v515, 0
      %v592 = vsel %vm563, %v516, 0
      %v595 = vsel %vm563, %v517, 0
      %v598 = vsel %vm563, %v518, 0
      %v601 = vsel %vm563, %v519, 0
      %v604 = vsel %vm563, %v520, 0
      %v607 = vsel %vm563, %v521, 0
      %v610 = vsel %vm563, %v522, 0
      %v613 = vsel %vm563, %v523, 0
      %v616 = vsel %vm563, %v524, 0
      %v619 = vsel %vm563, %v525, 0
      %v622 = vsel %vm563, %v526, 0
      %v625 = vsel %vm563, %v527, 0
      %v628 = vsel %vm563, %v528, 0
      %v631 = vsel %vm563, %v529, 0
      %v634 = vsel %vm563, %v530, 0
      %v637 = vsel %vm563, %v531, 0
      %v640 = vsel %vm563, %v532, 0
      %v643 = vsel %vm563, %v533, 0
      %v646 = vsel %vm563, %v534, 0
      %v649 = vsel %vm563, %v535, 0
      %v652 = vsel %vm563, %v536, 0
      %v655 = vsel %vm563, %v537, 0
      %v658 = vsel %vm563, %v538, 0
      %660 = vmatpush.bf16.msra.mxu0 0
      %661 = vmatpush.bf16.msra.mxu0 0
      %662 = vmatpush.bf16.msra.mxu0 0
      %663 = vmatpush.bf16.msra.mxu0 0
      %664 = vmatpush.bf16.msra.mxu0 %v558
      %665 = vmatpush.bf16.msra.mxu0 %v557
      %666 = vmatpush.bf16.msra.mxu0 %v556
      %667 = vmatpush.bf16.msra.mxu0 %v555
      %668 = vmatmul.bf16.gmra.mxu0 %v565
      %v669 = vpop.f32.mrf.mxu0
      %v670 = vadd.f32 0.0, %v669
      %v671 = vpop.f32.mrf.mxu0
      %v672 = vadd.f32 0.0, %v671
      %673 = vmatmul.bf16.gmra.mxu0 %v568
      %v674 = vpop.f32.mrf.mxu0
      %v675 = vadd.f32 0.0, %v674
      %v676 = vpop.f32.mrf.mxu0
      %v677 = vadd.f32 0.0, %v676
      %678 = vmatmul.bf16.gmra.mxu0 %v571
      %v679 = vpop.f32.mrf.mxu0
      %v680 = vadd.f32 0.0, %v679
      %v681 = vpop.f32.mrf.mxu0
      %v682 = vadd.f32 0.0, %v681
      %683 = vmatmul.bf16.gmra.mxu0 %v574
      %v684 = vpop.f32.mrf.mxu0
      %v685 = vadd.f32 0.0, %v684
      %v686 = vpop.f32.mrf.mxu0
      %v687 = vadd.f32 0.0, %v686
      %688 = vmatmul.bf16.gmra.mxu0 %v577
      %v689 = vpop.f32.mrf.mxu0
      %v690 = vadd.f32 0.0, %v689
      %v691 = vpop.f32.mrf.mxu0
      %v692 = vadd.f32 0.0, %v691
      %693 = vmatmul.bf16.gmra.mxu0 %v580
      %v694 = vpop.f32.mrf.mxu0
      %v695 = vadd.f32 0.0, %v694
      %v696 = vpop.f32.mrf.mxu0
      %v697 = vadd.f32 0.0, %v696
      %698 = vmatmul.bf16.gmra.mxu0 %v583
      %v699 = vpop.f32.mrf.mxu0
      %v700 = vadd.f32 0.0, %v699
      %v701 = vpop.f32.mrf.mxu0
      %v702 = vadd.f32 0.0, %v701
      %703 = vmatmul.bf16.gmra.mxu0 %v586
      %v704 = vpop.f32.mrf.mxu0
      %v705 = vadd.f32 0.0, %v704
      %v706 = vpop.f32.mrf.mxu0
      %v707 = vadd.f32 0.0, %v706
      %708 = vmatmul.bf16.gmra.mxu0 %v589
      %v709 = vpop.f32.mrf.mxu0
      %v710 = vadd.f32 0.0, %v709
      %v711 = vpop.f32.mrf.mxu0
      %v712 = vadd.f32 0.0, %v711
      %713 = vmatmul.bf16.gmra.mxu0 %v592
      %v714 = vpop.f32.mrf.mxu0
      %v715 = vadd.f32 0.0, %v714
      %v716 = vpop.f32.mrf.mxu0
      %v717 = vadd.f32 0.0, %v716
      %718 = vmatmul.bf16.gmra.mxu0 %v595
      %v719 = vpop.f32.mrf.mxu0
      %v720 = vadd.f32 0.0, %v719
      %v721 = vpop.f32.mrf.mxu0
      %v722 = vadd.f32 0.0, %v721
      %723 = vmatmul.bf16.gmra.mxu0 %v598
      %v724 = vpop.f32.mrf.mxu0
      %v725 = vadd.f32 0.0, %v724
      %v726 = vpop.f32.mrf.mxu0
      %v727 = vadd.f32 0.0, %v726
      %728 = vmatmul.bf16.gmra.mxu0 %v601
      %v729 = vpop.f32.mrf.mxu0
      %v730 = vadd.f32 0.0, %v729
      %v731 = vpop.f32.mrf.mxu0
      %v732 = vadd.f32 0.0, %v731
      %733 = vmatmul.bf16.gmra.mxu0 %v604
      %v734 = vpop.f32.mrf.mxu0
      %v735 = vadd.f32 0.0, %v734
      %v736 = vpop.f32.mrf.mxu0
      %v737 = vadd.f32 0.0, %v736
      %738 = vmatmul.bf16.gmra.mxu0 %v607
      %v739 = vpop.f32.mrf.mxu0
      %v740 = vadd.f32 0.0, %v739
      %v741 = vpop.f32.mrf.mxu0
      %v742 = vadd.f32 0.0, %v741
      %743 = vmatmul.bf16.gmra.mxu0 %v610
      %v744 = vpop.f32.mrf.mxu0
      %v745 = vadd.f32 0.0, %v744
      %v746 = vpop.f32.mrf.mxu0
      %v747 = vadd.f32 0.0, %v746
      %748 = vmatmul.bf16.gmra.mxu0 %v613
      %v749 = vpop.f32.mrf.mxu0
      %v750 = vadd.f32 0.0, %v749
      %v751 = vpop.f32.mrf.mxu0
      %v752 = vadd.f32 0.0, %v751
      %753 = vmatmul.bf16.gmra.mxu0 %v616
      %v754 = vpop.f32.mrf.mxu0
      %v755 = vadd.f32 0.0, %v754
      %v756 = vpop.f32.mrf.mxu0
      %v757 = vadd.f32 0.0, %v756
      %758 = vmatmul.bf16.gmra.mxu0 %v619
      %v759 = vpop.f32.mrf.mxu0
      %v760 = vadd.f32 0.0, %v759
      %v761 = vpop.f32.mrf.mxu0
      %v762 = vadd.f32 0.0, %v761
      %763 = vmatmul.bf16.gmra.mxu0 %v622
      %v764 = vpop.f32.mrf.mxu0
      %v765 = vadd.f32 0.0, %v764
      %v766 = vpop.f32.mrf.mxu0
      %v767 = vadd.f32 0.0, %v766
      %768 = vmatmul.bf16.gmra.mxu0 %v625
      %v769 = vpop.f32.mrf.mxu0
      %v770 = vadd.f32 0.0, %v769
      %v771 = vpop.f32.mrf.mxu0
      %v772 = vadd.f32 0.0, %v771
      %773 = vmatmul.bf16.gmra.mxu0 %v628
      %v774 = vpop.f32.mrf.mxu0
      %v775 = vadd.f32 0.0, %v774
      %v776 = vpop.f32.mrf.mxu0
      %v777 = vadd.f32 0.0, %v776
      %778 = vmatmul.bf16.gmra.mxu0 %v631
      %v779 = vpop.f32.mrf.mxu0
      %v780 = vadd.f32 0.0, %v779
      %v781 = vpop.f32.mrf.mxu0
      %v782 = vadd.f32 0.0, %v781
      %783 = vmatmul.bf16.gmra.mxu0 %v634
      %v784 = vpop.f32.mrf.mxu0
      %v785 = vadd.f32 0.0, %v784
      %v786 = vpop.f32.mrf.mxu0
      %v787 = vadd.f32 0.0, %v786
      %788 = vmatmul.bf16.gmra.mxu0 %v637
      %v789 = vpop.f32.mrf.mxu0
      %v790 = vadd.f32 0.0, %v789
      %v791 = vpop.f32.mrf.mxu0
      %v792 = vadd.f32 0.0, %v791
      %793 = vmatmul.bf16.gmra.mxu0 %v640
      %v794 = vpop.f32.mrf.mxu0
      %v795 = vadd.f32 0.0, %v794
      %v796 = vpop.f32.mrf.mxu0
      %v797 = vadd.f32 0.0, %v796
      %798 = vmatmul.bf16.gmra.mxu0 %v643
      %v799 = vpop.f32.mrf.mxu0
      %v800 = vadd.f32 0.0, %v799
      %v801 = vpop.f32.mrf.mxu0
      %v802 = vadd.f32 0.0, %v801
      %803 = vmatmul.bf16.gmra.mxu0 %v646
      %v804 = vpop.f32.mrf.mxu0
      %v805 = vadd.f32 0.0, %v804
      %v806 = vpop.f32.mrf.mxu0
      %v807 = vadd.f32 0.0, %v806
      %808 = vmatmul.bf16.gmra.mxu0 %v649
      %v809 = vpop.f32.mrf.mxu0
      %v810 = vadd.f32 0.0, %v809
      %v811 = vpop.f32.mrf.mxu0
      %v812 = vadd.f32 0.0, %v811
      %813 = vmatmul.bf16.gmra.mxu0 %v652
      %v814 = vpop.f32.mrf.mxu0
      %v815 = vadd.f32 0.0, %v814
      %v816 = vpop.f32.mrf.mxu0
      %v817 = vadd.f32 0.0, %v816
      %818 = vmatmul.bf16.gmra.mxu0 %v655
      %v819 = vpop.f32.mrf.mxu0
      %v820 = vadd.f32 0.0, %v819
      %v821 = vpop.f32.mrf.mxu0
      %v822 = vadd.f32 0.0, %v821
      %823 = vmatmul.bf16.gmra.mxu0 %v658
      %v824 = vpop.f32.mrf.mxu0
      %v825 = vadd.f32 0.0, %v824
      %v826 = vpop.f32.mrf.mxu0
      %v827 = vadd.f32 0.0, %v826
      %828 = vdwg.mxu0
      %v829 = vpack.c.bf16 %v672, %v670
      %v830 = vpack.c.bf16 %v677, %v675
      %v831 = vpack.c.bf16 %v682, %v680
      %v832 = vpack.c.bf16 %v687, %v685
      %v833 = vpack.c.bf16 %v692, %v690
      %v834 = vpack.c.bf16 %v697, %v695
      %v835 = vpack.c.bf16 %v702, %v700
      %v836 = vpack.c.bf16 %v707, %v705
      %v837 = vpack.c.bf16 %v712, %v710
      %v838 = vpack.c.bf16 %v717, %v715
      %v839 = vpack.c.bf16 %v722, %v720
      %v840 = vpack.c.bf16 %v727, %v725
      %v841 = vpack.c.bf16 %v732, %v730
      %v842 = vpack.c.bf16 %v737, %v735
      %v843 = vpack.c.bf16 %v742, %v740
      %v844 = vpack.c.bf16 %v747, %v745
      %v845 = vpack.c.bf16 %v752, %v750
      %v846 = vpack.c.bf16 %v757, %v755
      %v847 = vpack.c.bf16 %v762, %v760
      %v848 = vpack.c.bf16 %v767, %v765
      %v849 = vpack.c.bf16 %v772, %v770
      %v850 = vpack.c.bf16 %v777, %v775
      %v851 = vpack.c.bf16 %v782, %v780
      %v852 = vpack.c.bf16 %v787, %v785
      %v853 = vpack.c.bf16 %v792, %v790
      %v854 = vpack.c.bf16 %v797, %v795
      %v855 = vpack.c.bf16 %v802, %v800
      %v856 = vpack.c.bf16 %v807, %v805
      %v857 = vpack.c.bf16 %v812, %v810
      %v858 = vpack.c.bf16 %v817, %v815
      %v859 = vpack.c.bf16 %v822, %v820
      %v860 = vpack.c.bf16 %v827, %v825
      %v861 = vld [vmem:[%s2] sm:$0xf]
      %v862 = vld [vmem:[%s2 + $0x4] sm:$0xf]
      %v863 = vld [vmem:[%s2 + $0x8] sm:$0xf]
      %v864 = vld [vmem:[%s2 + $0xc] sm:$0xf]
      %v865 = vld [vmem:[%s2 + $0x10] sm:$0xf]
      %v866 = vld [vmem:[%s2 + $0x14] sm:$0xf]
      %v867 = vld [vmem:[%s2 + $0x18] sm:$0xf]
      %v868 = vld [vmem:[%s2 + $0x1c] sm:$0xf]
      %v869 = vld [vmem:[%s3] sm:$0x1]
      %v871 = vperm.slane %v869, 0
      %v881 = vunpack.c.l.b16 %v861
      %v882 = vunpack.c.l.b16 %v862
      %v883 = vunpack.c.l.b16 %v863
      %v884 = vunpack.c.l.b16 %v864
      %v885 = vunpack.c.l.b16 %v865
      %v886 = vunpack.c.l.b16 %v866
      %v887 = vunpack.c.l.b16 %v867
      %v888 = vunpack.c.l.b16 %v868
      %v889 = vpack.c.b16 %v882, %v881
      %v890 = vpack.c.b16 %v884, %v883
      %v891 = vpack.c.b16 %v886, %v885
      %v892 = vpack.c.b16 %v888, %v887
      %v898 = vsel %vm563, %v829, 0
      %v901 = vsel %vm563, %v830, 0
      %v904 = vsel %vm563, %v831, 0
      %v907 = vsel %vm563, %v832, 0
      %v910 = vsel %vm563, %v833, 0
      %v913 = vsel %vm563, %v834, 0
      %v916 = vsel %vm563, %v835, 0
      %v919 = vsel %vm563, %v836, 0
      %v922 = vsel %vm563, %v837, 0
      %v925 = vsel %vm563, %v838, 0
      %v928 = vsel %vm563, %v839, 0
      %v931 = vsel %vm563, %v840, 0
      %v934 = vsel %vm563, %v841, 0
      %v937 = vsel %vm563, %v842, 0
      %v940 = vsel %vm563, %v843, 0
      %v943 = vsel %vm563, %v844, 0
      %v946 = vsel %vm563, %v845, 0
      %v949 = vsel %vm563, %v846, 0
      %v952 = vsel %vm563, %v847, 0
      %v955 = vsel %vm563, %v848, 0
      %v958 = vsel %vm563, %v849, 0
      %v961 = vsel %vm563, %v850, 0
      %v964 = vsel %vm563, %v851, 0
      %v967 = vsel %vm563, %v852, 0
      %v970 = vsel %vm563, %v853, 0
      %v973 = vsel %vm563, %v854, 0
      %v976 = vsel %vm563, %v855, 0
      %v979 = vsel %vm563, %v856, 0
      %v982 = vsel %vm563, %v857, 0
      %v985 = vsel %vm563, %v858, 0
      %v988 = vsel %vm563, %v859, 0
      %v991 = vsel %vm563, %v860, 0
      %993 = vmatpush.bf16.msra.mxu0 0
      %994 = vmatpush.bf16.msra.mxu0 0
      %995 = vmatpush.bf16.msra.mxu0 0
      %996 = vmatpush.bf16.msra.mxu0 0
      %997 = vmatpush.bf16.msra.mxu0 %v892
      %998 = vmatpush.bf16.msra.mxu0 %v891
      %999 = vmatpush.bf16.msra.mxu0 %v890
      %1000 = vmatpush.bf16.msra.mxu0 %v889
      %1001 = vmatmul.bf16.gmra.mxu0 %v898
      %v1002 = vpop.f32.mrf.mxu0
      %v1003 = vadd.f32 %v871, %v1002
      %v1004 = vpop.f32.mrf.mxu0
      %v1005 = vadd.f32 %v871, %v1004
      %1006 = vmatmul.bf16.gmra.mxu0 %v901
      %v1007 = vpop.f32.mrf.mxu0
      %v1008 = vadd.f32 %v871, %v1007
      %v1009 = vpop.f32.mrf.mxu0
      %v1010 = vadd.f32 %v871, %v1009
      %1011 = vmatmul.bf16.gmra.mxu0 %v904
      %v1012 = vpop.f32.mrf.mxu0
      %v1013 = vadd.f32 %v871, %v1012
      %v1014 = vpop.f32.mrf.mxu0
      %v1015 = vadd.f32 %v871, %v1014
      %1016 = vmatmul.bf16.gmra.mxu0 %v907
      %v1017 = vpop.f32.mrf.mxu0
      %v1018 = vadd.f32 %v871, %v1017
      %v1019 = vpop.f32.mrf.mxu0
      %v1020 = vadd.f32 %v871, %v1019
      %1021 = vmatmul.bf16.gmra.mxu0 %v910
      %v1022 = vpop.f32.mrf.mxu0
      %v1023 = vadd.f32 %v871, %v1022
      %v1024 = vpop.f32.mrf.mxu0
      %v1025 = vadd.f32 %v871, %v1024
      %1026 = vmatmul.bf16.gmra.mxu0 %v913
      %v1027 = vpop.f32.mrf.mxu0
      %v1028 = vadd.f32 %v871, %v1027
      %v1029 = vpop.f32.mrf.mxu0
      %v1030 = vadd.f32 %v871, %v1029
      %1031 = vmatmul.bf16.gmra.mxu0 %v916
      %v1032 = vpop.f32.mrf.mxu0
      %v1033 = vadd.f32 %v871, %v1032
      %v1034 = vpop.f32.mrf.mxu0
      %v1035 = vadd.f32 %v871, %v1034
      %1036 = vmatmul.bf16.gmra.mxu0 %v919
      %v1037 = vpop.f32.mrf.mxu0
      %v1038 = vadd.f32 %v871, %v1037
      %v1039 = vpop.f32.mrf.mxu0
      %v1040 = vadd.f32 %v871, %v1039
      %1041 = vmatmul.bf16.gmra.mxu0 %v922
      %v1042 = vpop.f32.mrf.mxu0
      %v1043 = vadd.f32 %v871, %v1042
      %v1044 = vpop.f32.mrf.mxu0
      %v1045 = vadd.f32 %v871, %v1044
      %1046 = vmatmul.bf16.gmra.mxu0 %v925
      %v1047 = vpop.f32.mrf.mxu0
      %v1048 = vadd.f32 %v871, %v1047
      %v1049 = vpop.f32.mrf.mxu0
      %v1050 = vadd.f32 %v871, %v1049
      %1051 = vmatmul.bf16.gmra.mxu0 %v928
      %v1052 = vpop.f32.mrf.mxu0
      %v1053 = vadd.f32 %v871, %v1052
      %v1054 = vpop.f32.mrf.mxu0
      %v1055 = vadd.f32 %v871, %v1054
      %1056 = vmatmul.bf16.gmra.mxu0 %v931
      %v1057 = vpop.f32.mrf.mxu0
      %v1058 = vadd.f32 %v871, %v1057
      %v1059 = vpop.f32.mrf.mxu0
      %v1060 = vadd.f32 %v871, %v1059
      %1061 = vmatmul.bf16.gmra.mxu0 %v934
      %v1062 = vpop.f32.mrf.mxu0
      %v1063 = vadd.f32 %v871, %v1062
      %v1064 = vpop.f32.mrf.mxu0
      %v1065 = vadd.f32 %v871, %v1064
      %1066 = vmatmul.bf16.gmra.mxu0 %v937
      %v1067 = vpop.f32.mrf.mxu0
      %v1068 = vadd.f32 %v871, %v1067
      %v1069 = vpop.f32.mrf.mxu0
      %v1070 = vadd.f32 %v871, %v1069
      %1071 = vmatmul.bf16.gmra.mxu0 %v940
      %v1072 = vpop.f32.mrf.mxu0
      %v1073 = vadd.f32 %v871, %v1072
      %v1074 = vpop.f32.mrf.mxu0
      %v1075 = vadd.f32 %v871, %v1074
      %1076 = vmatmul.bf16.gmra.mxu0 %v943
      %v1077 = vpop.f32.mrf.mxu0
      %v1078 = vadd.f32 %v871, %v1077
      %v1079 = vpop.f32.mrf.mxu0
      %v1080 = vadd.f32 %v871, %v1079
      %1081 = vmatmul.bf16.gmra.mxu0 %v946
      %v1082 = vpop.f32.mrf.mxu0
      %v1083 = vadd.f32 %v871, %v1082
      %v1084 = vpop.f32.mrf.mxu0
      %v1085 = vadd.f32 %v871, %v1084
      %1086 = vmatmul.bf16.gmra.mxu0 %v949
      %v1087 = vpop.f32.mrf.mxu0
      %v1088 = vadd.f32 %v871, %v1087
      %v1089 = vpop.f32.mrf.mxu0
      %v1090 = vadd.f32 %v871, %v1089
      %1091 = vmatmul.bf16.gmra.mxu0 %v952
      %v1092 = vpop.f32.mrf.mxu0
      %v1093 = vadd.f32 %v871, %v1092
      %v1094 = vpop.f32.mrf.mxu0
      %v1095 = vadd.f32 %v871, %v1094
      %1096 = vmatmul.bf16.gmra.mxu0 %v955
      %v1097 = vpop.f32.mrf.mxu0
      %v1098 = vadd.f32 %v871, %v1097
      %v1099 = vpop.f32.mrf.mxu0
      %v1100 = vadd.f32 %v871, %v1099
      %1101 = vmatmul.bf16.gmra.mxu0 %v958
      %v1102 = vpop.f32.mrf.mxu0
      %v1103 = vadd.f32 %v871, %v1102
      %v1104 = vpop.f32.mrf.mxu0
      %v1105 = vadd.f32 %v871, %v1104
      %1106 = vmatmul.bf16.gmra.mxu0 %v961
      %v1107 = vpop.f32.mrf.mxu0
      %v1108 = vadd.f32 %v871, %v1107
      %v1109 = vpop.f32.mrf.mxu0
      %v1110 = vadd.f32 %v871, %v1109
      %1111 = vmatmul.bf16.gmra.mxu0 %v964
      %v1112 = vpop.f32.mrf.mxu0
      %v1113 = vadd.f32 %v871, %v1112
      %v1114 = vpop.f32.mrf.mxu0
      %v1115 = vadd.f32 %v871, %v1114
      %1116 = vmatmul.bf16.gmra.mxu0 %v967
      %v1117 = vpop.f32.mrf.mxu0
      %v1118 = vadd.f32 %v871, %v1117
      %v1119 = vpop.f32.mrf.mxu0
      %v1120 = vadd.f32 %v871, %v1119
      %1121 = vmatmul.bf16.gmra.mxu0 %v970
      %v1122 = vpop.f32.mrf.mxu0
      %v1123 = vadd.f32 %v871, %v1122
      %v1124 = vpop.f32.mrf.mxu0
      %v1125 = vadd.f32 %v871, %v1124
      %1126 = vmatmul.bf16.gmra.mxu0 %v973
      %v1127 = vpop.f32.mrf.mxu0
      %v1128 = vadd.f32 %v871, %v1127
      %v1129 = vpop.f32.mrf.mxu0
      %v1130 = vadd.f32 %v871, %v1129
      %1131 = vmatmul.bf16.gmra.mxu0 %v976
      %v1132 = vpop.f32.mrf.mxu0
      %v1133 = vadd.f32 %v871, %v1132
      %v1134 = vpop.f32.mrf.mxu0
      %v1135 = vadd.f32 %v871, %v1134
      %1136 = vmatmul.bf16.gmra.mxu0 %v979
      %v1137 = vpop.f32.mrf.mxu0
      %v1138 = vadd.f32 %v871, %v1137
      %v1139 = vpop.f32.mrf.mxu0
      %v1140 = vadd.f32 %v871, %v1139
      %1141 = vmatmul.bf16.gmra.mxu0 %v982
      %v1142 = vpop.f32.mrf.mxu0
      %v1143 = vadd.f32 %v871, %v1142
      %v1144 = vpop.f32.mrf.mxu0
      %v1145 = vadd.f32 %v871, %v1144
      %1146 = vmatmul.bf16.gmra.mxu0 %v985
      %v1147 = vpop.f32.mrf.mxu0
      %v1148 = vadd.f32 %v871, %v1147
      %v1149 = vpop.f32.mrf.mxu0
      %v1150 = vadd.f32 %v871, %v1149
      %1151 = vmatmul.bf16.gmra.mxu0 %v988
      %v1152 = vpop.f32.mrf.mxu0
      %v1153 = vadd.f32 %v871, %v1152
      %v1154 = vpop.f32.mrf.mxu0
      %v1155 = vadd.f32 %v871, %v1154
      %1156 = vmatmul.bf16.gmra.mxu0 %v991
      %v1157 = vpop.f32.mrf.mxu0
      %v1158 = vadd.f32 %v871, %v1157
      %v1159 = vpop.f32.mrf.mxu0
      %v1160 = vadd.f32 %v871, %v1159
      %1161 = vdwg.mxu0
      %v1162 = vld [vmem:[%s294] sm:$0xff]
      %v1163 = vld [vmem:[%s294 + $0x8] sm:$0xff]
      %v1164 = vld [vmem:[%s294 + $0x10] sm:$0xff]
      %v1165 = vld [vmem:[%s294 + $0x18] sm:$0xff]
      %v1166 = vld [vmem:[%s294 + $0x20] sm:$0xff]
      %v1167 = vld [vmem:[%s294 + $0x28] sm:$0xff]
      %v1168 = vld [vmem:[%s294 + $0x30] sm:$0xff]
      %v1169 = vld [vmem:[%s294 + $0x38] sm:$0xff]
      %v1170 = vld [vmem:[%s294 + $0x40] sm:$0xff]
      %v1171 = vld [vmem:[%s294 + $0x48] sm:$0xff]
      %v1172 = vld [vmem:[%s294 + $0x50] sm:$0xff]
      %v1173 = vld [vmem:[%s294 + $0x58] sm:$0xff]
      %v1174 = vld [vmem:[%s294 + $0x60] sm:$0xff]
      %v1175 = vld [vmem:[%s294 + $0x68] sm:$0xff]
      %v1176 = vld [vmem:[%s294 + $0x70] sm:$0xff]
      %v1177 = vld [vmem:[%s294 + $0x78] sm:$0xff]
      %v1178 = vld [vmem:[%s294 + $0x80] sm:$0xff]
      %v1179 = vld [vmem:[%s294 + $0x88] sm:$0xff]
      %v1180 = vld [vmem:[%s294 + $0x90] sm:$0xff]
      %v1181 = vld [vmem:[%s294 + $0x98] sm:$0xff]
      %v1182 = vld [vmem:[%s294 + $0xa0] sm:$0xff]
      %v1183 = vld [vmem:[%s294 + $0xa8] sm:$0xff]
      %v1184 = vld [vmem:[%s294 + $0xb0] sm:$0xff]
      %v1185 = vld [vmem:[%s294 + $0xb8] sm:$0xff]
      %v1186 = vld [vmem:[%s294 + $0xc0] sm:$0xff]
      %v1187 = vld [vmem:[%s294 + $0xc8] sm:$0xff]
      %v1188 = vld [vmem:[%s294 + $0xd0] sm:$0xff]
      %v1189 = vld [vmem:[%s294 + $0xd8] sm:$0xff]
      %v1190 = vld [vmem:[%s294 + $0xe0] sm:$0xff]
      %v1191 = vld [vmem:[%s294 + $0xe8] sm:$0xff]
      %v1192 = vld [vmem:[%s294 + $0xf0] sm:$0xff]
      %v1193 = vld [vmem:[%s294 + $0xf8] sm:$0xff]
      %v1194 = vld [vmem:[%s294 + $0x100] sm:$0xff]
      %v1195 = vld [vmem:[%s294 + $0x108] sm:$0xff]
      %v1196 = vld [vmem:[%s294 + $0x110] sm:$0xff]
      %v1197 = vld [vmem:[%s294 + $0x118] sm:$0xff]
      %v1198 = vld [vmem:[%s294 + $0x120] sm:$0xff]
      %v1199 = vld [vmem:[%s294 + $0x128] sm:$0xff]
      %v1200 = vld [vmem:[%s294 + $0x130] sm:$0xff]
      %v1201 = vld [vmem:[%s294 + $0x138] sm:$0xff]
      %v1202 = vld [vmem:[%s294 + $0x140] sm:$0xff]
      %v1203 = vld [vmem:[%s294 + $0x148] sm:$0xff]
      %v1204 = vld [vmem:[%s294 + $0x150] sm:$0xff]
      %v1205 = vld [vmem:[%s294 + $0x158] sm:$0xff]
      %v1206 = vld [vmem:[%s294 + $0x160] sm:$0xff]
      %v1207 = vld [vmem:[%s294 + $0x168] sm:$0xff]
      %v1208 = vld [vmem:[%s294 + $0x170] sm:$0xff]
      %v1209 = vld [vmem:[%s294 + $0x178] sm:$0xff]
      %v1210 = vld [vmem:[%s294 + $0x180] sm:$0xff]
      %v1211 = vld [vmem:[%s294 + $0x188] sm:$0xff]
      %v1212 = vld [vmem:[%s294 + $0x190] sm:$0xff]
      %v1213 = vld [vmem:[%s294 + $0x198] sm:$0xff]
      %v1214 = vld [vmem:[%s294 + $0x1a0] sm:$0xff]
      %v1215 = vld [vmem:[%s294 + $0x1a8] sm:$0xff]
      %v1216 = vld [vmem:[%s294 + $0x1b0] sm:$0xff]
      %v1217 = vld [vmem:[%s294 + $0x1b8] sm:$0xff]
      %v1218 = vld [vmem:[%s294 + $0x1c0] sm:$0xff]
      %v1219 = vld [vmem:[%s294 + $0x1c8] sm:$0xff]
      %v1220 = vld [vmem:[%s294 + $0x1d0] sm:$0xff]
      %v1221 = vld [vmem:[%s294 + $0x1d8] sm:$0xff]
      %v1222 = vld [vmem:[%s294 + $0x1e0] sm:$0xff]
      %v1223 = vld [vmem:[%s294 + $0x1e8] sm:$0xff]
      %v1224 = vld [vmem:[%s294 + $0x1f0] sm:$0xff]
      %v1225 = vld [vmem:[%s294 + $0x1f8] sm:$0xff]
      %v1226 = vadd.f32 %v1003, %v1162
      %v1227 = vadd.f32 %v1005, %v1163
      %v1228 = vadd.f32 %v1008, %v1164
      %v1229 = vadd.f32 %v1010, %v1165
      %v1230 = vadd.f32 %v1013, %v1166
      %v1231 = vadd.f32 %v1015, %v1167
      %v1232 = vadd.f32 %v1018, %v1168
      %v1233 = vadd.f32 %v1020, %v1169
      %v1234 = vadd.f32 %v1023, %v1170
      %v1235 = vadd.f32 %v1025, %v1171
      %v1236 = vadd.f32 %v1028, %v1172
      %v1237 = vadd.f32 %v1030, %v1173
      %v1238 = vadd.f32 %v1033, %v1174
      %v1239 = vadd.f32 %v1035, %v1175
      %v1240 = vadd.f32 %v1038, %v1176
      %v1241 = vadd.f32 %v1040, %v1177
      %v1242 = vadd.f32 %v1043, %v1178
      %v1243 = vadd.f32 %v1045, %v1179
      %v1244 = vadd.f32 %v1048, %v1180
      %v1245 = vadd.f32 %v1050, %v1181
      %v1246 = vadd.f32 %v1053, %v1182
      %v1247 = vadd.f32 %v1055, %v1183
      %v1248 = vadd.f32 %v1058, %v1184
      %v1249 = vadd.f32 %v1060, %v1185
      %v1250 = vadd.f32 %v1063, %v1186
      %v1251 = vadd.f32 %v1065, %v1187
      %v1252 = vadd.f32 %v1068, %v1188
      %v1253 = vadd.f32 %v1070, %v1189
      %v1254 = vadd.f32 %v1073, %v1190
      %v1255 = vadd.f32 %v1075, %v1191
      %v1256 = vadd.f32 %v1078, %v1192
      %v1257 = vadd.f32 %v1080, %v1193
      %v1258 = vadd.f32 %v1083, %v1194
      %v1259 = vadd.f32 %v1085, %v1195
      %v1260 = vadd.f32 %v1088, %v1196
      %v1261 = vadd.f32 %v1090, %v1197
      %v1262 = vadd.f32 %v1093, %v1198
      %v1263 = vadd.f32 %v1095, %v1199
      %v1264 = vadd.f32 %v1098, %v1200
      %v1265 = vadd.f32 %v1100, %v1201
      %v1266 = vadd.f32 %v1103, %v1202
      %v1267 = vadd.f32 %v1105, %v1203
      %v1268 = vadd.f32 %v1108, %v1204
      %v1269 = vadd.f32 %v1110, %v1205
      %v1270 = vadd.f32 %v1113, %v1206
      %v1271 = vadd.f32 %v1115, %v1207
      %v1272 = vadd.f32 %v1118, %v1208
      %v1273 = vadd.f32 %v1120, %v1209
      %v1274 = vadd.f32 %v1123, %v1210
      %v1275 = vadd.f32 %v1125, %v1211
      %v1276 = vadd.f32 %v1128, %v1212
      %v1277 = vadd.f32 %v1130, %v1213
      %v1278 = vadd.f32 %v1133, %v1214
      %v1279 = vadd.f32 %v1135, %v1215
      %v1280 = vadd.f32 %v1138, %v1216
      %v1281 = vadd.f32 %v1140, %v1217
      %v1282 = vadd.f32 %v1143, %v1218
      %v1283 = vadd.f32 %v1145, %v1219
      %v1284 = vadd.f32 %v1148, %v1220
      %v1285 = vadd.f32 %v1150, %v1221
      %v1286 = vadd.f32 %v1153, %v1222
      %v1287 = vadd.f32 %v1155, %v1223
      %v1288 = vadd.f32 %v1158, %v1224
      %v1289 = vadd.f32 %v1160, %v1225
      %vm1290 = vcmask 261120
      %1291 = vst.msk [vmem:[%s304] sm:$0xff] %vm1290, %v1226
      %1292 = vst.msk [vmem:[%s304 + $0x8] sm:$0xff] %vm1290, %v1227
      %1293 = vst.msk [vmem:[%s304 + $0x10] sm:$0xff] %vm1290, %v1228
      %1294 = vst.msk [vmem:[%s304 + $0x18] sm:$0xff] %vm1290, %v1229
      %1295 = vst.msk [vmem:[%s304 + $0x20] sm:$0xff] %vm1290, %v1230
      %1296 = vst.msk [vmem:[%s304 + $0x28] sm:$0xff] %vm1290, %v1231
      %1297 = vst.msk [vmem:[%s304 + $0x30] sm:$0xff] %vm1290, %v1232
      %1298 = vst.msk [vmem:[%s304 + $0x38] sm:$0xff] %vm1290, %v1233
      %1299 = vst.msk [vmem:[%s304 + $0x40] sm:$0xff] %vm1290, %v1234
      %1300 = vst.msk [vmem:[%s304 + $0x48] sm:$0xff] %vm1290, %v1235
      %1301 = vst.msk [vmem:[%s304 + $0x50] sm:$0xff] %vm1290, %v1236
      %1302 = vst.msk [vmem:[%s304 + $0x58] sm:$0xff] %vm1290, %v1237
      %1303 = vst.msk [vmem:[%s304 + $0x60] sm:$0xff] %vm1290, %v1238
      %1304 = vst.msk [vmem:[%s304 + $0x68] sm:$0xff] %vm1290, %v1239
      %1305 = vst.msk [vmem:[%s304 + $0x70] sm:$0xff] %vm1290, %v1240
      %1306 = vst.msk [vmem:[%s304 + $0x78] sm:$0xff] %vm1290, %v1241
      %1307 = vst.msk [vmem:[%s304 + $0x80] sm:$0xff] %vm1290, %v1242
      %1308 = vst.msk [vmem:[%s304 + $0x88] sm:$0xff] %vm1290, %v1243
      %1309 = vst.msk [vmem:[%s304 + $0x90] sm:$0xff] %vm1290, %v1244
      %1310 = vst.msk [vmem:[%s304 + $0x98] sm:$0xff] %vm1290, %v1245
      %1311 = vst.msk [vmem:[%s304 + $0xa0] sm:$0xff] %vm1290, %v1246
      %1312 = vst.msk [vmem:[%s304 + $0xa8] sm:$0xff] %vm1290, %v1247
      %1313 = vst.msk [vmem:[%s304 + $0xb0] sm:$0xff] %vm1290, %v1248
      %1314 = vst.msk [vmem:[%s304 + $0xb8] sm:$0xff] %vm1290, %v1249
      %1315 = vst.msk [vmem:[%s304 + $0xc0] sm:$0xff] %vm1290, %v1250
      %1316 = vst.msk [vmem:[%s304 + $0xc8] sm:$0xff] %vm1290, %v1251
      %1317 = vst.msk [vmem:[%s304 + $0xd0] sm:$0xff] %vm1290, %v1252
      %1318 = vst.msk [vmem:[%s304 + $0xd8] sm:$0xff] %vm1290, %v1253
      %1319 = vst.msk [vmem:[%s304 + $0xe0] sm:$0xff] %vm1290, %v1254
      %1320 = vst.msk [vmem:[%s304 + $0xe8] sm:$0xff] %vm1290, %v1255
      %1321 = vst.msk [vmem:[%s304 + $0xf0] sm:$0xff] %vm1290, %v1256
      %1322 = vst.msk [vmem:[%s304 + $0xf8] sm:$0xff] %vm1290, %v1257
      %1323 = vst.msk [vmem:[%s304 + $0x100] sm:$0xff] %vm1290, %v1258
      %1324 = vst.msk [vmem:[%s304 + $0x108] sm:$0xff] %vm1290, %v1259
      %1325 = vst.msk [vmem:[%s304 + $0x110] sm:$0xff] %vm1290, %v1260
      %1326 = vst.msk [vmem:[%s304 + $0x118] sm:$0xff] %vm1290, %v1261
      %1327 = vst.msk [vmem:[%s304 + $0x120] sm:$0xff] %vm1290, %v1262
      %1328 = vst.msk [vmem:[%s304 + $0x128] sm:$0xff] %vm1290, %v1263
      %1329 = vst.msk [vmem:[%s304 + $0x130] sm:$0xff] %vm1290, %v1264
      %1330 = vst.msk [vmem:[%s304 + $0x138] sm:$0xff] %vm1290, %v1265
      %1331 = vst.msk [vmem:[%s304 + $0x140] sm:$0xff] %vm1290, %v1266
      %1332 = vst.msk [vmem:[%s304 + $0x148] sm:$0xff] %vm1290, %v1267
      %1333 = vst.msk [vmem:[%s304 + $0x150] sm:$0xff] %vm1290, %v1268
      %1334 = vst.msk [vmem:[%s304 + $0x158] sm:$0xff] %vm1290, %v1269
      %1335 = vst.msk [vmem:[%s304 + $0x160] sm:$0xff] %vm1290, %v1270
      %1336 = vst.msk [vmem:[%s304 + $0x168] sm:$0xff] %vm1290, %v1271
      %1337 = vst.msk [vmem:[%s304 + $0x170] sm:$0xff] %vm1290, %v1272
      %1338 = vst.msk [vmem:[%s304 + $0x178] sm:$0xff] %vm1290, %v1273
      %1339 = vst.msk [vmem:[%s304 + $0x180] sm:$0xff] %vm1290, %v1274
      %1340 = vst.msk [vmem:[%s304 + $0x188] sm:$0xff] %vm1290, %v1275
      %1341 = vst.msk [vmem:[%s304 + $0x190] sm:$0xff] %vm1290, %v1276
      %1342 = vst.msk [vmem:[%s304 + $0x198] sm:$0xff] %vm1290, %v1277
      %1343 = vst.msk [vmem:[%s304 + $0x1a0] sm:$0xff] %vm1290, %v1278
      %1344 = vst.msk [vmem:[%s304 + $0x1a8] sm:$0xff] %vm1290, %v1279
      %1345 = vst.msk [vmem:[%s304 + $0x1b0] sm:$0xff] %vm1290, %v1280
      %1346 = vst.msk [vmem:[%s304 + $0x1b8] sm:$0xff] %vm1290, %v1281
      %1347 = vst.msk [vmem:[%s304 + $0x1c0] sm:$0xff] %vm1290, %v1282
      %1348 = vst.msk [vmem:[%s304 + $0x1c8] sm:$0xff] %vm1290, %v1283
      %1349 = vst.msk [vmem:[%s304 + $0x1d0] sm:$0xff] %vm1290, %v1284
      %1350 = vst.msk [vmem:[%s304 + $0x1d8] sm:$0xff] %vm1290, %v1285
      %1351 = vst.msk [vmem:[%s304 + $0x1e0] sm:$0xff] %vm1290, %v1286
      %1352 = vst.msk [vmem:[%s304 + $0x1e8] sm:$0xff] %vm1290, %v1287
      %1353 = vst.msk [vmem:[%s304 + $0x1f0] sm:$0xff] %vm1290, %v1288
      %1354 = vst.msk [vmem:[%s304 + $0x1f8] sm:$0xff] %vm1290, %v1289
      %s1355 = smul.u32 64, %s21
      %p1356 = scmp.lt.s32.totalorder %s20, 1
      %s1357 = scalar_select %p1356, %s20, 1
      %p1358 = scmp.lt.s32.totalorder %s1355, 127
      %s1359 = scalar_select %p1358, %s1355, 127
      %s1360 = smul.addr %s1357, 128
      %s1361 = sadd.s32 %s1359, %s1360
      %s1362 = smul.addr %s1361, 8
      %s1363 = scalar_lea.vmem %s5, %s1362
      // Predicated region
      $region41: #{glse_pallas.39} parent=39 // pred_check
        %p1364 = pneg %p170
      $region42: #{glse_pallas.39} parent=39 // pred_check_branch
        %1366 = sbr.rel (%p1364) target = $region44
      $region43: #{glse_pallas.39} parent=39 // pred_region
        %s1367 = smul.u32 64, %s21
      $region44: #{glse_pallas.39} parent=39 // pred_fallthru
        _
    $region40: #{glse_pallas.39} parent=5 // pred_fallthru
      _
    %p1368 = scmp.le.s32.totalorder 2, %s11
    // Predicated region
    $region45: #{glse_pallas.39} parent=5 // pred_check
      %p1369 = pneg %p1368
    $region46: #{glse_pallas.39} parent=5 // pred_check_branch
      %1371 = sbr.rel (%p1369) target = $region48
    $region47: #{glse_pallas.39} parent=5 // pred_region
      %s1372 = ssub.s32 %s11, 2
      // Predicated region
      $region49: #{glse_pallas.39} parent=47 // pred_check
        %p1373 = pneg %p176
      $region50: #{glse_pallas.39} parent=47 // pred_check_branch
        %1375 = sbr.rel (%p1373) target = $region52
      $region51: #{glse_pallas.39} parent=47 // pred_region
        %s1376 = smul.u32 64, %s23
        %p1377 = scmp.lt.s32.totalorder %s22, 1
        %s1378 = scalar_select %p1377, %s22, 1
        %p1379 = scmp.lt.s32.totalorder %s1376, 127
        %s1380 = scalar_select %p1379, %s1376, 127
        %s1381 = smul.addr %s1378, 128
        %s1382 = sadd.s32 %s1380, %s1381
        %s1383 = smul.addr %s1382, 8
        %s1384 = scalar_lea.vmem %s5, %s1383
      $region52: #{glse_pallas.39} parent=47 // pred_fallthru
        _
    $region48: #{glse_pallas.39} parent=5 // pred_fallthru
      _
  $region6: #{glse_pallas.39} parent=0 // loop_footer
    %s15 = sadd.s32 1, %s11
  $region7: #{glse_pallas.39} parent=0 // loop_footer_branch
    %10 = sbr.rel target = $region3
  $region8: #{glse_pallas.39} parent=0 // loop_exit
    _

</llo_original>
